<compile_context>
chip_gen: v7x
topology: tpu7x:2x2x1
jax: 0.10.0
libtpu: 0.0.40
codegen_flags: <defaults>
</compile_context>

<pallas_src>
import functools

import jax
import jax.numpy as jnp
from jax import lax
from jax.experimental import pallas as pl
from jax.experimental.pallas import tpu as pltpu


def _round_up(x, m):
    return ((x + m - 1) // m) * m


def _residual_kernel(H, W, Cin, Cout,
                     x_ref,
                     s1_ref, t1_ref,
                     w1_ref, b1_ref,
                     w2_ref, b2_ref,
                     w34_ref, b34_ref,
                     out_ref,
                     xin_ref, xpad_ref, acc_ref):
    f32 = jnp.float32
    bf16 = jnp.bfloat16
    HW = H * W
    Cin_p = w1_ref.shape[0]
    Cmid = w1_ref.shape[1]          # already lane-padded (multiple of 128)
    Cout_p = w34_ref.shape[1]

    # ---- input: zero-extend channels to Cin_p inside VMEM (no wrapper HBM pad pass) ----
    if Cin == Cin_p:
        x2d = x_ref[0]                                          # (HW, Cin_p) f32
    else:
        xin_ref[...] = jnp.zeros_like(xin_ref)
        xin_ref[:, :Cin] = x_ref[0]                             # narrow lane-masked store
        x2d = xin_ref[...]

    # ---- bn1 + relu (f32 VPU), then conv1 (1x1, bn2 folded into w1/b1) on the MXU ----
    h = jnp.maximum(x2d * s1_ref[...] + t1_ref[...], 0.0)
    h = jnp.dot(h.astype(bf16), w1_ref[...], preferred_element_type=f32)
    h = jnp.maximum(h + b1_ref[...], 0.0)                       # (HW, Cmid) f32

    # ---- conv2: 3x3, stride 1, SAME -----------------------------------------------
    # Zero-haloed frame with NO width padding: rows 1..H hold the image, rows 0/H+1 are
    # zero.  All stores are dense and sublane-aligned (W % 8 == 0 at the tested shape).
    xpad_ref[0] = jnp.zeros((W, Cmid), f32)
    xpad_ref[H + 1] = jnp.zeros((W, Cmid), f32)
    xpad_ref[1:H + 1] = h.reshape(H, W, Cmid)                   # one dense store

    # Edge-column masks for the +-1 width shifts (hoisted out of the tap loop).
    col = lax.broadcasted_iota(jnp.int32, (HW, 1), 0) % W
    has_left = jnp.broadcast_to(col != 0, (HW, Cmid))           # w-1 exists in same row
    has_right = jnp.broadcast_to(col != W - 1, (HW, Cmid))      # w+1 exists in same row

    # 9 whole-image shifted matmuls (bn3 folded into w2/b2).  dy -> aligned row-slab
    # reads; dx -> pltpu.roll (+-1 on the flattened spatial axis, XLU) + edge mask.
    # Accumulate in a VMEM scratch to keep vreg pressure low.
    for dy in range(3):
        for dx in range(3):
            slab = xpad_ref[dy:dy + H].reshape(HW, Cmid)        # contiguous, aligned
            if dx == 0:
                opnd = jnp.where(has_left, pltpu.roll(slab, 1, axis=0), 0.0)
            elif dx == 2:
                opnd = jnp.where(has_right, pltpu.roll(slab, HW - 1, axis=0), 0.0)
            else:
                opnd = slab
            tap = jnp.dot(opnd.astype(bf16), w2_ref[3 * dy + dx],
                          preferred_element_type=f32)
            if dy == 0 and dx == 0:
                acc_ref[...] = tap
            else:
                acc_ref[...] += tap

    h2 = jnp.maximum(acc_ref[...] + b2_ref[...], 0.0)           # (HW, Cmid) f32

    # ---- fused conv3 (1x1) + shortcut conv4 (1x1): one MXU pass, K = Cmid_p + Cin_p ----
    cat = jnp.concatenate([h2.astype(bf16), x2d.astype(bf16)], axis=-1)
    res = jnp.dot(cat, w34_ref[...], preferred_element_type=f32) + b34_ref[...]

    # Depad channels in the epilogue (output block carries the true Cout).
    if Cout == Cout_p:
        out_ref[0] = res.astype(out_ref.dtype)
    else:
        out_ref[0] = res[:, :Cout].astype(out_ref.dtype)


def residual_forward_nhwc(x_nhwc, prep):
    """x_nhwc: (N, H, W, Cin) float32 -> (N, H, W, Cout) float32."""
    N, H, W, Cin = x_nhwc.shape
    Cin_p, Cmid_p = prep["w1"].shape
    Cout_p = prep["w34"].shape[1]
    Cout = prep["cout"]
    HW = H * W

    x = x_nhwc.reshape(N, HW, Cin)                              # layout no-op

    def full_spec(shape):
        zeros = (0,) * len(shape)
        return pl.BlockSpec(shape, lambda n, _z=zeros: _z)

    in_specs = [
        pl.BlockSpec((1, HW, Cin), lambda n: (n, 0, 0)),        # true Cin (full extent)
        full_spec((1, Cin_p)), full_spec((1, Cin_p)),
        full_spec((Cin_p, Cmid_p)), full_spec((1, Cmid_p)),
        full_spec((9, Cmid_p, Cmid_p)), full_spec((1, Cmid_p)),
        full_spec((Cmid_p + Cin_p, Cout_p)), full_spec((1, Cout_p)),
    ]
    out_spec = pl.BlockSpec((1, HW, Cout), lambda n: (n, 0, 0))  # true Cout (full extent)

    # VMEM budget: double-buffered I/O + weights, plus the three scratch buffers.
    weight_bytes = (2 * Cin_p * 4
                    + Cin_p * Cmid_p * 2 + Cmid_p * 4
                    + 9 * Cmid_p * Cmid_p * 2 + Cmid_p * 4
                    + (Cmid_p + Cin_p) * Cout_p * 2 + Cout_p * 4)
    block_bytes = HW * Cin * 4 + HW * Cout * 4
    scratch_bytes = (HW * Cin_p + (H + 2) * W * Cmid_p + HW * Cmid_p) * 4
    needed = 2 * (block_bytes + weight_bytes) + scratch_bytes
    try:
        phys = getattr(pltpu.get_tpu_info(), "vmem_capacity_bytes", 64 << 20)
    except Exception:
        phys = 64 << 20                                         # conservative (v7x)
    vmem_limit = int(min(max(2 * needed, 16 << 20), phys * 5 // 8))

    out = pl.pallas_call(
        functools.partial(_residual_kernel, H, W, Cin, Cout),
        out_shape=jax.ShapeDtypeStruct((N, HW, Cout), jnp.float32),
        grid_spec=pltpu.PrefetchScalarGridSpec(
            num_scalar_prefetch=0,
            grid=(N,),
            in_specs=in_specs,
            out_specs=out_spec,
            scratch_shapes=[
                pltpu.VMEM((HW, Cin_p), jnp.float32),            # channel-padded x
                pltpu.VMEM((H + 2, W, Cmid_p), jnp.float32),     # zero-haloed conv2 frame
                pltpu.VMEM((HW, Cmid_p), jnp.float32),           # 9-tap accumulator
            ],
        ),
        compiler_params=pltpu.CompilerParams(
            dimension_semantics=("parallel",),
            vmem_limit_bytes=vmem_limit),
    )(x,
      prep["s1"], prep["t1"], prep["w1"], prep["b1"],
      prep["w2"], prep["b2"], prep["w34"], prep["b34"])

    return out.reshape(N, H, W, Cout)


def residual_forward(x_nchw, prep):
    """PyTorch-convention entry point: (N, Cin, H, W) -> (N, Cout, H, W)."""
    # TODO(synk): the NCHW<->NHWC transposes are two whole-tensor HBM passes; callers
    #             able to supply NHWC should call residual_forward_nhwc directly.
    x = jnp.transpose(x_nchw, (0, 2, 3, 1))
    out = residual_forward_nhwc(x, prep)
    return jnp.transpose(out, (0, 3, 1, 2))


def make_params(key, Cin, Cout):
    """Deterministic synthetic parameters matching the torch module's shapes."""
    Cmid = Cout // 2
    ks = jax.random.split(key, 16)

    def bn(k, C):
        kg, kb, km, kv = jax.random.split(k, 4)
        return dict(
            g=1.0 + 0.1 * jax.random.normal(kg, (C,), jnp.float32),
            b=0.1 * jax.random.normal(kb, (C,), jnp.float32),
            m=0.1 * jax.random.normal(km, (C,), jnp.float32),
            v=jax.random.uniform(kv, (C,), jnp.float32, 0.5, 1.5))

    return {
        "bn1": bn(ks[0], Cin), "bn2": bn(ks[1], Cmid), "bn3": bn(ks[2], Cmid),
        # 1x1 conv weights stored (Cin, Cout); 3x3 stored HWIO (3, 3, Cin, Cout).
        "w1": 0.1 * jax.random.normal(ks[3], (Cin, Cmid), jnp.float32),
        "b1": 0.1 * jax.random.normal(ks[4], (Cmid,), jnp.float32),
        "w2": 0.1 * jax.random.normal(ks[5], (3, 3, Cmid, Cmid), jnp.float32),
        "b2": 0.1 * jax.random.normal(ks[6], (Cmid,), jnp.float32),
        "w3": 0.1 * jax.random.normal(ks[7], (Cmid, Cout), jnp.float32),
        "b3": 0.1 * jax.random.normal(ks[8], (Cout,), jnp.float32),
        "w4": 0.1 * jax.random.normal(ks[9], (Cin, Cout), jnp.float32),
        "b4": 0.1 * jax.random.normal(ks[10], (Cout,), jnp.float32),
    }


def prepare_params(raw, eps=1e-5):
    """Fold BN (inference mode) into conv weights/biases, fuse conv3+conv4 into one
    matmul, pad channel dims to multiples of 128, and store matmul weights as bf16."""
    Cin, Cmid = raw["w1"].shape
    Cout = raw["w3"].shape[1]
    Cin_p, Cmid_p, Cout_p = (_round_up(c, 128) for c in (Cin, Cmid, Cout))

    def fold(p):
        s = p["g"] / jnp.sqrt(p["v"] + eps)
        return s, p["b"] - p["m"] * s

    s1, t1 = fold(raw["bn1"])
    s2, t2 = fold(raw["bn2"])
    s3, t3 = fold(raw["bn3"])

    # Fold bn2 into conv1 and bn3 into conv2 (scale output channels).
    w1 = raw["w1"] * s2[None, :]
    b1 = raw["b1"] * s2 + t2
    w2 = raw["w2"] * s3[None, None, None, :]
    b2 = raw["b2"] * s3 + t3

    if "w4" in raw:                       # projected shortcut (Cin != Cout in the module)
        w4, b4 = raw["w4"], raw["b4"]
    else:                                 # identity shortcut expressed as an eye matmul
        w4 = jnp.eye(Cin, Cout, dtype=jnp.float32)
        b4 = jnp.zeros((Cout,), jnp.float32)

    def pad_to(a, shape):
        return jnp.pad(a, [(0, t - s) for s, t in zip(a.shape, shape)])

    # Fused conv3 + shortcut: stacked weight (Cmid_p + Cin_p, Cout_p), summed bias.
    w34 = jnp.concatenate([pad_to(raw["w3"], (Cmid_p, Cout_p)),
                           pad_to(w4, (Cin_p, Cout_p))], axis=0)
    b34 = pad_to(raw["b3"] + b4, (Cout_p,))

    bf16 = jnp.bfloat16
    return {
        "s1": pad_to(s1, (Cin_p,)).reshape(1, Cin_p),
        "t1": pad_to(t1, (Cin_p,)).reshape(1, Cin_p),
        "w1": pad_to(w1, (Cin_p, Cmid_p)).astype(bf16),
        "b1": pad_to(b1, (Cmid_p,)).reshape(1, Cmid_p),
        "w2": pad_to(w2, (3, 3, Cmid_p, Cmid_p)).reshape(9, Cmid_p, Cmid_p).astype(bf16),
        "b2": pad_to(b2, (Cmid_p,)).reshape(1, Cmid_p),
        "w34": w34.astype(bf16),
        "b34": b34.reshape(1, Cout_p),
        "cout": Cout,
    }


def reference_forward_nhwc(x, raw, eps=1e-5):
    """Pure-JAX f32 reference (inference-mode BN), NHWC in/out."""
    c = lambda a: a.reshape(1, 1, 1, -1)

    def bn(h, p):
        return (h - c(p["m"])) / jnp.sqrt(c(p["v"]) + eps) * c(p["g"]) + c(p["b"])

    h = jnp.maximum(bn(x, raw["bn1"]), 0.0)
    h = jnp.einsum("nhwc,cd->nhwd", h, raw["w1"]) + c(raw["b1"])
    h = jnp.maximum(bn(h, raw["bn2"]), 0.0)
    h = lax.conv_general_dilated(h, raw["w2"], (1, 1), "SAME",
                                 dimension_numbers=("NHWC", "HWIO", "NHWC"))
    h = h + c(raw["b2"])
    h = jnp.maximum(bn(h, raw["bn3"]), 0.0)
    h = jnp.einsum("nhwc,cd->nhwd", h, raw["w3"]) + c(raw["b3"])
    if "w4" in raw:
        res = jnp.einsum("nhwc,cd->nhwd", x, raw["w4"]) + c(raw["b4"])
    else:
        res = x
    return h + res


if __name__ == "__main__":
    N, Cin, Cout, H, W = 2, 4, 8, 16, 16

    key = jax.random.PRNGKey(0)
    kx, kp = jax.random.split(key)
    # NHWC input: the preferred (transpose-free) entry point per the performance review.
    x = jax.random.normal(kx, (N, H, W, Cin), jnp.float32)
    raw = make_params(kp, Cin, Cout)
    prep = prepare_params(raw)

    out = jax.block_until_ready(residual_forward_nhwc(x, prep))
    ref = jax.block_until_ready(reference_forward_nhwc(x, raw))

    assert out.shape == (N, H, W, Cout)
    # Slightly looser tolerance than the all-f32 version: MXU operands are bf16 now.
    max_diff = float(jnp.max(jnp.abs(out - ref)))
    assert jnp.allclose(out, ref, rtol=2e-2, atol=3e-2), f"max abs diff {max_diff}"

    print("KERNEL_OK")
</pallas_src>

<mosaic_0001>
module attributes {stable_mosaic.version = 11 : i64} {
  func.func @_residual_kernel(%arg0: i32, %arg1: memref<1x256x4xf32, #tpu.memory_space<vmem>>, %arg2: memref<1x128xf32, #tpu.memory_space<vmem>>, %arg3: memref<1x128xf32, #tpu.memory_space<vmem>>, %arg4: memref<128x128xbf16, #tpu.memory_space<vmem>>, %arg5: memref<1x128xf32, #tpu.memory_space<vmem>>, %arg6: memref<9x128x128xbf16, #tpu.memory_space<vmem>>, %arg7: memref<1x128xf32, #tpu.memory_space<vmem>>, %arg8: memref<256x128xbf16, #tpu.memory_space<vmem>>, %arg9: memref<1x128xf32, #tpu.memory_space<vmem>>, %arg10: memref<1x256x8xf32, #tpu.memory_space<vmem>>, %arg11: memref<256x128xf32, #tpu.memory_space<vmem>>, %arg12: memref<18x16x128xf32, #tpu.memory_space<vmem>>, %arg13: memref<256x128xf32, #tpu.memory_space<vmem>>) attributes {dimension_semantics = [#tpu.dimension_semantics<parallel>], iteration_bounds = array<i64: 2>, scalar_prefetch = 0 : i64, scratch_operands = 3 : i64, tpu.core_type = #tpu.core_type<tc>, window_params = [{transform_indices = @transform_0, window_bounds = array<i64: 1, 256, 4>}, {pipeline_mode = #tpu.pipeline_mode<synchronous>, transform_indices = @transform_1, window_bounds = array<i64: 1, 128>}, {pipeline_mode = #tpu.pipeline_mode<synchronous>, transform_indices = @transform_2, window_bounds = array<i64: 1, 128>}, {pipeline_mode = #tpu.pipeline_mode<synchronous>, transform_indices = @transform_3, window_bounds = array<i64: 128, 128>}, {pipeline_mode = #tpu.pipeline_mode<synchronous>, transform_indices = @transform_4, window_bounds = array<i64: 1, 128>}, {pipeline_mode = #tpu.pipeline_mode<synchronous>, transform_indices = @transform_5, window_bounds = array<i64: 9, 128, 128>}, {pipeline_mode = #tpu.pipeline_mode<synchronous>, transform_indices = @transform_6, window_bounds = array<i64: 1, 128>}, {pipeline_mode = #tpu.pipeline_mode<synchronous>, transform_indices = @transform_7, window_bounds = array<i64: 256, 128>}, {pipeline_mode = #tpu.pipeline_mode<synchronous>, transform_indices = @transform_8, window_bounds = array<i64: 1, 128>}, {transform_indices = @transform_9, window_bounds = array<i64: 1, 256, 8>}]} {
    %cst = arith.constant 0.000000e+00 : f32
    %0 = vector.broadcast %cst : f32 to vector<256x128xf32>
    %c0 = arith.constant 0 : index
    %c0_0 = arith.constant 0 : index
    %1 = vector.load %arg11[%c0, %c0_0] : memref<256x128xf32, #tpu.memory_space<vmem>>, vector<256x128xf32>
    tpu.vector_store %arg11[%c0, %c0_0], %0 {strides = array<i32>} : memref<256x128xf32, #tpu.memory_space<vmem>>, vector<256x128xf32>,
    %c0_1 = arith.constant 0 : index
    %c0_2 = arith.constant 0 : index
    %c0_3 = arith.constant 0 : index
    %2 = vector.load %arg1[%c0_1, %c0_2, %c0_3] : memref<1x256x4xf32, #tpu.memory_space<vmem>>, vector<1x256x4xf32>
    %3 = vector.shape_cast %2 : vector<1x256x4xf32> to vector<256x4xf32>
    %c0_4 = arith.constant 0 : index
    %c0_5 = arith.constant 0 : index
    %4 = vector.load %arg11[%c0_4, %c0_5] : memref<256x128xf32, #tpu.memory_space<vmem>>, vector<256x4xf32>
    tpu.vector_store %arg11[%c0_4, %c0_5], %3 {strides = array<i32>} : memref<256x128xf32, #tpu.memory_space<vmem>>, vector<256x4xf32>,
    %c0_6 = arith.constant 0 : index
    %c0_7 = arith.constant 0 : index
    %5 = vector.load %arg11[%c0_6, %c0_7] : memref<256x128xf32, #tpu.memory_space<vmem>>, vector<256x128xf32>
    %c0_8 = arith.constant 0 : index
    %c0_9 = arith.constant 0 : index
    %6 = vector.load %arg2[%c0_8, %c0_9] : memref<1x128xf32, #tpu.memory_space<vmem>>, vector<1x128xf32>
    %7 = vector.broadcast %6 : vector<1x128xf32> to vector<256x128xf32>
    %8 = arith.mulf %5, %7 : vector<256x128xf32>
    %c0_10 = arith.constant 0 : index
    %c0_11 = arith.constant 0 : index
    %9 = vector.load %arg3[%c0_10, %c0_11] : memref<1x128xf32, #tpu.memory_space<vmem>>, vector<1x128xf32>
    %10 = vector.broadcast %9 : vector<1x128xf32> to vector<256x128xf32>
    %11 = arith.addf %8, %10 : vector<256x128xf32>
    %cst_12 = arith.constant 0.000000e+00 : f32
    %12 = vector.broadcast %cst_12 : f32 to vector<256x128xf32>
    %13 = arith.maximumf %11, %12 : vector<256x128xf32>
    %14 = arith.truncf %13 : vector<256x128xf32> to vector<256x128xbf16>
    %c0_13 = arith.constant 0 : index
    %c0_14 = arith.constant 0 : index
    %15 = vector.load %arg4[%c0_13, %c0_14] : memref<128x128xbf16, #tpu.memory_space<vmem>>, vector<128x128xbf16>
    %cst_15 = arith.constant dense<0.000000e+00> : vector<256x128xf32>
    %16 = tpu.matmul %14, %15, %cst_15 {dimension_numbers = #tpu.dot_dimension_numbers<[1], [0], [0], [1], [0, 0, 1, 1], [], []>} : vector<256x128xbf16>, vector<128x128xbf16>, vector<256x128xf32> -> vector<256x128xf32>
    %c0_16 = arith.constant 0 : index
    %c0_17 = arith.constant 0 : index
    %17 = vector.load %arg5[%c0_16, %c0_17] : memref<1x128xf32, #tpu.memory_space<vmem>>, vector<1x128xf32>
    %18 = vector.broadcast %17 : vector<1x128xf32> to vector<256x128xf32>
    %19 = arith.addf %16, %18 : vector<256x128xf32>
    %cst_18 = arith.constant 0.000000e+00 : f32
    %20 = vector.broadcast %cst_18 : f32 to vector<256x128xf32>
    %21 = arith.maximumf %19, %20 : vector<256x128xf32>
    %cst_19 = arith.constant 0.000000e+00 : f32
    %22 = vector.broadcast %cst_19 : f32 to vector<16x128xf32>
    %c0_20 = arith.constant 0 : index
    %c0_21 = arith.constant 0 : index
    %c0_22 = arith.constant 0 : index
    %23 = vector.load %arg12[%c0_20, %c0_21, %c0_22] : memref<18x16x128xf32, #tpu.memory_space<vmem>>, vector<1x16x128xf32>
    %24 = vector.shape_cast %23 : vector<1x16x128xf32> to vector<16x128xf32>
    %25 = vector.shape_cast %22 : vector<16x128xf32> to vector<1x16x128xf32>
    tpu.vector_store %arg12[%c0_20, %c0_21, %c0_22], %25 {strides = array<i32>} : memref<18x16x128xf32, #tpu.memory_space<vmem>>, vector<1x16x128xf32>,
    %cst_23 = arith.constant 0.000000e+00 : f32
    %26 = vector.broadcast %cst_23 : f32 to vector<16x128xf32>
    %c17 = arith.constant 17 : index
    %c0_24 = arith.constant 0 : index
    %c0_25 = arith.constant 0 : index
    %27 = vector.load %arg12[%c17, %c0_24, %c0_25] : memref<18x16x128xf32, #tpu.memory_space<vmem>>, vector<1x16x128xf32>
    %28 = vector.shape_cast %27 : vector<1x16x128xf32> to vector<16x128xf32>
    %29 = vector.shape_cast %26 : vector<16x128xf32> to vector<1x16x128xf32>
    tpu.vector_store %arg12[%c17, %c0_24, %c0_25], %29 {strides = array<i32>} : memref<18x16x128xf32, #tpu.memory_space<vmem>>, vector<1x16x128xf32>,
    %30 = vector.shape_cast %21 : vector<256x128xf32> to vector<16x16x128xf32>
    %c1 = arith.constant 1 : index
    %c0_26 = arith.constant 0 : index
    %c0_27 = arith.constant 0 : index
    %31 = vector.load %arg12[%c1, %c0_26, %c0_27] : memref<18x16x128xf32, #tpu.memory_space<vmem>>, vector<16x16x128xf32>
    tpu.vector_store %arg12[%c1, %c0_26, %c0_27], %30 {strides = array<i32>} : memref<18x16x128xf32, #tpu.memory_space<vmem>>, vector<16x16x128xf32>,
    %32 = tpu.iota {dimensions = array<i32: 0>} : vector<256x1xi32>
    %c16_i32 = arith.constant 16 : i32
    %c0_i32 = arith.constant 0 : i32
    %33 = arith.cmpi eq, %c16_i32, %c0_i32 : i32
    %c1_i32 = arith.constant 1 : i32
    %34 = arith.select %33, %c1_i32, %c16_i32 : i32
    %35 = vector.broadcast %34 : i32 to vector<256x1xi32>
    %36 = arith.remsi %32, %35 : vector<256x1xi32>
    %c0_i32_28 = arith.constant 0 : i32
    %37 = vector.broadcast %c0_i32_28 : i32 to vector<256x1xi32>
    %38 = arith.cmpi ne, %36, %37 : vector<256x1xi32>
    %c0_i32_29 = arith.constant 0 : i32
    %39 = vector.broadcast %c0_i32_29 : i32 to vector<256x1xi32>
    %40 = arith.cmpi slt, %36, %39 : vector<256x1xi32>
    %c0_i32_30 = arith.constant 0 : i32
    %41 = arith.cmpi slt, %34, %c0_i32_30 : i32
    %42 = vector.broadcast %41 : i1 to vector<256x1xi1>
    %43 = vector.broadcast %42 : vector<256x1xi1> to vector<256x1xi1>
    %44 = arith.xori %40, %43 : vector<256x1xi1>
    %45 = arith.andi %44, %38 : vector<256x1xi1>
    %46 = vector.broadcast %34 : i32 to vector<256x1xi32>
    %47 = arith.addi %36, %46 : vector<256x1xi32>
    %48 = arith.select %45, %47, %36 : vector<256x1xi1>, vector<256x1xi32>
    %c0_i32_31 = arith.constant 0 : i32
    %49 = vector.broadcast %c0_i32_31 : i32 to vector<256x1xi32>
    %50 = arith.cmpi ne, %48, %49 : vector<256x1xi32>
    %51 = vector.shape_cast %50 : vector<256x1xi1> to vector<256x1xi1>
    %52 = vector.broadcast %51 : vector<256x1xi1> to vector<256x128xi1>
    %c15_i32 = arith.constant 15 : i32
    %53 = vector.broadcast %c15_i32 : i32 to vector<256x1xi32>
    %54 = arith.cmpi ne, %48, %53 : vector<256x1xi32>
    %55 = vector.shape_cast %54 : vector<256x1xi1> to vector<256x1xi1>
    %56 = vector.broadcast %55 : vector<256x1xi1> to vector<256x128xi1>
    %c0_32 = arith.constant 0 : index
    %c0_33 = arith.constant 0 : index
    %c0_34 = arith.constant 0 : index
    %57 = vector.load %arg12[%c0_32, %c0_33, %c0_34] : memref<18x16x128xf32, #tpu.memory_space<vmem>>, vector<16x16x128xf32>
    %58 = vector.shape_cast %57 : vector<16x16x128xf32> to vector<256x128xf32>
    %c1_i32_35 = arith.constant 1 : i32
    %59 = tpu.dynamic_rotate %58 by %c1_i32_35 dim 0 : vector<256x128xf32>, i32 -> vector<256x128xf32>
    %cst_36 = arith.constant 0.000000e+00 : f32
    %60 = vector.broadcast %cst_36 : f32 to vector<256x128xf32>
    %61 = arith.select %52, %59, %60 : vector<256x128xi1>, vector<256x128xf32>
    %62 = arith.truncf %61 : vector<256x128xf32> to vector<256x128xbf16>
    %c0_37 = arith.constant 0 : index
    %c0_38 = arith.constant 0 : index
    %c0_39 = arith.constant 0 : index
    %63 = vector.load %arg6[%c0_37, %c0_38, %c0_39] : memref<9x128x128xbf16, #tpu.memory_space<vmem>>, vector<1x128x128xbf16>
    %64 = vector.shape_cast %63 : vector<1x128x128xbf16> to vector<128x128xbf16>
    %cst_40 = arith.constant dense<0.000000e+00> : vector<256x128xf32>
    %65 = tpu.matmul %62, %64, %cst_40 {dimension_numbers = #tpu.dot_dimension_numbers<[1], [0], [0], [1], [0, 0, 1, 1], [], []>} : vector<256x128xbf16>, vector<128x128xbf16>, vector<256x128xf32> -> vector<256x128xf32>
    %c0_41 = arith.constant 0 : index
    %c0_42 = arith.constant 0 : index
    %66 = vector.load %arg13[%c0_41, %c0_42] : memref<256x128xf32, #tpu.memory_space<vmem>>, vector<256x128xf32>
    tpu.vector_store %arg13[%c0_41, %c0_42], %65 {strides = array<i32>} : memref<256x128xf32, #tpu.memory_space<vmem>>, vector<256x128xf32>,
    %c0_43 = arith.constant 0 : index
    %c0_44 = arith.constant 0 : index
    %c0_45 = arith.constant 0 : index
    %67 = vector.load %arg12[%c0_43, %c0_44, %c0_45] : memref<18x16x128xf32, #tpu.memory_space<vmem>>, vector<16x16x128xf32>
    %68 = vector.shape_cast %67 : vector<16x16x128xf32> to vector<256x128xf32>
    %69 = arith.truncf %68 : vector<256x128xf32> to vector<256x128xbf16>
    %c1_46 = arith.constant 1 : index
    %c0_47 = arith.constant 0 : index
    %c0_48 = arith.constant 0 : index
    %70 = vector.load %arg6[%c1_46, %c0_47, %c0_48] : memref<9x128x128xbf16, #tpu.memory_space<vmem>>, vector<1x128x128xbf16>
    %71 = vector.shape_cast %70 : vector<1x128x128xbf16> to vector<128x128xbf16>
    %cst_49 = arith.constant dense<0.000000e+00> : vector<256x128xf32>
    %72 = tpu.matmul %69, %71, %cst_49 {dimension_numbers = #tpu.dot_dimension_numbers<[1], [0], [0], [1], [0, 0, 1, 1], [], []>} : vector<256x128xbf16>, vector<128x128xbf16>, vector<256x128xf32> -> vector<256x128xf32>
    %c0_50 = arith.constant 0 : index
    %c0_51 = arith.constant 0 : index
    %73 = vector.load %arg13[%c0_50, %c0_51] : memref<256x128xf32, #tpu.memory_space<vmem>>, vector<256x128xf32>
    %74 = arith.addf %73, %72 : vector<256x128xf32>
    %c0_52 = arith.constant 0 : index
    %c0_53 = arith.constant 0 : index
    %75 = vector.load %arg13[%c0_52, %c0_53] : memref<256x128xf32, #tpu.memory_space<vmem>>, vector<256x128xf32>
    tpu.vector_store %arg13[%c0_52, %c0_53], %74 {strides = array<i32>} : memref<256x128xf32, #tpu.memory_space<vmem>>, vector<256x128xf32>,
    %c0_54 = arith.constant 0 : index
    %c0_55 = arith.constant 0 : index
    %c0_56 = arith.constant 0 : index
    %76 = vector.load %arg12[%c0_54, %c0_55, %c0_56] : memref<18x16x128xf32, #tpu.memory_space<vmem>>, vector<16x16x128xf32>
    %77 = vector.shape_cast %76 : vector<16x16x128xf32> to vector<256x128xf32>
    %c255_i32 = arith.constant 255 : i32
    %78 = tpu.dynamic_rotate %77 by %c255_i32 dim 0 : vector<256x128xf32>, i32 -> vector<256x128xf32>
    %cst_57 = arith.constant 0.000000e+00 : f32
    %79 = vector.broadcast %cst_57 : f32 to vector<256x128xf32>
    %80 = arith.select %56, %78, %79 : vector<256x128xi1>, vector<256x128xf32>
    %81 = arith.truncf %80 : vector<256x128xf32> to vector<256x128xbf16>
    %c2 = arith.constant 2 : index
    %c0_58 = arith.constant 0 : index
    %c0_59 = arith.constant 0 : index
    %82 = vector.load %arg6[%c2, %c0_58, %c0_59] : memref<9x128x128xbf16, #tpu.memory_space<vmem>>, vector<1x128x128xbf16>
    %83 = vector.shape_cast %82 : vector<1x128x128xbf16> to vector<128x128xbf16>
    %cst_60 = arith.constant dense<0.000000e+00> : vector<256x128xf32>
    %84 = tpu.matmul %81, %83, %cst_60 {dimension_numbers = #tpu.dot_dimension_numbers<[1], [0], [0], [1], [0, 0, 1, 1], [], []>} : vector<256x128xbf16>, vector<128x128xbf16>, vector<256x128xf32> -> vector<256x128xf32>
    %c0_61 = arith.constant 0 : index
    %c0_62 = arith.constant 0 : index
    %85 = vector.load %arg13[%c0_61, %c0_62] : memref<256x128xf32, #tpu.memory_space<vmem>>, vector<256x128xf32>
    %86 = arith.addf %85, %84 : vector<256x128xf32>
    %c0_63 = arith.constant 0 : index
    %c0_64 = arith.constant 0 : index
    %87 = vector.load %arg13[%c0_63, %c0_64] : memref<256x128xf32, #tpu.memory_space<vmem>>, vector<256x128xf32>
    tpu.vector_store %arg13[%c0_63, %c0_64], %86 {strides = array<i32>} : memref<256x128xf32, #tpu.memory_space<vmem>>, vector<256x128xf32>,
    %c1_65 = arith.constant 1 : index
    %c0_66 = arith.constant 0 : index
    %c0_67 = arith.constant 0 : index
    %88 = vector.load %arg12[%c1_65, %c0_66, %c0_67] : memref<18x16x128xf32, #tpu.memory_space<vmem>>, vector<16x16x128xf32>
    %89 = vector.shape_cast %88 : vector<16x16x128xf32> to vector<256x128xf32>
    %c1_i32_68 = arith.constant 1 : i32
    %90 = tpu.dynamic_rotate %89 by %c1_i32_68 dim 0 : vector<256x128xf32>, i32 -> vector<256x128xf32>
    %cst_69 = arith.constant 0.000000e+00 : f32
    %91 = vector.broadcast %cst_69 : f32 to vector<256x128xf32>
    %92 = arith.select %52, %90, %91 : vector<256x128xi1>, vector<256x128xf32>
    %93 = arith.truncf %92 : vector<256x128xf32> to vector<256x128xbf16>
    %c3 = arith.constant 3 : index
    %c0_70 = arith.constant 0 : index
    %c0_71 = arith.constant 0 : index
    %94 = vector.load %arg6[%c3, %c0_70, %c0_71] : memref<9x128x128xbf16, #tpu.memory_space<vmem>>, vector<1x128x128xbf16>
    %95 = vector.shape_cast %94 : vector<1x128x128xbf16> to vector<128x128xbf16>
    %cst_72 = arith.constant dense<0.000000e+00> : vector<256x128xf32>
    %96 = tpu.matmul %93, %95, %cst_72 {dimension_numbers = #tpu.dot_dimension_numbers<[1], [0], [0], [1], [0, 0, 1, 1], [], []>} : vector<256x128xbf16>, vector<128x128xbf16>, vector<256x128xf32> -> vector<256x128xf32>
    %c0_73 = arith.constant 0 : index
    %c0_74 = arith.constant 0 : index
    %97 = vector.load %arg13[%c0_73, %c0_74] : memref<256x128xf32, #tpu.memory_space<vmem>>, vector<256x128xf32>
    %98 = arith.addf %97, %96 : vector<256x128xf32>
    %c0_75 = arith.constant 0 : index
    %c0_76 = arith.constant 0 : index
    %99 = vector.load %arg13[%c0_75, %c0_76] : memref<256x128xf32, #tpu.memory_space<vmem>>, vector<256x128xf32>
    tpu.vector_store %arg13[%c0_75, %c0_76], %98 {strides = array<i32>} : memref<256x128xf32, #tpu.memory_space<vmem>>, vector<256x128xf32>,
    %c1_77 = arith.constant 1 : index
    %c0_78 = arith.constant 0 : index
    %c0_79 = arith.constant 0 : index
    %100 = vector.load %arg12[%c1_77, %c0_78, %c0_79] : memref<18x16x128xf32, #tpu.memory_space<vmem>>, vector<16x16x128xf32>
    %101 = vector.shape_cast %100 : vector<16x16x128xf32> to vector<256x128xf32>
    %102 = arith.truncf %101 : vector<256x128xf32> to vector<256x128xbf16>
    %c4 = arith.constant 4 : index
    %c0_80 = arith.constant 0 : index
    %c0_81 = arith.constant 0 : index
    %103 = vector.load %arg6[%c4, %c0_80, %c0_81] : memref<9x128x128xbf16, #tpu.memory_space<vmem>>, vector<1x128x128xbf16>
    %104 = vector.shape_cast %103 : vector<1x128x128xbf16> to vector<128x128xbf16>
    %cst_82 = arith.constant dense<0.000000e+00> : vector<256x128xf32>
    %105 = tpu.matmul %102, %104, %cst_82 {dimension_numbers = #tpu.dot_dimension_numbers<[1], [0], [0], [1], [0, 0, 1, 1], [], []>} : vector<256x128xbf16>, vector<128x128xbf16>, vector<256x128xf32> -> vector<256x128xf32>
    %c0_83 = arith.constant 0 : index
    %c0_84 = arith.constant 0 : index
    %106 = vector.load %arg13[%c0_83, %c0_84] : memref<256x128xf32, #tpu.memory_space<vmem>>, vector<256x128xf32>
    %107 = arith.addf %106, %105 : vector<256x128xf32>
    %c0_85 = arith.constant 0 : index
    %c0_86 = arith.constant 0 : index
    %108 = vector.load %arg13[%c0_85, %c0_86] : memref<256x128xf32, #tpu.memory_space<vmem>>, vector<256x128xf32>
    tpu.vector_store %arg13[%c0_85, %c0_86], %107 {strides = array<i32>} : memref<256x128xf32, #tpu.memory_space<vmem>>, vector<256x128xf32>,
    %c1_87 = arith.constant 1 : index
    %c0_88 = arith.constant 0 : index
    %c0_89 = arith.constant 0 : index
    %109 = vector.load %arg12[%c1_87, %c0_88, %c0_89] : memref<18x16x128xf32, #tpu.memory_space<vmem>>, vector<16x16x128xf32>
    %110 = vector.shape_cast %109 : vector<16x16x128xf32> to vector<256x128xf32>
    %c255_i32_90 = arith.constant 255 : i32
    %111 = tpu.dynamic_rotate %110 by %c255_i32_90 dim 0 : vector<256x128xf32>, i32 -> vector<256x128xf32>
    %cst_91 = arith.constant 0.000000e+00 : f32
    %112 = vector.broadcast %cst_91 : f32 to vector<256x128xf32>
    %113 = arith.select %56, %111, %112 : vector<256x128xi1>, vector<256x128xf32>
    %114 = arith.truncf %113 : vector<256x128xf32> to vector<256x128xbf16>
    %c5 = arith.constant 5 : index
    %c0_92 = arith.constant 0 : index
    %c0_93 = arith.constant 0 : index
    %115 = vector.load %arg6[%c5, %c0_92, %c0_93] : memref<9x128x128xbf16, #tpu.memory_space<vmem>>, vector<1x128x128xbf16>
    %116 = vector.shape_cast %115 : vector<1x128x128xbf16> to vector<128x128xbf16>
    %cst_94 = arith.constant dense<0.000000e+00> : vector<256x128xf32>
    %117 = tpu.matmul %114, %116, %cst_94 {dimension_numbers = #tpu.dot_dimension_numbers<[1], [0], [0], [1], [0, 0, 1, 1], [], []>} : vector<256x128xbf16>, vector<128x128xbf16>, vector<256x128xf32> -> vector<256x128xf32>
    %c0_95 = arith.constant 0 : index
    %c0_96 = arith.constant 0 : index
    %118 = vector.load %arg13[%c0_95, %c0_96] : memref<256x128xf32, #tpu.memory_space<vmem>>, vector<256x128xf32>
    %119 = arith.addf %118, %117 : vector<256x128xf32>
    %c0_97 = arith.constant 0 : index
    %c0_98 = arith.constant 0 : index
    %120 = vector.load %arg13[%c0_97, %c0_98] : memref<256x128xf32, #tpu.memory_space<vmem>>, vector<256x128xf32>
    tpu.vector_store %arg13[%c0_97, %c0_98], %119 {strides = array<i32>} : memref<256x128xf32, #tpu.memory_space<vmem>>, vector<256x128xf32>,
    %c2_99 = arith.constant 2 : index
    %c0_100 = arith.constant 0 : index
    %c0_101 = arith.constant 0 : index
    %121 = vector.load %arg12[%c2_99, %c0_100, %c0_101] : memref<18x16x128xf32, #tpu.memory_space<vmem>>, vector<16x16x128xf32>
    %122 = vector.shape_cast %121 : vector<16x16x128xf32> to vector<256x128xf32>
    %c1_i32_102 = arith.constant 1 : i32
    %123 = tpu.dynamic_rotate %122 by %c1_i32_102 dim 0 : vector<256x128xf32>, i32 -> vector<256x128xf32>
    %cst_103 = arith.constant 0.000000e+00 : f32
    %124 = vector.broadcast %cst_103 : f32 to vector<256x128xf32>
    %125 = arith.select %52, %123, %124 : vector<256x128xi1>, vector<256x128xf32>
    %126 = arith.truncf %125 : vector<256x128xf32> to vector<256x128xbf16>
    %c6 = arith.constant 6 : index
    %c0_104 = arith.constant 0 : index
    %c0_105 = arith.constant 0 : index
    %127 = vector.load %arg6[%c6, %c0_104, %c0_105] : memref<9x128x128xbf16, #tpu.memory_space<vmem>>, vector<1x128x128xbf16>
    %128 = vector.shape_cast %127 : vector<1x128x128xbf16> to vector<128x128xbf16>
    %cst_106 = arith.constant dense<0.000000e+00> : vector<256x128xf32>
    %129 = tpu.matmul %126, %128, %cst_106 {dimension_numbers = #tpu.dot_dimension_numbers<[1], [0], [0], [1], [0, 0, 1, 1], [], []>} : vector<256x128xbf16>, vector<128x128xbf16>, vector<256x128xf32> -> vector<256x128xf32>
    %c0_107 = arith.constant 0 : index
    %c0_108 = arith.constant 0 : index
    %130 = vector.load %arg13[%c0_107, %c0_108] : memref<256x128xf32, #tpu.memory_space<vmem>>, vector<256x128xf32>
    %131 = arith.addf %130, %129 : vector<256x128xf32>
    %c0_109 = arith.constant 0 : index
    %c0_110 = arith.constant 0 : index
    %132 = vector.load %arg13[%c0_109, %c0_110] : memref<256x128xf32, #tpu.memory_space<vmem>>, vector<256x128xf32>
    tpu.vector_store %arg13[%c0_109, %c0_110], %131 {strides = array<i32>} : memref<256x128xf32, #tpu.memory_space<vmem>>, vector<256x128xf32>,
    %c2_111 = arith.constant 2 : index
    %c0_112 = arith.constant 0 : index
    %c0_113 = arith.constant 0 : index
    %133 = vector.load %arg12[%c2_111, %c0_112, %c0_113] : memref<18x16x128xf32, #tpu.memory_space<vmem>>, vector<16x16x128xf32>
    %134 = vector.shape_cast %133 : vector<16x16x128xf32> to vector<256x128xf32>
    %135 = arith.truncf %134 : vector<256x128xf32> to vector<256x128xbf16>
    %c7 = arith.constant 7 : index
    %c0_114 = arith.constant 0 : index
    %c0_115 = arith.constant 0 : index
    %136 = vector.load %arg6[%c7, %c0_114, %c0_115] : memref<9x128x128xbf16, #tpu.memory_space<vmem>>, vector<1x128x128xbf16>
    %137 = vector.shape_cast %136 : vector<1x128x128xbf16> to vector<128x128xbf16>
    %cst_116 = arith.constant dense<0.000000e+00> : vector<256x128xf32>
    %138 = tpu.matmul %135, %137, %cst_116 {dimension_numbers = #tpu.dot_dimension_numbers<[1], [0], [0], [1], [0, 0, 1, 1], [], []>} : vector<256x128xbf16>, vector<128x128xbf16>, vector<256x128xf32> -> vector<256x128xf32>
    %c0_117 = arith.constant 0 : index
    %c0_118 = arith.constant 0 : index
    %139 = vector.load %arg13[%c0_117, %c0_118] : memref<256x128xf32, #tpu.memory_space<vmem>>, vector<256x128xf32>
    %140 = arith.addf %139, %138 : vector<256x128xf32>
    %c0_119 = arith.constant 0 : index
    %c0_120 = arith.constant 0 : index
    %141 = vector.load %arg13[%c0_119, %c0_120] : memref<256x128xf32, #tpu.memory_space<vmem>>, vector<256x128xf32>
    tpu.vector_store %arg13[%c0_119, %c0_120], %140 {strides = array<i32>} : memref<256x128xf32, #tpu.memory_space<vmem>>, vector<256x128xf32>,
    %c2_121 = arith.constant 2 : index
    %c0_122 = arith.constant 0 : index
    %c0_123 = arith.constant 0 : index
    %142 = vector.load %arg12[%c2_121, %c0_122, %c0_123] : memref<18x16x128xf32, #tpu.memory_space<vmem>>, vector<16x16x128xf32>
    %143 = vector.shape_cast %142 : vector<16x16x128xf32> to vector<256x128xf32>
    %c255_i32_124 = arith.constant 255 : i32
    %144 = tpu.dynamic_rotate %143 by %c255_i32_124 dim 0 : vector<256x128xf32>, i32 -> vector<256x128xf32>
    %cst_125 = arith.constant 0.000000e+00 : f32
    %145 = vector.broadcast %cst_125 : f32 to vector<256x128xf32>
    %146 = arith.select %56, %144, %145 : vector<256x128xi1>, vector<256x128xf32>
    %147 = arith.truncf %146 : vector<256x128xf32> to vector<256x128xbf16>
    %c8 = arith.constant 8 : index
    %c0_126 = arith.constant 0 : index
    %c0_127 = arith.constant 0 : index
    %148 = vector.load %arg6[%c8, %c0_126, %c0_127] : memref<9x128x128xbf16, #tpu.memory_space<vmem>>, vector<1x128x128xbf16>
    %149 = vector.shape_cast %148 : vector<1x128x128xbf16> to vector<128x128xbf16>
    %cst_128 = arith.constant dense<0.000000e+00> : vector<256x128xf32>
    %150 = tpu.matmul %147, %149, %cst_128 {dimension_numbers = #tpu.dot_dimension_numbers<[1], [0], [0], [1], [0, 0, 1, 1], [], []>} : vector<256x128xbf16>, vector<128x128xbf16>, vector<256x128xf32> -> vector<256x128xf32>
    %c0_129 = arith.constant 0 : index
    %c0_130 = arith.constant 0 : index
    %151 = vector.load %arg13[%c0_129, %c0_130] : memref<256x128xf32, #tpu.memory_space<vmem>>, vector<256x128xf32>
    %152 = arith.addf %151, %150 : vector<256x128xf32>
    %c0_131 = arith.constant 0 : index
    %c0_132 = arith.constant 0 : index
    %153 = vector.load %arg13[%c0_131, %c0_132] : memref<256x128xf32, #tpu.memory_space<vmem>>, vector<256x128xf32>
    tpu.vector_store %arg13[%c0_131, %c0_132], %152 {strides = array<i32>} : memref<256x128xf32, #tpu.memory_space<vmem>>, vector<256x128xf32>,
    %c0_133 = arith.constant 0 : index
    %c0_134 = arith.constant 0 : index
    %154 = vector.load %arg13[%c0_133, %c0_134] : memref<256x128xf32, #tpu.memory_space<vmem>>, vector<256x128xf32>
    %c0_135 = arith.constant 0 : index
    %c0_136 = arith.constant 0 : index
    %155 = vector.load %arg7[%c0_135, %c0_136] : memref<1x128xf32, #tpu.memory_space<vmem>>, vector<1x128xf32>
    %156 = vector.broadcast %155 : vector<1x128xf32> to vector<256x128xf32>
    %157 = arith.addf %154, %156 : vector<256x128xf32>
    %cst_137 = arith.constant 0.000000e+00 : f32
    %158 = vector.broadcast %cst_137 : f32 to vector<256x128xf32>
    %159 = arith.maximumf %157, %158 : vector<256x128xf32>
    %160 = arith.truncf %159 : vector<256x128xf32> to vector<256x128xbf16>
    %161 = arith.truncf %5 : vector<256x128xf32> to vector<256x128xbf16>
    %162 = tpu.concatenate %160, %161 in 1 : vector<256x128xbf16>, vector<256x128xbf16> -> vector<256x256xbf16>
    %c0_138 = arith.constant 0 : index
    %c0_139 = arith.constant 0 : index
    %163 = vector.load %arg8[%c0_138, %c0_139] : memref<256x128xbf16, #tpu.memory_space<vmem>>, vector<256x128xbf16>
    %cst_140 = arith.constant dense<0.000000e+00> : vector<256x128xf32>
    %164 = tpu.matmul %162, %163, %cst_140 {dimension_numbers = #tpu.dot_dimension_numbers<[1], [0], [0], [1], [0, 0, 1, 1], [], []>} : vector<256x256xbf16>, vector<256x128xbf16>, vector<256x128xf32> -> vector<256x128xf32>
    %c0_141 = arith.constant 0 : index
    %c0_142 = arith.constant 0 : index
    %165 = vector.load %arg9[%c0_141, %c0_142] : memref<1x128xf32, #tpu.memory_space<vmem>>, vector<1x128xf32>
    %166 = vector.broadcast %165 : vector<1x128xf32> to vector<256x128xf32>
    %167 = arith.addf %164, %166 : vector<256x128xf32>
    %168 = vector.extract_strided_slice %167 {offsets = [0, 0], sizes = [256, 8], strides = [1, 1]} : vector<256x128xf32> to vector<256x8xf32>
    %c0_143 = arith.constant 0 : index
    %c0_144 = arith.constant 0 : index
    %c0_145 = arith.constant 0 : index
    %169 = vector.load %arg10[%c0_143, %c0_144, %c0_145] : memref<1x256x8xf32, #tpu.memory_space<vmem>>, vector<1x256x8xf32>
    %170 = vector.shape_cast %169 : vector<1x256x8xf32> to vector<256x8xf32>
    %171 = vector.shape_cast %168 : vector<256x8xf32> to vector<1x256x8xf32>
    tpu.vector_store %arg10[%c0_143, %c0_144, %c0_145], %171 {strides = array<i32>} : memref<1x256x8xf32, #tpu.memory_space<vmem>>, vector<1x256x8xf32>,
    return
  }
  func.func @transform_0(%arg0: i32) -> (i32, i32, i32) {
    %c0_i32 = arith.constant 0 : i32
    %c0_i32_0 = arith.constant 0 : i32
    %c0_i32_1 = arith.constant 0 : i32
    return %arg0, %c0_i32, %c0_i32_0 : i32, i32, i32
  }
  func.func @transform_1(%arg0: i32) -> (i32, i32) {
    %c0_i32 = arith.constant 0 : i32
    %c0_i32_0 = arith.constant 0 : i32
    %c0_i32_1 = arith.constant 0 : i32
    return %c0_i32, %c0_i32_0 : i32, i32
  }
  func.func @transform_2(%arg0: i32) -> (i32, i32) {
    %c0_i32 = arith.constant 0 : i32
    %c0_i32_0 = arith.constant 0 : i32
    %c0_i32_1 = arith.constant 0 : i32
    return %c0_i32, %c0_i32_0 : i32, i32
  }
  func.func @transform_3(%arg0: i32) -> (i32, i32) {
    %c0_i32 = arith.constant 0 : i32
    %c0_i32_0 = arith.constant 0 : i32
    %c0_i32_1 = arith.constant 0 : i32
    return %c0_i32, %c0_i32_0 : i32, i32
  }
  func.func @transform_4(%arg0: i32) -> (i32, i32) {
    %c0_i32 = arith.constant 0 : i32
    %c0_i32_0 = arith.constant 0 : i32
    %c0_i32_1 = arith.constant 0 : i32
    return %c0_i32, %c0_i32_0 : i32, i32
  }
  func.func @transform_5(%arg0: i32) -> (i32, i32, i32) {
    %c0_i32 = arith.constant 0 : i32
    %c0_i32_0 = arith.constant 0 : i32
    %c0_i32_1 = arith.constant 0 : i32
    %c0_i32_2 = arith.constant 0 : i32
    return %c0_i32, %c0_i32_0, %c0_i32_1 : i32, i32, i32
  }
  func.func @transform_6(%arg0: i32) -> (i32, i32) {
    %c0_i32 = arith.constant 0 : i32
    %c0_i32_0 = arith.constant 0 : i32
    %c0_i32_1 = arith.constant 0 : i32
    return %c0_i32, %c0_i32_0 : i32, i32
  }
  func.func @transform_7(%arg0: i32) -> (i32, i32) {
    %c0_i32 = arith.constant 0 : i32
    %c0_i32_0 = arith.constant 0 : i32
    %c0_i32_1 = arith.constant 0 : i32
    return %c0_i32, %c0_i32_0 : i32, i32
  }
  func.func @transform_8(%arg0: i32) -> (i32, i32) {
    %c0_i32 = arith.constant 0 : i32
    %c0_i32_0 = arith.constant 0 : i32
    %c0_i32_1 = arith.constant 0 : i32
    return %c0_i32, %c0_i32_0 : i32, i32
  }
  func.func @transform_9(%arg0: i32) -> (i32, i32, i32) {
    %c0_i32 = arith.constant 0 : i32
    %c0_i32_0 = arith.constant 0 : i32
    %c0_i32_1 = arith.constant 0 : i32
    return %arg0, %c0_i32, %c0_i32_0 : i32, i32, i32
  }
}

</mosaic_0001>

<llo_original>
// kernel: tpu_custom_call.1
$region0: #{tpu_custom_call.1}
  #allocation0 [shape = 'u32[]', space=smem, size = 0x4, offset = 0x4, fixed_abs, tag = 'smem constant byte address 0x4 - core index']
  #allocation1 [shape = 'u32[144,128]{1,0:T(1,128)}', space=vmem, size = 0x12000, scoped, tag = 'internal scratch']
  #allocation2 [shape = 'f32[256,128]{1,0:T(8,128)}', space=vmem, size = 0x20000, scoped, tag = 'scratch operand']
  #allocation3 [shape = 'f32[18,16,128]{2,1,0:T(8,128)}', space=vmem, size = 0x24000, scoped, tag = 'scratch operand']
  #allocation4 [shape = 'f32[256,128]{1,0:T(8,128)}', space=vmem, size = 0x20000, scoped, tag = 'scratch operand']
  %s0 = inlined_call_operand.vmem [shape: f32[2,256,4], index: 0, kind: input, shape index: {}]
  %s1 = inlined_call_operand.vmem [shape: f32[1,128], index: 1, kind: input, shape index: {}]
  %s2 = inlined_call_operand.vmem [shape: f32[1,128], index: 2, kind: input, shape index: {}]
  %s3 = inlined_call_operand.vmem [shape: bf16[128,128], index: 3, kind: input, shape index: {}]
  %s4 = inlined_call_operand.vmem [shape: f32[1,128], index: 4, kind: input, shape index: {}]
  %s5 = inlined_call_operand.hbm [shape: bf16[9,128,128], index: 5, kind: input, shape index: {}]
  %s6 = inlined_call_operand.vmem [shape: f32[1,128], index: 6, kind: input, shape index: {}]
  %s7 = inlined_call_operand.vmem [shape: bf16[256,128], index: 7, kind: input, shape index: {}]
  %s8 = inlined_call_operand.vmem [shape: f32[1,128], index: 8, kind: input, shape index: {}]
  %s9 = inlined_call_operand.vmem [shape: f32[2,256,8], index: 9, kind: output, shape index: {}]
  %s10 = sld [smem:[#allocation0]]
  $region73: #{tpu_custom_call.1} parent=0
    _
  %s12 = ssub.s32 1, %s10
  %s13 = scalar_select 0, %s12, %s10
  $region1: #{tpu_custom_call.1} parent=0
    #allocation5 [shape = 'u8[294912]{0}', space=vmem, size = 0x48000, scoped, tag = 'input window, operand 5, single buffered']
    #allocation6 [shape = 's32[2]{0}', space=sflag, size = 0x8, scoped, tag = 'scoped memory for tpu_custom_call.1']
    %14 = vsyncpa [#allocation6], 0
    loop: start=0, step=1, limit=4
    $region2: #{tpu_custom_call.1} parent=1 // loop_pre_header
      _
    $region3: #{tpu_custom_call.1} parent=1 // loop_header
      %s16 = sphi 0, %s20
      %p17 = scmp.ge.s32.totalorder %s16, 4
      %s26 = sphi 0, %s28
      %s29 = sphi 0, %s26
      %s30 = sphi 0, %s29
      %s46 = sphi 0, %s30
      %s50 = sphi 0, %s50
      %s52 = sphi 0, %s50
      %s53 = sphi 0, %s52
      %s67 = sphi 0, %s53
      %s71 = sphi 0, %s71
      %s73 = sphi 0, %s71
      %s74 = sphi 0, %s73
      %s88 = sphi 0, %s74
      %s92 = sphi 0, %s92
      %s94 = sphi 0, %s92
      %s95 = sphi 0, %s94
      %s109 = sphi 0, %s95
      %s113 = sphi 0, %s113
      %s115 = sphi 0, %s113
      %s116 = sphi 0, %s115
      %s130 = sphi 0, %s116
      %s134 = sphi 0, %s134
      %s136 = sphi 0, %s134
      %s137 = sphi 0, %s136
      %s151 = sphi 0, %s137
      %s155 = sphi 0, %s155
      %s157 = sphi 0, %s155
      %s158 = sphi 0, %s157
      %s172 = sphi 0, %s158
      %s176 = sphi 0, %s176
      %s178 = sphi 0, %s176
      %s179 = sphi 0, %s178
      %s193 = sphi 0, %s179
      %s197 = sphi 0, %s197
      %s199 = sphi 0, %s197
      %s200 = sphi 0, %s199
      %s214 = sphi 0, %s200
      %s220 = sphi 0, %s222
      %s223 = sphi 0, %s220
      %s224 = sphi 0, %s223
      %s240 = sphi 0, %s224
    $region4: #{tpu_custom_call.1} parent=1 // loop_header_branch
      %19 = sbr.rel (%p17) target = $region8
    $region5: #{tpu_custom_call.1} parent=1 // loop_body
      %s21 = ssub.s32 %s16, 1
      %s22 = ssub.s32 %s16, 2
      %s23 = sadd.s32 %s16, 1
      %s24 = ssub.s32 %s16, %s23
      %p25 = scmp.eq.s32.totalorder %s24, 0
      %s27 = sadd.s32 %s26, 1
      %s28 = scalar_select %p25, %s26, %s27
      %p31 = pneg %p25
      %p32 = scmp.eq.s32.totalorder %s16, 1
      %p33 = por %p31, %p32
      %p34 = scmp.ne.s32.totalorder %s26, %s29
      %p35 = scmp.eq.s32.totalorder %s16, 0
      %p36 = por %p34, %p35
      %p37 = scmp.ne.s32.totalorder %s26, %s29
      %p38 = scmp.eq.s32.totalorder %s21, 1
      %p39 = por %p37, %p38
      %p40 = scmp.ne.s32.totalorder %s29, %s30
      %p41 = scmp.eq.s32.totalorder %s21, 0
      %p42 = por %p40, %p41
      %p43 = scmp.ne.s32.totalorder %s29, %s30
      %p44 = scmp.eq.s32.totalorder %s22, 1
      %p45 = por %p43, %p44
      %p47 = scmp.ne.s32.totalorder %s30, %s46
      %p48 = scmp.eq.s32.totalorder %s22, 0
      %p49 = por %p47, %p48
      %s51 = sadd.s32 %s50, 1
      %p54 = scmp.eq.s32.totalorder %s16, 1
      %p55 = scmp.ne.s32.totalorder %s50, %s52
      %p56 = scmp.eq.s32.totalorder %s16, 0
      %p57 = por %p55, %p56
      %p58 = scmp.ne.s32.totalorder %s50, %s52
      %p59 = scmp.eq.s32.totalorder %s21, 1
      %p60 = por %p58, %p59
      %p61 = scmp.ne.s32.totalorder %s52, %s53
      %p62 = scmp.eq.s32.totalorder %s21, 0
      %p63 = por %p61, %p62
      %p64 = scmp.ne.s32.totalorder %s52, %s53
      %p65 = scmp.eq.s32.totalorder %s22, 1
      %p66 = por %p64, %p65
      %p68 = scmp.ne.s32.totalorder %s53, %s67
      %p69 = scmp.eq.s32.totalorder %s22, 0
      %p70 = por %p68, %p69
      %s72 = sadd.s32 %s71, 1
      %p75 = scmp.eq.s32.totalorder %s16, 1
      %p76 = scmp.ne.s32.totalorder %s71, %s73
      %p77 = scmp.eq.s32.totalorder %s16, 0
      %p78 = por %p76, %p77
      %p79 = scmp.ne.s32.totalorder %s71, %s73
      %p80 = scmp.eq.s32.totalorder %s21, 1
      %p81 = por %p79, %p80
      %p82 = scmp.ne.s32.totalorder %s73, %s74
      %p83 = scmp.eq.s32.totalorder %s21, 0
      %p84 = por %p82, %p83
      %p85 = scmp.ne.s32.totalorder %s73, %s74
      %p86 = scmp.eq.s32.totalorder %s22, 1
      %p87 = por %p85, %p86
      %p89 = scmp.ne.s32.totalorder %s74, %s88
      %p90 = scmp.eq.s32.totalorder %s22, 0
      %p91 = por %p89, %p90
      %s93 = sadd.s32 %s92, 1
      %p96 = scmp.eq.s32.totalorder %s16, 1
      %p97 = scmp.ne.s32.totalorder %s92, %s94
      %p98 = scmp.eq.s32.totalorder %s16, 0
      %p99 = por %p97, %p98
      %p100 = scmp.ne.s32.totalorder %s92, %s94
      %p101 = scmp.eq.s32.totalorder %s21, 1
      %p102 = por %p100, %p101
      %p103 = scmp.ne.s32.totalorder %s94, %s95
      %p104 = scmp.eq.s32.totalorder %s21, 0
      %p105 = por %p103, %p104
      %p106 = scmp.ne.s32.totalorder %s94, %s95
      %p107 = scmp.eq.s32.totalorder %s22, 1
      %p108 = por %p106, %p107
      %p110 = scmp.ne.s32.totalorder %s95, %s109
      %p111 = scmp.eq.s32.totalorder %s22, 0
      %p112 = por %p110, %p111
      %s114 = sadd.s32 %s113, 1
      %p117 = scmp.eq.s32.totalorder %s16, 1
      %p118 = scmp.ne.s32.totalorder %s113, %s115
      %p119 = scmp.eq.s32.totalorder %s16, 0
      %p120 = por %p118, %p119
      %p121 = scmp.ne.s32.totalorder %s113, %s115
      %p122 = scmp.eq.s32.totalorder %s21, 1
      %p123 = por %p121, %p122
      %p124 = scmp.ne.s32.totalorder %s115, %s116
      %p125 = scmp.eq.s32.totalorder %s21, 0
      %p126 = por %p124, %p125
      %p127 = scmp.ne.s32.totalorder %s115, %s116
      %p128 = scmp.eq.s32.totalorder %s22, 1
      %p129 = por %p127, %p128
      %p131 = scmp.ne.s32.totalorder %s116, %s130
      %p132 = scmp.eq.s32.totalorder %s22, 0
      %p133 = por %p131, %p132
      %s135 = sadd.s32 %s134, 1
      %p138 = scmp.eq.s32.totalorder %s16, 1
      %p139 = scmp.ne.s32.totalorder %s134, %s136
      %p140 = scmp.eq.s32.totalorder %s16, 0
      %p141 = por %p139, %p140
      %p142 = scmp.ne.s32.totalorder %s134, %s136
      %p143 = scmp.eq.s32.totalorder %s21, 1
      %p144 = por %p142, %p143
      %p145 = scmp.ne.s32.totalorder %s136, %s137
      %p146 = scmp.eq.s32.totalorder %s21, 0
      %p147 = por %p145, %p146
      %p148 = scmp.ne.s32.totalorder %s136, %s137
      %p149 = scmp.eq.s32.totalorder %s22, 1
      %p150 = por %p148, %p149
      %p152 = scmp.ne.s32.totalorder %s137, %s151
      %p153 = scmp.eq.s32.totalorder %s22, 0
      %p154 = por %p152, %p153
      %s156 = sadd.s32 %s155, 1
      %p159 = scmp.eq.s32.totalorder %s16, 1
      %p160 = scmp.ne.s32.totalorder %s155, %s157
      %p161 = scmp.eq.s32.totalorder %s16, 0
      %p162 = por %p160, %p161
      %p163 = scmp.ne.s32.totalorder %s155, %s157
      %p164 = scmp.eq.s32.totalorder %s21, 1
      %p165 = por %p163, %p164
      %p166 = scmp.ne.s32.totalorder %s157, %s158
      %p167 = scmp.eq.s32.totalorder %s21, 0
      %p168 = por %p166, %p167
      %p169 = scmp.ne.s32.totalorder %s157, %s158
      %p170 = scmp.eq.s32.totalorder %s22, 1
      %p171 = por %p169, %p170
      %p173 = scmp.ne.s32.totalorder %s158, %s172
      %p174 = scmp.eq.s32.totalorder %s22, 0
      %p175 = por %p173, %p174
      %s177 = sadd.s32 %s176, 1
      %p180 = scmp.eq.s32.totalorder %s16, 1
      %p181 = scmp.ne.s32.totalorder %s176, %s178
      %p182 = scmp.eq.s32.totalorder %s16, 0
      %p183 = por %p181, %p182
      %p184 = scmp.ne.s32.totalorder %s176, %s178
      %p185 = scmp.eq.s32.totalorder %s21, 1
      %p186 = por %p184, %p185
      %p187 = scmp.ne.s32.totalorder %s178, %s179
      %p188 = scmp.eq.s32.totalorder %s21, 0
      %p189 = por %p187, %p188
      %p190 = scmp.ne.s32.totalorder %s178, %s179
      %p191 = scmp.eq.s32.totalorder %s22, 1
      %p192 = por %p190, %p191
      %p194 = scmp.ne.s32.totalorder %s179, %s193
      %p195 = scmp.eq.s32.totalorder %s22, 0
      %p196 = por %p194, %p195
      %s198 = sadd.s32 %s197, 1
      %p201 = scmp.eq.s32.totalorder %s16, 1
      %p202 = scmp.ne.s32.totalorder %s197, %s199
      %p203 = scmp.eq.s32.totalorder %s16, 0
      %p204 = por %p202, %p203
      %p205 = scmp.ne.s32.totalorder %s197, %s199
      %p206 = scmp.eq.s32.totalorder %s21, 1
      %p207 = por %p205, %p206
      %p208 = scmp.ne.s32.totalorder %s199, %s200
      %p209 = scmp.eq.s32.totalorder %s21, 0
      %p210 = por %p208, %p209
      %p211 = scmp.ne.s32.totalorder %s199, %s200
      %p212 = scmp.eq.s32.totalorder %s22, 1
      %p213 = por %p211, %p212
      %p215 = scmp.ne.s32.totalorder %s200, %s214
      %p216 = scmp.eq.s32.totalorder %s22, 0
      %p217 = por %p215, %p216
      %s218 = ssub.s32 %s16, %s23
      %p219 = scmp.eq.s32.totalorder %s218, 0
      %s221 = sadd.s32 %s220, 1
      %s222 = scalar_select %p219, %s220, %s221
      %p225 = pneg %p219
      %p226 = scmp.eq.s32.totalorder %s16, 1
      %p227 = por %p225, %p226
      %p228 = scmp.ne.s32.totalorder %s220, %s223
      %p229 = scmp.eq.s32.totalorder %s16, 0
      %p230 = por %p228, %p229
      %p231 = scmp.ne.s32.totalorder %s220, %s223
      %p232 = scmp.eq.s32.totalorder %s21, 1
      %p233 = por %p231, %p232
      %p234 = scmp.ne.s32.totalorder %s223, %s224
      %p235 = scmp.eq.s32.totalorder %s21, 0
      %p236 = por %p234, %p235
      %p237 = scmp.ne.s32.totalorder %s223, %s224
      %p238 = scmp.eq.s32.totalorder %s22, 1
      %p239 = por %p237, %p238
      %p241 = scmp.ne.s32.totalorder %s224, %s240
      %p242 = scmp.eq.s32.totalorder %s22, 0
      %p243 = por %p241, %p242
      %p244 = scmp.le.s32.totalorder 1, %s16
      %p245 = scmp.lt.s32.totalorder %s16, 3
      %p246 = pnand %p244, %p245
      %p247 = pneg %p246
      // Predicated region
      $region9: #{tpu_custom_call.1} parent=5 // pred_check
        _
      $region10: #{tpu_custom_call.1} parent=5 // pred_check_branch
        %249 = sbr.rel (%p246) target = $region12
      $region11: #{tpu_custom_call.1} parent=5 // pred_region
        %s250 = ssub.s32 %s16, 1
        // Predicated region
        $region13: #{tpu_custom_call.1} parent=11 // pred_check
          %p251 = pneg %p63
        $region14: #{tpu_custom_call.1} parent=11 // pred_check_branch
          %253 = sbr.rel (%p251) target = $region16
        $region15: #{tpu_custom_call.1} parent=11 // pred_region
          _
        $region16: #{tpu_custom_call.1} parent=11 // pred_fallthru
          _
        // Predicated region
        $region17: #{tpu_custom_call.1} parent=11 // pred_check
          %p254 = pneg %p84
        $region18: #{tpu_custom_call.1} parent=11 // pred_check_branch
          %256 = sbr.rel (%p254) target = $region20
        $region19: #{tpu_custom_call.1} parent=11 // pred_region
          _
        $region20: #{tpu_custom_call.1} parent=11 // pred_fallthru
          _
        // Predicated region
        $region21: #{tpu_custom_call.1} parent=11 // pred_check
          %p257 = pneg %p105
        $region22: #{tpu_custom_call.1} parent=11 // pred_check_branch
          %259 = sbr.rel (%p257) target = $region24
        $region23: #{tpu_custom_call.1} parent=11 // pred_region
          _
        $region24: #{tpu_custom_call.1} parent=11 // pred_fallthru
          _
        // Predicated region
        $region25: #{tpu_custom_call.1} parent=11 // pred_check
          %p260 = pneg %p126
        $region26: #{tpu_custom_call.1} parent=11 // pred_check_branch
          %262 = sbr.rel (%p260) target = $region28
        $region27: #{tpu_custom_call.1} parent=11 // pred_region
          _
        $region28: #{tpu_custom_call.1} parent=11 // pred_fallthru
          _
        // Predicated region
        $region29: #{tpu_custom_call.1} parent=11 // pred_check
          %p263 = pneg %p147
        $region30: #{tpu_custom_call.1} parent=11 // pred_check_branch
          %265 = sbr.rel (%p263) target = $region32
        $region31: #{tpu_custom_call.1} parent=11 // pred_region
          %s267 = ssub.s32 9216, 9216
          %268 = vsyncadd [#allocation6], %s267
          %s269 = sshll.u32 [#allocation5], 4
          %s270 = int_to_ptr.vmem [resolvable:$true] %s269
          %275 = dma.hbm_to_vmem [thread:$0]  %s5, 9216, %s270, [#allocation6], 64, 64, 4
        $region32: #{tpu_custom_call.1} parent=11 // pred_fallthru
          _
        // Predicated region
        $region33: #{tpu_custom_call.1} parent=11 // pred_check
          %p276 = pneg %p168
        $region34: #{tpu_custom_call.1} parent=11 // pred_check_branch
          %278 = sbr.rel (%p276) target = $region36
        $region35: #{tpu_custom_call.1} parent=11 // pred_region
          _
        $region36: #{tpu_custom_call.1} parent=11 // pred_fallthru
          _
        // Predicated region
        $region37: #{tpu_custom_call.1} parent=11 // pred_check
          %p279 = pneg %p189
        $region38: #{tpu_custom_call.1} parent=11 // pred_check_branch
          %281 = sbr.rel (%p279) target = $region40
        $region39: #{tpu_custom_call.1} parent=11 // pred_region
          _
        $region40: #{tpu_custom_call.1} parent=11 // pred_fallthru
          _
        // Predicated region
        $region41: #{tpu_custom_call.1} parent=11 // pred_check
          %p282 = pneg %p210
        $region42: #{tpu_custom_call.1} parent=11 // pred_check_branch
          %284 = sbr.rel (%p282) target = $region44
        $region43: #{tpu_custom_call.1} parent=11 // pred_region
          _
        $region44: #{tpu_custom_call.1} parent=11 // pred_fallthru
          _
      $region12: #{tpu_custom_call.1} parent=5 // pred_fallthru
        _
      %p285 = scmp.lt.s32.totalorder %s16, 2
      // Predicated region
      $region45: #{tpu_custom_call.1} parent=5 // pred_check
        %p286 = pneg %p285
      $region46: #{tpu_custom_call.1} parent=5 // pred_check_branch
        %288 = sbr.rel (%p286) target = $region48
      $region47: #{tpu_custom_call.1} parent=5 // pred_region
        // Predicated region
        $region49: #{tpu_custom_call.1} parent=47 // pred_check
          %p289 = pneg %p36
        $region50: #{tpu_custom_call.1} parent=47 // pred_check_branch
          %291 = sbr.rel (%p289) target = $region52
        $region51: #{tpu_custom_call.1} parent=47 // pred_region
          %p292 = scmp.lt.s32.totalorder %s16, 1
          %s293 = scalar_select %p292, %s16, 1
          %s294 = smul.addr %s293, 32
          %s295 = smul.addr %s294, 8
          %s296 = scalar_lea.vmem %s0, %s295
        $region52: #{tpu_custom_call.1} parent=47 // pred_fallthru
          _
      $region48: #{tpu_custom_call.1} parent=5 // pred_fallthru
        _
      %p297 = scmp.le.s32.totalorder 1, %s16
      %p298 = scmp.lt.s32.totalorder %s16, 3
      %p299 = pnand %p297, %p298
      %p300 = pneg %p299
      // Predicated region
      $region53: #{tpu_custom_call.1} parent=5 // pred_check
        _
      $region54: #{tpu_custom_call.1} parent=5 // pred_check_branch
        %302 = sbr.rel (%p299) target = $region56
      $region55: #{tpu_custom_call.1} parent=5 // pred_region
        %s303 = ssub.s32 %s16, 1
        // Predicated region
        $region57: #{tpu_custom_call.1} parent=55 // pred_check
          %p304 = pneg %p147
        $region58: #{tpu_custom_call.1} parent=55 // pred_check_branch
          %306 = sbr.rel (%p304) target = $region60
        $region59: #{tpu_custom_call.1} parent=55 // pred_region
          %307 = dma.done [#allocation6], 9216
        $region60: #{tpu_custom_call.1} parent=55 // pred_fallthru
          _
        %p308 = scmp.lt.s32.totalorder %s21, 1
        %s309 = scalar_select %p308, %s21, 1
        %s310 = smul.addr %s309, 32
        %s311 = smul.addr %s310, 8
        %s312 = scalar_lea.vmem %s0, %s311
        %p313 = pneg %p42
        %p314 = pneg %p39
        %p315 = pneg %p63
        %p316 = pneg %p60
        %p317 = pneg %p84
        %p318 = pneg %p81
        %p319 = pneg %p105
        %p320 = pneg %p102
        %p321 = pneg %p126
        %p322 = pneg %p123
        %p323 = pneg %p147
        %p324 = pneg %p144
        %p325 = pneg %p168
        %p326 = pneg %p165
        %p327 = pneg %p189
        %p328 = pneg %p186
        %p329 = pneg %p210
        %p330 = pneg %p207
        %p331 = pneg %p236
        %p332 = pneg %p233
        %p333 = scmp.lt.s32.totalorder %s21, 1
        %s334 = scalar_select %p333, %s21, 1
        %s335 = smul.addr %s334, 32
        %s336 = smul.addr %s335, 8
        %s337 = scalar_lea.vmem %s9, %s336
        %p338 = scmp.lt.s32.totalorder %s21, 1
        %s339 = scalar_select %p338, %s21, 1
        %s340 = smul.addr %s339, 32
        %s341 = smul.addr %s340, 8
        %s342 = scalar_lea.vmem %s0, %s341
        %p343 = scmp.lt.s32.totalorder %s21, 1
        %s344 = scalar_select %p343, %s21, 1
        %s345 = smul.addr %s344, 32
        %s346 = smul.addr %s345, 8
        %s347 = scalar_lea.vmem %s9, %s346
        %349 = vst [vmem:[#allocation2] sm:$0xff] 0.0
        %350 = vst [vmem:[#allocation2 + $0x8] sm:$0xff] 0.0
        %351 = vst [vmem:[#allocation2 + $0x10] sm:$0xff] 0.0
        %352 = vst [vmem:[#allocation2 + $0x18] sm:$0xff] 0.0
        %353 = vst [vmem:[#allocation2 + $0x20] sm:$0xff] 0.0
        %354 = vst [vmem:[#allocation2 + $0x28] sm:$0xff] 0.0
        %355 = vst [vmem:[#allocation2 + $0x30] sm:$0xff] 0.0
        %356 = vst [vmem:[#allocation2 + $0x38] sm:$0xff] 0.0
        %357 = vst [vmem:[#allocation2 + $0x40] sm:$0xff] 0.0
        %358 = vst [vmem:[#allocation2 + $0x48] sm:$0xff] 0.0
        %359 = vst [vmem:[#allocation2 + $0x50] sm:$0xff] 0.0
        %360 = vst [vmem:[#allocation2 + $0x58] sm:$0xff] 0.0
        %361 = vst [vmem:[#allocation2 + $0x60] sm:$0xff] 0.0
        %362 = vst [vmem:[#allocation2 + $0x68] sm:$0xff] 0.0
        %363 = vst [vmem:[#allocation2 + $0x70] sm:$0xff] 0.0
        %364 = vst [vmem:[#allocation2 + $0x78] sm:$0xff] 0.0
        %365 = vst [vmem:[#allocation2 + $0x80] sm:$0xff] 0.0
        %366 = vst [vmem:[#allocation2 + $0x88] sm:$0xff] 0.0
        %367 = vst [vmem:[#allocation2 + $0x90] sm:$0xff] 0.0
        %368 = vst [vmem:[#allocation2 + $0x98] sm:$0xff] 0.0
        %369 = vst [vmem:[#allocation2 + $0xa0] sm:$0xff] 0.0
        %370 = vst [vmem:[#allocation2 + $0xa8] sm:$0xff] 0.0
        %371 = vst [vmem:[#allocation2 + $0xb0] sm:$0xff] 0.0
        %372 = vst [vmem:[#allocation2 + $0xb8] sm:$0xff] 0.0
        %373 = vst [vmem:[#allocation2 + $0xc0] sm:$0xff] 0.0
        %374 = vst [vmem:[#allocation2 + $0xc8] sm:$0xff] 0.0
        %375 = vst [vmem:[#allocation2 + $0xd0] sm:$0xff] 0.0
        %376 = vst [vmem:[#allocation2 + $0xd8] sm:$0xff] 0.0
        %377 = vst [vmem:[#allocation2 + $0xe0] sm:$0xff] 0.0
        %378 = vst [vmem:[#allocation2 + $0xe8] sm:$0xff] 0.0
        %379 = vst [vmem:[#allocation2 + $0xf0] sm:$0xff] 0.0
        %380 = vst [vmem:[#allocation2 + $0xf8] sm:$0xff] 0.0
        %v381 = vld [vmem:[%s342] sm:$0xff]
        %v382 = vld [vmem:[%s342 + $0x8] sm:$0xff]
        %v383 = vld [vmem:[%s342 + $0x10] sm:$0xff]
        %v384 = vld [vmem:[%s342 + $0x18] sm:$0xff]
        %v385 = vld [vmem:[%s342 + $0x20] sm:$0xff]
        %v386 = vld [vmem:[%s342 + $0x28] sm:$0xff]
        %v387 = vld [vmem:[%s342 + $0x30] sm:$0xff]
        %v388 = vld [vmem:[%s342 + $0x38] sm:$0xff]
        %v389 = vld [vmem:[%s342 + $0x40] sm:$0xff]
        %v390 = vld [vmem:[%s342 + $0x48] sm:$0xff]
        %v391 = vld [vmem:[%s342 + $0x50] sm:$0xff]
        %v392 = vld [vmem:[%s342 + $0x58] sm:$0xff]
        %v393 = vld [vmem:[%s342 + $0x60] sm:$0xff]
        %v394 = vld [vmem:[%s342 + $0x68] sm:$0xff]
        %v395 = vld [vmem:[%s342 + $0x70] sm:$0xff]
        %v396 = vld [vmem:[%s342 + $0x78] sm:$0xff]
        %v397 = vld [vmem:[%s342 + $0x80] sm:$0xff]
        %v398 = vld [vmem:[%s342 + $0x88] sm:$0xff]
        %v399 = vld [vmem:[%s342 + $0x90] sm:$0xff]
        %v400 = vld [vmem:[%s342 + $0x98] sm:$0xff]
        %v401 = vld [vmem:[%s342 + $0xa0] sm:$0xff]
        %v402 = vld [vmem:[%s342 + $0xa8] sm:$0xff]
        %v403 = vld [vmem:[%s342 + $0xb0] sm:$0xff]
        %v404 = vld [vmem:[%s342 + $0xb8] sm:$0xff]
        %v405 = vld [vmem:[%s342 + $0xc0] sm:$0xff]
        %v406 = vld [vmem:[%s342 + $0xc8] sm:$0xff]
        %v407 = vld [vmem:[%s342 + $0xd0] sm:$0xff]
        %v408 = vld [vmem:[%s342 + $0xd8] sm:$0xff]
        %v409 = vld [vmem:[%s342 + $0xe0] sm:$0xff]
        %v410 = vld [vmem:[%s342 + $0xe8] sm:$0xff]
        %v411 = vld [vmem:[%s342 + $0xf0] sm:$0xff]
        %v412 = vld [vmem:[%s342 + $0xf8] sm:$0xff]
        %vm413 = vcmask 31744
        %414 = vst.msk [vmem:[#allocation2] sm:$0xff] %vm413, %v381
        %415 = vst.msk [vmem:[#allocation2 + $0x8] sm:$0xff] %vm413, %v382
        %416 = vst.msk [vmem:[#allocation2 + $0x10] sm:$0xff] %vm413, %v383
        %417 = vst.msk [vmem:[#allocation2 + $0x18] sm:$0xff] %vm413, %v384
        %418 = vst.msk [vmem:[#allocation2 + $0x20] sm:$0xff] %vm413, %v385
        %419 = vst.msk [vmem:[#allocation2 + $0x28] sm:$0xff] %vm413, %v386
        %420 = vst.msk [vmem:[#allocation2 + $0x30] sm:$0xff] %vm413, %v387
        %421 = vst.msk [vmem:[#allocation2 + $0x38] sm:$0xff] %vm413, %v388
        %422 = vst.msk [vmem:[#allocation2 + $0x40] sm:$0xff] %vm413, %v389
        %423 = vst.msk [vmem:[#allocation2 + $0x48] sm:$0xff] %vm413, %v390
        %424 = vst.msk [vmem:[#allocation2 + $0x50] sm:$0xff] %vm413, %v391
        %425 = vst.msk [vmem:[#allocation2 + $0x58] sm:$0xff] %vm413, %v392
        %426 = vst.msk [vmem:[#allocation2 + $0x60] sm:$0xff] %vm413, %v393
        %427 = vst.msk [vmem:[#allocation2 + $0x68] sm:$0xff] %vm413, %v394
        %428 = vst.msk [vmem:[#allocation2 + $0x70] sm:$0xff] %vm413, %v395
        %429 = vst.msk [vmem:[#allocation2 + $0x78] sm:$0xff] %vm413, %v396
        %430 = vst.msk [vmem:[#allocation2 + $0x80] sm:$0xff] %vm413, %v397
        %431 = vst.msk [vmem:[#allocation2 + $0x88] sm:$0xff] %vm413, %v398
        %432 = vst.msk [vmem:[#allocation2 + $0x90] sm:$0xff] %vm413, %v399
        %433 = vst.msk [vmem:[#allocation2 + $0x98] sm:$0xff] %vm413, %v400
        %434 = vst.msk [vmem:[#allocation2 + $0xa0] sm:$0xff] %vm413, %v401
        %435 = vst.msk [vmem:[#allocation2 + $0xa8] sm:$0xff] %vm413, %v402
        %436 = vst.msk [vmem:[#allocation2 + $0xb0] sm:$0xff] %vm413, %v403
        %437 = vst.msk [vmem:[#allocation2 + $0xb8] sm:$0xff] %vm413, %v404
        %438 = vst.msk [vmem:[#allocation2 + $0xc0] sm:$0xff] %vm413, %v405
        %439 = vst.msk [vmem:[#allocation2 + $0xc8] sm:$0xff] %vm413, %v406
        %440 = vst.msk [vmem:[#allocation2 + $0xd0] sm:$0xff] %vm413, %v407
        %441 = vst.msk [vmem:[#allocation2 + $0xd8] sm:$0xff] %vm413, %v408
        %442 = vst.msk [vmem:[#allocation2 + $0xe0] sm:$0xff] %vm413, %v409
        %443 = vst.msk [vmem:[#allocation2 + $0xe8] sm:$0xff] %vm413, %v410
        %444 = vst.msk [vmem:[#allocation2 + $0xf0] sm:$0xff] %vm413, %v411
        %445 = vst.msk [vmem:[#allocation2 + $0xf8] sm:$0xff] %vm413, %v412
        %v446 = vld [vmem:[#allocation2] sm:$0xff]
        %v447 = vld [vmem:[#allocation2 + $0x8] sm:$0xff]
        %v448 = vld [vmem:[#allocation2 + $0x10] sm:$0xff]
        %v449 = vld [vmem:[#allocation2 + $0x18] sm:$0xff]
        %v450 = vld [vmem:[#allocation2 + $0x20] sm:$0xff]
        %v451 = vld [vmem:[#allocation2 + $0x28] sm:$0xff]
        %v452 = vld [vmem:[#allocation2 + $0x30] sm:$0xff]
        %v453 = vld [vmem:[#allocation2 + $0x38] sm:$0xff]
        %v454 = vld [vmem:[#allocation2 + $0x40] sm:$0xff]
        %v455 = vld [vmem:[#allocation2 + $0x48] sm:$0xff]
        %v456 = vld [vmem:[#allocation2 + $0x50] sm:$0xff]
        %v457 = vld [vmem:[#allocation2 + $0x58] sm:$0xff]
        %v458 = vld [vmem:[#allocation2 + $0x60] sm:$0xff]
        %v459 = vld [vmem:[#allocation2 + $0x68] sm:$0xff]
        %v460 = vld [vmem:[#allocation2 + $0x70] sm:$0xff]
        %v461 = vld [vmem:[#allocation2 + $0x78] sm:$0xff]
        %v462 = vld [vmem:[#allocation2 + $0x80] sm:$0xff]
        %v463 = vld [vmem:[#allocation2 + $0x88] sm:$0xff]
        %v464 = vld [vmem:[#allocation2 + $0x90] sm:$0xff]
        %v465 = vld [vmem:[#allocation2 + $0x98] sm:$0xff]
        %v466 = vld [vmem:[#allocation2 + $0xa0] sm:$0xff]
        %v467 = vld [vmem:[#allocation2 + $0xa8] sm:$0xff]
        %v468 = vld [vmem:[#allocation2 + $0xb0] sm:$0xff]
        %v469 = vld [vmem:[#allocation2 + $0xb8] sm:$0xff]
        %v470 = vld [vmem:[#allocation2 + $0xc0] sm:$0xff]
        %v471 = vld [vmem:[#allocation2 + $0xc8] sm:$0xff]
        %v472 = vld [vmem:[#allocation2 + $0xd0] sm:$0xff]
        %v473 = vld [vmem:[#allocation2 + $0xd8] sm:$0xff]
        %v474 = vld [vmem:[#allocation2 + $0xe0] sm:$0xff]
        %v475 = vld [vmem:[#allocation2 + $0xe8] sm:$0xff]
        %v476 = vld [vmem:[#allocation2 + $0xf0] sm:$0xff]
        %v477 = vld [vmem:[#allocation2 + $0xf8] sm:$0xff]
        %v478 = vld [vmem:[%s1] sm:$0x1]
        %v480 = vlaneseq
        %v481 = vshrl.u32 %v480, 7
        %v482 = vsub.s32 0, %v481
        %v483 = vrot.slane %v478, %v482
        %v485 = vmul.f32 %v446, %v483
        %v486 = vmul.f32 %v447, %v483
        %v487 = vmul.f32 %v448, %v483
        %v488 = vmul.f32 %v449, %v483
        %v489 = vmul.f32 %v450, %v483
        %v490 = vmul.f32 %v451, %v483
        %v491 = vmul.f32 %v452, %v483
        %v492 = vmul.f32 %v453, %v483
        %v493 = vmul.f32 %v454, %v483
        %v494 = vmul.f32 %v455, %v483
        %v495 = vmul.f32 %v456, %v483
        %v496 = vmul.f32 %v457, %v483
        %v497 = vmul.f32 %v458, %v483
        %v498 = vmul.f32 %v459, %v483
        %v499 = vmul.f32 %v460, %v483
        %v500 = vmul.f32 %v461, %v483
        %v501 = vmul.f32 %v462, %v483
        %v502 = vmul.f32 %v463, %v483
        %v503 = vmul.f32 %v464, %v483
        %v504 = vmul.f32 %v465, %v483
        %v505 = vmul.f32 %v466, %v483
        %v506 = vmul.f32 %v467, %v483
        %v507 = vmul.f32 %v468, %v483
        %v508 = vmul.f32 %v469, %v483
        %v509 = vmul.f32 %v470, %v483
        %v510 = vmul.f32 %v471, %v483
        %v511 = vmul.f32 %v472, %v483
        %v512 = vmul.f32 %v473, %v483
        %v513 = vmul.f32 %v474, %v483
        %v514 = vmul.f32 %v475, %v483
        %v515 = vmul.f32 %v476, %v483
        %v516 = vmul.f32 %v477, %v483
        %v517 = vld [vmem:[%s2] sm:$0x1]
        %v519 = vlaneseq
        %v520 = vshrl.u32 %v519, 7
        %v521 = vsub.s32 0, %v520
        %v522 = vrot.slane %v517, %v521
        %v524 = vadd.f32 %v485, %v522
        %v525 = vadd.f32 %v486, %v522
        %v526 = vadd.f32 %v487, %v522
        %v527 = vadd.f32 %v488, %v522
        %v528 = vadd.f32 %v489, %v522
        %v529 = vadd.f32 %v490, %v522
        %v530 = vadd.f32 %v491, %v522
        %v531 = vadd.f32 %v492, %v522
        %v532 = vadd.f32 %v493, %v522
        %v533 = vadd.f32 %v494, %v522
        %v534 = vadd.f32 %v495, %v522
        %v535 = vadd.f32 %v496, %v522
        %v536 = vadd.f32 %v497, %v522
        %v537 = vadd.f32 %v498, %v522
        %v538 = vadd.f32 %v499, %v522
        %v539 = vadd.f32 %v500, %v522
        %v540 = vadd.f32 %v501, %v522
        %v541 = vadd.f32 %v502, %v522
        %v542 = vadd.f32 %v503, %v522
        %v543 = vadd.f32 %v504, %v522
        %v544 = vadd.f32 %v505, %v522
        %v545 = vadd.f32 %v506, %v522
        %v546 = vadd.f32 %v507, %v522
        %v547 = vadd.f32 %v508, %v522
        %v548 = vadd.f32 %v509, %v522
        %v549 = vadd.f32 %v510, %v522
        %v550 = vadd.f32 %v511, %v522
        %v551 = vadd.f32 %v512, %v522
        %v552 = vadd.f32 %v513, %v522
        %v553 = vadd.f32 %v514, %v522
        %v554 = vadd.f32 %v515, %v522
        %v555 = vadd.f32 %v516, %v522
        %v556 = vmax.f32 %v524, 0.0
        %v557 = vmax.f32 %v525, 0.0
        %v558 = vmax.f32 %v526, 0.0
        %v559 = vmax.f32 %v527, 0.0
        %v560 = vmax.f32 %v528, 0.0
        %v561 = vmax.f32 %v529, 0.0
        %v562 = vmax.f32 %v530, 0.0
        %v563 = vmax.f32 %v531, 0.0
        %v564 = vmax.f32 %v532, 0.0
        %v565 = vmax.f32 %v533, 0.0
        %v566 = vmax.f32 %v534, 0.0
        %v567 = vmax.f32 %v535, 0.0
        %v568 = vmax.f32 %v536, 0.0
        %v569 = vmax.f32 %v537, 0.0
        %v570 = vmax.f32 %v538, 0.0
        %v571 = vmax.f32 %v539, 0.0
        %v572 = vmax.f32 %v540, 0.0
        %v573 = vmax.f32 %v541, 0.0
        %v574 = vmax.f32 %v542, 0.0
        %v575 = vmax.f32 %v543, 0.0
        %v576 = vmax.f32 %v544, 0.0
        %v577 = vmax.f32 %v545, 0.0
        %v578 = vmax.f32 %v546, 0.0
        %v579 = vmax.f32 %v547, 0.0
        %v580 = vmax.f32 %v548, 0.0
        %v581 = vmax.f32 %v549, 0.0
        %v582 = vmax.f32 %v550, 0.0
        %v583 = vmax.f32 %v551, 0.0
        %v584 = vmax.f32 %v552, 0.0
        %v585 = vmax.f32 %v553, 0.0
        %v586 = vmax.f32 %v554, 0.0
        %v587 = vmax.f32 %v555, 0.0
        %v588 = vpack.c.bf16 %v557, %v556
        %v589 = vpack.c.bf16 %v559, %v558
        %v590 = vpack.c.bf16 %v561, %v560
        %v591 = vpack.c.bf16 %v563, %v562
        %v592 = vpack.c.bf16 %v565, %v564
        %v593 = vpack.c.bf16 %v567, %v566
        %v594 = vpack.c.bf16 %v569, %v568
        %v595 = vpack.c.bf16 %v571, %v570
        %v596 = vpack.c.bf16 %v573, %v572
        %v597 = vpack.c.bf16 %v575, %v574
        %v598 = vpack.c.bf16 %v577, %v576
        %v599 = vpack.c.bf16 %v579, %v578
        %v600 = vpack.c.bf16 %v581, %v580
        %v601 = vpack.c.bf16 %v583, %v582
        %v602 = vpack.c.bf16 %v585, %v584
        %v603 = vpack.c.bf16 %v587, %v586
        %v604 = vld [vmem:[%s3] sm:$0xf]
        %v605 = vld [vmem:[%s3 + $0x4] sm:$0xf]
        %v606 = vld [vmem:[%s3 + $0x8] sm:$0xf]
        %v607 = vld [vmem:[%s3 + $0xc] sm:$0xf]
        %v608 = vld [vmem:[%s3 + $0x10] sm:$0xf]
        %v609 = vld [vmem:[%s3 + $0x14] sm:$0xf]
        %v610 = vld [vmem:[%s3 + $0x18] sm:$0xf]
        %v611 = vld [vmem:[%s3 + $0x1c] sm:$0xf]
        %v612 = vld [vmem:[%s3 + $0x20] sm:$0xf]
        %v613 = vld [vmem:[%s3 + $0x24] sm:$0xf]
        %v614 = vld [vmem:[%s3 + $0x28] sm:$0xf]
        %v615 = vld [vmem:[%s3 + $0x2c] sm:$0xf]
        %v616 = vld [vmem:[%s3 + $0x30] sm:$0xf]
        %v617 = vld [vmem:[%s3 + $0x34] sm:$0xf]
        %v618 = vld [vmem:[%s3 + $0x38] sm:$0xf]
        %v619 = vld [vmem:[%s3 + $0x3c] sm:$0xf]
        %v620 = vld [vmem:[%s4] sm:$0x1]
        %v622 = vlaneseq
        %v623 = vshrl.u32 %v622, 7
        %v624 = vsub.s32 0, %v623
        %v625 = vrot.slane %v620, %v624
        %v643 = vunpack.c.l.b16 %v604
        %v644 = vunpack.c.l.b16 %v605
        %v645 = vunpack.c.l.b16 %v606
        %v646 = vunpack.c.l.b16 %v607
        %v647 = vunpack.c.l.b16 %v608
        %v648 = vunpack.c.l.b16 %v609
        %v649 = vunpack.c.l.b16 %v610
        %v650 = vunpack.c.l.b16 %v611
        %v651 = vunpack.c.l.b16 %v612
        %v652 = vunpack.c.l.b16 %v613
        %v653 = vunpack.c.l.b16 %v614
        %v654 = vunpack.c.l.b16 %v615
        %v655 = vunpack.c.l.b16 %v616
        %v656 = vunpack.c.l.b16 %v617
        %v657 = vunpack.c.l.b16 %v618
        %v658 = vunpack.c.l.b16 %v619
        %v659 = vpack.c.b16 %v644, %v643
        %v660 = vpack.c.b16 %v646, %v645
        %v661 = vpack.c.b16 %v648, %v647
        %v662 = vpack.c.b16 %v650, %v649
        %v663 = vpack.c.b16 %v652, %v651
        %v664 = vpack.c.b16 %v654, %v653
        %v665 = vpack.c.b16 %v656, %v655
        %v666 = vpack.c.b16 %v658, %v657
        %675 = vmatprep.subr.bf16.mxu0 0
        %676 = vmatpush1.bf16.msra.mxu0 %v659
        %677 = vmatprep.subr.bf16.mxu0 0
        %678 = vmatpush1.bf16.msra.mxu0 %v660
        %679 = vmatprep.subr.bf16.mxu0 0
        %680 = vmatpush1.bf16.msra.mxu0 %v661
        %681 = vmatprep.subr.bf16.mxu0 0
        %682 = vmatpush1.bf16.msra.mxu0 %v662
        %683 = vmatprep.subr.bf16.mxu0 0
        %684 = vmatpush1.bf16.msra.mxu0 %v663
        %685 = vmatprep.subr.bf16.mxu0 0
        %686 = vmatpush1.bf16.msra.mxu0 %v664
        %687 = vmatprep.subr.bf16.mxu0 0
        %688 = vmatpush1.bf16.msra.mxu0 %v665
        %689 = vmatprep.subr.bf16.mxu0 0
        %690 = vmatpush1.bf16.msra.mxu0 %v666
        %691 = vmatprep.subr.bf16.mxu0 0
        %692 = vmatpush1.bf16.msra.mxu0 0
        %693 = vmatprep.subr.bf16.mxu0 0
        %694 = vmatpush1.bf16.msra.mxu0 0
        %695 = vmatprep.subr.bf16.mxu0 0
        %696 = vmatpush1.bf16.msra.mxu0 0
        %697 = vmatprep.subr.bf16.mxu0 0
        %698 = vmatpush1.bf16.msra.mxu0 0
        %699 = vmatprep.subr.bf16.mxu0 0
        %700 = vmatpush1.bf16.msra.mxu0 0
        %701 = vmatprep.subr.bf16.mxu0 0
        %702 = vmatpush1.bf16.msra.mxu0 0
        %703 = vmatprep.subr.bf16.mxu0 0
        %704 = vmatpush1.bf16.msra.mxu0 0
        %705 = vmatprep.subr.bf16.mxu0 0
        %706 = vmatpush1.bf16.msra.mxu0 0
        %707 = vmatprep.mubr.bf16.mxu0 0
        %708 = vmatmul.mubr.bf16.gmra.mrb[0].mxu0 %v588
        %v709 = vpop.f32.mrb[0].mxu0
        %v710 = vadd.f32 %v625, %v709
        %v711 = vpop.f32.mrb[0].mxu0
        %v712 = vpop.f32.mrb[0].mxu0
        %v713 = vadd.f32 %v625, %v712
        %v714 = vpop.f32.mrb[0].mxu0
        %715 = vmatprep.mubr.bf16.mxu0 0
        %716 = vmatmul.mubr.bf16.gmra.mrb[0].mxu0 %v589
        %v717 = vpop.f32.mrb[0].mxu0
        %v718 = vadd.f32 %v625, %v717
        %v719 = vpop.f32.mrb[0].mxu0
        %v720 = vpop.f32.mrb[0].mxu0
        %v721 = vadd.f32 %v625, %v720
        %v722 = vpop.f32.mrb[0].mxu0
        %723 = vmatprep.mubr.bf16.mxu0 0
        %724 = vmatmul.mubr.bf16.gmra.mrb[0].mxu0 %v590
        %v725 = vpop.f32.mrb[0].mxu0
        %v726 = vadd.f32 %v625, %v725
        %v727 = vpop.f32.mrb[0].mxu0
        %v728 = vpop.f32.mrb[0].mxu0
        %v729 = vadd.f32 %v625, %v728
        %v730 = vpop.f32.mrb[0].mxu0
        %731 = vmatprep.mubr.bf16.mxu0 0
        %732 = vmatmul.mubr.bf16.gmra.mrb[0].mxu0 %v591
        %v733 = vpop.f32.mrb[0].mxu0
        %v734 = vadd.f32 %v625, %v733
        %v735 = vpop.f32.mrb[0].mxu0
        %v736 = vpop.f32.mrb[0].mxu0
        %v737 = vadd.f32 %v625, %v736
        %v738 = vpop.f32.mrb[0].mxu0
        %739 = vmatprep.mubr.bf16.mxu0 0
        %740 = vmatmul.mubr.bf16.gmra.mrb[0].mxu0 %v592
        %v741 = vpop.f32.mrb[0].mxu0
        %v742 = vadd.f32 %v625, %v741
        %v743 = vpop.f32.mrb[0].mxu0
        %v744 = vpop.f32.mrb[0].mxu0
        %v745 = vadd.f32 %v625, %v744
        %v746 = vpop.f32.mrb[0].mxu0
        %747 = vmatprep.mubr.bf16.mxu0 0
        %748 = vmatmul.mubr.bf16.gmra.mrb[0].mxu0 %v593
        %v749 = vpop.f32.mrb[0].mxu0
        %v750 = vadd.f32 %v625, %v749
        %v751 = vpop.f32.mrb[0].mxu0
        %v752 = vpop.f32.mrb[0].mxu0
        %v753 = vadd.f32 %v625, %v752
        %v754 = vpop.f32.mrb[0].mxu0
        %755 = vmatprep.mubr.bf16.mxu0 0
        %756 = vmatmul.mubr.bf16.gmra.mrb[0].mxu0 %v594
        %v757 = vpop.f32.mrb[0].mxu0
        %v758 = vadd.f32 %v625, %v757
        %v759 = vpop.f32.mrb[0].mxu0
        %v760 = vpop.f32.mrb[0].mxu0
        %v761 = vadd.f32 %v625, %v760
        %v762 = vpop.f32.mrb[0].mxu0
        %763 = vmatprep.mubr.bf16.mxu0 0
        %764 = vmatmul.mubr.bf16.gmra.mrb[0].mxu0 %v595
        %v765 = vpop.f32.mrb[0].mxu0
        %v766 = vadd.f32 %v625, %v765
        %v767 = vpop.f32.mrb[0].mxu0
        %v768 = vpop.f32.mrb[0].mxu0
        %v769 = vadd.f32 %v625, %v768
        %v770 = vpop.f32.mrb[0].mxu0
        %771 = vmatprep.mubr.bf16.mxu0 0
        %772 = vmatmul.mubr.bf16.gmra.mrb[0].mxu0 %v596
        %v773 = vpop.f32.mrb[0].mxu0
        %v774 = vadd.f32 %v625, %v773
        %v775 = vpop.f32.mrb[0].mxu0
        %v776 = vpop.f32.mrb[0].mxu0
        %v777 = vadd.f32 %v625, %v776
        %v778 = vpop.f32.mrb[0].mxu0
        %779 = vmatprep.mubr.bf16.mxu0 0
        %780 = vmatmul.mubr.bf16.gmra.mrb[0].mxu0 %v597
        %v781 = vpop.f32.mrb[0].mxu0
        %v782 = vadd.f32 %v625, %v781
        %v783 = vpop.f32.mrb[0].mxu0
        %v784 = vpop.f32.mrb[0].mxu0
        %v785 = vadd.f32 %v625, %v784
        %v786 = vpop.f32.mrb[0].mxu0
        %787 = vmatprep.mubr.bf16.mxu0 0
        %788 = vmatmul.mubr.bf16.gmra.mrb[0].mxu0 %v598
        %v789 = vpop.f32.mrb[0].mxu0
        %v790 = vadd.f32 %v625, %v789
        %v791 = vpop.f32.mrb[0].mxu0
        %v792 = vpop.f32.mrb[0].mxu0
        %v793 = vadd.f32 %v625, %v792
        %v794 = vpop.f32.mrb[0].mxu0
        %795 = vmatprep.mubr.bf16.mxu0 0
        %796 = vmatmul.mubr.bf16.gmra.mrb[0].mxu0 %v599
        %v797 = vpop.f32.mrb[0].mxu0
        %v798 = vadd.f32 %v625, %v797
        %v799 = vpop.f32.mrb[0].mxu0
        %v800 = vpop.f32.mrb[0].mxu0
        %v801 = vadd.f32 %v625, %v800
        %v802 = vpop.f32.mrb[0].mxu0
        %803 = vmatprep.mubr.bf16.mxu0 0
        %804 = vmatmul.mubr.bf16.gmra.mrb[0].mxu0 %v600
        %v805 = vpop.f32.mrb[0].mxu0
        %v806 = vadd.f32 %v625, %v805
        %v807 = vpop.f32.mrb[0].mxu0
        %v808 = vpop.f32.mrb[0].mxu0
        %v809 = vadd.f32 %v625, %v808
        %v810 = vpop.f32.mrb[0].mxu0
        %811 = vmatprep.mubr.bf16.mxu0 0
        %812 = vmatmul.mubr.bf16.gmra.mrb[0].mxu0 %v601
        %v813 = vpop.f32.mrb[0].mxu0
        %v814 = vadd.f32 %v625, %v813
        %v815 = vpop.f32.mrb[0].mxu0
        %v816 = vpop.f32.mrb[0].mxu0
        %v817 = vadd.f32 %v625, %v816
        %v818 = vpop.f32.mrb[0].mxu0
        %819 = vmatprep.mubr.bf16.mxu0 0
        %820 = vmatmul.mubr.bf16.gmra.mrb[0].mxu0 %v602
        %v821 = vpop.f32.mrb[0].mxu0
        %v822 = vadd.f32 %v625, %v821
        %v823 = vpop.f32.mrb[0].mxu0
        %v824 = vpop.f32.mrb[0].mxu0
        %v825 = vadd.f32 %v625, %v824
        %v826 = vpop.f32.mrb[0].mxu0
        %827 = vmatprep.mubr.bf16.mxu0 0
        %828 = vmatmul.mubr.bf16.gmra.mrb[0].mxu0 %v603
        %v829 = vpop.f32.mrb[0].mxu0
        %v830 = vadd.f32 %v625, %v829
        %v831 = vpop.f32.mrb[0].mxu0
        %v832 = vpop.f32.mrb[0].mxu0
        %v833 = vadd.f32 %v625, %v832
        %v834 = vpop.f32.mrb[0].mxu0
        %835 = vdwg.mxu0
        %v836 = vmax.f32 %v710, 0.0
        %v837 = vmax.f32 %v713, 0.0
        %v838 = vmax.f32 %v718, 0.0
        %v839 = vmax.f32 %v721, 0.0
        %v840 = vmax.f32 %v726, 0.0
        %v841 = vmax.f32 %v729, 0.0
        %v842 = vmax.f32 %v734, 0.0
        %v843 = vmax.f32 %v737, 0.0
        %v844 = vmax.f32 %v742, 0.0
        %v845 = vmax.f32 %v745, 0.0
        %v846 = vmax.f32 %v750, 0.0
        %v847 = vmax.f32 %v753, 0.0
        %v848 = vmax.f32 %v758, 0.0
        %v849 = vmax.f32 %v761, 0.0
        %v850 = vmax.f32 %v766, 0.0
        %v851 = vmax.f32 %v769, 0.0
        %v852 = vmax.f32 %v774, 0.0
        %v853 = vmax.f32 %v777, 0.0
        %v854 = vmax.f32 %v782, 0.0
        %v855 = vmax.f32 %v785, 0.0
        %v856 = vmax.f32 %v790, 0.0
        %v857 = vmax.f32 %v793, 0.0
        %v858 = vmax.f32 %v798, 0.0
        %v859 = vmax.f32 %v801, 0.0
        %v860 = vmax.f32 %v806, 0.0
        %v861 = vmax.f32 %v809, 0.0
        %v862 = vmax.f32 %v814, 0.0
        %v863 = vmax.f32 %v817, 0.0
        %v864 = vmax.f32 %v822, 0.0
        %v865 = vmax.f32 %v825, 0.0
        %v866 = vmax.f32 %v830, 0.0
        %v867 = vmax.f32 %v833, 0.0
        %868 = vst [vmem:[#allocation3] sm:$0xff] 0.0
        %869 = vst [vmem:[#allocation3 + $0x8] sm:$0xff] 0.0
        %s870 = scalar_lea.vmem [#allocation3], 272
        %871 = vst [vmem:[%s870] sm:$0xff] 0.0
        %872 = vst [vmem:[%s870 + $0x8] sm:$0xff] 0.0
        %s873 = scalar_lea.vmem [#allocation3], 16
        %874 = vst [vmem:[%s873] sm:$0xff] %v836
        %875 = vst [vmem:[%s873 + $0x8] sm:$0xff] %v837
        %876 = vst [vmem:[%s873 + $0x10] sm:$0xff] %v838
        %877 = vst [vmem:[%s873 + $0x18] sm:$0xff] %v839
        %878 = vst [vmem:[%s873 + $0x20] sm:$0xff] %v840
        %879 = vst [vmem:[%s873 + $0x28] sm:$0xff] %v841
        %880 = vst [vmem:[%s873 + $0x30] sm:$0xff] %v842
        %881 = vst [vmem:[%s873 + $0x38] sm:$0xff] %v843
        %882 = vst [vmem:[%s873 + $0x40] sm:$0xff] %v844
        %883 = vst [vmem:[%s873 + $0x48] sm:$0xff] %v845
        %884 = vst [vmem:[%s873 + $0x50] sm:$0xff] %v846
        %885 = vst [vmem:[%s873 + $0x58] sm:$0xff] %v847
        %886 = vst [vmem:[%s873 + $0x60] sm:$0xff] %v848
        %887 = vst [vmem:[%s873 + $0x68] sm:$0xff] %v849
        %888 = vst [vmem:[%s873 + $0x70] sm:$0xff] %v850
        %889 = vst [vmem:[%s873 + $0x78] sm:$0xff] %v851
        %890 = vst [vmem:[%s873 + $0x80] sm:$0xff] %v852
        %891 = vst [vmem:[%s873 + $0x88] sm:$0xff] %v853
        %892 = vst [vmem:[%s873 + $0x90] sm:$0xff] %v854
        %893 = vst [vmem:[%s873 + $0x98] sm:$0xff] %v855
        %894 = vst [vmem:[%s873 + $0xa0] sm:$0xff] %v856
        %895 = vst [vmem:[%s873 + $0xa8] sm:$0xff] %v857
        %896 = vst [vmem:[%s873 + $0xb0] sm:$0xff] %v858
        %897 = vst [vmem:[%s873 + $0xb8] sm:$0xff] %v859
        %898 = vst [vmem:[%s873 + $0xc0] sm:$0xff] %v860
        %899 = vst [vmem:[%s873 + $0xc8] sm:$0xff] %v861
        %900 = vst [vmem:[%s873 + $0xd0] sm:$0xff] %v862
        %901 = vst [vmem:[%s873 + $0xd8] sm:$0xff] %v863
        %902 = vst [vmem:[%s873 + $0xe0] sm:$0xff] %v864
        %903 = vst [vmem:[%s873 + $0xe8] sm:$0xff] %v865
        %904 = vst [vmem:[%s873 + $0xf0] sm:$0xff] %v866
        %905 = vst [vmem:[%s873 + $0xf8] sm:$0xff] %v867
        %v906 = vlaneseq
        %v907 = vshrl.u32 %v906, 7
        %v908 = vadd.s32 %v907, 8
        %v909 = vadd.s32 %v907, 16
        %v910 = vadd.s32 %v907, 24
        %v911 = vadd.s32 %v907, 32
        %v912 = vadd.s32 %v907, 40
        %v913 = vadd.s32 %v907, 48
        %v914 = vadd.s32 %v907, 56
        %v915 = vadd.s32 %v907, 64
        %v916 = vadd.s32 %v907, 72
        %v917 = vadd.s32 %v907, 80
        %v918 = vadd.s32 %v907, 88
        %v919 = vadd.s32 %v907, 96
        %v920 = vadd.s32 %v907, 104
        %v921 = vadd.s32 %v907, 112
        %v922 = vadd.s32 %v907, 120
        %v923 = vadd.s32 %v907, 128
        %v924 = vadd.s32 %v907, 136
        %v925 = vadd.s32 %v907, 144
        %v926 = vadd.s32 %v907, 152
        %v927 = vadd.s32 %v907, 160
        %v928 = vadd.s32 %v907, 168
        %v929 = vadd.s32 %v907, 176
        %v930 = vadd.s32 %v907, 184
        %v931 = vadd.s32 %v907, 192
        %v932 = vadd.s32 %v907, 200
        %v933 = vadd.s32 %v907, 208
        %v934 = vadd.s32 %v907, 216
        %v935 = vadd.s32 %v907, 224
        %v936 = vadd.s32 %v907, 232
        %v937 = vadd.s32 %v907, 240
        %v938 = vadd.s32 %v907, 248
        %vm939 = vcmp.lt.s32.totalorder %v907, 0
        %v940 = vsub.s32 0, %v907
        %v941 = vsel %vm939, %v940, %v907
        %v942 = vshrl.u32 %v941, 4
        %v943 = vand.u32 %v941, 15
        %v944 = vsub.s32 0, %v943
        %v945 = vsel %vm939, %v944, %v943
        %vm946 = vcmp.lt.s32.totalorder %v908, 0
        %v947 = vsub.s32 0, %v908
        %v948 = vsel %vm946, %v947, %v908
        %v949 = vshrl.u32 %v948, 4
        %v950 = vand.u32 %v948, 15
        %v951 = vsub.s32 0, %v950
        %v952 = vsel %vm946, %v951, %v950
        %vm953 = vcmp.lt.s32.totalorder %v909, 0
        %v954 = vsub.s32 0, %v909
        %v955 = vsel %vm953, %v954, %v909
        %v956 = vshrl.u32 %v955, 4
        %v957 = vand.u32 %v955, 15
        %v958 = vsub.s32 0, %v957
        %v959 = vsel %vm953, %v958, %v957
        %vm960 = vcmp.lt.s32.totalorder %v910, 0
        %v961 = vsub.s32 0, %v910
        %v962 = vsel %vm960, %v961, %v910
        %v963 = vshrl.u32 %v962, 4
        %v964 = vand.u32 %v962, 15
        %v965 = vsub.s32 0, %v964
        %v966 = vsel %vm960, %v965, %v964
        %vm967 = vcmp.lt.s32.totalorder %v911, 0
        %v968 = vsub.s32 0, %v911
        %v969 = vsel %vm967, %v968, %v911
        %v970 = vshrl.u32 %v969, 4
        %v971 = vand.u32 %v969, 15
        %v972 = vsub.s32 0, %v971
        %v973 = vsel %vm967, %v972, %v971
        %vm974 = vcmp.lt.s32.totalorder %v912, 0
        %v975 = vsub.s32 0, %v912
        %v976 = vsel %vm974, %v975, %v912
        %v977 = vshrl.u32 %v976, 4
        %v978 = vand.u32 %v976, 15
        %v979 = vsub.s32 0, %v978
        %v980 = vsel %vm974, %v979, %v978
        %vm981 = vcmp.lt.s32.totalorder %v913, 0
        %v982 = vsub.s32 0, %v913
        %v983 = vsel %vm981, %v982, %v913
        %v984 = vshrl.u32 %v983, 4
        %v985 = vand.u32 %v983, 15
        %v986 = vsub.s32 0, %v985
        %v987 = vsel %vm981, %v986, %v985
        %vm988 = vcmp.lt.s32.totalorder %v914, 0
        %v989 = vsub.s32 0, %v914
        %v990 = vsel %vm988, %v989, %v914
        %v991 = vshrl.u32 %v990, 4
        %v992 = vand.u32 %v990, 15
        %v993 = vsub.s32 0, %v992
        %v994 = vsel %vm988, %v993, %v992
        %vm995 = vcmp.lt.s32.totalorder %v915, 0
        %v996 = vsub.s32 0, %v915
        %v997 = vsel %vm995, %v996, %v915
        %v998 = vshrl.u32 %v997, 4
        %v999 = vand.u32 %v997, 15
        %v1000 = vsub.s32 0, %v999
        %v1001 = vsel %vm995, %v1000, %v999
        %vm1002 = vcmp.lt.s32.totalorder %v916, 0
        %v1003 = vsub.s32 0, %v916
        %v1004 = vsel %vm1002, %v1003, %v916
        %v1005 = vshrl.u32 %v1004, 4
        %v1006 = vand.u32 %v1004, 15
        %v1007 = vsub.s32 0, %v1006
        %v1008 = vsel %vm1002, %v1007, %v1006
        %vm1009 = vcmp.lt.s32.totalorder %v917, 0
        %v1010 = vsub.s32 0, %v917
        %v1011 = vsel %vm1009, %v1010, %v917
        %v1012 = vshrl.u32 %v1011, 4
        %v1013 = vand.u32 %v1011, 15
        %v1014 = vsub.s32 0, %v1013
        %v1015 = vsel %vm1009, %v1014, %v1013
        %vm1016 = vcmp.lt.s32.totalorder %v918, 0
        %v1017 = vsub.s32 0, %v918
        %v1018 = vsel %vm1016, %v1017, %v918
        %v1019 = vshrl.u32 %v1018, 4
        %v1020 = vand.u32 %v1018, 15
        %v1021 = vsub.s32 0, %v1020
        %v1022 = vsel %vm1016, %v1021, %v1020
        %vm1023 = vcmp.lt.s32.totalorder %v919, 0
        %v1024 = vsub.s32 0, %v919
        %v1025 = vsel %vm1023, %v1024, %v919
        %v1026 = vshrl.u32 %v1025, 4
        %v1027 = vand.u32 %v1025, 15
        %v1028 = vsub.s32 0, %v1027
        %v1029 = vsel %vm1023, %v1028, %v1027
        %vm1030 = vcmp.lt.s32.totalorder %v920, 0
        %v1031 = vsub.s32 0, %v920
        %v1032 = vsel %vm1030, %v1031, %v920
        %v1033 = vshrl.u32 %v1032, 4
        %v1034 = vand.u32 %v1032, 15
        %v1035 = vsub.s32 0, %v1034
        %v1036 = vsel %vm1030, %v1035, %v1034
        %vm1037 = vcmp.lt.s32.totalorder %v921, 0
        %v1038 = vsub.s32 0, %v921
        %v1039 = vsel %vm1037, %v1038, %v921
        %v1040 = vshrl.u32 %v1039, 4
        %v1041 = vand.u32 %v1039, 15
        %v1042 = vsub.s32 0, %v1041
        %v1043 = vsel %vm1037, %v1042, %v1041
        %vm1044 = vcmp.lt.s32.totalorder %v922, 0
        %v1045 = vsub.s32 0, %v922
        %v1046 = vsel %vm1044, %v1045, %v922
        %v1047 = vshrl.u32 %v1046, 4
        %v1048 = vand.u32 %v1046, 15
        %v1049 = vsub.s32 0, %v1048
        %v1050 = vsel %vm1044, %v1049, %v1048
        %vm1051 = vcmp.lt.s32.totalorder %v923, 0
        %v1052 = vsub.s32 0, %v923
        %v1053 = vsel %vm1051, %v1052, %v923
        %v1054 = vshrl.u32 %v1053, 4
        %v1055 = vand.u32 %v1053, 15
        %v1056 = vsub.s32 0, %v1055
        %v1057 = vsel %vm1051, %v1056, %v1055
        %vm1058 = vcmp.lt.s32.totalorder %v924, 0
        %v1059 = vsub.s32 0, %v924
        %v1060 = vsel %vm1058, %v1059, %v924
        %v1061 = vshrl.u32 %v1060, 4
        %v1062 = vand.u32 %v1060, 15
        %v1063 = vsub.s32 0, %v1062
        %v1064 = vsel %vm1058, %v1063, %v1062
        %vm1065 = vcmp.lt.s32.totalorder %v925, 0
        %v1066 = vsub.s32 0, %v925
        %v1067 = vsel %vm1065, %v1066, %v925
        %v1068 = vshrl.u32 %v1067, 4
        %v1069 = vand.u32 %v1067, 15
        %v1070 = vsub.s32 0, %v1069
        %v1071 = vsel %vm1065, %v1070, %v1069
        %vm1072 = vcmp.lt.s32.totalorder %v926, 0
        %v1073 = vsub.s32 0, %v926
        %v1074 = vsel %vm1072, %v1073, %v926
        %v1075 = vshrl.u32 %v1074, 4
        %v1076 = vand.u32 %v1074, 15
        %v1077 = vsub.s32 0, %v1076
        %v1078 = vsel %vm1072, %v1077, %v1076
        %vm1079 = vcmp.lt.s32.totalorder %v927, 0
        %v1080 = vsub.s32 0, %v927
        %v1081 = vsel %vm1079, %v1080, %v927
        %v1082 = vshrl.u32 %v1081, 4
        %v1083 = vand.u32 %v1081, 15
        %v1084 = vsub.s32 0, %v1083
        %v1085 = vsel %vm1079, %v1084, %v1083
        %vm1086 = vcmp.lt.s32.totalorder %v928, 0
        %v1087 = vsub.s32 0, %v928
        %v1088 = vsel %vm1086, %v1087, %v928
        %v1089 = vshrl.u32 %v1088, 4
        %v1090 = vand.u32 %v1088, 15
        %v1091 = vsub.s32 0, %v1090
        %v1092 = vsel %vm1086, %v1091, %v1090
        %vm1093 = vcmp.lt.s32.totalorder %v929, 0
        %v1094 = vsub.s32 0, %v929
        %v1095 = vsel %vm1093, %v1094, %v929
        %v1096 = vshrl.u32 %v1095, 4
        %v1097 = vand.u32 %v1095, 15
        %v1098 = vsub.s32 0, %v1097
        %v1099 = vsel %vm1093, %v1098, %v1097
        %vm1100 = vcmp.lt.s32.totalorder %v930, 0
        %v1101 = vsub.s32 0, %v930
        %v1102 = vsel %vm1100, %v1101, %v930
        %v1103 = vshrl.u32 %v1102, 4
        %v1104 = vand.u32 %v1102, 15
        %v1105 = vsub.s32 0, %v1104
        %v1106 = vsel %vm1100, %v1105, %v1104
        %vm1107 = vcmp.lt.s32.totalorder %v931, 0
        %v1108 = vsub.s32 0, %v931
        %v1109 = vsel %vm1107, %v1108, %v931
        %v1110 = vshrl.u32 %v1109, 4
        %v1111 = vand.u32 %v1109, 15
        %v1112 = vsub.s32 0, %v1111
        %v1113 = vsel %vm1107, %v1112, %v1111
        %vm1114 = vcmp.lt.s32.totalorder %v932, 0
        %v1115 = vsub.s32 0, %v932
        %v1116 = vsel %vm1114, %v1115, %v932
        %v1117 = vshrl.u32 %v1116, 4
        %v1118 = vand.u32 %v1116, 15
        %v1119 = vsub.s32 0, %v1118
        %v1120 = vsel %vm1114, %v1119, %v1118
        %vm1121 = vcmp.lt.s32.totalorder %v933, 0
        %v1122 = vsub.s32 0, %v933
        %v1123 = vsel %vm1121, %v1122, %v933
        %v1124 = vshrl.u32 %v1123, 4
        %v1125 = vand.u32 %v1123, 15
        %v1126 = vsub.s32 0, %v1125
        %v1127 = vsel %vm1121, %v1126, %v1125
        %vm1128 = vcmp.lt.s32.totalorder %v934, 0
        %v1129 = vsub.s32 0, %v934
        %v1130 = vsel %vm1128, %v1129, %v934
        %v1131 = vshrl.u32 %v1130, 4
        %v1132 = vand.u32 %v1130, 15
        %v1133 = vsub.s32 0, %v1132
        %v1134 = vsel %vm1128, %v1133, %v1132
        %vm1135 = vcmp.lt.s32.totalorder %v935, 0
        %v1136 = vsub.s32 0, %v935
        %v1137 = vsel %vm1135, %v1136, %v935
        %v1138 = vshrl.u32 %v1137, 4
        %v1139 = vand.u32 %v1137, 15
        %v1140 = vsub.s32 0, %v1139
        %v1141 = vsel %vm1135, %v1140, %v1139
        %vm1142 = vcmp.lt.s32.totalorder %v936, 0
        %v1143 = vsub.s32 0, %v936
        %v1144 = vsel %vm1142, %v1143, %v936
        %v1145 = vshrl.u32 %v1144, 4
        %v1146 = vand.u32 %v1144, 15
        %v1147 = vsub.s32 0, %v1146
        %v1148 = vsel %vm1142, %v1147, %v1146
        %vm1149 = vcmp.lt.s32.totalorder %v937, 0
        %v1150 = vsub.s32 0, %v937
        %v1151 = vsel %vm1149, %v1150, %v937
        %v1152 = vshrl.u32 %v1151, 4
        %v1153 = vand.u32 %v1151, 15
        %v1154 = vsub.s32 0, %v1153
        %v1155 = vsel %vm1149, %v1154, %v1153
        %vm1156 = vcmp.lt.s32.totalorder %v938, 0
        %v1157 = vsub.s32 0, %v938
        %v1158 = vsel %vm1156, %v1157, %v938
        %v1159 = vshrl.u32 %v1158, 4
        %v1160 = vand.u32 %v1158, 15
        %v1161 = vsub.s32 0, %v1160
        %v1162 = vsel %vm1156, %v1161, %v1160
        %vm1163 = vcmp.ne.s32.totalorder %v945, 0
        %vm1164 = vcmp.ne.s32.totalorder %v952, 0
        %vm1165 = vcmp.ne.s32.totalorder %v959, 0
        %vm1166 = vcmp.ne.s32.totalorder %v966, 0
        %vm1167 = vcmp.ne.s32.totalorder %v973, 0
        %vm1168 = vcmp.ne.s32.totalorder %v980, 0
        %vm1169 = vcmp.ne.s32.totalorder %v987, 0
        %vm1170 = vcmp.ne.s32.totalorder %v994, 0
        %vm1171 = vcmp.ne.s32.totalorder %v1001, 0
        %vm1172 = vcmp.ne.s32.totalorder %v1008, 0
        %vm1173 = vcmp.ne.s32.totalorder %v1015, 0
        %vm1174 = vcmp.ne.s32.totalorder %v1022, 0
        %vm1175 = vcmp.ne.s32.totalorder %v1029, 0
        %vm1176 = vcmp.ne.s32.totalorder %v1036, 0
        %vm1177 = vcmp.ne.s32.totalorder %v1043, 0
        %vm1178 = vcmp.ne.s32.totalorder %v1050, 0
        %vm1179 = vcmp.ne.s32.totalorder %v1057, 0
        %vm1180 = vcmp.ne.s32.totalorder %v1064, 0
        %vm1181 = vcmp.ne.s32.totalorder %v1071, 0
        %vm1182 = vcmp.ne.s32.totalorder %v1078, 0
        %vm1183 = vcmp.ne.s32.totalorder %v1085, 0
        %vm1184 = vcmp.ne.s32.totalorder %v1092, 0
        %vm1185 = vcmp.ne.s32.totalorder %v1099, 0
        %vm1186 = vcmp.ne.s32.totalorder %v1106, 0
        %vm1187 = vcmp.ne.s32.totalorder %v1113, 0
        %vm1188 = vcmp.ne.s32.totalorder %v1120, 0
        %vm1189 = vcmp.ne.s32.totalorder %v1127, 0
        %vm1190 = vcmp.ne.s32.totalorder %v1134, 0
        %vm1191 = vcmp.ne.s32.totalorder %v1141, 0
        %vm1192 = vcmp.ne.s32.totalorder %v1148, 0
        %vm1193 = vcmp.ne.s32.totalorder %v1155, 0
        %vm1194 = vcmp.ne.s32.totalorder %v1162, 0
        %vm1195 = vcmp.lt.s32.totalorder %v945, 0
        %vm1196 = vcmp.lt.s32.totalorder %v952, 0
        %vm1197 = vcmp.lt.s32.totalorder %v959, 0
        %vm1198 = vcmp.lt.s32.totalorder %v966, 0
        %vm1199 = vcmp.lt.s32.totalorder %v973, 0
        %vm1200 = vcmp.lt.s32.totalorder %v980, 0
        %vm1201 = vcmp.lt.s32.totalorder %v987, 0
        %vm1202 = vcmp.lt.s32.totalorder %v994, 0
        %vm1203 = vcmp.lt.s32.totalorder %v1001, 0
        %vm1204 = vcmp.lt.s32.totalorder %v1008, 0
        %vm1205 = vcmp.lt.s32.totalorder %v1015, 0
        %vm1206 = vcmp.lt.s32.totalorder %v1022, 0
        %vm1207 = vcmp.lt.s32.totalorder %v1029, 0
        %vm1208 = vcmp.lt.s32.totalorder %v1036, 0
        %vm1209 = vcmp.lt.s32.totalorder %v1043, 0
        %vm1210 = vcmp.lt.s32.totalorder %v1050, 0
        %vm1211 = vcmp.lt.s32.totalorder %v1057, 0
        %vm1212 = vcmp.lt.s32.totalorder %v1064, 0
        %vm1213 = vcmp.lt.s32.totalorder %v1071, 0
        %vm1214 = vcmp.lt.s32.totalorder %v1078, 0
        %vm1215 = vcmp.lt.s32.totalorder %v1085, 0
        %vm1216 = vcmp.lt.s32.totalorder %v1092, 0
        %vm1217 = vcmp.lt.s32.totalorder %v1099, 0
        %vm1218 = vcmp.lt.s32.totalorder %v1106, 0
        %vm1219 = vcmp.lt.s32.totalorder %v1113, 0
        %vm1220 = vcmp.lt.s32.totalorder %v1120, 0
        %vm1221 = vcmp.lt.s32.totalorder %v1127, 0
        %vm1222 = vcmp.lt.s32.totalorder %v1134, 0
        %vm1223 = vcmp.lt.s32.totalorder %v1141, 0
        %vm1224 = vcmp.lt.s32.totalorder %v1148, 0
        %vm1225 = vcmp.lt.s32.totalorder %v1155, 0
        %vm1226 = vcmp.lt.s32.totalorder %v1162, 0
        %vm1227 = vmand %vm1195, %vm1163
        %vm1228 = vmand %vm1196, %vm1164
        %vm1229 = vmand %vm1197, %vm1165
        %vm1230 = vmand %vm1198, %vm1166
        %vm1231 = vmand %vm1199, %vm1167
        %vm1232 = vmand %vm1200, %vm1168
        %vm1233 = vmand %vm1201, %vm1169
        %vm1234 = vmand %vm1202, %vm1170
        %vm1235 = vmand %vm1203, %vm1171
        %vm1236 = vmand %vm1204, %vm1172
        %vm1237 = vmand %vm1205, %vm1173
        %vm1238 = vmand %vm1206, %vm1174
        %vm1239 = vmand %vm1207, %vm1175
        %vm1240 = vmand %vm1208, %vm1176
        %vm1241 = vmand %vm1209, %vm1177
        %vm1242 = vmand %vm1210, %vm1178
        %vm1243 = vmand %vm1211, %vm1179
        %vm1244 = vmand %vm1212, %vm1180
        %vm1245 = vmand %vm1213, %vm1181
        %vm1246 = vmand %vm1214, %vm1182
        %vm1247 = vmand %vm1215, %vm1183
        %vm1248 = vmand %vm1216, %vm1184
        %vm1249 = vmand %vm1217, %vm1185
        %vm1250 = vmand %vm1218, %vm1186
        %vm1251 = vmand %vm1219, %vm1187
        %vm1252 = vmand %vm1220, %vm1188
        %vm1253 = vmand %vm1221, %vm1189
        %vm1254 = vmand %vm1222, %vm1190
        %vm1255 = vmand %vm1223, %vm1191
        %vm1256 = vmand %vm1224, %vm1192
        %vm1257 = vmand %vm1225, %vm1193
        %vm1258 = vmand %vm1226, %vm1194
        %v1259 = vadd.s32 %v945, 16
        %v1260 = vadd.s32 %v952, 16
        %v1261 = vadd.s32 %v959, 16
        %v1262 = vadd.s32 %v966, 16
        %v1263 = vadd.s32 %v973, 16
        %v1264 = vadd.s32 %v980, 16
        %v1265 = vadd.s32 %v987, 16
        %v1266 = vadd.s32 %v994, 16
        %v1267 = vadd.s32 %v1001, 16
        %v1268 = vadd.s32 %v1008, 16
        %v1269 = vadd.s32 %v1015, 16
        %v1270 = vadd.s32 %v1022, 16
        %v1271 = vadd.s32 %v1029, 16
        %v1272 = vadd.s32 %v1036, 16
        %v1273 = vadd.s32 %v1043, 16
        %v1274 = vadd.s32 %v1050, 16
        %v1275 = vadd.s32 %v1057, 16
        %v1276 = vadd.s32 %v1064, 16
        %v1277 = vadd.s32 %v1071, 16
        %v1278 = vadd.s32 %v1078, 16
        %v1279 = vadd.s32 %v1085, 16
        %v1280 = vadd.s32 %v1092, 16
        %v1281 = vadd.s32 %v1099, 16
        %v1282 = vadd.s32 %v1106, 16
        %v1283 = vadd.s32 %v1113, 16
        %v1284 = vadd.s32 %v1120, 16
        %v1285 = vadd.s32 %v1127, 16
        %v1286 = vadd.s32 %v1134, 16
        %v1287 = vadd.s32 %v1141, 16
        %v1288 = vadd.s32 %v1148, 16
        %v1289 = vadd.s32 %v1155, 16
        %v1290 = vadd.s32 %v1162, 16
        %v1291 = vsel %vm1227, %v1259, %v945
        %v1292 = vsel %vm1228, %v1260, %v952
        %v1293 = vsel %vm1229, %v1261, %v959
        %v1294 = vsel %vm1230, %v1262, %v966
        %v1295 = vsel %vm1231, %v1263, %v973
        %v1296 = vsel %vm1232, %v1264, %v980
        %v1297 = vsel %vm1233, %v1265, %v987
        %v1298 = vsel %vm1234, %v1266, %v994
        %v1299 = vsel %vm1235, %v1267, %v1001
        %v1300 = vsel %vm1236, %v1268, %v1008
        %v1301 = vsel %vm1237, %v1269, %v1015
        %v1302 = vsel %vm1238, %v1270, %v1022
        %v1303 = vsel %vm1239, %v1271, %v1029
        %v1304 = vsel %vm1240, %v1272, %v1036
        %v1305 = vsel %vm1241, %v1273, %v1043
        %v1306 = vsel %vm1242, %v1274, %v1050
        %v1307 = vsel %vm1243, %v1275, %v1057
        %v1308 = vsel %vm1244, %v1276, %v1064
        %v1309 = vsel %vm1245, %v1277, %v1071
        %v1310 = vsel %vm1246, %v1278, %v1078
        %v1311 = vsel %vm1247, %v1279, %v1085
        %v1312 = vsel %vm1248, %v1280, %v1092
        %v1313 = vsel %vm1249, %v1281, %v1099
        %v1314 = vsel %vm1250, %v1282, %v1106
        %v1315 = vsel %vm1251, %v1283, %v1113
        %v1316 = vsel %vm1252, %v1284, %v1120
        %v1317 = vsel %vm1253, %v1285, %v1127
        %v1318 = vsel %vm1254, %v1286, %v1134
        %v1319 = vsel %vm1255, %v1287, %v1141
        %v1320 = vsel %vm1256, %v1288, %v1148
        %v1321 = vsel %vm1257, %v1289, %v1155
        %v1322 = vsel %vm1258, %v1290, %v1162
        %vm1323 = vcmp.ne.s32.totalorder %v1291, 0
        %vm1324 = vcmp.ne.s32.totalorder %v1292, 0
        %vm1325 = vcmp.ne.s32.totalorder %v1293, 0
        %vm1326 = vcmp.ne.s32.totalorder %v1294, 0
        %vm1327 = vcmp.ne.s32.totalorder %v1295, 0
        %vm1328 = vcmp.ne.s32.totalorder %v1296, 0
        %vm1329 = vcmp.ne.s32.totalorder %v1297, 0
        %vm1330 = vcmp.ne.s32.totalorder %v1298, 0
        %vm1331 = vcmp.ne.s32.totalorder %v1299, 0
        %vm1332 = vcmp.ne.s32.totalorder %v1300, 0
        %vm1333 = vcmp.ne.s32.totalorder %v1301, 0
        %vm1334 = vcmp.ne.s32.totalorder %v1302, 0
        %vm1335 = vcmp.ne.s32.totalorder %v1303, 0
        %vm1336 = vcmp.ne.s32.totalorder %v1304, 0
        %vm1337 = vcmp.ne.s32.totalorder %v1305, 0
        %vm1338 = vcmp.ne.s32.totalorder %v1306, 0
        %vm1339 = vcmp.ne.s32.totalorder %v1307, 0
        %vm1340 = vcmp.ne.s32.totalorder %v1308, 0
        %vm1341 = vcmp.ne.s32.totalorder %v1309, 0
        %vm1342 = vcmp.ne.s32.totalorder %v1310, 0
        %vm1343 = vcmp.ne.s32.totalorder %v1311, 0
        %vm1344 = vcmp.ne.s32.totalorder %v1312, 0
        %vm1345 = vcmp.ne.s32.totalorder %v1313, 0
        %vm1346 = vcmp.ne.s32.totalorder %v1314, 0
        %vm1347 = vcmp.ne.s32.totalorder %v1315, 0
        %vm1348 = vcmp.ne.s32.totalorder %v1316, 0
        %vm1349 = vcmp.ne.s32.totalorder %v1317, 0
        %vm1350 = vcmp.ne.s32.totalorder %v1318, 0
        %vm1351 = vcmp.ne.s32.totalorder %v1319, 0
        %vm1352 = vcmp.ne.s32.totalorder %v1320, 0
        %vm1353 = vcmp.ne.s32.totalorder %v1321, 0
        %vm1354 = vcmp.ne.s32.totalorder %v1322, 0
        %v1355 = vsel %vm1323, 1, 0
        %v1356 = vsel %vm1324, 1, 0
        %v1357 = vsel %vm1325, 1, 0
        %v1358 = vsel %vm1326, 1, 0
        %v1359 = vsel %vm1327, 1, 0
        %v1360 = vsel %vm1328, 1, 0
        %v1361 = vsel %vm1329, 1, 0
        %v1362 = vsel %vm1330, 1, 0
        %v1363 = vsel %vm1331, 1, 0
        %v1364 = vsel %vm1332, 1, 0
        %v1365 = vsel %vm1333, 1, 0
        %v1366 = vsel %vm1334, 1, 0
        %v1367 = vsel %vm1335, 1, 0
        %v1368 = vsel %vm1336, 1, 0
        %v1369 = vsel %vm1337, 1, 0
        %v1370 = vsel %vm1338, 1, 0
        %v1371 = vsel %vm1339, 1, 0
        %v1372 = vsel %vm1340, 1, 0
        %v1373 = vsel %vm1341, 1, 0
        %v1374 = vsel %vm1342, 1, 0
        %v1375 = vsel %vm1343, 1, 0
        %v1376 = vsel %vm1344, 1, 0
        %v1377 = vsel %vm1345, 1, 0
        %v1378 = vsel %vm1346, 1, 0
        %v1379 = vsel %vm1347, 1, 0
        %v1380 = vsel %vm1348, 1, 0
        %v1381 = vsel %vm1349, 1, 0
        %v1382 = vsel %vm1350, 1, 0
        %v1383 = vsel %vm1351, 1, 0
        %v1384 = vsel %vm1352, 1, 0
        %v1385 = vsel %vm1353, 1, 0
        %v1386 = vsel %vm1354, 1, 0
        %vm1387 = vcmp.eq.s32.totalorder %v1355, 1
        %vm1388 = vcmp.eq.s32.totalorder %v1356, 1
        %vm1389 = vcmp.eq.s32.totalorder %v1357, 1
        %vm1390 = vcmp.eq.s32.totalorder %v1358, 1
        %vm1391 = vcmp.eq.s32.totalorder %v1359, 1
        %vm1392 = vcmp.eq.s32.totalorder %v1360, 1
        %vm1393 = vcmp.eq.s32.totalorder %v1361, 1
        %vm1394 = vcmp.eq.s32.totalorder %v1362, 1
        %vm1395 = vcmp.eq.s32.totalorder %v1363, 1
        %vm1396 = vcmp.eq.s32.totalorder %v1364, 1
        %vm1397 = vcmp.eq.s32.totalorder %v1365, 1
        %vm1398 = vcmp.eq.s32.totalorder %v1366, 1
        %vm1399 = vcmp.eq.s32.totalorder %v1367, 1
        %vm1400 = vcmp.eq.s32.totalorder %v1368, 1
        %vm1401 = vcmp.eq.s32.totalorder %v1369, 1
        %vm1402 = vcmp.eq.s32.totalorder %v1370, 1
        %vm1403 = vcmp.eq.s32.totalorder %v1371, 1
        %vm1404 = vcmp.eq.s32.totalorder %v1372, 1
        %vm1405 = vcmp.eq.s32.totalorder %v1373, 1
        %vm1406 = vcmp.eq.s32.totalorder %v1374, 1
        %vm1407 = vcmp.eq.s32.totalorder %v1375, 1
        %vm1408 = vcmp.eq.s32.totalorder %v1376, 1
        %vm1409 = vcmp.eq.s32.totalorder %v1377, 1
        %vm1410 = vcmp.eq.s32.totalorder %v1378, 1
        %vm1411 = vcmp.eq.s32.totalorder %v1379, 1
        %vm1412 = vcmp.eq.s32.totalorder %v1380, 1
        %vm1413 = vcmp.eq.s32.totalorder %v1381, 1
        %vm1414 = vcmp.eq.s32.totalorder %v1382, 1
        %vm1415 = vcmp.eq.s32.totalorder %v1383, 1
        %vm1416 = vcmp.eq.s32.totalorder %v1384, 1
        %vm1417 = vcmp.eq.s32.totalorder %v1385, 1
        %vm1418 = vcmp.eq.s32.totalorder %v1386, 1
        %vm1419 = vcmp.ne.s32.totalorder %v1291, 15
        %vm1420 = vcmp.ne.s32.totalorder %v1292, 15
        %vm1421 = vcmp.ne.s32.totalorder %v1293, 15
        %vm1422 = vcmp.ne.s32.totalorder %v1294, 15
        %vm1423 = vcmp.ne.s32.totalorder %v1295, 15
        %vm1424 = vcmp.ne.s32.totalorder %v1296, 15
        %vm1425 = vcmp.ne.s32.totalorder %v1297, 15
        %vm1426 = vcmp.ne.s32.totalorder %v1298, 15
        %vm1427 = vcmp.ne.s32.totalorder %v1299, 15
        %vm1428 = vcmp.ne.s32.totalorder %v1300, 15
        %vm1429 = vcmp.ne.s32.totalorder %v1301, 15
        %vm1430 = vcmp.ne.s32.totalorder %v1302, 15
        %vm1431 = vcmp.ne.s32.totalorder %v1303, 15
        %vm1432 = vcmp.ne.s32.totalorder %v1304, 15
        %vm1433 = vcmp.ne.s32.totalorder %v1305, 15
        %vm1434 = vcmp.ne.s32.totalorder %v1306, 15
        %vm1435 = vcmp.ne.s32.totalorder %v1307, 15
        %vm1436 = vcmp.ne.s32.totalorder %v1308, 15
        %vm1437 = vcmp.ne.s32.totalorder %v1309, 15
        %vm1438 = vcmp.ne.s32.totalorder %v1310, 15
        %vm1439 = vcmp.ne.s32.totalorder %v1311, 15
        %vm1440 = vcmp.ne.s32.totalorder %v1312, 15
        %vm1441 = vcmp.ne.s32.totalorder %v1313, 15
        %vm1442 = vcmp.ne.s32.totalorder %v1314, 15
        %vm1443 = vcmp.ne.s32.totalorder %v1315, 15
        %vm1444 = vcmp.ne.s32.totalorder %v1316, 15
        %vm1445 = vcmp.ne.s32.totalorder %v1317, 15
        %vm1446 = vcmp.ne.s32.totalorder %v1318, 15
        %vm1447 = vcmp.ne.s32.totalorder %v1319, 15
        %vm1448 = vcmp.ne.s32.totalorder %v1320, 15
        %vm1449 = vcmp.ne.s32.totalorder %v1321, 15
        %vm1450 = vcmp.ne.s32.totalorder %v1322, 15
        %v1451 = vsel %vm1419, 1, 0
        %v1452 = vsel %vm1420, 1, 0
        %v1453 = vsel %vm1421, 1, 0
        %v1454 = vsel %vm1422, 1, 0
        %v1455 = vsel %vm1423, 1, 0
        %v1456 = vsel %vm1424, 1, 0
        %v1457 = vsel %vm1425, 1, 0
        %v1458 = vsel %vm1426, 1, 0
        %v1459 = vsel %vm1427, 1, 0
        %v1460 = vsel %vm1428, 1, 0
        %v1461 = vsel %vm1429, 1, 0
        %v1462 = vsel %vm1430, 1, 0
        %v1463 = vsel %vm1431, 1, 0
        %v1464 = vsel %vm1432, 1, 0
        %v1465 = vsel %vm1433, 1, 0
        %v1466 = vsel %vm1434, 1, 0
        %v1467 = vsel %vm1435, 1, 0
        %v1468 = vsel %vm1436, 1, 0
        %v1469 = vsel %vm1437, 1, 0
        %v1470 = vsel %vm1438, 1, 0
        %v1471 = vsel %vm1439, 1, 0
        %v1472 = vsel %vm1440, 1, 0
        %v1473 = vsel %vm1441, 1, 0
        %v1474 = vsel %vm1442, 1, 0
        %v1475 = vsel %vm1443, 1, 0
        %v1476 = vsel %vm1444, 1, 0
        %v1477 = vsel %vm1445, 1, 0
        %v1478 = vsel %vm1446, 1, 0
        %v1479 = vsel %vm1447, 1, 0
        %v1480 = vsel %vm1448, 1, 0
        %v1481 = vsel %vm1449, 1, 0
        %v1482 = vsel %vm1450, 1, 0
        %vm1483 = vcmp.eq.s32.totalorder %v1451, 1
        %vm1484 = vcmp.eq.s32.totalorder %v1452, 1
        %vm1485 = vcmp.eq.s32.totalorder %v1453, 1
        %vm1486 = vcmp.eq.s32.totalorder %v1454, 1
        %vm1487 = vcmp.eq.s32.totalorder %v1455, 1
        %vm1488 = vcmp.eq.s32.totalorder %v1456, 1
        %vm1489 = vcmp.eq.s32.totalorder %v1457, 1
        %vm1490 = vcmp.eq.s32.totalorder %v1458, 1
        %vm1491 = vcmp.eq.s32.totalorder %v1459, 1
        %vm1492 = vcmp.eq.s32.totalorder %v1460, 1
        %vm1493 = vcmp.eq.s32.totalorder %v1461, 1
        %vm1494 = vcmp.eq.s32.totalorder %v1462, 1
        %vm1495 = vcmp.eq.s32.totalorder %v1463, 1
        %vm1496 = vcmp.eq.s32.totalorder %v1464, 1
        %vm1497 = vcmp.eq.s32.totalorder %v1465, 1
        %vm1498 = vcmp.eq.s32.totalorder %v1466, 1
        %vm1499 = vcmp.eq.s32.totalorder %v1467, 1
        %vm1500 = vcmp.eq.s32.totalorder %v1468, 1
        %vm1501 = vcmp.eq.s32.totalorder %v1469, 1
        %vm1502 = vcmp.eq.s32.totalorder %v1470, 1
        %vm1503 = vcmp.eq.s32.totalorder %v1471, 1
        %vm1504 = vcmp.eq.s32.totalorder %v1472, 1
        %vm1505 = vcmp.eq.s32.totalorder %v1473, 1
        %vm1506 = vcmp.eq.s32.totalorder %v1474, 1
        %vm1507 = vcmp.eq.s32.totalorder %v1475, 1
        %vm1508 = vcmp.eq.s32.totalorder %v1476, 1
        %vm1509 = vcmp.eq.s32.totalorder %v1477, 1
        %vm1510 = vcmp.eq.s32.totalorder %v1478, 1
        %vm1511 = vcmp.eq.s32.totalorder %v1479, 1
        %vm1512 = vcmp.eq.s32.totalorder %v1480, 1
        %vm1513 = vcmp.eq.s32.totalorder %v1481, 1
        %vm1514 = vcmp.eq.s32.totalorder %v1482, 1
        %v1515 = vld [vmem:[#allocation3] sm:$0xff]
        %v1516 = vld [vmem:[#allocation3 + $0x8] sm:$0xff]
        %v1517 = vld [vmem:[#allocation3 + $0x10] sm:$0xff]
        %v1518 = vld [vmem:[#allocation3 + $0x18] sm:$0xff]
        %v1519 = vld [vmem:[#allocation3 + $0x20] sm:$0xff]
        %v1520 = vld [vmem:[#allocation3 + $0x28] sm:$0xff]
        %v1521 = vld [vmem:[#allocation3 + $0x30] sm:$0xff]
        %v1522 = vld [vmem:[#allocation3 + $0x38] sm:$0xff]
        %v1523 = vld [vmem:[#allocation3 + $0x40] sm:$0xff]
        %v1524 = vld [vmem:[#allocation3 + $0x48] sm:$0xff]
        %v1525 = vld [vmem:[#allocation3 + $0x50] sm:$0xff]
        %v1526 = vld [vmem:[#allocation3 + $0x58] sm:$0xff]
        %v1527 = vld [vmem:[#allocation3 + $0x60] sm:$0xff]
        %v1528 = vld [vmem:[#allocation3 + $0x68] sm:$0xff]
        %v1529 = vld [vmem:[#allocation3 + $0x70] sm:$0xff]
        %v1530 = vld [vmem:[#allocation3 + $0x78] sm:$0xff]
        %v1531 = vld [vmem:[#allocation3 + $0x80] sm:$0xff]
        %v1532 = vld [vmem:[#allocation3 + $0x88] sm:$0xff]
        %v1533 = vld [vmem:[#allocation3 + $0x90] sm:$0xff]
        %v1534 = vld [vmem:[#allocation3 + $0x98] sm:$0xff]
        %v1535 = vld [vmem:[#allocation3 + $0xa0] sm:$0xff]
        %v1536 = vld [vmem:[#allocation3 + $0xa8] sm:$0xff]
        %v1537 = vld [vmem:[#allocation3 + $0xb0] sm:$0xff]
        %v1538 = vld [vmem:[#allocation3 + $0xb8] sm:$0xff]
        %v1539 = vld [vmem:[#allocation3 + $0xc0] sm:$0xff]
        %v1540 = vld [vmem:[#allocation3 + $0xc8] sm:$0xff]
        %v1541 = vld [vmem:[#allocation3 + $0xd0] sm:$0xff]
        %v1542 = vld [vmem:[#allocation3 + $0xd8] sm:$0xff]
        %v1543 = vld [vmem:[#allocation3 + $0xe0] sm:$0xff]
        %v1544 = vld [vmem:[#allocation3 + $0xe8] sm:$0xff]
        %v1545 = vld [vmem:[#allocation3 + $0xf0] sm:$0xff]
        %v1546 = vld [vmem:[#allocation3 + $0xf8] sm:$0xff]
        %v1547 = vrot.slane %v1515, 7
        %v1548 = vrot.slane %v1516, 7
        %v1549 = vrot.slane %v1517, 7
        %v1550 = vrot.slane %v1518, 7
        %v1551 = vrot.slane %v1519, 7
        %v1552 = vrot.slane %v1520, 7
        %v1553 = vrot.slane %v1521, 7
        %v1554 = vrot.slane %v1522, 7
        %v1555 = vrot.slane %v1523, 7
        %v1556 = vrot.slane %v1524, 7
        %v1557 = vrot.slane %v1525, 7
        %v1558 = vrot.slane %v1526, 7
        %v1559 = vrot.slane %v1527, 7
        %v1560 = vrot.slane %v1528, 7
        %v1561 = vrot.slane %v1529, 7
        %v1562 = vrot.slane %v1530, 7
        %v1563 = vrot.slane %v1531, 7
        %v1564 = vrot.slane %v1532, 7
        %v1565 = vrot.slane %v1533, 7
        %v1566 = vrot.slane %v1534, 7
        %v1567 = vrot.slane %v1535, 7
        %v1568 = vrot.slane %v1536, 7
        %v1569 = vrot.slane %v1537, 7
        %v1570 = vrot.slane %v1538, 7
        %v1571 = vrot.slane %v1539, 7
        %v1572 = vrot.slane %v1540, 7
        %v1573 = vrot.slane %v1541, 7
        %v1574 = vrot.slane %v1542, 7
        %v1575 = vrot.slane %v1543, 7
        %v1576 = vrot.slane %v1544, 7
        %v1577 = vrot.slane %v1545, 7
        %v1578 = vrot.slane %v1546, 7
        %vm1579 = vcmp.lt.s32.totalorder %v907, 1
        %v1580 = vsel %vm1579, %v1577, %v1578
        %v1581 = vsel %vm1579, %v1576, %v1577
        %v1582 = vsel %vm1579, %v1575, %v1576
        %v1583 = vsel %vm1579, %v1574, %v1575
        %v1584 = vsel %vm1579, %v1573, %v1574
        %v1585 = vsel %vm1579, %v1572, %v1573
        %v1586 = vsel %vm1579, %v1571, %v1572
        %v1587 = vsel %vm1579, %v1570, %v1571
        %v1588 = vsel %vm1579, %v1569, %v1570
        %v1589 = vsel %vm1579, %v1568, %v1569
        %v1590 = vsel %vm1579, %v1567, %v1568
        %v1591 = vsel %vm1579, %v1566, %v1567
        %v1592 = vsel %vm1579, %v1565, %v1566
        %v1593 = vsel %vm1579, %v1564, %v1565
        %v1594 = vsel %vm1579, %v1563, %v1564
        %v1595 = vsel %vm1579, %v1562, %v1563
        %v1596 = vsel %vm1579, %v1561, %v1562
        %v1597 = vsel %vm1579, %v1560, %v1561
        %v1598 = vsel %vm1579, %v1559, %v1560
        %v1599 = vsel %vm1579, %v1558, %v1559
        %v1600 = vsel %vm1579, %v1557, %v1558
        %v1601 = vsel %vm1579, %v1556, %v1557
        %v1602 = vsel %vm1579, %v1555, %v1556
        %v1603 = vsel %vm1579, %v1554, %v1555
        %v1604 = vsel %vm1579, %v1553, %v1554
        %v1605 = vsel %vm1579, %v1552, %v1553
        %v1606 = vsel %vm1579, %v1551, %v1552
        %v1607 = vsel %vm1579, %v1550, %v1551
        %v1608 = vsel %vm1579, %v1549, %v1550
        %v1609 = vsel %vm1579, %v1548, %v1549
        %v1610 = vsel %vm1579, %v1547, %v1548
        %v1611 = vsel %vm1579, %v1578, %v1547
        %v1612 = vsel %vm1387, %v1611, 0.0
        %v1613 = vsel %vm1388, %v1610, 0.0
        %v1614 = vsel %vm1389, %v1609, 0.0
        %v1615 = vsel %vm1390, %v1608, 0.0
        %v1616 = vsel %vm1391, %v1607, 0.0
        %v1617 = vsel %vm1392, %v1606, 0.0
        %v1618 = vsel %vm1393, %v1605, 0.0
        %v1619 = vsel %vm1394, %v1604, 0.0
        %v1620 = vsel %vm1395, %v1603, 0.0
        %v1621 = vsel %vm1396, %v1602, 0.0
        %v1622 = vsel %vm1397, %v1601, 0.0
        %v1623 = vsel %vm1398, %v1600, 0.0
        %v1624 = vsel %vm1399, %v1599, 0.0
        %v1625 = vsel %vm1400, %v1598, 0.0
        %v1626 = vsel %vm1401, %v1597, 0.0
        %v1627 = vsel %vm1402, %v1596, 0.0
        %v1628 = vsel %vm1403, %v1595, 0.0
        %v1629 = vsel %vm1404, %v1594, 0.0
        %v1630 = vsel %vm1405, %v1593, 0.0
        %v1631 = vsel %vm1406, %v1592, 0.0
        %v1632 = vsel %vm1407, %v1591, 0.0
        %v1633 = vsel %vm1408, %v1590, 0.0
        %v1634 = vsel %vm1409, %v1589, 0.0
        %v1635 = vsel %vm1410, %v1588, 0.0
        %v1636 = vsel %vm1411, %v1587, 0.0
        %v1637 = vsel %vm1412, %v1586, 0.0
        %v1638 = vsel %vm1413, %v1585, 0.0
        %v1639 = vsel %vm1414, %v1584, 0.0
        %v1640 = vsel %vm1415, %v1583, 0.0
        %v1641 = vsel %vm1416, %v1582, 0.0
        %v1642 = vsel %vm1417, %v1581, 0.0
        %v1643 = vsel %vm1418, %v1580, 0.0
        %v1644 = vpack.c.bf16 %v1613, %v1612
        %v1645 = vpack.c.bf16 %v1615, %v1614
        %v1646 = vpack.c.bf16 %v1617, %v1616
        %v1647 = vpack.c.bf16 %v1619, %v1618
        %v1648 = vpack.c.bf16 %v1621, %v1620
        %v1649 = vpack.c.bf16 %v1623, %v1622
        %v1650 = vpack.c.bf16 %v1625, %v1624
        %v1651 = vpack.c.bf16 %v1627, %v1626
        %v1652 = vpack.c.bf16 %v1629, %v1628
        %v1653 = vpack.c.bf16 %v1631, %v1630
        %v1654 = vpack.c.bf16 %v1633, %v1632
        %v1655 = vpack.c.bf16 %v1635, %v1634
        %v1656 = vpack.c.bf16 %v1637, %v1636
        %v1657 = vpack.c.bf16 %v1639, %v1638
        %v1658 = vpack.c.bf16 %v1641, %v1640
        %v1659 = vpack.c.bf16 %v1643, %v1642
        %v1660 = vld [vmem:[#allocation5] sm:$0xf]
        %v1661 = vld [vmem:[#allocation5 + $0x4] sm:$0xf]
        %v1662 = vld [vmem:[#allocation5 + $0x8] sm:$0xf]
        %v1663 = vld [vmem:[#allocation5 + $0xc] sm:$0xf]
        %v1664 = vld [vmem:[#allocation5 + $0x10] sm:$0xf]
        %v1665 = vld [vmem:[#allocation5 + $0x14] sm:$0xf]
        %v1666 = vld [vmem:[#allocation5 + $0x18] sm:$0xf]
        %v1667 = vld [vmem:[#allocation5 + $0x1c] sm:$0xf]
        %v1668 = vld [vmem:[#allocation5 + $0x20] sm:$0xf]
        %v1669 = vld [vmem:[#allocation5 + $0x24] sm:$0xf]
        %v1670 = vld [vmem:[#allocation5 + $0x28] sm:$0xf]
        %v1671 = vld [vmem:[#allocation5 + $0x2c] sm:$0xf]
        %v1672 = vld [vmem:[#allocation5 + $0x30] sm:$0xf]
        %v1673 = vld [vmem:[#allocation5 + $0x34] sm:$0xf]
        %v1674 = vld [vmem:[#allocation5 + $0x38] sm:$0xf]
        %v1675 = vld [vmem:[#allocation5 + $0x3c] sm:$0xf]
        %v1692 = vunpack.c.l.b16 %v1660
        %v1693 = vunpack.c.l.b16 %v1661
        %v1694 = vunpack.c.l.b16 %v1662
        %v1695 = vunpack.c.l.b16 %v1663
        %v1696 = vunpack.c.l.b16 %v1664
        %v1697 = vunpack.c.l.b16 %v1665
        %v1698 = vunpack.c.l.b16 %v1666
        %v1699 = vunpack.c.l.b16 %v1667
        %v1700 = vunpack.c.l.b16 %v1668
        %v1701 = vunpack.c.l.b16 %v1669
        %v1702 = vunpack.c.l.b16 %v1670
        %v1703 = vunpack.c.l.b16 %v1671
        %v1704 = vunpack.c.l.b16 %v1672
        %v1705 = vunpack.c.l.b16 %v1673
        %v1706 = vunpack.c.l.b16 %v1674
        %v1707 = vunpack.c.l.b16 %v1675
        %v1708 = vpack.c.b16 %v1693, %v1692
        %v1709 = vpack.c.b16 %v1695, %v1694
        %v1710 = vpack.c.b16 %v1697, %v1696
        %v1711 = vpack.c.b16 %v1699, %v1698
        %v1712 = vpack.c.b16 %v1701, %v1700
        %v1713 = vpack.c.b16 %v1703, %v1702
        %v1714 = vpack.c.b16 %v1705, %v1704
        %v1715 = vpack.c.b16 %v1707, %v1706
        %1724 = vmatprep.subr.bf16.mxu0 0
        %1725 = vmatpush1.bf16.msra.mxu0 %v1708
        %1726 = vmatprep.subr.bf16.mxu0 0
        %1727 = vmatpush1.bf16.msra.mxu0 %v1709
        %1728 = vmatprep.subr.bf16.mxu0 0
        %1729 = vmatpush1.bf16.msra.mxu0 %v1710
        %1730 = vmatprep.subr.bf16.mxu0 0
        %1731 = vmatpush1.bf16.msra.mxu0 %v1711
        %1732 = vmatprep.subr.bf16.mxu0 0
        %1733 = vmatpush1.bf16.msra.mxu0 %v1712
        %1734 = vmatprep.subr.bf16.mxu0 0
        %1735 = vmatpush1.bf16.msra.mxu0 %v1713
        %1736 = vmatprep.subr.bf16.mxu0 0
        %1737 = vmatpush1.bf16.msra.mxu0 %v1714
        %1738 = vmatprep.subr.bf16.mxu0 0
        %1739 = vmatpush1.bf16.msra.mxu0 %v1715
        %1740 = vmatprep.subr.bf16.mxu0 0
        %1741 = vmatpush1.bf16.msra.mxu0 0
        %1742 = vmatprep.subr.bf16.mxu0 0
        %1743 = vmatpush1.bf16.msra.mxu0 0
        %1744 = vmatprep.subr.bf16.mxu0 0
        %1745 = vmatpush1.bf16.msra.mxu0 0
        %1746 = vmatprep.subr.bf16.mxu0 0
        %1747 = vmatpush1.bf16.msra.mxu0 0
        %1748 = vmatprep.subr.bf16.mxu0 0
        %1749 = vmatpush1.bf16.msra.mxu0 0
        %1750 = vmatprep.subr.bf16.mxu0 0
        %1751 = vmatpush1.bf16.msra.mxu0 0
        %1752 = vmatprep.subr.bf16.mxu0 0
        %1753 = vmatpush1.bf16.msra.mxu0 0
        %1754 = vmatprep.subr.bf16.mxu0 0
        %1755 = vmatpush1.bf16.msra.mxu0 0
        %1756 = vmatprep.mubr.bf16.mxu0 0
        %1757 = vmatmul.mubr.bf16.gmra.mrb[0].mxu0 %v1644
        %v1758 = vpop.f32.mrb[0].mxu0
        %v1759 = vadd.f32 0.0, %v1758
        %v1760 = vpop.f32.mrb[0].mxu0
        %v1761 = vpop.f32.mrb[0].mxu0
        %v1762 = vadd.f32 0.0, %v1761
        %v1763 = vpop.f32.mrb[0].mxu0
        %1764 = vmatprep.mubr.bf16.mxu0 0
        %1765 = vmatmul.mubr.bf16.gmra.mrb[0].mxu0 %v1645
        %v1766 = vpop.f32.mrb[0].mxu0
        %v1767 = vadd.f32 0.0, %v1766
        %v1768 = vpop.f32.mrb[0].mxu0
        %v1769 = vpop.f32.mrb[0].mxu0
        %v1770 = vadd.f32 0.0, %v1769
        %v1771 = vpop.f32.mrb[0].mxu0
        %1772 = vmatprep.mubr.bf16.mxu0 0
        %1773 = vmatmul.mubr.bf16.gmra.mrb[0].mxu0 %v1646
        %v1774 = vpop.f32.mrb[0].mxu0
        %v1775 = vadd.f32 0.0, %v1774
        %v1776 = vpop.f32.mrb[0].mxu0
        %v1777 = vpop.f32.mrb[0].mxu0
        %v1778 = vadd.f32 0.0, %v1777
        %v1779 = vpop.f32.mrb[0].mxu0
        %1780 = vmatprep.mubr.bf16.mxu0 0
        %1781 = vmatmul.mubr.bf16.gmra.mrb[0].mxu0 %v1647
        %v1782 = vpop.f32.mrb[0].mxu0
        %v1783 = vadd.f32 0.0, %v1782
        %v1784 = vpop.f32.mrb[0].mxu0
        %v1785 = vpop.f32.mrb[0].mxu0
        %v1786 = vadd.f32 0.0, %v1785
        %v1787 = vpop.f32.mrb[0].mxu0
        %1788 = vmatprep.mubr.bf16.mxu0 0
        %1789 = vmatmul.mubr.bf16.gmra.mrb[0].mxu0 %v1648
        %v1790 = vpop.f32.mrb[0].mxu0
        %v1791 = vadd.f32 0.0, %v1790
        %v1792 = vpop.f32.mrb[0].mxu0
        %v1793 = vpop.f32.mrb[0].mxu0
        %v1794 = vadd.f32 0.0, %v1793
        %v1795 = vpop.f32.mrb[0].mxu0
        %1796 = vmatprep.mubr.bf16.mxu0 0
        %1797 = vmatmul.mubr.bf16.gmra.mrb[0].mxu0 %v1649
        %v1798 = vpop.f32.mrb[0].mxu0
        %v1799 = vadd.f32 0.0, %v1798
        %v1800 = vpop.f32.mrb[0].mxu0
        %v1801 = vpop.f32.mrb[0].mxu0
        %v1802 = vadd.f32 0.0, %v1801
        %v1803 = vpop.f32.mrb[0].mxu0
        %1804 = vmatprep.mubr.bf16.mxu0 0
        %1805 = vmatmul.mubr.bf16.gmra.mrb[0].mxu0 %v1650
        %v1806 = vpop.f32.mrb[0].mxu0
        %v1807 = vadd.f32 0.0, %v1806
        %v1808 = vpop.f32.mrb[0].mxu0
        %v1809 = vpop.f32.mrb[0].mxu0
        %v1810 = vadd.f32 0.0, %v1809
        %v1811 = vpop.f32.mrb[0].mxu0
        %1812 = vmatprep.mubr.bf16.mxu0 0
        %1813 = vmatmul.mubr.bf16.gmra.mrb[0].mxu0 %v1651
        %v1814 = vpop.f32.mrb[0].mxu0
        %v1815 = vadd.f32 0.0, %v1814
        %v1816 = vpop.f32.mrb[0].mxu0
        %v1817 = vpop.f32.mrb[0].mxu0
        %v1818 = vadd.f32 0.0, %v1817
        %v1819 = vpop.f32.mrb[0].mxu0
        %1820 = vmatprep.mubr.bf16.mxu0 0
        %1821 = vmatmul.mubr.bf16.gmra.mrb[0].mxu0 %v1652
        %v1822 = vpop.f32.mrb[0].mxu0
        %v1823 = vadd.f32 0.0, %v1822
        %v1824 = vpop.f32.mrb[0].mxu0
        %v1825 = vpop.f32.mrb[0].mxu0
        %v1826 = vadd.f32 0.0, %v1825
        %v1827 = vpop.f32.mrb[0].mxu0
        %1828 = vmatprep.mubr.bf16.mxu0 0
        %1829 = vmatmul.mubr.bf16.gmra.mrb[0].mxu0 %v1653
        %v1830 = vpop.f32.mrb[0].mxu0
        %v1831 = vadd.f32 0.0, %v1830
        %v1832 = vpop.f32.mrb[0].mxu0
        %v1833 = vpop.f32.mrb[0].mxu0
        %v1834 = vadd.f32 0.0, %v1833
        %v1835 = vpop.f32.mrb[0].mxu0
        %1836 = vmatprep.mubr.bf16.mxu0 0
        %1837 = vmatmul.mubr.bf16.gmra.mrb[0].mxu0 %v1654
        %v1838 = vpop.f32.mrb[0].mxu0
        %v1839 = vadd.f32 0.0, %v1838
        %v1840 = vpop.f32.mrb[0].mxu0
        %v1841 = vpop.f32.mrb[0].mxu0
        %v1842 = vadd.f32 0.0, %v1841
        %v1843 = vpop.f32.mrb[0].mxu0
        %1844 = vmatprep.mubr.bf16.mxu0 0
        %1845 = vmatmul.mubr.bf16.gmra.mrb[0].mxu0 %v1655
        %v1846 = vpop.f32.mrb[0].mxu0
        %v1847 = vadd.f32 0.0, %v1846
        %v1848 = vpop.f32.mrb[0].mxu0
        %v1849 = vpop.f32.mrb[0].mxu0
        %v1850 = vadd.f32 0.0, %v1849
        %v1851 = vpop.f32.mrb[0].mxu0
        %1852 = vmatprep.mubr.bf16.mxu0 0
        %1853 = vmatmul.mubr.bf16.gmra.mrb[0].mxu0 %v1656
        %v1854 = vpop.f32.mrb[0].mxu0
        %v1855 = vadd.f32 0.0, %v1854
        %v1856 = vpop.f32.mrb[0].mxu0
        %v1857 = vpop.f32.mrb[0].mxu0
        %v1858 = vadd.f32 0.0, %v1857
        %v1859 = vpop.f32.mrb[0].mxu0
        %1860 = vmatprep.mubr.bf16.mxu0 0
        %1861 = vmatmul.mubr.bf16.gmra.mrb[0].mxu0 %v1657
        %v1862 = vpop.f32.mrb[0].mxu0
        %v1863 = vadd.f32 0.0, %v1862
        %v1864 = vpop.f32.mrb[0].mxu0
        %v1865 = vpop.f32.mrb[0].mxu0
        %v1866 = vadd.f32 0.0, %v1865
        %v1867 = vpop.f32.mrb[0].mxu0
        %1868 = vmatprep.mubr.bf16.mxu0 0
        %1869 = vmatmul.mubr.bf16.gmra.mrb[0].mxu0 %v1658
        %v1870 = vpop.f32.mrb[0].mxu0
        %v1871 = vadd.f32 0.0, %v1870
        %v1872 = vpop.f32.mrb[0].mxu0
        %v1873 = vpop.f32.mrb[0].mxu0
        %v1874 = vadd.f32 0.0, %v1873
        %v1875 = vpop.f32.mrb[0].mxu0
        %1876 = vmatprep.mubr.bf16.mxu0 0
        %1877 = vmatmul.mubr.bf16.gmra.mrb[0].mxu0 %v1659
        %v1878 = vpop.f32.mrb[0].mxu0
        %v1879 = vadd.f32 0.0, %v1878
        %v1880 = vpop.f32.mrb[0].mxu0
        %v1881 = vpop.f32.mrb[0].mxu0
        %v1882 = vadd.f32 0.0, %v1881
        %v1883 = vpop.f32.mrb[0].mxu0
        %1884 = vdwg.mxu0
        %1885 = vst [vmem:[#allocation4] sm:$0xff] %v1759
        %1886 = vst [vmem:[#allocation4 + $0x8] sm:$0xff] %v1762
        %1887 = vst [vmem:[#allocation4 + $0x10] sm:$0xff] %v1767
        %1888 = vst [vmem:[#allocation4 + $0x18] sm:$0xff] %v1770
        %1889 = vst [vmem:[#allocation4 + $0x20] sm:$0xff] %v1775
        %1890 = vst [vmem:[#allocation4 + $0x28] sm:$0xff] %v1778
        %1891 = vst [vmem:[#allocation4 + $0x30] sm:$0xff] %v1783
        %1892 = vst [vmem:[#allocation4 + $0x38] sm:$0xff] %v1786
        %1893 = vst [vmem:[#allocation4 + $0x40] sm:$0xff] %v1791
        %1894 = vst [vmem:[#allocation4 + $0x48] sm:$0xff] %v1794
        %1895 = vst [vmem:[#allocation4 + $0x50] sm:$0xff] %v1799
        %1896 = vst [vmem:[#allocation4 + $0x58] sm:$0xff] %v1802
        %1897 = vst [vmem:[#allocation4 + $0x60] sm:$0xff] %v1807
        %1898 = vst [vmem:[#allocation4 + $0x68] sm:$0xff] %v1810
        %1899 = vst [vmem:[#allocation4 + $0x70] sm:$0xff] %v1815
        %1900 = vst [vmem:[#allocation4 + $0x78] sm:$0xff] %v1818
        %1901 = vst [vmem:[#allocation4 + $0x80] sm:$0xff] %v1823
        %1902 = vst [vmem:[#allocation4 + $0x88] sm:$0xff] %v1826
        %1903 = vst [vmem:[#allocation4 + $0x90] sm:$0xff] %v1831
        %1904 = vst [vmem:[#allocation4 + $0x98] sm:$0xff] %v1834
        %1905 = vst [vmem:[#allocation4 + $0xa0] sm:$0xff] %v1839
        %1906 = vst [vmem:[#allocation4 + $0xa8] sm:$0xff] %v1842
        %1907 = vst [vmem:[#allocation4 + $0xb0] sm:$0xff] %v1847
        %1908 = vst [vmem:[#allocation4 + $0xb8] sm:$0xff] %v1850
        %1909 = vst [vmem:[#allocation4 + $0xc0] sm:$0xff] %v1855
        %1910 = vst [vmem:[#allocation4 + $0xc8] sm:$0xff] %v1858
        %1911 = vst [vmem:[#allocation4 + $0xd0] sm:$0xff] %v1863
        %1912 = vst [vmem:[#allocation4 + $0xd8] sm:$0xff] %v1866
        %1913 = vst [vmem:[#allocation4 + $0xe0] sm:$0xff] %v1871
        %1914 = vst [vmem:[#allocation4 + $0xe8] sm:$0xff] %v1874
        %1915 = vst [vmem:[#allocation4 + $0xf0] sm:$0xff] %v1879
        %1916 = vst [vmem:[#allocation4 + $0xf8] sm:$0xff] %v1882
        %v1917 = vld [vmem:[#allocation3] sm:$0xff]
        %v1918 = vld [vmem:[#allocation3 + $0x8] sm:$0xff]
        %v1919 = vld [vmem:[#allocation3 + $0x10] sm:$0xff]
        %v1920 = vld [vmem:[#allocation3 + $0x18] sm:$0xff]
        %v1921 = vld [vmem:[#allocation3 + $0x20] sm:$0xff]
        %v1922 = vld [vmem:[#allocation3 + $0x28] sm:$0xff]
        %v1923 = vld [vmem:[#allocation3 + $0x30] sm:$0xff]
        %v1924 = vld [vmem:[#allocation3 + $0x38] sm:$0xff]
        %v1925 = vld [vmem:[#allocation3 + $0x40] sm:$0xff]
        %v1926 = vld [vmem:[#allocation3 + $0x48] sm:$0xff]
        %v1927 = vld [vmem:[#allocation3 + $0x50] sm:$0xff]
        %v1928 = vld [vmem:[#allocation3 + $0x58] sm:$0xff]
        %v1929 = vld [vmem:[#allocation3 + $0x60] sm:$0xff]
        %v1930 = vld [vmem:[#allocation3 + $0x68] sm:$0xff]
        %v1931 = vld [vmem:[#allocation3 + $0x70] sm:$0xff]
        %v1932 = vld [vmem:[#allocation3 + $0x78] sm:$0xff]
        %v1933 = vld [vmem:[#allocation3 + $0x80] sm:$0xff]
        %v1934 = vld [vmem:[#allocation3 + $0x88] sm:$0xff]
        %v1935 = vld [vmem:[#allocation3 + $0x90] sm:$0xff]
        %v1936 = vld [vmem:[#allocation3 + $0x98] sm:$0xff]
        %v1937 = vld [vmem:[#allocation3 + $0xa0] sm:$0xff]
        %v1938 = vld [vmem:[#allocation3 + $0xa8] sm:$0xff]
        %v1939 = vld [vmem:[#allocation3 + $0xb0] sm:$0xff]
        %v1940 = vld [vmem:[#allocation3 + $0xb8] sm:$0xff]
        %v1941 = vld [vmem:[#allocation3 + $0xc0] sm:$0xff]
        %v1942 = vld [vmem:[#allocation3 + $0xc8] sm:$0xff]
        %v1943 = vld [vmem:[#allocation3 + $0xd0] sm:$0xff]
        %v1944 = vld [vmem:[#allocation3 + $0xd8] sm:$0xff]
        %v1945 = vld [vmem:[#allocation3 + $0xe0] sm:$0xff]
        %v1946 = vld [vmem:[#allocation3 + $0xe8] sm:$0xff]
        %v1947 = vld [vmem:[#allocation3 + $0xf0] sm:$0xff]
        %v1948 = vld [vmem:[#allocation3 + $0xf8] sm:$0xff]
        %v1949 = vpack.c.bf16 %v1918, %v1917
        %v1950 = vpack.c.bf16 %v1920, %v1919
        %v1951 = vpack.c.bf16 %v1922, %v1921
        %v1952 = vpack.c.bf16 %v1924, %v1923
        %v1953 = vpack.c.bf16 %v1926, %v1925
        %v1954 = vpack.c.bf16 %v1928, %v1927
        %v1955 = vpack.c.bf16 %v1930, %v1929
        %v1956 = vpack.c.bf16 %v1932, %v1931
        %v1957 = vpack.c.bf16 %v1934, %v1933
        %v1958 = vpack.c.bf16 %v1936, %v1935
        %v1959 = vpack.c.bf16 %v1938, %v1937
        %v1960 = vpack.c.bf16 %v1940, %v1939
        %v1961 = vpack.c.bf16 %v1942, %v1941
        %v1962 = vpack.c.bf16 %v1944, %v1943
        %v1963 = vpack.c.bf16 %v1946, %v1945
        %v1964 = vpack.c.bf16 %v1948, %v1947
        %s1965 = scalar_lea.vmem [#allocation5], 64
        %v1966 = vld [vmem:[%s1965] sm:$0xf]
        %v1967 = vld [vmem:[%s1965 + $0x4] sm:$0xf]
        %v1968 = vld [vmem:[%s1965 + $0x8] sm:$0xf]
        %v1969 = vld [vmem:[%s1965 + $0xc] sm:$0xf]
        %v1970 = vld [vmem:[%s1965 + $0x10] sm:$0xf]
        %v1971 = vld [vmem:[%s1965 + $0x14] sm:$0xf]
        %v1972 = vld [vmem:[%s1965 + $0x18] sm:$0xf]
        %v1973 = vld [vmem:[%s1965 + $0x1c] sm:$0xf]
        %v1974 = vld [vmem:[%s1965 + $0x20] sm:$0xf]
        %v1975 = vld [vmem:[%s1965 + $0x24] sm:$0xf]
        %v1976 = vld [vmem:[%s1965 + $0x28] sm:$0xf]
        %v1977 = vld [vmem:[%s1965 + $0x2c] sm:$0xf]
        %v1978 = vld [vmem:[%s1965 + $0x30] sm:$0xf]
        %v1979 = vld [vmem:[%s1965 + $0x34] sm:$0xf]
        %v1980 = vld [vmem:[%s1965 + $0x38] sm:$0xf]
        %v1981 = vld [vmem:[%s1965 + $0x3c] sm:$0xf]
        %v1998 = vunpack.c.l.b16 %v1966
        %v1999 = vunpack.c.l.b16 %v1967
        %v2000 = vunpack.c.l.b16 %v1968
        %v2001 = vunpack.c.l.b16 %v1969
        %v2002 = vunpack.c.l.b16 %v1970
        %v2003 = vunpack.c.l.b16 %v1971
        %v2004 = vunpack.c.l.b16 %v1972
        %v2005 = vunpack.c.l.b16 %v1973
        %v2006 = vunpack.c.l.b16 %v1974
        %v2007 = vunpack.c.l.b16 %v1975
        %v2008 = vunpack.c.l.b16 %v1976
        %v2009 = vunpack.c.l.b16 %v1977
        %v2010 = vunpack.c.l.b16 %v1978
        %v2011 = vunpack.c.l.b16 %v1979
        %v2012 = vunpack.c.l.b16 %v1980
        %v2013 = vunpack.c.l.b16 %v1981
        %v2014 = vpack.c.b16 %v1999, %v1998
        %v2015 = vpack.c.b16 %v2001, %v2000
        %v2016 = vpack.c.b16 %v2003, %v2002
        %v2017 = vpack.c.b16 %v2005, %v2004
        %v2018 = vpack.c.b16 %v2007, %v2006
        %v2019 = vpack.c.b16 %v2009, %v2008
        %v2020 = vpack.c.b16 %v2011, %v2010
        %v2021 = vpack.c.b16 %v2013, %v2012
        %2030 = vmatprep.subr.bf16.mxu0 0
        %2031 = vmatpush1.bf16.msra.mxu0 %v2014
        %2032 = vmatprep.subr.bf16.mxu0 0
        %2033 = vmatpush1.bf16.msra.mxu0 %v2015
        %2034 = vmatprep.subr.bf16.mxu0 0
        %2035 = vmatpush1.bf16.msra.mxu0 %v2016
        %2036 = vmatprep.subr.bf16.mxu0 0
        %2037 = vmatpush1.bf16.msra.mxu0 %v2017
        %2038 = vmatprep.subr.bf16.mxu0 0
        %2039 = vmatpush1.bf16.msra.mxu0 %v2018
        %2040 = vmatprep.subr.bf16.mxu0 0
        %2041 = vmatpush1.bf16.msra.mxu0 %v2019
        %2042 = vmatprep.subr.bf16.mxu0 0
        %2043 = vmatpush1.bf16.msra.mxu0 %v2020
        %2044 = vmatprep.subr.bf16.mxu0 0
        %2045 = vmatpush1.bf16.msra.mxu0 %v2021
        %2046 = vmatprep.subr.bf16.mxu0 0
        %2047 = vmatpush1.bf16.msra.mxu0 0
        %2048 = vmatprep.subr.bf16.mxu0 0
        %2049 = vmatpush1.bf16.msra.mxu0 0
        %2050 = vmatprep.subr.bf16.mxu0 0
        %2051 = vmatpush1.bf16.msra.mxu0 0
        %2052 = vmatprep.subr.bf16.mxu0 0
        %2053 = vmatpush1.bf16.msra.mxu0 0
        %2054 = vmatprep.subr.bf16.mxu0 0
        %2055 = vmatpush1.bf16.msra.mxu0 0
        %2056 = vmatprep.subr.bf16.mxu0 0
        %2057 = vmatpush1.bf16.msra.mxu0 0
        %2058 = vmatprep.subr.bf16.mxu0 0
        %2059 = vmatpush1.bf16.msra.mxu0 0
        %2060 = vmatprep.subr.bf16.mxu0 0
        %2061 = vmatpush1.bf16.msra.mxu0 0
        %2062 = vmatprep.mubr.bf16.mxu0 0
        %2063 = vmatmul.mubr.bf16.gmra.mrb[0].mxu0 %v1949
        %v2064 = vpop.f32.mrb[0].mxu0
        %v2065 = vadd.f32 0.0, %v2064
        %v2066 = vpop.f32.mrb[0].mxu0
        %v2067 = vpop.f32.mrb[0].mxu0
        %v2068 = vadd.f32 0.0, %v2067
        %v2069 = vpop.f32.mrb[0].mxu0
        %2070 = vmatprep.mubr.bf16.mxu0 0
        %2071 = vmatmul.mubr.bf16.gmra.mrb[0].mxu0 %v1950
        %v2072 = vpop.f32.mrb[0].mxu0
        %v2073 = vadd.f32 0.0, %v2072
        %v2074 = vpop.f32.mrb[0].mxu0
        %v2075 = vpop.f32.mrb[0].mxu0
        %v2076 = vadd.f32 0.0, %v2075
        %v2077 = vpop.f32.mrb[0].mxu0
        %2078 = vmatprep.mubr.bf16.mxu0 0
        %2079 = vmatmul.mubr.bf16.gmra.mrb[0].mxu0 %v1951
        %v2080 = vpop.f32.mrb[0].mxu0
        %v2081 = vadd.f32 0.0, %v2080
        %v2082 = vpop.f32.mrb[0].mxu0
        %v2083 = vpop.f32.mrb[0].mxu0
        %v2084 = vadd.f32 0.0, %v2083
        %v2085 = vpop.f32.mrb[0].mxu0
        %2086 = vmatprep.mubr.bf16.mxu0 0
        %2087 = vmatmul.mubr.bf16.gmra.mrb[0].mxu0 %v1952
        %v2088 = vpop.f32.mrb[0].mxu0
        %v2089 = vadd.f32 0.0, %v2088
        %v2090 = vpop.f32.mrb[0].mxu0
        %v2091 = vpop.f32.mrb[0].mxu0
        %v2092 = vadd.f32 0.0, %v2091
        %v2093 = vpop.f32.mrb[0].mxu0
        %2094 = vmatprep.mubr.bf16.mxu0 0
        %2095 = vmatmul.mubr.bf16.gmra.mrb[0].mxu0 %v1953
        %v2096 = vpop.f32.mrb[0].mxu0
        %v2097 = vadd.f32 0.0, %v2096
        %v2098 = vpop.f32.mrb[0].mxu0
        %v2099 = vpop.f32.mrb[0].mxu0
        %v2100 = vadd.f32 0.0, %v2099
        %v2101 = vpop.f32.mrb[0].mxu0
        %2102 = vmatprep.mubr.bf16.mxu0 0
        %2103 = vmatmul.mubr.bf16.gmra.mrb[0].mxu0 %v1954
        %v2104 = vpop.f32.mrb[0].mxu0
        %v2105 = vadd.f32 0.0, %v2104
        %v2106 = vpop.f32.mrb[0].mxu0
        %v2107 = vpop.f32.mrb[0].mxu0
        %v2108 = vadd.f32 0.0, %v2107
        %v2109 = vpop.f32.mrb[0].mxu0
        %2110 = vmatprep.mubr.bf16.mxu0 0
        %2111 = vmatmul.mubr.bf16.gmra.mrb[0].mxu0 %v1955
        %v2112 = vpop.f32.mrb[0].mxu0
        %v2113 = vadd.f32 0.0, %v2112
        %v2114 = vpop.f32.mrb[0].mxu0
        %v2115 = vpop.f32.mrb[0].mxu0
        %v2116 = vadd.f32 0.0, %v2115
        %v2117 = vpop.f32.mrb[0].mxu0
        %2118 = vmatprep.mubr.bf16.mxu0 0
        %2119 = vmatmul.mubr.bf16.gmra.mrb[0].mxu0 %v1956
        %v2120 = vpop.f32.mrb[0].mxu0
        %v2121 = vadd.f32 0.0, %v2120
        %v2122 = vpop.f32.mrb[0].mxu0
        %v2123 = vpop.f32.mrb[0].mxu0
        %v2124 = vadd.f32 0.0, %v2123
        %v2125 = vpop.f32.mrb[0].mxu0
        %2126 = vmatprep.mubr.bf16.mxu0 0
        %2127 = vmatmul.mubr.bf16.gmra.mrb[0].mxu0 %v1957
        %v2128 = vpop.f32.mrb[0].mxu0
        %v2129 = vadd.f32 0.0, %v2128
        %v2130 = vpop.f32.mrb[0].mxu0
        %v2131 = vpop.f32.mrb[0].mxu0
        %v2132 = vadd.f32 0.0, %v2131
        %v2133 = vpop.f32.mrb[0].mxu0
        %2134 = vmatprep.mubr.bf16.mxu0 0
        %2135 = vmatmul.mubr.bf16.gmra.mrb[0].mxu0 %v1958
        %v2136 = vpop.f32.mrb[0].mxu0
        %v2137 = vadd.f32 0.0, %v2136
        %v2138 = vpop.f32.mrb[0].mxu0
        %v2139 = vpop.f32.mrb[0].mxu0
        %v2140 = vadd.f32 0.0, %v2139
        %v2141 = vpop.f32.mrb[0].mxu0
        %2142 = vmatprep.mubr.bf16.mxu0 0
        %2143 = vmatmul.mubr.bf16.gmra.mrb[0].mxu0 %v1959
        %v2144 = vpop.f32.mrb[0].mxu0
        %v2145 = vadd.f32 0.0, %v2144
        %v2146 = vpop.f32.mrb[0].mxu0
        %v2147 = vpop.f32.mrb[0].mxu0
        %v2148 = vadd.f32 0.0, %v2147
        %v2149 = vpop.f32.mrb[0].mxu0
        %2150 = vmatprep.mubr.bf16.mxu0 0
        %2151 = vmatmul.mubr.bf16.gmra.mrb[0].mxu0 %v1960
        %v2152 = vpop.f32.mrb[0].mxu0
        %v2153 = vadd.f32 0.0, %v2152
        %v2154 = vpop.f32.mrb[0].mxu0
        %v2155 = vpop.f32.mrb[0].mxu0
        %v2156 = vadd.f32 0.0, %v2155
        %v2157 = vpop.f32.mrb[0].mxu0
        %2158 = vmatprep.mubr.bf16.mxu0 0
        %2159 = vmatmul.mubr.bf16.gmra.mrb[0].mxu0 %v1961
        %v2160 = vpop.f32.mrb[0].mxu0
        %v2161 = vadd.f32 0.0, %v2160
        %v2162 = vpop.f32.mrb[0].mxu0
        %v2163 = vpop.f32.mrb[0].mxu0
        %v2164 = vadd.f32 0.0, %v2163
        %v2165 = vpop.f32.mrb[0].mxu0
        %2166 = vmatprep.mubr.bf16.mxu0 0
        %2167 = vmatmul.mubr.bf16.gmra.mrb[0].mxu0 %v1962
        %v2168 = vpop.f32.mrb[0].mxu0
        %v2169 = vadd.f32 0.0, %v2168
        %v2170 = vpop.f32.mrb[0].mxu0
        %v2171 = vpop.f32.mrb[0].mxu0
        %v2172 = vadd.f32 0.0, %v2171
        %v2173 = vpop.f32.mrb[0].mxu0
        %2174 = vmatprep.mubr.bf16.mxu0 0
        %2175 = vmatmul.mubr.bf16.gmra.mrb[0].mxu0 %v1963
        %v2176 = vpop.f32.mrb[0].mxu0
        %v2177 = vadd.f32 0.0, %v2176
        %v2178 = vpop.f32.mrb[0].mxu0
        %v2179 = vpop.f32.mrb[0].mxu0
        %v2180 = vadd.f32 0.0, %v2179
        %v2181 = vpop.f32.mrb[0].mxu0
        %2182 = vmatprep.mubr.bf16.mxu0 0
        %2183 = vmatmul.mubr.bf16.gmra.mrb[0].mxu0 %v1964
        %v2184 = vpop.f32.mrb[0].mxu0
        %v2185 = vadd.f32 0.0, %v2184
        %v2186 = vpop.f32.mrb[0].mxu0
        %v2187 = vpop.f32.mrb[0].mxu0
        %v2188 = vadd.f32 0.0, %v2187
        %v2189 = vpop.f32.mrb[0].mxu0
        %2190 = vdwg.mxu0
        %v2191 = vld [vmem:[#allocation4] sm:$0xff]
        %v2192 = vld [vmem:[#allocation4 + $0x8] sm:$0xff]
        %v2193 = vld [vmem:[#allocation4 + $0x10] sm:$0xff]
        %v2194 = vld [vmem:[#allocation4 + $0x18] sm:$0xff]
        %v2195 = vld [vmem:[#allocation4 + $0x20] sm:$0xff]
        %v2196 = vld [vmem:[#allocation4 + $0x28] sm:$0xff]
        %v2197 = vld [vmem:[#allocation4 + $0x30] sm:$0xff]
        %v2198 = vld [vmem:[#allocation4 + $0x38] sm:$0xff]
        %v2199 = vld [vmem:[#allocation4 + $0x40] sm:$0xff]
        %v2200 = vld [vmem:[#allocation4 + $0x48] sm:$0xff]
        %v2201 = vld [vmem:[#allocation4 + $0x50] sm:$0xff]
        %v2202 = vld [vmem:[#allocation4 + $0x58] sm:$0xff]
        %v2203 = vld [vmem:[#allocation4 + $0x60] sm:$0xff]
        %v2204 = vld [vmem:[#allocation4 + $0x68] sm:$0xff]
        %v2205 = vld [vmem:[#allocation4 + $0x70] sm:$0xff]
        %v2206 = vld [vmem:[#allocation4 + $0x78] sm:$0xff]
        %v2207 = vld [vmem:[#allocation4 + $0x80] sm:$0xff]
        %v2208 = vld [vmem:[#allocation4 + $0x88] sm:$0xff]
        %v2209 = vld [vmem:[#allocation4 + $0x90] sm:$0xff]
        %v2210 = vld [vmem:[#allocation4 + $0x98] sm:$0xff]
        %v2211 = vld [vmem:[#allocation4 + $0xa0] sm:$0xff]
        %v2212 = vld [vmem:[#allocation4 + $0xa8] sm:$0xff]
        %v2213 = vld [vmem:[#allocation4 + $0xb0] sm:$0xff]
        %v2214 = vld [vmem:[#allocation4 + $0xb8] sm:$0xff]
        %v2215 = vld [vmem:[#allocation4 + $0xc0] sm:$0xff]
        %v2216 = vld [vmem:[#allocation4 + $0xc8] sm:$0xff]
        %v2217 = vld [vmem:[#allocation4 + $0xd0] sm:$0xff]
        %v2218 = vld [vmem:[#allocation4 + $0xd8] sm:$0xff]
        %v2219 = vld [vmem:[#allocation4 + $0xe0] sm:$0xff]
        %v2220 = vld [vmem:[#allocation4 + $0xe8] sm:$0xff]
        %v2221 = vld [vmem:[#allocation4 + $0xf0] sm:$0xff]
        %v2222 = vld [vmem:[#allocation4 + $0xf8] sm:$0xff]
        %v2223 = vadd.f32 %v2191, %v2065
        %v2224 = vadd.f32 %v2192, %v2068
        %v2225 = vadd.f32 %v2193, %v2073
        %v2226 = vadd.f32 %v2194, %v2076
        %v2227 = vadd.f32 %v2195, %v2081
        %v2228 = vadd.f32 %v2196, %v2084
        %v2229 = vadd.f32 %v2197, %v2089
        %v2230 = vadd.f32 %v2198, %v2092
        %v2231 = vadd.f32 %v2199, %v2097
        %v2232 = vadd.f32 %v2200, %v2100
        %v2233 = vadd.f32 %v2201, %v2105
        %v2234 = vadd.f32 %v2202, %v2108
        %v2235 = vadd.f32 %v2203, %v2113
        %v2236 = vadd.f32 %v2204, %v2116
        %v2237 = vadd.f32 %v2205, %v2121
        %v2238 = vadd.f32 %v2206, %v2124
        %v2239 = vadd.f32 %v2207, %v2129
        %v2240 = vadd.f32 %v2208, %v2132
        %v2241 = vadd.f32 %v2209, %v2137
        %v2242 = vadd.f32 %v2210, %v2140
        %v2243 = vadd.f32 %v2211, %v2145
        %v2244 = vadd.f32 %v2212, %v2148
        %v2245 = vadd.f32 %v2213, %v2153
        %v2246 = vadd.f32 %v2214, %v2156
        %v2247 = vadd.f32 %v2215, %v2161
        %v2248 = vadd.f32 %v2216, %v2164
        %v2249 = vadd.f32 %v2217, %v2169
        %v2250 = vadd.f32 %v2218, %v2172
        %v2251 = vadd.f32 %v2219, %v2177
        %v2252 = vadd.f32 %v2220, %v2180
        %v2253 = vadd.f32 %v2221, %v2185
        %v2254 = vadd.f32 %v2222, %v2188
        %2255 = vst [vmem:[#allocation4] sm:$0xff] %v2223
        %2256 = vst [vmem:[#allocation4 + $0x8] sm:$0xff] %v2224
        %2257 = vst [vmem:[#allocation4 + $0x10] sm:$0xff] %v2225
        %2258 = vst [vmem:[#allocation4 + $0x18] sm:$0xff] %v2226
        %2259 = vst [vmem:[#allocation4 + $0x20] sm:$0xff] %v2227
        %2260 = vst [vmem:[#allocation4 + $0x28] sm:$0xff] %v2228
        %2261 = vst [vmem:[#allocation4 + $0x30] sm:$0xff] %v2229
        %2262 = vst [vmem:[#allocation4 + $0x38] sm:$0xff] %v2230
        %2263 = vst [vmem:[#allocation4 + $0x40] sm:$0xff] %v2231
        %2264 = vst [vmem:[#allocation4 + $0x48] sm:$0xff] %v2232
        %2265 = vst [vmem:[#allocation4 + $0x50] sm:$0xff] %v2233
        %2266 = vst [vmem:[#allocation4 + $0x58] sm:$0xff] %v2234
        %2267 = vst [vmem:[#allocation4 + $0x60] sm:$0xff] %v2235
        %2268 = vst [vmem:[#allocation4 + $0x68] sm:$0xff] %v2236
        %2269 = vst [vmem:[#allocation4 + $0x70] sm:$0xff] %v2237
        %2270 = vst [vmem:[#allocation4 + $0x78] sm:$0xff] %v2238
        %2271 = vst [vmem:[#allocation4 + $0x80] sm:$0xff] %v2239
        %2272 = vst [vmem:[#allocation4 + $0x88] sm:$0xff] %v2240
        %2273 = vst [vmem:[#allocation4 + $0x90] sm:$0xff] %v2241
        %2274 = vst [vmem:[#allocation4 + $0x98] sm:$0xff] %v2242
        %2275 = vst [vmem:[#allocation4 + $0xa0] sm:$0xff] %v2243
        %2276 = vst [vmem:[#allocation4 + $0xa8] sm:$0xff] %v2244
        %2277 = vst [vmem:[#allocation4 + $0xb0] sm:$0xff] %v2245
        %2278 = vst [vmem:[#allocation4 + $0xb8] sm:$0xff] %v2246
        %2279 = vst [vmem:[#allocation4 + $0xc0] sm:$0xff] %v2247
        %2280 = vst [vmem:[#allocation4 + $0xc8] sm:$0xff] %v2248
        %2281 = vst [vmem:[#allocation4 + $0xd0] sm:$0xff] %v2249
        %2282 = vst [vmem:[#allocation4 + $0xd8] sm:$0xff] %v2250
        %2283 = vst [vmem:[#allocation4 + $0xe0] sm:$0xff] %v2251
        %2284 = vst [vmem:[#allocation4 + $0xe8] sm:$0xff] %v2252
        %2285 = vst [vmem:[#allocation4 + $0xf0] sm:$0xff] %v2253
        %2286 = vst [vmem:[#allocation4 + $0xf8] sm:$0xff] %v2254
        %v2287 = vld [vmem:[#allocation3] sm:$0xff]
        %v2288 = vld [vmem:[#allocation3 + $0x8] sm:$0xff]
        %v2289 = vld [vmem:[#allocation3 + $0x10] sm:$0xff]
        %v2290 = vld [vmem:[#allocation3 + $0x18] sm:$0xff]
        %v2291 = vld [vmem:[#allocation3 + $0x20] sm:$0xff]
        %v2292 = vld [vmem:[#allocation3 + $0x28] sm:$0xff]
        %v2293 = vld [vmem:[#allocation3 + $0x30] sm:$0xff]
        %v2294 = vld [vmem:[#allocation3 + $0x38] sm:$0xff]
        %v2295 = vld [vmem:[#allocation3 + $0x40] sm:$0xff]
        %v2296 = vld [vmem:[#allocation3 + $0x48] sm:$0xff]
        %v2297 = vld [vmem:[#allocation3 + $0x50] sm:$0xff]
        %v2298 = vld [vmem:[#allocation3 + $0x58] sm:$0xff]
        %v2299 = vld [vmem:[#allocation3 + $0x60] sm:$0xff]
        %v2300 = vld [vmem:[#allocation3 + $0x68] sm:$0xff]
        %v2301 = vld [vmem:[#allocation3 + $0x70] sm:$0xff]
        %v2302 = vld [vmem:[#allocation3 + $0x78] sm:$0xff]
        %v2303 = vld [vmem:[#allocation3 + $0x80] sm:$0xff]
        %v2304 = vld [vmem:[#allocation3 + $0x88] sm:$0xff]
        %v2305 = vld [vmem:[#allocation3 + $0x90] sm:$0xff]
        %v2306 = vld [vmem:[#allocation3 + $0x98] sm:$0xff]
        %v2307 = vld [vmem:[#allocation3 + $0xa0] sm:$0xff]
        %v2308 = vld [vmem:[#allocation3 + $0xa8] sm:$0xff]
        %v2309 = vld [vmem:[#allocation3 + $0xb0] sm:$0xff]
        %v2310 = vld [vmem:[#allocation3 + $0xb8] sm:$0xff]
        %v2311 = vld [vmem:[#allocation3 + $0xc0] sm:$0xff]
        %v2312 = vld [vmem:[#allocation3 + $0xc8] sm:$0xff]
        %v2313 = vld [vmem:[#allocation3 + $0xd0] sm:$0xff]
        %v2314 = vld [vmem:[#allocation3 + $0xd8] sm:$0xff]
        %v2315 = vld [vmem:[#allocation3 + $0xe0] sm:$0xff]
        %v2316 = vld [vmem:[#allocation3 + $0xe8] sm:$0xff]
        %v2317 = vld [vmem:[#allocation3 + $0xf0] sm:$0xff]
        %v2318 = vld [vmem:[#allocation3 + $0xf8] sm:$0xff]
        %v2319 = vrot.slane %v2287, 1
        %v2320 = vrot.slane %v2288, 1
        %v2321 = vrot.slane %v2289, 1
        %v2322 = vrot.slane %v2290, 1
        %v2323 = vrot.slane %v2291, 1
        %v2324 = vrot.slane %v2292, 1
        %v2325 = vrot.slane %v2293, 1
        %v2326 = vrot.slane %v2294, 1
        %v2327 = vrot.slane %v2295, 1
        %v2328 = vrot.slane %v2296, 1
        %v2329 = vrot.slane %v2297, 1
        %v2330 = vrot.slane %v2298, 1
        %v2331 = vrot.slane %v2299, 1
        %v2332 = vrot.slane %v2300, 1
        %v2333 = vrot.slane %v2301, 1
        %v2334 = vrot.slane %v2302, 1
        %v2335 = vrot.slane %v2303, 1
        %v2336 = vrot.slane %v2304, 1
        %v2337 = vrot.slane %v2305, 1
        %v2338 = vrot.slane %v2306, 1
        %v2339 = vrot.slane %v2307, 1
        %v2340 = vrot.slane %v2308, 1
        %v2341 = vrot.slane %v2309, 1
        %v2342 = vrot.slane %v2310, 1
        %v2343 = vrot.slane %v2311, 1
        %v2344 = vrot.slane %v2312, 1
        %v2345 = vrot.slane %v2313, 1
        %v2346 = vrot.slane %v2314, 1
        %v2347 = vrot.slane %v2315, 1
        %v2348 = vrot.slane %v2316, 1
        %v2349 = vrot.slane %v2317, 1
        %v2350 = vrot.slane %v2318, 1
        %vm2351 = vcmp.lt.s32.totalorder %v907, 7
        %v2352 = vsel %vm2351, %v2349, %v2350
        %v2353 = vsel %vm2351, %v2348, %v2349
        %v2354 = vsel %vm2351, %v2347, %v2348
        %v2355 = vsel %vm2351, %v2346, %v2347
        %v2356 = vsel %vm2351, %v2345, %v2346
        %v2357 = vsel %vm2351, %v2344, %v2345
        %v2358 = vsel %vm2351, %v2343, %v2344
        %v2359 = vsel %vm2351, %v2342, %v2343
        %v2360 = vsel %vm2351, %v2341, %v2342
        %v2361 = vsel %vm2351, %v2340, %v2341
        %v2362 = vsel %vm2351, %v2339, %v2340
        %v2363 = vsel %vm2351, %v2338, %v2339
        %v2364 = vsel %vm2351, %v2337, %v2338
        %v2365 = vsel %vm2351, %v2336, %v2337
        %v2366 = vsel %vm2351, %v2335, %v2336
        %v2367 = vsel %vm2351, %v2334, %v2335
        %v2368 = vsel %vm2351, %v2333, %v2334
        %v2369 = vsel %vm2351, %v2332, %v2333
        %v2370 = vsel %vm2351, %v2331, %v2332
        %v2371 = vsel %vm2351, %v2330, %v2331
        %v2372 = vsel %vm2351, %v2329, %v2330
        %v2373 = vsel %vm2351, %v2328, %v2329
        %v2374 = vsel %vm2351, %v2327, %v2328
        %v2375 = vsel %vm2351, %v2326, %v2327
        %v2376 = vsel %vm2351, %v2325, %v2326
        %v2377 = vsel %vm2351, %v2324, %v2325
        %v2378 = vsel %vm2351, %v2323, %v2324
        %v2379 = vsel %vm2351, %v2322, %v2323
        %v2380 = vsel %vm2351, %v2321, %v2322
        %v2381 = vsel %vm2351, %v2320, %v2321
        %v2382 = vsel %vm2351, %v2319, %v2320
        %v2383 = vsel %vm2351, %v2350, %v2319
        %v2384 = vsel %vm1483, %v2382, 0.0
        %v2385 = vsel %vm1484, %v2381, 0.0
        %v2386 = vsel %vm1485, %v2380, 0.0
        %v2387 = vsel %vm1486, %v2379, 0.0
        %v2388 = vsel %vm1487, %v2378, 0.0
        %v2389 = vsel %vm1488, %v2377, 0.0
        %v2390 = vsel %vm1489, %v2376, 0.0
        %v2391 = vsel %vm1490, %v2375, 0.0
        %v2392 = vsel %vm1491, %v2374, 0.0
        %v2393 = vsel %vm1492, %v2373, 0.0
        %v2394 = vsel %vm1493, %v2372, 0.0
        %v2395 = vsel %vm1494, %v2371, 0.0
        %v2396 = vsel %vm1495, %v2370, 0.0
        %v2397 = vsel %vm1496, %v2369, 0.0
        %v2398 = vsel %vm1497, %v2368, 0.0
        %v2399 = vsel %vm1498, %v2367, 0.0
        %v2400 = vsel %vm1499, %v2366, 0.0
        %v2401 = vsel %vm1500, %v2365, 0.0
        %v2402 = vsel %vm1501, %v2364, 0.0
        %v2403 = vsel %vm1502, %v2363, 0.0
        %v2404 = vsel %vm1503, %v2362, 0.0
        %v2405 = vsel %vm1504, %v2361, 0.0
        %v2406 = vsel %vm1505, %v2360, 0.0
        %v2407 = vsel %vm1506, %v2359, 0.0
        %v2408 = vsel %vm1507, %v2358, 0.0
        %v2409 = vsel %vm1508, %v2357, 0.0
        %v2410 = vsel %vm1509, %v2356, 0.0
        %v2411 = vsel %vm1510, %v2355, 0.0
        %v2412 = vsel %vm1511, %v2354, 0.0
        %v2413 = vsel %vm1512, %v2353, 0.0
        %v2414 = vsel %vm1513, %v2352, 0.0
        %v2415 = vsel %vm1514, %v2383, 0.0
        %v2416 = vpack.c.bf16 %v2385, %v2384
        %v2417 = vpack.c.bf16 %v2387, %v2386
        %v2418 = vpack.c.bf16 %v2389, %v2388
        %v2419 = vpack.c.bf16 %v2391, %v2390
        %v2420 = vpack.c.bf16 %v2393, %v2392
        %v2421 = vpack.c.bf16 %v2395, %v2394
        %v2422 = vpack.c.bf16 %v2397, %v2396
        %v2423 = vpack.c.bf16 %v2399, %v2398
        %v2424 = vpack.c.bf16 %v2401, %v2400
        %v2425 = vpack.c.bf16 %v2403, %v2402
        %v2426 = vpack.c.bf16 %v2405, %v2404
        %v2427 = vpack.c.bf16 %v2407, %v2406
        %v2428 = vpack.c.bf16 %v2409, %v2408
        %v2429 = vpack.c.bf16 %v2411, %v2410
        %v2430 = vpack.c.bf16 %v2413, %v2412
        %v2431 = vpack.c.bf16 %v2415, %v2414
        %s2432 = scalar_lea.vmem [#allocation5], 128
        %v2433 = vld [vmem:[%s2432] sm:$0xf]
        %v2434 = vld [vmem:[%s2432 + $0x4] sm:$0xf]
        %v2435 = vld [vmem:[%s2432 + $0x8] sm:$0xf]
        %v2436 = vld [vmem:[%s2432 + $0xc] sm:$0xf]
        %v2437 = vld [vmem:[%s2432 + $0x10] sm:$0xf]
        %v2438 = vld [vmem:[%s2432 + $0x14] sm:$0xf]
        %v2439 = vld [vmem:[%s2432 + $0x18] sm:$0xf]
        %v2440 = vld [vmem:[%s2432 + $0x1c] sm:$0xf]
        %v2441 = vld [vmem:[%s2432 + $0x20] sm:$0xf]
        %v2442 = vld [vmem:[%s2432 + $0x24] sm:$0xf]
        %v2443 = vld [vmem:[%s2432 + $0x28] sm:$0xf]
        %v2444 = vld [vmem:[%s2432 + $0x2c] sm:$0xf]
        %v2445 = vld [vmem:[%s2432 + $0x30] sm:$0xf]
        %v2446 = vld [vmem:[%s2432 + $0x34] sm:$0xf]
        %v2447 = vld [vmem:[%s2432 + $0x38] sm:$0xf]
        %v2448 = vld [vmem:[%s2432 + $0x3c] sm:$0xf]
        %v2465 = vunpack.c.l.b16 %v2433
        %v2466 = vunpack.c.l.b16 %v2434
        %v2467 = vunpack.c.l.b16 %v2435
        %v2468 = vunpack.c.l.b16 %v2436
        %v2469 = vunpack.c.l.b16 %v2437
        %v2470 = vunpack.c.l.b16 %v2438
        %v2471 = vunpack.c.l.b16 %v2439
        %v2472 = vunpack.c.l.b16 %v2440
        %v2473 = vunpack.c.l.b16 %v2441
        %v2474 = vunpack.c.l.b16 %v2442
        %v2475 = vunpack.c.l.b16 %v2443
        %v2476 = vunpack.c.l.b16 %v2444
        %v2477 = vunpack.c.l.b16 %v2445
        %v2478 = vunpack.c.l.b16 %v2446
        %v2479 = vunpack.c.l.b16 %v2447
        %v2480 = vunpack.c.l.b16 %v2448
        %v2481 = vpack.c.b16 %v2466, %v2465
        %v2482 = vpack.c.b16 %v2468, %v2467
        %v2483 = vpack.c.b16 %v2470, %v2469
        %v2484 = vpack.c.b16 %v2472, %v2471
        %v2485 = vpack.c.b16 %v2474, %v2473
        %v2486 = vpack.c.b16 %v2476, %v2475
        %v2487 = vpack.c.b16 %v2478, %v2477
        %v2488 = vpack.c.b16 %v2480, %v2479
        %2497 = vmatprep.subr.bf16.mxu0 0
        %2498 = vmatpush1.bf16.msra.mxu0 %v2481
        %2499 = vmatprep.subr.bf16.mxu0 0
        %2500 = vmatpush1.bf16.msra.mxu0 %v2482
        %2501 = vmatprep.subr.bf16.mxu0 0
        %2502 = vmatpush1.bf16.msra.mxu0 %v2483
        %2503 = vmatprep.subr.bf16.mxu0 0
        %2504 = vmatpush1.bf16.msra.mxu0 %v2484
        %2505 = vmatprep.subr.bf16.mxu0 0
        %2506 = vmatpush1.bf16.msra.mxu0 %v2485
        %2507 = vmatprep.subr.bf16.mxu0 0
        %2508 = vmatpush1.bf16.msra.mxu0 %v2486
        %2509 = vmatprep.subr.bf16.mxu0 0
        %2510 = vmatpush1.bf16.msra.mxu0 %v2487
        %2511 = vmatprep.subr.bf16.mxu0 0
        %2512 = vmatpush1.bf16.msra.mxu0 %v2488
        %2513 = vmatprep.subr.bf16.mxu0 0
        %2514 = vmatpush1.bf16.msra.mxu0 0
        %2515 = vmatprep.subr.bf16.mxu0 0
        %2516 = vmatpush1.bf16.msra.mxu0 0
        %2517 = vmatprep.subr.bf16.mxu0 0
        %2518 = vmatpush1.bf16.msra.mxu0 0
        %2519 = vmatprep.subr.bf16.mxu0 0
        %2520 = vmatpush1.bf16.msra.mxu0 0
        %2521 = vmatprep.subr.bf16.mxu0 0
        %2522 = vmatpush1.bf16.msra.mxu0 0
        %2523 = vmatprep.subr.bf16.mxu0 0
        %2524 = vmatpush1.bf16.msra.mxu0 0
        %2525 = vmatprep.subr.bf16.mxu0 0
        %2526 = vmatpush1.bf16.msra.mxu0 0
        %2527 = vmatprep.subr.bf16.mxu0 0
        %2528 = vmatpush1.bf16.msra.mxu0 0
        %2529 = vmatprep.mubr.bf16.mxu0 0
        %2530 = vmatmul.mubr.bf16.gmra.mrb[0].mxu0 %v2416
        %v2531 = vpop.f32.mrb[0].mxu0
        %v2532 = vadd.f32 0.0, %v2531
        %v2533 = vpop.f32.mrb[0].mxu0
        %v2534 = vpop.f32.mrb[0].mxu0
        %v2535 = vadd.f32 0.0, %v2534
        %v2536 = vpop.f32.mrb[0].mxu0
        %2537 = vmatprep.mubr.bf16.mxu0 0
        %2538 = vmatmul.mubr.bf16.gmra.mrb[0].mxu0 %v2417
        %v2539 = vpop.f32.mrb[0].mxu0
        %v2540 = vadd.f32 0.0, %v2539
        %v2541 = vpop.f32.mrb[0].mxu0
        %v2542 = vpop.f32.mrb[0].mxu0
        %v2543 = vadd.f32 0.0, %v2542
        %v2544 = vpop.f32.mrb[0].mxu0
        %2545 = vmatprep.mubr.bf16.mxu0 0
        %2546 = vmatmul.mubr.bf16.gmra.mrb[0].mxu0 %v2418
        %v2547 = vpop.f32.mrb[0].mxu0
        %v2548 = vadd.f32 0.0, %v2547
        %v2549 = vpop.f32.mrb[0].mxu0
        %v2550 = vpop.f32.mrb[0].mxu0
        %v2551 = vadd.f32 0.0, %v2550
        %v2552 = vpop.f32.mrb[0].mxu0
        %2553 = vmatprep.mubr.bf16.mxu0 0
        %2554 = vmatmul.mubr.bf16.gmra.mrb[0].mxu0 %v2419
        %v2555 = vpop.f32.mrb[0].mxu0
        %v2556 = vadd.f32 0.0, %v2555
        %v2557 = vpop.f32.mrb[0].mxu0
        %v2558 = vpop.f32.mrb[0].mxu0
        %v2559 = vadd.f32 0.0, %v2558
        %v2560 = vpop.f32.mrb[0].mxu0
        %2561 = vmatprep.mubr.bf16.mxu0 0
        %2562 = vmatmul.mubr.bf16.gmra.mrb[0].mxu0 %v2420
        %v2563 = vpop.f32.mrb[0].mxu0
        %v2564 = vadd.f32 0.0, %v2563
        %v2565 = vpop.f32.mrb[0].mxu0
        %v2566 = vpop.f32.mrb[0].mxu0
        %v2567 = vadd.f32 0.0, %v2566
        %v2568 = vpop.f32.mrb[0].mxu0
        %2569 = vmatprep.mubr.bf16.mxu0 0
        %2570 = vmatmul.mubr.bf16.gmra.mrb[0].mxu0 %v2421
        %v2571 = vpop.f32.mrb[0].mxu0
        %v2572 = vadd.f32 0.0, %v2571
        %v2573 = vpop.f32.mrb[0].mxu0
        %v2574 = vpop.f32.mrb[0].mxu0
        %v2575 = vadd.f32 0.0, %v2574
        %v2576 = vpop.f32.mrb[0].mxu0
        %2577 = vmatprep.mubr.bf16.mxu0 0
        %2578 = vmatmul.mubr.bf16.gmra.mrb[0].mxu0 %v2422
        %v2579 = vpop.f32.mrb[0].mxu0
        %v2580 = vadd.f32 0.0, %v2579
        %v2581 = vpop.f32.mrb[0].mxu0
        %v2582 = vpop.f32.mrb[0].mxu0
        %v2583 = vadd.f32 0.0, %v2582
        %v2584 = vpop.f32.mrb[0].mxu0
        %2585 = vmatprep.mubr.bf16.mxu0 0
        %2586 = vmatmul.mubr.bf16.gmra.mrb[0].mxu0 %v2423
        %v2587 = vpop.f32.mrb[0].mxu0
        %v2588 = vadd.f32 0.0, %v2587
        %v2589 = vpop.f32.mrb[0].mxu0
        %v2590 = vpop.f32.mrb[0].mxu0
        %v2591 = vadd.f32 0.0, %v2590
        %v2592 = vpop.f32.mrb[0].mxu0
        %2593 = vmatprep.mubr.bf16.mxu0 0
        %2594 = vmatmul.mubr.bf16.gmra.mrb[0].mxu0 %v2424
        %v2595 = vpop.f32.mrb[0].mxu0
        %v2596 = vadd.f32 0.0, %v2595
        %v2597 = vpop.f32.mrb[0].mxu0
        %v2598 = vpop.f32.mrb[0].mxu0
        %v2599 = vadd.f32 0.0, %v2598
        %v2600 = vpop.f32.mrb[0].mxu0
        %2601 = vmatprep.mubr.bf16.mxu0 0
        %2602 = vmatmul.mubr.bf16.gmra.mrb[0].mxu0 %v2425
        %v2603 = vpop.f32.mrb[0].mxu0
        %v2604 = vadd.f32 0.0, %v2603
        %v2605 = vpop.f32.mrb[0].mxu0
        %v2606 = vpop.f32.mrb[0].mxu0
        %v2607 = vadd.f32 0.0, %v2606
        %v2608 = vpop.f32.mrb[0].mxu0
        %2609 = vmatprep.mubr.bf16.mxu0 0
        %2610 = vmatmul.mubr.bf16.gmra.mrb[0].mxu0 %v2426
        %v2611 = vpop.f32.mrb[0].mxu0
        %v2612 = vadd.f32 0.0, %v2611
        %v2613 = vpop.f32.mrb[0].mxu0
        %v2614 = vpop.f32.mrb[0].mxu0
        %v2615 = vadd.f32 0.0, %v2614
        %v2616 = vpop.f32.mrb[0].mxu0
        %2617 = vmatprep.mubr.bf16.mxu0 0
        %2618 = vmatmul.mubr.bf16.gmra.mrb[0].mxu0 %v2427
        %v2619 = vpop.f32.mrb[0].mxu0
        %v2620 = vadd.f32 0.0, %v2619
        %v2621 = vpop.f32.mrb[0].mxu0
        %v2622 = vpop.f32.mrb[0].mxu0
        %v2623 = vadd.f32 0.0, %v2622
        %v2624 = vpop.f32.mrb[0].mxu0
        %2625 = vmatprep.mubr.bf16.mxu0 0
        %2626 = vmatmul.mubr.bf16.gmra.mrb[0].mxu0 %v2428
        %v2627 = vpop.f32.mrb[0].mxu0
        %v2628 = vadd.f32 0.0, %v2627
        %v2629 = vpop.f32.mrb[0].mxu0
        %v2630 = vpop.f32.mrb[0].mxu0
        %v2631 = vadd.f32 0.0, %v2630
        %v2632 = vpop.f32.mrb[0].mxu0
        %2633 = vmatprep.mubr.bf16.mxu0 0
        %2634 = vmatmul.mubr.bf16.gmra.mrb[0].mxu0 %v2429
        %v2635 = vpop.f32.mrb[0].mxu0
        %v2636 = vadd.f32 0.0, %v2635
        %v2637 = vpop.f32.mrb[0].mxu0
        %v2638 = vpop.f32.mrb[0].mxu0
        %v2639 = vadd.f32 0.0, %v2638
        %v2640 = vpop.f32.mrb[0].mxu0
        %2641 = vmatprep.mubr.bf16.mxu0 0
        %2642 = vmatmul.mubr.bf16.gmra.mrb[0].mxu0 %v2430
        %v2643 = vpop.f32.mrb[0].mxu0
        %v2644 = vadd.f32 0.0, %v2643
        %v2645 = vpop.f32.mrb[0].mxu0
        %v2646 = vpop.f32.mrb[0].mxu0
        %v2647 = vadd.f32 0.0, %v2646
        %v2648 = vpop.f32.mrb[0].mxu0
        %2649 = vmatprep.mubr.bf16.mxu0 0
        %2650 = vmatmul.mubr.bf16.gmra.mrb[0].mxu0 %v2431
        %v2651 = vpop.f32.mrb[0].mxu0
        %v2652 = vadd.f32 0.0, %v2651
        %v2653 = vpop.f32.mrb[0].mxu0
        %v2654 = vpop.f32.mrb[0].mxu0
        %v2655 = vadd.f32 0.0, %v2654
        %v2656 = vpop.f32.mrb[0].mxu0
        %2657 = vdwg.mxu0
        %v2658 = vld [vmem:[#allocation4] sm:$0xff]
        %v2659 = vld [vmem:[#allocation4 + $0x8] sm:$0xff]
        %v2660 = vld [vmem:[#allocation4 + $0x10] sm:$0xff]
        %v2661 = vld [vmem:[#allocation4 + $0x18] sm:$0xff]
        %v2662 = vld [vmem:[#allocation4 + $0x20] sm:$0xff]
        %v2663 = vld [vmem:[#allocation4 + $0x28] sm:$0xff]
        %v2664 = vld [vmem:[#allocation4 + $0x30] sm:$0xff]
        %v2665 = vld [vmem:[#allocation4 + $0x38] sm:$0xff]
        %v2666 = vld [vmem:[#allocation4 + $0x40] sm:$0xff]
        %v2667 = vld [vmem:[#allocation4 + $0x48] sm:$0xff]
        %v2668 = vld [vmem:[#allocation4 + $0x50] sm:$0xff]
        %v2669 = vld [vmem:[#allocation4 + $0x58] sm:$0xff]
        %v2670 = vld [vmem:[#allocation4 + $0x60] sm:$0xff]
        %v2671 = vld [vmem:[#allocation4 + $0x68] sm:$0xff]
        %v2672 = vld [vmem:[#allocation4 + $0x70] sm:$0xff]
        %v2673 = vld [vmem:[#allocation4 + $0x78] sm:$0xff]
        %v2674 = vld [vmem:[#allocation4 + $0x80] sm:$0xff]
        %v2675 = vld [vmem:[#allocation4 + $0x88] sm:$0xff]
        %v2676 = vld [vmem:[#allocation4 + $0x90] sm:$0xff]
        %v2677 = vld [vmem:[#allocation4 + $0x98] sm:$0xff]
        %v2678 = vld [vmem:[#allocation4 + $0xa0] sm:$0xff]
        %v2679 = vld [vmem:[#allocation4 + $0xa8] sm:$0xff]
        %v2680 = vld [vmem:[#allocation4 + $0xb0] sm:$0xff]
        %v2681 = vld [vmem:[#allocation4 + $0xb8] sm:$0xff]
        %v2682 = vld [vmem:[#allocation4 + $0xc0] sm:$0xff]
        %v2683 = vld [vmem:[#allocation4 + $0xc8] sm:$0xff]
        %v2684 = vld [vmem:[#allocation4 + $0xd0] sm:$0xff]
        %v2685 = vld [vmem:[#allocation4 + $0xd8] sm:$0xff]
        %v2686 = vld [vmem:[#allocation4 + $0xe0] sm:$0xff]
        %v2687 = vld [vmem:[#allocation4 + $0xe8] sm:$0xff]
        %v2688 = vld [vmem:[#allocation4 + $0xf0] sm:$0xff]
        %v2689 = vld [vmem:[#allocation4 + $0xf8] sm:$0xff]
        %v2690 = vadd.f32 %v2658, %v2532
        %v2691 = vadd.f32 %v2659, %v2535
        %v2692 = vadd.f32 %v2660, %v2540
        %v2693 = vadd.f32 %v2661, %v2543
        %v2694 = vadd.f32 %v2662, %v2548
        %v2695 = vadd.f32 %v2663, %v2551
        %v2696 = vadd.f32 %v2664, %v2556
        %v2697 = vadd.f32 %v2665, %v2559
        %v2698 = vadd.f32 %v2666, %v2564
        %v2699 = vadd.f32 %v2667, %v2567
        %v2700 = vadd.f32 %v2668, %v2572
        %v2701 = vadd.f32 %v2669, %v2575
        %v2702 = vadd.f32 %v2670, %v2580
        %v2703 = vadd.f32 %v2671, %v2583
        %v2704 = vadd.f32 %v2672, %v2588
        %v2705 = vadd.f32 %v2673, %v2591
        %v2706 = vadd.f32 %v2674, %v2596
        %v2707 = vadd.f32 %v2675, %v2599
        %v2708 = vadd.f32 %v2676, %v2604
        %v2709 = vadd.f32 %v2677, %v2607
        %v2710 = vadd.f32 %v2678, %v2612
        %v2711 = vadd.f32 %v2679, %v2615
        %v2712 = vadd.f32 %v2680, %v2620
        %v2713 = vadd.f32 %v2681, %v2623
        %v2714 = vadd.f32 %v2682, %v2628
        %v2715 = vadd.f32 %v2683, %v2631
        %v2716 = vadd.f32 %v2684, %v2636
        %v2717 = vadd.f32 %v2685, %v2639
        %v2718 = vadd.f32 %v2686, %v2644
        %v2719 = vadd.f32 %v2687, %v2647
        %v2720 = vadd.f32 %v2688, %v2652
        %v2721 = vadd.f32 %v2689, %v2655
        %2722 = vst [vmem:[#allocation4] sm:$0xff] %v2690
        %2723 = vst [vmem:[#allocation4 + $0x8] sm:$0xff] %v2691
        %2724 = vst [vmem:[#allocation4 + $0x10] sm:$0xff] %v2692
        %2725 = vst [vmem:[#allocation4 + $0x18] sm:$0xff] %v2693
        %2726 = vst [vmem:[#allocation4 + $0x20] sm:$0xff] %v2694
        %2727 = vst [vmem:[#allocation4 + $0x28] sm:$0xff] %v2695
        %2728 = vst [vmem:[#allocation4 + $0x30] sm:$0xff] %v2696
        %2729 = vst [vmem:[#allocation4 + $0x38] sm:$0xff] %v2697
        %2730 = vst [vmem:[#allocation4 + $0x40] sm:$0xff] %v2698
        %2731 = vst [vmem:[#allocation4 + $0x48] sm:$0xff] %v2699
        %2732 = vst [vmem:[#allocation4 + $0x50] sm:$0xff] %v2700
        %2733 = vst [vmem:[#allocation4 + $0x58] sm:$0xff] %v2701
        %2734 = vst [vmem:[#allocation4 + $0x60] sm:$0xff] %v2702
        %2735 = vst [vmem:[#allocation4 + $0x68] sm:$0xff] %v2703
        %2736 = vst [vmem:[#allocation4 + $0x70] sm:$0xff] %v2704
        %2737 = vst [vmem:[#allocation4 + $0x78] sm:$0xff] %v2705
        %2738 = vst [vmem:[#allocation4 + $0x80] sm:$0xff] %v2706
        %2739 = vst [vmem:[#allocation4 + $0x88] sm:$0xff] %v2707
        %2740 = vst [vmem:[#allocation4 + $0x90] sm:$0xff] %v2708
        %2741 = vst [vmem:[#allocation4 + $0x98] sm:$0xff] %v2709
        %2742 = vst [vmem:[#allocation4 + $0xa0] sm:$0xff] %v2710
        %2743 = vst [vmem:[#allocation4 + $0xa8] sm:$0xff] %v2711
        %2744 = vst [vmem:[#allocation4 + $0xb0] sm:$0xff] %v2712
        %2745 = vst [vmem:[#allocation4 + $0xb8] sm:$0xff] %v2713
        %2746 = vst [vmem:[#allocation4 + $0xc0] sm:$0xff] %v2714
        %2747 = vst [vmem:[#allocation4 + $0xc8] sm:$0xff] %v2715
        %2748 = vst [vmem:[#allocation4 + $0xd0] sm:$0xff] %v2716
        %2749 = vst [vmem:[#allocation4 + $0xd8] sm:$0xff] %v2717
        %2750 = vst [vmem:[#allocation4 + $0xe0] sm:$0xff] %v2718
        %2751 = vst [vmem:[#allocation4 + $0xe8] sm:$0xff] %v2719
        %2752 = vst [vmem:[#allocation4 + $0xf0] sm:$0xff] %v2720
        %2753 = vst [vmem:[#allocation4 + $0xf8] sm:$0xff] %v2721
        %v2754 = vld [vmem:[%s873] sm:$0xff]
        %v2755 = vld [vmem:[%s873 + $0x8] sm:$0xff]
        %v2756 = vld [vmem:[%s873 + $0x10] sm:$0xff]
        %v2757 = vld [vmem:[%s873 + $0x18] sm:$0xff]
        %v2758 = vld [vmem:[%s873 + $0x20] sm:$0xff]
        %v2759 = vld [vmem:[%s873 + $0x28] sm:$0xff]
        %v2760 = vld [vmem:[%s873 + $0x30] sm:$0xff]
        %v2761 = vld [vmem:[%s873 + $0x38] sm:$0xff]
        %v2762 = vld [vmem:[%s873 + $0x40] sm:$0xff]
        %v2763 = vld [vmem:[%s873 + $0x48] sm:$0xff]
        %v2764 = vld [vmem:[%s873 + $0x50] sm:$0xff]
        %v2765 = vld [vmem:[%s873 + $0x58] sm:$0xff]
        %v2766 = vld [vmem:[%s873 + $0x60] sm:$0xff]
        %v2767 = vld [vmem:[%s873 + $0x68] sm:$0xff]
        %v2768 = vld [vmem:[%s873 + $0x70] sm:$0xff]
        %v2769 = vld [vmem:[%s873 + $0x78] sm:$0xff]
        %v2770 = vld [vmem:[%s873 + $0x80] sm:$0xff]
        %v2771 = vld [vmem:[%s873 + $0x88] sm:$0xff]
        %v2772 = vld [vmem:[%s873 + $0x90] sm:$0xff]
        %v2773 = vld [vmem:[%s873 + $0x98] sm:$0xff]
        %v2774 = vld [vmem:[%s873 + $0xa0] sm:$0xff]
        %v2775 = vld [vmem:[%s873 + $0xa8] sm:$0xff]
        %v2776 = vld [vmem:[%s873 + $0xb0] sm:$0xff]
        %v2777 = vld [vmem:[%s873 + $0xb8] sm:$0xff]
        %v2778 = vld [vmem:[%s873 + $0xc0] sm:$0xff]
        %v2779 = vld [vmem:[%s873 + $0xc8] sm:$0xff]
        %v2780 = vld [vmem:[%s873 + $0xd0] sm:$0xff]
        %v2781 = vld [vmem:[%s873 + $0xd8] sm:$0xff]
        %v2782 = vld [vmem:[%s873 + $0xe0] sm:$0xff]
        %v2783 = vld [vmem:[%s873 + $0xe8] sm:$0xff]
        %v2784 = vld [vmem:[%s873 + $0xf0] sm:$0xff]
        %v2785 = vld [vmem:[%s873 + $0xf8] sm:$0xff]
        %v2786 = vrot.slane %v2754, 7
        %v2787 = vrot.slane %v2755, 7
        %v2788 = vrot.slane %v2756, 7
        %v2789 = vrot.slane %v2757, 7
        %v2790 = vrot.slane %v2758, 7
        %v2791 = vrot.slane %v2759, 7
        %v2792 = vrot.slane %v2760, 7
        %v2793 = vrot.slane %v2761, 7
        %v2794 = vrot.slane %v2762, 7
        %v2795 = vrot.slane %v2763, 7
        %v2796 = vrot.slane %v2764, 7
        %v2797 = vrot.slane %v2765, 7
        %v2798 = vrot.slane %v2766, 7
        %v2799 = vrot.slane %v2767, 7
        %v2800 = vrot.slane %v2768, 7
        %v2801 = vrot.slane %v2769, 7
        %v2802 = vrot.slane %v2770, 7
        %v2803 = vrot.slane %v2771, 7
        %v2804 = vrot.slane %v2772, 7
        %v2805 = vrot.slane %v2773, 7
        %v2806 = vrot.slane %v2774, 7
        %v2807 = vrot.slane %v2775, 7
        %v2808 = vrot.slane %v2776, 7
        %v2809 = vrot.slane %v2777, 7
        %v2810 = vrot.slane %v2778, 7
        %v2811 = vrot.slane %v2779, 7
        %v2812 = vrot.slane %v2780, 7
        %v2813 = vrot.slane %v2781, 7
        %v2814 = vrot.slane %v2782, 7
        %v2815 = vrot.slane %v2783, 7
        %v2816 = vrot.slane %v2784, 7
        %v2817 = vrot.slane %v2785, 7
        %v2818 = vsel %vm1579, %v2816, %v2817
        %v2819 = vsel %vm1579, %v2815, %v2816
        %v2820 = vsel %vm1579, %v2814, %v2815
        %v2821 = vsel %vm1579, %v2813, %v2814
        %v2822 = vsel %vm1579, %v2812, %v2813
        %v2823 = vsel %vm1579, %v2811, %v2812
        %v2824 = vsel %vm1579, %v2810, %v2811
        %v2825 = vsel %vm1579, %v2809, %v2810
        %v2826 = vsel %vm1579, %v2808, %v2809
        %v2827 = vsel %vm1579, %v2807, %v2808
        %v2828 = vsel %vm1579, %v2806, %v2807
        %v2829 = vsel %vm1579, %v2805, %v2806
        %v2830 = vsel %vm1579, %v2804, %v2805
        %v2831 = vsel %vm1579, %v2803, %v2804
        %v2832 = vsel %vm1579, %v2802, %v2803
        %v2833 = vsel %vm1579, %v2801, %v2802
        %v2834 = vsel %vm1579, %v2800, %v2801
        %v2835 = vsel %vm1579, %v2799, %v2800
        %v2836 = vsel %vm1579, %v2798, %v2799
        %v2837 = vsel %vm1579, %v2797, %v2798
        %v2838 = vsel %vm1579, %v2796, %v2797
        %v2839 = vsel %vm1579, %v2795, %v2796
        %v2840 = vsel %vm1579, %v2794, %v2795
        %v2841 = vsel %vm1579, %v2793, %v2794
        %v2842 = vsel %vm1579, %v2792, %v2793
        %v2843 = vsel %vm1579, %v2791, %v2792
        %v2844 = vsel %vm1579, %v2790, %v2791
        %v2845 = vsel %vm1579, %v2789, %v2790
        %v2846 = vsel %vm1579, %v2788, %v2789
        %v2847 = vsel %vm1579, %v2787, %v2788
        %v2848 = vsel %vm1579, %v2786, %v2787
        %v2849 = vsel %vm1579, %v2817, %v2786
        %v2850 = vsel %vm1387, %v2849, 0.0
        %v2851 = vsel %vm1388, %v2848, 0.0
        %v2852 = vsel %vm1389, %v2847, 0.0
        %v2853 = vsel %vm1390, %v2846, 0.0
        %v2854 = vsel %vm1391, %v2845, 0.0
        %v2855 = vsel %vm1392, %v2844, 0.0
        %v2856 = vsel %vm1393, %v2843, 0.0
        %v2857 = vsel %vm1394, %v2842, 0.0
        %v2858 = vsel %vm1395, %v2841, 0.0
        %v2859 = vsel %vm1396, %v2840, 0.0
        %v2860 = vsel %vm1397, %v2839, 0.0
        %v2861 = vsel %vm1398, %v2838, 0.0
        %v2862 = vsel %vm1399, %v2837, 0.0
        %v2863 = vsel %vm1400, %v2836, 0.0
        %v2864 = vsel %vm1401, %v2835, 0.0
        %v2865 = vsel %vm1402, %v2834, 0.0
        %v2866 = vsel %vm1403, %v2833, 0.0
        %v2867 = vsel %vm1404, %v2832, 0.0
        %v2868 = vsel %vm1405, %v2831, 0.0
        %v2869 = vsel %vm1406, %v2830, 0.0
        %v2870 = vsel %vm1407, %v2829, 0.0
        %v2871 = vsel %vm1408, %v2828, 0.0
        %v2872 = vsel %vm1409, %v2827, 0.0
        %v2873 = vsel %vm1410, %v2826, 0.0
        %v2874 = vsel %vm1411, %v2825, 0.0
        %v2875 = vsel %vm1412, %v2824, 0.0
        %v2876 = vsel %vm1413, %v2823, 0.0
        %v2877 = vsel %vm1414, %v2822, 0.0
        %v2878 = vsel %vm1415, %v2821, 0.0
        %v2879 = vsel %vm1416, %v2820, 0.0
        %v2880 = vsel %vm1417, %v2819, 0.0
        %v2881 = vsel %vm1418, %v2818, 0.0
        %v2882 = vpack.c.bf16 %v2851, %v2850
        %v2883 = vpack.c.bf16 %v2853, %v2852
        %v2884 = vpack.c.bf16 %v2855, %v2854
        %v2885 = vpack.c.bf16 %v2857, %v2856
        %v2886 = vpack.c.bf16 %v2859, %v2858
        %v2887 = vpack.c.bf16 %v2861, %v2860
        %v2888 = vpack.c.bf16 %v2863, %v2862
        %v2889 = vpack.c.bf16 %v2865, %v2864
        %v2890 = vpack.c.bf16 %v2867, %v2866
        %v2891 = vpack.c.bf16 %v2869, %v2868
        %v2892 = vpack.c.bf16 %v2871, %v2870
        %v2893 = vpack.c.bf16 %v2873, %v2872
        %v2894 = vpack.c.bf16 %v2875, %v2874
        %v2895 = vpack.c.bf16 %v2877, %v2876
        %v2896 = vpack.c.bf16 %v2879, %v2878
        %v2897 = vpack.c.bf16 %v2881, %v2880
        %s2898 = scalar_lea.vmem [#allocation5], 192
        %v2899 = vld [vmem:[%s2898] sm:$0xf]
        %v2900 = vld [vmem:[%s2898 + $0x4] sm:$0xf]
        %v2901 = vld [vmem:[%s2898 + $0x8] sm:$0xf]
        %v2902 = vld [vmem:[%s2898 + $0xc] sm:$0xf]
        %v2903 = vld [vmem:[%s2898 + $0x10] sm:$0xf]
        %v2904 = vld [vmem:[%s2898 + $0x14] sm:$0xf]
        %v2905 = vld [vmem:[%s2898 + $0x18] sm:$0xf]
        %v2906 = vld [vmem:[%s2898 + $0x1c] sm:$0xf]
        %v2907 = vld [vmem:[%s2898 + $0x20] sm:$0xf]
        %v2908 = vld [vmem:[%s2898 + $0x24] sm:$0xf]
        %v2909 = vld [vmem:[%s2898 + $0x28] sm:$0xf]
        %v2910 = vld [vmem:[%s2898 + $0x2c] sm:$0xf]
        %v2911 = vld [vmem:[%s2898 + $0x30] sm:$0xf]
        %v2912 = vld [vmem:[%s2898 + $0x34] sm:$0xf]
        %v2913 = vld [vmem:[%s2898 + $0x38] sm:$0xf]
        %v2914 = vld [vmem:[%s2898 + $0x3c] sm:$0xf]
        %v2931 = vunpack.c.l.b16 %v2899
        %v2932 = vunpack.c.l.b16 %v2900
        %v2933 = vunpack.c.l.b16 %v2901
        %v2934 = vunpack.c.l.b16 %v2902
        %v2935 = vunpack.c.l.b16 %v2903
        %v2936 = vunpack.c.l.b16 %v2904
        %v2937 = vunpack.c.l.b16 %v2905
        %v2938 = vunpack.c.l.b16 %v2906
        %v2939 = vunpack.c.l.b16 %v2907
        %v2940 = vunpack.c.l.b16 %v2908
        %v2941 = vunpack.c.l.b16 %v2909
        %v2942 = vunpack.c.l.b16 %v2910
        %v2943 = vunpack.c.l.b16 %v2911
        %v2944 = vunpack.c.l.b16 %v2912
        %v2945 = vunpack.c.l.b16 %v2913
        %v2946 = vunpack.c.l.b16 %v2914
        %v2947 = vpack.c.b16 %v2932, %v2931
        %v2948 = vpack.c.b16 %v2934, %v2933
        %v2949 = vpack.c.b16 %v2936, %v2935
        %v2950 = vpack.c.b16 %v2938, %v2937
        %v2951 = vpack.c.b16 %v2940, %v2939
        %v2952 = vpack.c.b16 %v2942, %v2941
        %v2953 = vpack.c.b16 %v2944, %v2943
        %v2954 = vpack.c.b16 %v2946, %v2945
        %2963 = vmatprep.subr.bf16.mxu0 0
        %2964 = vmatpush1.bf16.msra.mxu0 %v2947
        %2965 = vmatprep.subr.bf16.mxu0 0
        %2966 = vmatpush1.bf16.msra.mxu0 %v2948
        %2967 = vmatprep.subr.bf16.mxu0 0
        %2968 = vmatpush1.bf16.msra.mxu0 %v2949
        %2969 = vmatprep.subr.bf16.mxu0 0
        %2970 = vmatpush1.bf16.msra.mxu0 %v2950
        %2971 = vmatprep.subr.bf16.mxu0 0
        %2972 = vmatpush1.bf16.msra.mxu0 %v2951
        %2973 = vmatprep.subr.bf16.mxu0 0
        %2974 = vmatpush1.bf16.msra.mxu0 %v2952
        %2975 = vmatprep.subr.bf16.mxu0 0
        %2976 = vmatpush1.bf16.msra.mxu0 %v2953
        %2977 = vmatprep.subr.bf16.mxu0 0
        %2978 = vmatpush1.bf16.msra.mxu0 %v2954
        %2979 = vmatprep.subr.bf16.mxu0 0
        %2980 = vmatpush1.bf16.msra.mxu0 0
        %2981 = vmatprep.subr.bf16.mxu0 0
        %2982 = vmatpush1.bf16.msra.mxu0 0
        %2983 = vmatprep.subr.bf16.mxu0 0
        %2984 = vmatpush1.bf16.msra.mxu0 0
        %2985 = vmatprep.subr.bf16.mxu0 0
        %2986 = vmatpush1.bf16.msra.mxu0 0
        %2987 = vmatprep.subr.bf16.mxu0 0
        %2988 = vmatpush1.bf16.msra.mxu0 0
        %2989 = vmatprep.subr.bf16.mxu0 0
        %2990 = vmatpush1.bf16.msra.mxu0 0
        %2991 = vmatprep.subr.bf16.mxu0 0
        %2992 = vmatpush1.bf16.msra.mxu0 0
        %2993 = vmatprep.subr.bf16.mxu0 0
        %2994 = vmatpush1.bf16.msra.mxu0 0
        %2995 = vmatprep.mubr.bf16.mxu0 0
        %2996 = vmatmul.mubr.bf16.gmra.mrb[0].mxu0 %v2882
        %v2997 = vpop.f32.mrb[0].mxu0
        %v2998 = vadd.f32 0.0, %v2997
        %v2999 = vpop.f32.mrb[0].mxu0
        %v3000 = vpop.f32.mrb[0].mxu0
        %v3001 = vadd.f32 0.0, %v3000
        %v3002 = vpop.f32.mrb[0].mxu0
        %3003 = vmatprep.mubr.bf16.mxu0 0
        %3004 = vmatmul.mubr.bf16.gmra.mrb[0].mxu0 %v2883
        %v3005 = vpop.f32.mrb[0].mxu0
        %v3006 = vadd.f32 0.0, %v3005
        %v3007 = vpop.f32.mrb[0].mxu0
        %v3008 = vpop.f32.mrb[0].mxu0
        %v3009 = vadd.f32 0.0, %v3008
        %v3010 = vpop.f32.mrb[0].mxu0
        %3011 = vmatprep.mubr.bf16.mxu0 0
        %3012 = vmatmul.mubr.bf16.gmra.mrb[0].mxu0 %v2884
        %v3013 = vpop.f32.mrb[0].mxu0
        %v3014 = vadd.f32 0.0, %v3013
        %v3015 = vpop.f32.mrb[0].mxu0
        %v3016 = vpop.f32.mrb[0].mxu0
        %v3017 = vadd.f32 0.0, %v3016
        %v3018 = vpop.f32.mrb[0].mxu0
        %3019 = vmatprep.mubr.bf16.mxu0 0
        %3020 = vmatmul.mubr.bf16.gmra.mrb[0].mxu0 %v2885
        %v3021 = vpop.f32.mrb[0].mxu0
        %v3022 = vadd.f32 0.0, %v3021
        %v3023 = vpop.f32.mrb[0].mxu0
        %v3024 = vpop.f32.mrb[0].mxu0
        %v3025 = vadd.f32 0.0, %v3024
        %v3026 = vpop.f32.mrb[0].mxu0
        %3027 = vmatprep.mubr.bf16.mxu0 0
        %3028 = vmatmul.mubr.bf16.gmra.mrb[0].mxu0 %v2886
        %v3029 = vpop.f32.mrb[0].mxu0
        %v3030 = vadd.f32 0.0, %v3029
        %v3031 = vpop.f32.mrb[0].mxu0
        %v3032 = vpop.f32.mrb[0].mxu0
        %v3033 = vadd.f32 0.0, %v3032
        %v3034 = vpop.f32.mrb[0].mxu0
        %3035 = vmatprep.mubr.bf16.mxu0 0
        %3036 = vmatmul.mubr.bf16.gmra.mrb[0].mxu0 %v2887
        %v3037 = vpop.f32.mrb[0].mxu0
        %v3038 = vadd.f32 0.0, %v3037
        %v3039 = vpop.f32.mrb[0].mxu0
        %v3040 = vpop.f32.mrb[0].mxu0
        %v3041 = vadd.f32 0.0, %v3040
        %v3042 = vpop.f32.mrb[0].mxu0
        %3043 = vmatprep.mubr.bf16.mxu0 0
        %3044 = vmatmul.mubr.bf16.gmra.mrb[0].mxu0 %v2888
        %v3045 = vpop.f32.mrb[0].mxu0
        %v3046 = vadd.f32 0.0, %v3045
        %v3047 = vpop.f32.mrb[0].mxu0
        %v3048 = vpop.f32.mrb[0].mxu0
        %v3049 = vadd.f32 0.0, %v3048
        %v3050 = vpop.f32.mrb[0].mxu0
        %3051 = vmatprep.mubr.bf16.mxu0 0
        %3052 = vmatmul.mubr.bf16.gmra.mrb[0].mxu0 %v2889
        %v3053 = vpop.f32.mrb[0].mxu0
        %v3054 = vadd.f32 0.0, %v3053
        %v3055 = vpop.f32.mrb[0].mxu0
        %v3056 = vpop.f32.mrb[0].mxu0
        %v3057 = vadd.f32 0.0, %v3056
        %v3058 = vpop.f32.mrb[0].mxu0
        %3059 = vmatprep.mubr.bf16.mxu0 0
        %3060 = vmatmul.mubr.bf16.gmra.mrb[0].mxu0 %v2890
        %v3061 = vpop.f32.mrb[0].mxu0
        %v3062 = vadd.f32 0.0, %v3061
        %v3063 = vpop.f32.mrb[0].mxu0
        %v3064 = vpop.f32.mrb[0].mxu0
        %v3065 = vadd.f32 0.0, %v3064
        %v3066 = vpop.f32.mrb[0].mxu0
        %3067 = vmatprep.mubr.bf16.mxu0 0
        %3068 = vmatmul.mubr.bf16.gmra.mrb[0].mxu0 %v2891
        %v3069 = vpop.f32.mrb[0].mxu0
        %v3070 = vadd.f32 0.0, %v3069
        %v3071 = vpop.f32.mrb[0].mxu0
        %v3072 = vpop.f32.mrb[0].mxu0
        %v3073 = vadd.f32 0.0, %v3072
        %v3074 = vpop.f32.mrb[0].mxu0
        %3075 = vmatprep.mubr.bf16.mxu0 0
        %3076 = vmatmul.mubr.bf16.gmra.mrb[0].mxu0 %v2892
        %v3077 = vpop.f32.mrb[0].mxu0
        %v3078 = vadd.f32 0.0, %v3077
        %v3079 = vpop.f32.mrb[0].mxu0
        %v3080 = vpop.f32.mrb[0].mxu0
        %v3081 = vadd.f32 0.0, %v3080
        %v3082 = vpop.f32.mrb[0].mxu0
        %3083 = vmatprep.mubr.bf16.mxu0 0
        %3084 = vmatmul.mubr.bf16.gmra.mrb[0].mxu0 %v2893
        %v3085 = vpop.f32.mrb[0].mxu0
        %v3086 = vadd.f32 0.0, %v3085
        %v3087 = vpop.f32.mrb[0].mxu0
        %v3088 = vpop.f32.mrb[0].mxu0
        %v3089 = vadd.f32 0.0, %v3088
        %v3090 = vpop.f32.mrb[0].mxu0
        %3091 = vmatprep.mubr.bf16.mxu0 0
        %3092 = vmatmul.mubr.bf16.gmra.mrb[0].mxu0 %v2894
        %v3093 = vpop.f32.mrb[0].mxu0
        %v3094 = vadd.f32 0.0, %v3093
        %v3095 = vpop.f32.mrb[0].mxu0
        %v3096 = vpop.f32.mrb[0].mxu0
        %v3097 = vadd.f32 0.0, %v3096
        %v3098 = vpop.f32.mrb[0].mxu0
        %3099 = vmatprep.mubr.bf16.mxu0 0
        %3100 = vmatmul.mubr.bf16.gmra.mrb[0].mxu0 %v2895
        %v3101 = vpop.f32.mrb[0].mxu0
        %v3102 = vadd.f32 0.0, %v3101
        %v3103 = vpop.f32.mrb[0].mxu0
        %v3104 = vpop.f32.mrb[0].mxu0
        %v3105 = vadd.f32 0.0, %v3104
        %v3106 = vpop.f32.mrb[0].mxu0
        %3107 = vmatprep.mubr.bf16.mxu0 0
        %3108 = vmatmul.mubr.bf16.gmra.mrb[0].mxu0 %v2896
        %v3109 = vpop.f32.mrb[0].mxu0
        %v3110 = vadd.f32 0.0, %v3109
        %v3111 = vpop.f32.mrb[0].mxu0
        %v3112 = vpop.f32.mrb[0].mxu0
        %v3113 = vadd.f32 0.0, %v3112
        %v3114 = vpop.f32.mrb[0].mxu0
        %3115 = vmatprep.mubr.bf16.mxu0 0
        %3116 = vmatmul.mubr.bf16.gmra.mrb[0].mxu0 %v2897
        %v3117 = vpop.f32.mrb[0].mxu0
        %v3118 = vadd.f32 0.0, %v3117
        %v3119 = vpop.f32.mrb[0].mxu0
        %v3120 = vpop.f32.mrb[0].mxu0
        %v3121 = vadd.f32 0.0, %v3120
        %v3122 = vpop.f32.mrb[0].mxu0
        %3123 = vdwg.mxu0
        %v3124 = vld [vmem:[#allocation4] sm:$0xff]
        %v3125 = vld [vmem:[#allocation4 + $0x8] sm:$0xff]
        %v3126 = vld [vmem:[#allocation4 + $0x10] sm:$0xff]
        %v3127 = vld [vmem:[#allocation4 + $0x18] sm:$0xff]
        %v3128 = vld [vmem:[#allocation4 + $0x20] sm:$0xff]
        %v3129 = vld [vmem:[#allocation4 + $0x28] sm:$0xff]
        %v3130 = vld [vmem:[#allocation4 + $0x30] sm:$0xff]
        %v3131 = vld [vmem:[#allocation4 + $0x38] sm:$0xff]
        %v3132 = vld [vmem:[#allocation4 + $0x40] sm:$0xff]
        %v3133 = vld [vmem:[#allocation4 + $0x48] sm:$0xff]
        %v3134 = vld [vmem:[#allocation4 + $0x50] sm:$0xff]
        %v3135 = vld [vmem:[#allocation4 + $0x58] sm:$0xff]
        %v3136 = vld [vmem:[#allocation4 + $0x60] sm:$0xff]
        %v3137 = vld [vmem:[#allocation4 + $0x68] sm:$0xff]
        %v3138 = vld [vmem:[#allocation4 + $0x70] sm:$0xff]
        %v3139 = vld [vmem:[#allocation4 + $0x78] sm:$0xff]
        %v3140 = vld [vmem:[#allocation4 + $0x80] sm:$0xff]
        %v3141 = vld [vmem:[#allocation4 + $0x88] sm:$0xff]
        %v3142 = vld [vmem:[#allocation4 + $0x90] sm:$0xff]
        %v3143 = vld [vmem:[#allocation4 + $0x98] sm:$0xff]
        %v3144 = vld [vmem:[#allocation4 + $0xa0] sm:$0xff]
        %v3145 = vld [vmem:[#allocation4 + $0xa8] sm:$0xff]
        %v3146 = vld [vmem:[#allocation4 + $0xb0] sm:$0xff]
        %v3147 = vld [vmem:[#allocation4 + $0xb8] sm:$0xff]
        %v3148 = vld [vmem:[#allocation4 + $0xc0] sm:$0xff]
        %v3149 = vld [vmem:[#allocation4 + $0xc8] sm:$0xff]
        %v3150 = vld [vmem:[#allocation4 + $0xd0] sm:$0xff]
        %v3151 = vld [vmem:[#allocation4 + $0xd8] sm:$0xff]
        %v3152 = vld [vmem:[#allocation4 + $0xe0] sm:$0xff]
        %v3153 = vld [vmem:[#allocation4 + $0xe8] sm:$0xff]
        %v3154 = vld [vmem:[#allocation4 + $0xf0] sm:$0xff]
        %v3155 = vld [vmem:[#allocation4 + $0xf8] sm:$0xff]
        %v3156 = vadd.f32 %v3124, %v2998
        %v3157 = vadd.f32 %v3125, %v3001
        %v3158 = vadd.f32 %v3126, %v3006
        %v3159 = vadd.f32 %v3127, %v3009
        %v3160 = vadd.f32 %v3128, %v3014
        %v3161 = vadd.f32 %v3129, %v3017
        %v3162 = vadd.f32 %v3130, %v3022
        %v3163 = vadd.f32 %v3131, %v3025
        %v3164 = vadd.f32 %v3132, %v3030
        %v3165 = vadd.f32 %v3133, %v3033
        %v3166 = vadd.f32 %v3134, %v3038
        %v3167 = vadd.f32 %v3135, %v3041
        %v3168 = vadd.f32 %v3136, %v3046
        %v3169 = vadd.f32 %v3137, %v3049
        %v3170 = vadd.f32 %v3138, %v3054
        %v3171 = vadd.f32 %v3139, %v3057
        %v3172 = vadd.f32 %v3140, %v3062
        %v3173 = vadd.f32 %v3141, %v3065
        %v3174 = vadd.f32 %v3142, %v3070
        %v3175 = vadd.f32 %v3143, %v3073
        %v3176 = vadd.f32 %v3144, %v3078
        %v3177 = vadd.f32 %v3145, %v3081
        %v3178 = vadd.f32 %v3146, %v3086
        %v3179 = vadd.f32 %v3147, %v3089
        %v3180 = vadd.f32 %v3148, %v3094
        %v3181 = vadd.f32 %v3149, %v3097
        %v3182 = vadd.f32 %v3150, %v3102
        %v3183 = vadd.f32 %v3151, %v3105
        %v3184 = vadd.f32 %v3152, %v3110
        %v3185 = vadd.f32 %v3153, %v3113
        %v3186 = vadd.f32 %v3154, %v3118
        %v3187 = vadd.f32 %v3155, %v3121
        %3188 = vst [vmem:[#allocation4] sm:$0xff] %v3156
        %3189 = vst [vmem:[#allocation4 + $0x8] sm:$0xff] %v3157
        %3190 = vst [vmem:[#allocation4 + $0x10] sm:$0xff] %v3158
        %3191 = vst [vmem:[#allocation4 + $0x18] sm:$0xff] %v3159
        %3192 = vst [vmem:[#allocation4 + $0x20] sm:$0xff] %v3160
        %3193 = vst [vmem:[#allocation4 + $0x28] sm:$0xff] %v3161
        %3194 = vst [vmem:[#allocation4 + $0x30] sm:$0xff] %v3162
        %3195 = vst [vmem:[#allocation4 + $0x38] sm:$0xff] %v3163
        %3196 = vst [vmem:[#allocation4 + $0x40] sm:$0xff] %v3164
        %3197 = vst [vmem:[#allocation4 + $0x48] sm:$0xff] %v3165
        %3198 = vst [vmem:[#allocation4 + $0x50] sm:$0xff] %v3166
        %3199 = vst [vmem:[#allocation4 + $0x58] sm:$0xff] %v3167
        %3200 = vst [vmem:[#allocation4 + $0x60] sm:$0xff] %v3168
        %3201 = vst [vmem:[#allocation4 + $0x68] sm:$0xff] %v3169
        %3202 = vst [vmem:[#allocation4 + $0x70] sm:$0xff] %v3170
        %3203 = vst [vmem:[#allocation4 + $0x78] sm:$0xff] %v3171
        %3204 = vst [vmem:[#allocation4 + $0x80] sm:$0xff] %v3172
        %3205 = vst [vmem:[#allocation4 + $0x88] sm:$0xff] %v3173
        %3206 = vst [vmem:[#allocation4 + $0x90] sm:$0xff] %v3174
        %3207 = vst [vmem:[#allocation4 + $0x98] sm:$0xff] %v3175
        %3208 = vst [vmem:[#allocation4 + $0xa0] sm:$0xff] %v3176
        %3209 = vst [vmem:[#allocation4 + $0xa8] sm:$0xff] %v3177
        %3210 = vst [vmem:[#allocation4 + $0xb0] sm:$0xff] %v3178
        %3211 = vst [vmem:[#allocation4 + $0xb8] sm:$0xff] %v3179
        %3212 = vst [vmem:[#allocation4 + $0xc0] sm:$0xff] %v3180
        %3213 = vst [vmem:[#allocation4 + $0xc8] sm:$0xff] %v3181
        %3214 = vst [vmem:[#allocation4 + $0xd0] sm:$0xff] %v3182
        %3215 = vst [vmem:[#allocation4 + $0xd8] sm:$0xff] %v3183
        %3216 = vst [vmem:[#allocation4 + $0xe0] sm:$0xff] %v3184
        %3217 = vst [vmem:[#allocation4 + $0xe8] sm:$0xff] %v3185
        %3218 = vst [vmem:[#allocation4 + $0xf0] sm:$0xff] %v3186
        %3219 = vst [vmem:[#allocation4 + $0xf8] sm:$0xff] %v3187
        %v3220 = vld [vmem:[%s873] sm:$0xff]
        %v3221 = vld [vmem:[%s873 + $0x8] sm:$0xff]
        %v3222 = vld [vmem:[%s873 + $0x10] sm:$0xff]
        %v3223 = vld [vmem:[%s873 + $0x18] sm:$0xff]
        %v3224 = vld [vmem:[%s873 + $0x20] sm:$0xff]
        %v3225 = vld [vmem:[%s873 + $0x28] sm:$0xff]
        %v3226 = vld [vmem:[%s873 + $0x30] sm:$0xff]
        %v3227 = vld [vmem:[%s873 + $0x38] sm:$0xff]
        %v3228 = vld [vmem:[%s873 + $0x40] sm:$0xff]
        %v3229 = vld [vmem:[%s873 + $0x48] sm:$0xff]
        %v3230 = vld [vmem:[%s873 + $0x50] sm:$0xff]
        %v3231 = vld [vmem:[%s873 + $0x58] sm:$0xff]
        %v3232 = vld [vmem:[%s873 + $0x60] sm:$0xff]
        %v3233 = vld [vmem:[%s873 + $0x68] sm:$0xff]
        %v3234 = vld [vmem:[%s873 + $0x70] sm:$0xff]
        %v3235 = vld [vmem:[%s873 + $0x78] sm:$0xff]
        %v3236 = vld [vmem:[%s873 + $0x80] sm:$0xff]
        %v3237 = vld [vmem:[%s873 + $0x88] sm:$0xff]
        %v3238 = vld [vmem:[%s873 + $0x90] sm:$0xff]
        %v3239 = vld [vmem:[%s873 + $0x98] sm:$0xff]
        %v3240 = vld [vmem:[%s873 + $0xa0] sm:$0xff]
        %v3241 = vld [vmem:[%s873 + $0xa8] sm:$0xff]
        %v3242 = vld [vmem:[%s873 + $0xb0] sm:$0xff]
        %v3243 = vld [vmem:[%s873 + $0xb8] sm:$0xff]
        %v3244 = vld [vmem:[%s873 + $0xc0] sm:$0xff]
        %v3245 = vld [vmem:[%s873 + $0xc8] sm:$0xff]
        %v3246 = vld [vmem:[%s873 + $0xd0] sm:$0xff]
        %v3247 = vld [vmem:[%s873 + $0xd8] sm:$0xff]
        %v3248 = vld [vmem:[%s873 + $0xe0] sm:$0xff]
        %v3249 = vld [vmem:[%s873 + $0xe8] sm:$0xff]
        %v3250 = vld [vmem:[%s873 + $0xf0] sm:$0xff]
        %v3251 = vld [vmem:[%s873 + $0xf8] sm:$0xff]
        %v3252 = vpack.c.bf16 %v3221, %v3220
        %v3253 = vpack.c.bf16 %v3223, %v3222
        %v3254 = vpack.c.bf16 %v3225, %v3224
        %v3255 = vpack.c.bf16 %v3227, %v3226
        %v3256 = vpack.c.bf16 %v3229, %v3228
        %v3257 = vpack.c.bf16 %v3231, %v3230
        %v3258 = vpack.c.bf16 %v3233, %v3232
        %v3259 = vpack.c.bf16 %v3235, %v3234
        %v3260 = vpack.c.bf16 %v3237, %v3236
        %v3261 = vpack.c.bf16 %v3239, %v3238
        %v3262 = vpack.c.bf16 %v3241, %v3240
        %v3263 = vpack.c.bf16 %v3243, %v3242
        %v3264 = vpack.c.bf16 %v3245, %v3244
        %v3265 = vpack.c.bf16 %v3247, %v3246
        %v3266 = vpack.c.bf16 %v3249, %v3248
        %v3267 = vpack.c.bf16 %v3251, %v3250
        %s3268 = scalar_lea.vmem [#allocation5], 256
        %v3269 = vld [vmem:[%s3268] sm:$0xf]
        %v3270 = vld [vmem:[%s3268 + $0x4] sm:$0xf]
        %v3271 = vld [vmem:[%s3268 + $0x8] sm:$0xf]
        %v3272 = vld [vmem:[%s3268 + $0xc] sm:$0xf]
        %v3273 = vld [vmem:[%s3268 + $0x10] sm:$0xf]
        %v3274 = vld [vmem:[%s3268 + $0x14] sm:$0xf]
        %v3275 = vld [vmem:[%s3268 + $0x18] sm:$0xf]
        %v3276 = vld [vmem:[%s3268 + $0x1c] sm:$0xf]
        %v3277 = vld [vmem:[%s3268 + $0x20] sm:$0xf]
        %v3278 = vld [vmem:[%s3268 + $0x24] sm:$0xf]
        %v3279 = vld [vmem:[%s3268 + $0x28] sm:$0xf]
        %v3280 = vld [vmem:[%s3268 + $0x2c] sm:$0xf]
        %v3281 = vld [vmem:[%s3268 + $0x30] sm:$0xf]
        %v3282 = vld [vmem:[%s3268 + $0x34] sm:$0xf]
        %v3283 = vld [vmem:[%s3268 + $0x38] sm:$0xf]
        %v3284 = vld [vmem:[%s3268 + $0x3c] sm:$0xf]
        %v3301 = vunpack.c.l.b16 %v3269
        %v3302 = vunpack.c.l.b16 %v3270
        %v3303 = vunpack.c.l.b16 %v3271
        %v3304 = vunpack.c.l.b16 %v3272
        %v3305 = vunpack.c.l.b16 %v3273
        %v3306 = vunpack.c.l.b16 %v3274
        %v3307 = vunpack.c.l.b16 %v3275
        %v3308 = vunpack.c.l.b16 %v3276
        %v3309 = vunpack.c.l.b16 %v3277
        %v3310 = vunpack.c.l.b16 %v3278
        %v3311 = vunpack.c.l.b16 %v3279
        %v3312 = vunpack.c.l.b16 %v3280
        %v3313 = vunpack.c.l.b16 %v3281
        %v3314 = vunpack.c.l.b16 %v3282
        %v3315 = vunpack.c.l.b16 %v3283
        %v3316 = vunpack.c.l.b16 %v3284
        %v3317 = vpack.c.b16 %v3302, %v3301
        %v3318 = vpack.c.b16 %v3304, %v3303
        %v3319 = vpack.c.b16 %v3306, %v3305
        %v3320 = vpack.c.b16 %v3308, %v3307
        %v3321 = vpack.c.b16 %v3310, %v3309
        %v3322 = vpack.c.b16 %v3312, %v3311
        %v3323 = vpack.c.b16 %v3314, %v3313
        %v3324 = vpack.c.b16 %v3316, %v3315
        %3333 = vmatprep.subr.bf16.mxu0 0
        %3334 = vmatpush1.bf16.msra.mxu0 %v3317
        %3335 = vmatprep.subr.bf16.mxu0 0
        %3336 = vmatpush1.bf16.msra.mxu0 %v3318
        %3337 = vmatprep.subr.bf16.mxu0 0
        %3338 = vmatpush1.bf16.msra.mxu0 %v3319
        %3339 = vmatprep.subr.bf16.mxu0 0
        %3340 = vmatpush1.bf16.msra.mxu0 %v3320
        %3341 = vmatprep.subr.bf16.mxu0 0
        %3342 = vmatpush1.bf16.msra.mxu0 %v3321
        %3343 = vmatprep.subr.bf16.mxu0 0
        %3344 = vmatpush1.bf16.msra.mxu0 %v3322
        %3345 = vmatprep.subr.bf16.mxu0 0
        %3346 = vmatpush1.bf16.msra.mxu0 %v3323
        %3347 = vmatprep.subr.bf16.mxu0 0
        %3348 = vmatpush1.bf16.msra.mxu0 %v3324
        %3349 = vmatprep.subr.bf16.mxu0 0
        %3350 = vmatpush1.bf16.msra.mxu0 0
        %3351 = vmatprep.subr.bf16.mxu0 0
        %3352 = vmatpush1.bf16.msra.mxu0 0
        %3353 = vmatprep.subr.bf16.mxu0 0
        %3354 = vmatpush1.bf16.msra.mxu0 0
        %3355 = vmatprep.subr.bf16.mxu0 0
        %3356 = vmatpush1.bf16.msra.mxu0 0
        %3357 = vmatprep.subr.bf16.mxu0 0
        %3358 = vmatpush1.bf16.msra.mxu0 0
        %3359 = vmatprep.subr.bf16.mxu0 0
        %3360 = vmatpush1.bf16.msra.mxu0 0
        %3361 = vmatprep.subr.bf16.mxu0 0
        %3362 = vmatpush1.bf16.msra.mxu0 0
        %3363 = vmatprep.subr.bf16.mxu0 0
        %3364 = vmatpush1.bf16.msra.mxu0 0
        %3365 = vmatprep.mubr.bf16.mxu0 0
        %3366 = vmatmul.mubr.bf16.gmra.mrb[0].mxu0 %v3252
        %v3367 = vpop.f32.mrb[0].mxu0
        %v3368 = vadd.f32 0.0, %v3367
        %v3369 = vpop.f32.mrb[0].mxu0
        %v3370 = vpop.f32.mrb[0].mxu0
        %v3371 = vadd.f32 0.0, %v3370
        %v3372 = vpop.f32.mrb[0].mxu0
        %3373 = vmatprep.mubr.bf16.mxu0 0
        %3374 = vmatmul.mubr.bf16.gmra.mrb[0].mxu0 %v3253
        %v3375 = vpop.f32.mrb[0].mxu0
        %v3376 = vadd.f32 0.0, %v3375
        %v3377 = vpop.f32.mrb[0].mxu0
        %v3378 = vpop.f32.mrb[0].mxu0
        %v3379 = vadd.f32 0.0, %v3378
        %v3380 = vpop.f32.mrb[0].mxu0
        %3381 = vmatprep.mubr.bf16.mxu0 0
        %3382 = vmatmul.mubr.bf16.gmra.mrb[0].mxu0 %v3254
        %v3383 = vpop.f32.mrb[0].mxu0
        %v3384 = vadd.f32 0.0, %v3383
        %v3385 = vpop.f32.mrb[0].mxu0
        %v3386 = vpop.f32.mrb[0].mxu0
        %v3387 = vadd.f32 0.0, %v3386
        %v3388 = vpop.f32.mrb[0].mxu0
        %3389 = vmatprep.mubr.bf16.mxu0 0
        %3390 = vmatmul.mubr.bf16.gmra.mrb[0].mxu0 %v3255
        %v3391 = vpop.f32.mrb[0].mxu0
        %v3392 = vadd.f32 0.0, %v3391
        %v3393 = vpop.f32.mrb[0].mxu0
        %v3394 = vpop.f32.mrb[0].mxu0
        %v3395 = vadd.f32 0.0, %v3394
        %v3396 = vpop.f32.mrb[0].mxu0
        %3397 = vmatprep.mubr.bf16.mxu0 0
        %3398 = vmatmul.mubr.bf16.gmra.mrb[0].mxu0 %v3256
        %v3399 = vpop.f32.mrb[0].mxu0
        %v3400 = vadd.f32 0.0, %v3399
        %v3401 = vpop.f32.mrb[0].mxu0
        %v3402 = vpop.f32.mrb[0].mxu0
        %v3403 = vadd.f32 0.0, %v3402
        %v3404 = vpop.f32.mrb[0].mxu0
        %3405 = vmatprep.mubr.bf16.mxu0 0
        %3406 = vmatmul.mubr.bf16.gmra.mrb[0].mxu0 %v3257
        %v3407 = vpop.f32.mrb[0].mxu0
        %v3408 = vadd.f32 0.0, %v3407
        %v3409 = vpop.f32.mrb[0].mxu0
        %v3410 = vpop.f32.mrb[0].mxu0
        %v3411 = vadd.f32 0.0, %v3410
        %v3412 = vpop.f32.mrb[0].mxu0
        %3413 = vmatprep.mubr.bf16.mxu0 0
        %3414 = vmatmul.mubr.bf16.gmra.mrb[0].mxu0 %v3258
        %v3415 = vpop.f32.mrb[0].mxu0
        %v3416 = vadd.f32 0.0, %v3415
        %v3417 = vpop.f32.mrb[0].mxu0
        %v3418 = vpop.f32.mrb[0].mxu0
        %v3419 = vadd.f32 0.0, %v3418
        %v3420 = vpop.f32.mrb[0].mxu0
        %3421 = vmatprep.mubr.bf16.mxu0 0
        %3422 = vmatmul.mubr.bf16.gmra.mrb[0].mxu0 %v3259
        %v3423 = vpop.f32.mrb[0].mxu0
        %v3424 = vadd.f32 0.0, %v3423
        %v3425 = vpop.f32.mrb[0].mxu0
        %v3426 = vpop.f32.mrb[0].mxu0
        %v3427 = vadd.f32 0.0, %v3426
        %v3428 = vpop.f32.mrb[0].mxu0
        %3429 = vmatprep.mubr.bf16.mxu0 0
        %3430 = vmatmul.mubr.bf16.gmra.mrb[0].mxu0 %v3260
        %v3431 = vpop.f32.mrb[0].mxu0
        %v3432 = vadd.f32 0.0, %v3431
        %v3433 = vpop.f32.mrb[0].mxu0
        %v3434 = vpop.f32.mrb[0].mxu0
        %v3435 = vadd.f32 0.0, %v3434
        %v3436 = vpop.f32.mrb[0].mxu0
        %3437 = vmatprep.mubr.bf16.mxu0 0
        %3438 = vmatmul.mubr.bf16.gmra.mrb[0].mxu0 %v3261
        %v3439 = vpop.f32.mrb[0].mxu0
        %v3440 = vadd.f32 0.0, %v3439
        %v3441 = vpop.f32.mrb[0].mxu0
        %v3442 = vpop.f32.mrb[0].mxu0
        %v3443 = vadd.f32 0.0, %v3442
        %v3444 = vpop.f32.mrb[0].mxu0
        %3445 = vmatprep.mubr.bf16.mxu0 0
        %3446 = vmatmul.mubr.bf16.gmra.mrb[0].mxu0 %v3262
        %v3447 = vpop.f32.mrb[0].mxu0
        %v3448 = vadd.f32 0.0, %v3447
        %v3449 = vpop.f32.mrb[0].mxu0
        %v3450 = vpop.f32.mrb[0].mxu0
        %v3451 = vadd.f32 0.0, %v3450
        %v3452 = vpop.f32.mrb[0].mxu0
        %3453 = vmatprep.mubr.bf16.mxu0 0
        %3454 = vmatmul.mubr.bf16.gmra.mrb[0].mxu0 %v3263
        %v3455 = vpop.f32.mrb[0].mxu0
        %v3456 = vadd.f32 0.0, %v3455
        %v3457 = vpop.f32.mrb[0].mxu0
        %v3458 = vpop.f32.mrb[0].mxu0
        %v3459 = vadd.f32 0.0, %v3458
        %v3460 = vpop.f32.mrb[0].mxu0
        %3461 = vmatprep.mubr.bf16.mxu0 0
        %3462 = vmatmul.mubr.bf16.gmra.mrb[0].mxu0 %v3264
        %v3463 = vpop.f32.mrb[0].mxu0
        %v3464 = vadd.f32 0.0, %v3463
        %v3465 = vpop.f32.mrb[0].mxu0
        %v3466 = vpop.f32.mrb[0].mxu0
        %v3467 = vadd.f32 0.0, %v3466
        %v3468 = vpop.f32.mrb[0].mxu0
        %3469 = vmatprep.mubr.bf16.mxu0 0
        %3470 = vmatmul.mubr.bf16.gmra.mrb[0].mxu0 %v3265
        %v3471 = vpop.f32.mrb[0].mxu0
        %v3472 = vadd.f32 0.0, %v3471
        %v3473 = vpop.f32.mrb[0].mxu0
        %v3474 = vpop.f32.mrb[0].mxu0
        %v3475 = vadd.f32 0.0, %v3474
        %v3476 = vpop.f32.mrb[0].mxu0
        %3477 = vmatprep.mubr.bf16.mxu0 0
        %3478 = vmatmul.mubr.bf16.gmra.mrb[0].mxu0 %v3266
        %v3479 = vpop.f32.mrb[0].mxu0
        %v3480 = vadd.f32 0.0, %v3479
        %v3481 = vpop.f32.mrb[0].mxu0
        %v3482 = vpop.f32.mrb[0].mxu0
        %v3483 = vadd.f32 0.0, %v3482
        %v3484 = vpop.f32.mrb[0].mxu0
        %3485 = vmatprep.mubr.bf16.mxu0 0
        %3486 = vmatmul.mubr.bf16.gmra.mrb[0].mxu0 %v3267
        %v3487 = vpop.f32.mrb[0].mxu0
        %v3488 = vadd.f32 0.0, %v3487
        %v3489 = vpop.f32.mrb[0].mxu0
        %v3490 = vpop.f32.mrb[0].mxu0
        %v3491 = vadd.f32 0.0, %v3490
        %v3492 = vpop.f32.mrb[0].mxu0
        %3493 = vdwg.mxu0
        %v3494 = vld [vmem:[#allocation4] sm:$0xff]
        %v3495 = vld [vmem:[#allocation4 + $0x8] sm:$0xff]
        %v3496 = vld [vmem:[#allocation4 + $0x10] sm:$0xff]
        %v3497 = vld [vmem:[#allocation4 + $0x18] sm:$0xff]
        %v3498 = vld [vmem:[#allocation4 + $0x20] sm:$0xff]
        %v3499 = vld [vmem:[#allocation4 + $0x28] sm:$0xff]
        %v3500 = vld [vmem:[#allocation4 + $0x30] sm:$0xff]
        %v3501 = vld [vmem:[#allocation4 + $0x38] sm:$0xff]
        %v3502 = vld [vmem:[#allocation4 + $0x40] sm:$0xff]
        %v3503 = vld [vmem:[#allocation4 + $0x48] sm:$0xff]
        %v3504 = vld [vmem:[#allocation4 + $0x50] sm:$0xff]
        %v3505 = vld [vmem:[#allocation4 + $0x58] sm:$0xff]
        %v3506 = vld [vmem:[#allocation4 + $0x60] sm:$0xff]
        %v3507 = vld [vmem:[#allocation4 + $0x68] sm:$0xff]
        %v3508 = vld [vmem:[#allocation4 + $0x70] sm:$0xff]
        %v3509 = vld [vmem:[#allocation4 + $0x78] sm:$0xff]
        %v3510 = vld [vmem:[#allocation4 + $0x80] sm:$0xff]
        %v3511 = vld [vmem:[#allocation4 + $0x88] sm:$0xff]
        %v3512 = vld [vmem:[#allocation4 + $0x90] sm:$0xff]
        %v3513 = vld [vmem:[#allocation4 + $0x98] sm:$0xff]
        %v3514 = vld [vmem:[#allocation4 + $0xa0] sm:$0xff]
        %v3515 = vld [vmem:[#allocation4 + $0xa8] sm:$0xff]
        %v3516 = vld [vmem:[#allocation4 + $0xb0] sm:$0xff]
        %v3517 = vld [vmem:[#allocation4 + $0xb8] sm:$0xff]
        %v3518 = vld [vmem:[#allocation4 + $0xc0] sm:$0xff]
        %v3519 = vld [vmem:[#allocation4 + $0xc8] sm:$0xff]
        %v3520 = vld [vmem:[#allocation4 + $0xd0] sm:$0xff]
        %v3521 = vld [vmem:[#allocation4 + $0xd8] sm:$0xff]
        %v3522 = vld [vmem:[#allocation4 + $0xe0] sm:$0xff]
        %v3523 = vld [vmem:[#allocation4 + $0xe8] sm:$0xff]
        %v3524 = vld [vmem:[#allocation4 + $0xf0] sm:$0xff]
        %v3525 = vld [vmem:[#allocation4 + $0xf8] sm:$0xff]
        %v3526 = vadd.f32 %v3494, %v3368
        %v3527 = vadd.f32 %v3495, %v3371
        %v3528 = vadd.f32 %v3496, %v3376
        %v3529 = vadd.f32 %v3497, %v3379
        %v3530 = vadd.f32 %v3498, %v3384
        %v3531 = vadd.f32 %v3499, %v3387
        %v3532 = vadd.f32 %v3500, %v3392
        %v3533 = vadd.f32 %v3501, %v3395
        %v3534 = vadd.f32 %v3502, %v3400
        %v3535 = vadd.f32 %v3503, %v3403
        %v3536 = vadd.f32 %v3504, %v3408
        %v3537 = vadd.f32 %v3505, %v3411
        %v3538 = vadd.f32 %v3506, %v3416
        %v3539 = vadd.f32 %v3507, %v3419
        %v3540 = vadd.f32 %v3508, %v3424
        %v3541 = vadd.f32 %v3509, %v3427
        %v3542 = vadd.f32 %v3510, %v3432
        %v3543 = vadd.f32 %v3511, %v3435
        %v3544 = vadd.f32 %v3512, %v3440
        %v3545 = vadd.f32 %v3513, %v3443
        %v3546 = vadd.f32 %v3514, %v3448
        %v3547 = vadd.f32 %v3515, %v3451
        %v3548 = vadd.f32 %v3516, %v3456
        %v3549 = vadd.f32 %v3517, %v3459
        %v3550 = vadd.f32 %v3518, %v3464
        %v3551 = vadd.f32 %v3519, %v3467
        %v3552 = vadd.f32 %v3520, %v3472
        %v3553 = vadd.f32 %v3521, %v3475
        %v3554 = vadd.f32 %v3522, %v3480
        %v3555 = vadd.f32 %v3523, %v3483
        %v3556 = vadd.f32 %v3524, %v3488
        %v3557 = vadd.f32 %v3525, %v3491
        %3558 = vst [vmem:[#allocation4] sm:$0xff] %v3526
        %3559 = vst [vmem:[#allocation4 + $0x8] sm:$0xff] %v3527
        %3560 = vst [vmem:[#allocation4 + $0x10] sm:$0xff] %v3528
        %3561 = vst [vmem:[#allocation4 + $0x18] sm:$0xff] %v3529
        %3562 = vst [vmem:[#allocation4 + $0x20] sm:$0xff] %v3530
        %3563 = vst [vmem:[#allocation4 + $0x28] sm:$0xff] %v3531
        %3564 = vst [vmem:[#allocation4 + $0x30] sm:$0xff] %v3532
        %3565 = vst [vmem:[#allocation4 + $0x38] sm:$0xff] %v3533
        %3566 = vst [vmem:[#allocation4 + $0x40] sm:$0xff] %v3534
        %3567 = vst [vmem:[#allocation4 + $0x48] sm:$0xff] %v3535
        %3568 = vst [vmem:[#allocation4 + $0x50] sm:$0xff] %v3536
        %3569 = vst [vmem:[#allocation4 + $0x58] sm:$0xff] %v3537
        %3570 = vst [vmem:[#allocation4 + $0x60] sm:$0xff] %v3538
        %3571 = vst [vmem:[#allocation4 + $0x68] sm:$0xff] %v3539
        %3572 = vst [vmem:[#allocation4 + $0x70] sm:$0xff] %v3540
        %3573 = vst [vmem:[#allocation4 + $0x78] sm:$0xff] %v3541
        %3574 = vst [vmem:[#allocation4 + $0x80] sm:$0xff] %v3542
        %3575 = vst [vmem:[#allocation4 + $0x88] sm:$0xff] %v3543
        %3576 = vst [vmem:[#allocation4 + $0x90] sm:$0xff] %v3544
        %3577 = vst [vmem:[#allocation4 + $0x98] sm:$0xff] %v3545
        %3578 = vst [vmem:[#allocation4 + $0xa0] sm:$0xff] %v3546
        %3579 = vst [vmem:[#allocation4 + $0xa8] sm:$0xff] %v3547
        %3580 = vst [vmem:[#allocation4 + $0xb0] sm:$0xff] %v3548
        %3581 = vst [vmem:[#allocation4 + $0xb8] sm:$0xff] %v3549
        %3582 = vst [vmem:[#allocation4 + $0xc0] sm:$0xff] %v3550
        %3583 = vst [vmem:[#allocation4 + $0xc8] sm:$0xff] %v3551
        %3584 = vst [vmem:[#allocation4 + $0xd0] sm:$0xff] %v3552
        %3585 = vst [vmem:[#allocation4 + $0xd8] sm:$0xff] %v3553
        %3586 = vst [vmem:[#allocation4 + $0xe0] sm:$0xff] %v3554
        %3587 = vst [vmem:[#allocation4 + $0xe8] sm:$0xff] %v3555
        %3588 = vst [vmem:[#allocation4 + $0xf0] sm:$0xff] %v3556
        %3589 = vst [vmem:[#allocation4 + $0xf8] sm:$0xff] %v3557
        %v3590 = vld [vmem:[%s873] sm:$0xff]
        %v3591 = vld [vmem:[%s873 + $0x8] sm:$0xff]
        %v3592 = vld [vmem:[%s873 + $0x10] sm:$0xff]
        %v3593 = vld [vmem:[%s873 + $0x18] sm:$0xff]
        %v3594 = vld [vmem:[%s873 + $0x20] sm:$0xff]
        %v3595 = vld [vmem:[%s873 + $0x28] sm:$0xff]
        %v3596 = vld [vmem:[%s873 + $0x30] sm:$0xff]
        %v3597 = vld [vmem:[%s873 + $0x38] sm:$0xff]
        %v3598 = vld [vmem:[%s873 + $0x40] sm:$0xff]
        %v3599 = vld [vmem:[%s873 + $0x48] sm:$0xff]
        %v3600 = vld [vmem:[%s873 + $0x50] sm:$0xff]
        %v3601 = vld [vmem:[%s873 + $0x58] sm:$0xff]
        %v3602 = vld [vmem:[%s873 + $0x60] sm:$0xff]
        %v3603 = vld [vmem:[%s873 + $0x68] sm:$0xff]
        %v3604 = vld [vmem:[%s873 + $0x70] sm:$0xff]
        %v3605 = vld [vmem:[%s873 + $0x78] sm:$0xff]
        %v3606 = vld [vmem:[%s873 + $0x80] sm:$0xff]
        %v3607 = vld [vmem:[%s873 + $0x88] sm:$0xff]
        %v3608 = vld [vmem:[%s873 + $0x90] sm:$0xff]
        %v3609 = vld [vmem:[%s873 + $0x98] sm:$0xff]
        %v3610 = vld [vmem:[%s873 + $0xa0] sm:$0xff]
        %v3611 = vld [vmem:[%s873 + $0xa8] sm:$0xff]
        %v3612 = vld [vmem:[%s873 + $0xb0] sm:$0xff]
        %v3613 = vld [vmem:[%s873 + $0xb8] sm:$0xff]
        %v3614 = vld [vmem:[%s873 + $0xc0] sm:$0xff]
        %v3615 = vld [vmem:[%s873 + $0xc8] sm:$0xff]
        %v3616 = vld [vmem:[%s873 + $0xd0] sm:$0xff]
        %v3617 = vld [vmem:[%s873 + $0xd8] sm:$0xff]
        %v3618 = vld [vmem:[%s873 + $0xe0] sm:$0xff]
        %v3619 = vld [vmem:[%s873 + $0xe8] sm:$0xff]
        %v3620 = vld [vmem:[%s873 + $0xf0] sm:$0xff]
        %v3621 = vld [vmem:[%s873 + $0xf8] sm:$0xff]
        %v3622 = vrot.slane %v3590, 1
        %v3623 = vrot.slane %v3591, 1
        %v3624 = vrot.slane %v3592, 1
        %v3625 = vrot.slane %v3593, 1
        %v3626 = vrot.slane %v3594, 1
        %v3627 = vrot.slane %v3595, 1
        %v3628 = vrot.slane %v3596, 1
        %v3629 = vrot.slane %v3597, 1
        %v3630 = vrot.slane %v3598, 1
        %v3631 = vrot.slane %v3599, 1
        %v3632 = vrot.slane %v3600, 1
        %v3633 = vrot.slane %v3601, 1
        %v3634 = vrot.slane %v3602, 1
        %v3635 = vrot.slane %v3603, 1
        %v3636 = vrot.slane %v3604, 1
        %v3637 = vrot.slane %v3605, 1
        %v3638 = vrot.slane %v3606, 1
        %v3639 = vrot.slane %v3607, 1
        %v3640 = vrot.slane %v3608, 1
        %v3641 = vrot.slane %v3609, 1
        %v3642 = vrot.slane %v3610, 1
        %v3643 = vrot.slane %v3611, 1
        %v3644 = vrot.slane %v3612, 1
        %v3645 = vrot.slane %v3613, 1
        %v3646 = vrot.slane %v3614, 1
        %v3647 = vrot.slane %v3615, 1
        %v3648 = vrot.slane %v3616, 1
        %v3649 = vrot.slane %v3617, 1
        %v3650 = vrot.slane %v3618, 1
        %v3651 = vrot.slane %v3619, 1
        %v3652 = vrot.slane %v3620, 1
        %v3653 = vrot.slane %v3621, 1
        %v3654 = vsel %vm2351, %v3652, %v3653
        %v3655 = vsel %vm2351, %v3651, %v3652
        %v3656 = vsel %vm2351, %v3650, %v3651
        %v3657 = vsel %vm2351, %v3649, %v3650
        %v3658 = vsel %vm2351, %v3648, %v3649
        %v3659 = vsel %vm2351, %v3647, %v3648
        %v3660 = vsel %vm2351, %v3646, %v3647
        %v3661 = vsel %vm2351, %v3645, %v3646
        %v3662 = vsel %vm2351, %v3644, %v3645
        %v3663 = vsel %vm2351, %v3643, %v3644
        %v3664 = vsel %vm2351, %v3642, %v3643
        %v3665 = vsel %vm2351, %v3641, %v3642
        %v3666 = vsel %vm2351, %v3640, %v3641
        %v3667 = vsel %vm2351, %v3639, %v3640
        %v3668 = vsel %vm2351, %v3638, %v3639
        %v3669 = vsel %vm2351, %v3637, %v3638
        %v3670 = vsel %vm2351, %v3636, %v3637
        %v3671 = vsel %vm2351, %v3635, %v3636
        %v3672 = vsel %vm2351, %v3634, %v3635
        %v3673 = vsel %vm2351, %v3633, %v3634
        %v3674 = vsel %vm2351, %v3632, %v3633
        %v3675 = vsel %vm2351, %v3631, %v3632
        %v3676 = vsel %vm2351, %v3630, %v3631
        %v3677 = vsel %vm2351, %v3629, %v3630
        %v3678 = vsel %vm2351, %v3628, %v3629
        %v3679 = vsel %vm2351, %v3627, %v3628
        %v3680 = vsel %vm2351, %v3626, %v3627
        %v3681 = vsel %vm2351, %v3625, %v3626
        %v3682 = vsel %vm2351, %v3624, %v3625
        %v3683 = vsel %vm2351, %v3623, %v3624
        %v3684 = vsel %vm2351, %v3622, %v3623
        %v3685 = vsel %vm2351, %v3653, %v3622
        %v3686 = vsel %vm1483, %v3684, 0.0
        %v3687 = vsel %vm1484, %v3683, 0.0
        %v3688 = vsel %vm1485, %v3682, 0.0
        %v3689 = vsel %vm1486, %v3681, 0.0
        %v3690 = vsel %vm1487, %v3680, 0.0
        %v3691 = vsel %vm1488, %v3679, 0.0
        %v3692 = vsel %vm1489, %v3678, 0.0
        %v3693 = vsel %vm1490, %v3677, 0.0
        %v3694 = vsel %vm1491, %v3676, 0.0
        %v3695 = vsel %vm1492, %v3675, 0.0
        %v3696 = vsel %vm1493, %v3674, 0.0
        %v3697 = vsel %vm1494, %v3673, 0.0
        %v3698 = vsel %vm1495, %v3672, 0.0
        %v3699 = vsel %vm1496, %v3671, 0.0
        %v3700 = vsel %vm1497, %v3670, 0.0
        %v3701 = vsel %vm1498, %v3669, 0.0
        %v3702 = vsel %vm1499, %v3668, 0.0
        %v3703 = vsel %vm1500, %v3667, 0.0
        %v3704 = vsel %vm1501, %v3666, 0.0
        %v3705 = vsel %vm1502, %v3665, 0.0
        %v3706 = vsel %vm1503, %v3664, 0.0
        %v3707 = vsel %vm1504, %v3663, 0.0
        %v3708 = vsel %vm1505, %v3662, 0.0
        %v3709 = vsel %vm1506, %v3661, 0.0
        %v3710 = vsel %vm1507, %v3660, 0.0
        %v3711 = vsel %vm1508, %v3659, 0.0
        %v3712 = vsel %vm1509, %v3658, 0.0
        %v3713 = vsel %vm1510, %v3657, 0.0
        %v3714 = vsel %vm1511, %v3656, 0.0
        %v3715 = vsel %vm1512, %v3655, 0.0
        %v3716 = vsel %vm1513, %v3654, 0.0
        %v3717 = vsel %vm1514, %v3685, 0.0
        %v3718 = vpack.c.bf16 %v3687, %v3686
        %v3719 = vpack.c.bf16 %v3689, %v3688
        %v3720 = vpack.c.bf16 %v3691, %v3690
        %v3721 = vpack.c.bf16 %v3693, %v3692
        %v3722 = vpack.c.bf16 %v3695, %v3694
        %v3723 = vpack.c.bf16 %v3697, %v3696
        %v3724 = vpack.c.bf16 %v3699, %v3698
        %v3725 = vpack.c.bf16 %v3701, %v3700
        %v3726 = vpack.c.bf16 %v3703, %v3702
        %v3727 = vpack.c.bf16 %v3705, %v3704
        %v3728 = vpack.c.bf16 %v3707, %v3706
        %v3729 = vpack.c.bf16 %v3709, %v3708
        %v3730 = vpack.c.bf16 %v3711, %v3710
        %v3731 = vpack.c.bf16 %v3713, %v3712
        %v3732 = vpack.c.bf16 %v3715, %v3714
        %v3733 = vpack.c.bf16 %v3717, %v3716
        %s3734 = scalar_lea.vmem [#allocation5], 320
        %v3735 = vld [vmem:[%s3734] sm:$0xf]
        %v3736 = vld [vmem:[%s3734 + $0x4] sm:$0xf]
        %v3737 = vld [vmem:[%s3734 + $0x8] sm:$0xf]
        %v3738 = vld [vmem:[%s3734 + $0xc] sm:$0xf]
        %v3739 = vld [vmem:[%s3734 + $0x10] sm:$0xf]
        %v3740 = vld [vmem:[%s3734 + $0x14] sm:$0xf]
        %v3741 = vld [vmem:[%s3734 + $0x18] sm:$0xf]
        %v3742 = vld [vmem:[%s3734 + $0x1c] sm:$0xf]
        %v3743 = vld [vmem:[%s3734 + $0x20] sm:$0xf]
        %v3744 = vld [vmem:[%s3734 + $0x24] sm:$0xf]
        %v3745 = vld [vmem:[%s3734 + $0x28] sm:$0xf]
        %v3746 = vld [vmem:[%s3734 + $0x2c] sm:$0xf]
        %v3747 = vld [vmem:[%s3734 + $0x30] sm:$0xf]
        %v3748 = vld [vmem:[%s3734 + $0x34] sm:$0xf]
        %v3749 = vld [vmem:[%s3734 + $0x38] sm:$0xf]
        %v3750 = vld [vmem:[%s3734 + $0x3c] sm:$0xf]
        %v3767 = vunpack.c.l.b16 %v3735
        %v3768 = vunpack.c.l.b16 %v3736
        %v3769 = vunpack.c.l.b16 %v3737
        %v3770 = vunpack.c.l.b16 %v3738
        %v3771 = vunpack.c.l.b16 %v3739
        %v3772 = vunpack.c.l.b16 %v3740
        %v3773 = vunpack.c.l.b16 %v3741
        %v3774 = vunpack.c.l.b16 %v3742
        %v3775 = vunpack.c.l.b16 %v3743
        %v3776 = vunpack.c.l.b16 %v3744
        %v3777 = vunpack.c.l.b16 %v3745
        %v3778 = vunpack.c.l.b16 %v3746
        %v3779 = vunpack.c.l.b16 %v3747
        %v3780 = vunpack.c.l.b16 %v3748
        %v3781 = vunpack.c.l.b16 %v3749
        %v3782 = vunpack.c.l.b16 %v3750
        %v3783 = vpack.c.b16 %v3768, %v3767
        %v3784 = vpack.c.b16 %v3770, %v3769
        %v3785 = vpack.c.b16 %v3772, %v3771
        %v3786 = vpack.c.b16 %v3774, %v3773
        %v3787 = vpack.c.b16 %v3776, %v3775
        %v3788 = vpack.c.b16 %v3778, %v3777
        %v3789 = vpack.c.b16 %v3780, %v3779
        %v3790 = vpack.c.b16 %v3782, %v3781
        %3799 = vmatprep.subr.bf16.mxu0 0
        %3800 = vmatpush1.bf16.msra.mxu0 %v3783
        %3801 = vmatprep.subr.bf16.mxu0 0
        %3802 = vmatpush1.bf16.msra.mxu0 %v3784
        %3803 = vmatprep.subr.bf16.mxu0 0
        %3804 = vmatpush1.bf16.msra.mxu0 %v3785
        %3805 = vmatprep.subr.bf16.mxu0 0
        %3806 = vmatpush1.bf16.msra.mxu0 %v3786
        %3807 = vmatprep.subr.bf16.mxu0 0
        %3808 = vmatpush1.bf16.msra.mxu0 %v3787
        %3809 = vmatprep.subr.bf16.mxu0 0
        %3810 = vmatpush1.bf16.msra.mxu0 %v3788
        %3811 = vmatprep.subr.bf16.mxu0 0
        %3812 = vmatpush1.bf16.msra.mxu0 %v3789
        %3813 = vmatprep.subr.bf16.mxu0 0
        %3814 = vmatpush1.bf16.msra.mxu0 %v3790
        %3815 = vmatprep.subr.bf16.mxu0 0
        %3816 = vmatpush1.bf16.msra.mxu0 0
        %3817 = vmatprep.subr.bf16.mxu0 0
        %3818 = vmatpush1.bf16.msra.mxu0 0
        %3819 = vmatprep.subr.bf16.mxu0 0
        %3820 = vmatpush1.bf16.msra.mxu0 0
        %3821 = vmatprep.subr.bf16.mxu0 0
        %3822 = vmatpush1.bf16.msra.mxu0 0
        %3823 = vmatprep.subr.bf16.mxu0 0
        %3824 = vmatpush1.bf16.msra.mxu0 0
        %3825 = vmatprep.subr.bf16.mxu0 0
        %3826 = vmatpush1.bf16.msra.mxu0 0
        %3827 = vmatprep.subr.bf16.mxu0 0
        %3828 = vmatpush1.bf16.msra.mxu0 0
        %3829 = vmatprep.subr.bf16.mxu0 0
        %3830 = vmatpush1.bf16.msra.mxu0 0
        %3831 = vmatprep.mubr.bf16.mxu0 0
        %3832 = vmatmul.mubr.bf16.gmra.mrb[0].mxu0 %v3718
        %v3833 = vpop.f32.mrb[0].mxu0
        %v3834 = vadd.f32 0.0, %v3833
        %v3835 = vpop.f32.mrb[0].mxu0
        %v3836 = vpop.f32.mrb[0].mxu0
        %v3837 = vadd.f32 0.0, %v3836
        %v3838 = vpop.f32.mrb[0].mxu0
        %3839 = vmatprep.mubr.bf16.mxu0 0
        %3840 = vmatmul.mubr.bf16.gmra.mrb[0].mxu0 %v3719
        %v3841 = vpop.f32.mrb[0].mxu0
        %v3842 = vadd.f32 0.0, %v3841
        %v3843 = vpop.f32.mrb[0].mxu0
        %v3844 = vpop.f32.mrb[0].mxu0
        %v3845 = vadd.f32 0.0, %v3844
        %v3846 = vpop.f32.mrb[0].mxu0
        %3847 = vmatprep.mubr.bf16.mxu0 0
        %3848 = vmatmul.mubr.bf16.gmra.mrb[0].mxu0 %v3720
        %v3849 = vpop.f32.mrb[0].mxu0
        %v3850 = vadd.f32 0.0, %v3849
        %v3851 = vpop.f32.mrb[0].mxu0
        %v3852 = vpop.f32.mrb[0].mxu0
        %v3853 = vadd.f32 0.0, %v3852
        %v3854 = vpop.f32.mrb[0].mxu0
        %3855 = vmatprep.mubr.bf16.mxu0 0
        %3856 = vmatmul.mubr.bf16.gmra.mrb[0].mxu0 %v3721
        %v3857 = vpop.f32.mrb[0].mxu0
        %v3858 = vadd.f32 0.0, %v3857
        %v3859 = vpop.f32.mrb[0].mxu0
        %v3860 = vpop.f32.mrb[0].mxu0
        %v3861 = vadd.f32 0.0, %v3860
        %v3862 = vpop.f32.mrb[0].mxu0
        %3863 = vmatprep.mubr.bf16.mxu0 0
        %3864 = vmatmul.mubr.bf16.gmra.mrb[0].mxu0 %v3722
        %v3865 = vpop.f32.mrb[0].mxu0
        %v3866 = vadd.f32 0.0, %v3865
        %v3867 = vpop.f32.mrb[0].mxu0
        %v3868 = vpop.f32.mrb[0].mxu0
        %v3869 = vadd.f32 0.0, %v3868
        %v3870 = vpop.f32.mrb[0].mxu0
        %3871 = vmatprep.mubr.bf16.mxu0 0
        %3872 = vmatmul.mubr.bf16.gmra.mrb[0].mxu0 %v3723
        %v3873 = vpop.f32.mrb[0].mxu0
        %v3874 = vadd.f32 0.0, %v3873
        %v3875 = vpop.f32.mrb[0].mxu0
        %v3876 = vpop.f32.mrb[0].mxu0
        %v3877 = vadd.f32 0.0, %v3876
        %v3878 = vpop.f32.mrb[0].mxu0
        %3879 = vmatprep.mubr.bf16.mxu0 0
        %3880 = vmatmul.mubr.bf16.gmra.mrb[0].mxu0 %v3724
        %v3881 = vpop.f32.mrb[0].mxu0
        %v3882 = vadd.f32 0.0, %v3881
        %v3883 = vpop.f32.mrb[0].mxu0
        %v3884 = vpop.f32.mrb[0].mxu0
        %v3885 = vadd.f32 0.0, %v3884
        %v3886 = vpop.f32.mrb[0].mxu0
        %3887 = vmatprep.mubr.bf16.mxu0 0
        %3888 = vmatmul.mubr.bf16.gmra.mrb[0].mxu0 %v3725
        %v3889 = vpop.f32.mrb[0].mxu0
        %v3890 = vadd.f32 0.0, %v3889
        %v3891 = vpop.f32.mrb[0].mxu0
        %v3892 = vpop.f32.mrb[0].mxu0
        %v3893 = vadd.f32 0.0, %v3892
        %v3894 = vpop.f32.mrb[0].mxu0
        %3895 = vmatprep.mubr.bf16.mxu0 0
        %3896 = vmatmul.mubr.bf16.gmra.mrb[0].mxu0 %v3726
        %v3897 = vpop.f32.mrb[0].mxu0
        %v3898 = vadd.f32 0.0, %v3897
        %v3899 = vpop.f32.mrb[0].mxu0
        %v3900 = vpop.f32.mrb[0].mxu0
        %v3901 = vadd.f32 0.0, %v3900
        %v3902 = vpop.f32.mrb[0].mxu0
        %3903 = vmatprep.mubr.bf16.mxu0 0
        %3904 = vmatmul.mubr.bf16.gmra.mrb[0].mxu0 %v3727
        %v3905 = vpop.f32.mrb[0].mxu0
        %v3906 = vadd.f32 0.0, %v3905
        %v3907 = vpop.f32.mrb[0].mxu0
        %v3908 = vpop.f32.mrb[0].mxu0
        %v3909 = vadd.f32 0.0, %v3908
        %v3910 = vpop.f32.mrb[0].mxu0
        %3911 = vmatprep.mubr.bf16.mxu0 0
        %3912 = vmatmul.mubr.bf16.gmra.mrb[0].mxu0 %v3728
        %v3913 = vpop.f32.mrb[0].mxu0
        %v3914 = vadd.f32 0.0, %v3913
        %v3915 = vpop.f32.mrb[0].mxu0
        %v3916 = vpop.f32.mrb[0].mxu0
        %v3917 = vadd.f32 0.0, %v3916
        %v3918 = vpop.f32.mrb[0].mxu0
        %3919 = vmatprep.mubr.bf16.mxu0 0
        %3920 = vmatmul.mubr.bf16.gmra.mrb[0].mxu0 %v3729
        %v3921 = vpop.f32.mrb[0].mxu0
        %v3922 = vadd.f32 0.0, %v3921
        %v3923 = vpop.f32.mrb[0].mxu0
        %v3924 = vpop.f32.mrb[0].mxu0
        %v3925 = vadd.f32 0.0, %v3924
        %v3926 = vpop.f32.mrb[0].mxu0
        %3927 = vmatprep.mubr.bf16.mxu0 0
        %3928 = vmatmul.mubr.bf16.gmra.mrb[0].mxu0 %v3730
        %v3929 = vpop.f32.mrb[0].mxu0
        %v3930 = vadd.f32 0.0, %v3929
        %v3931 = vpop.f32.mrb[0].mxu0
        %v3932 = vpop.f32.mrb[0].mxu0
        %v3933 = vadd.f32 0.0, %v3932
        %v3934 = vpop.f32.mrb[0].mxu0
        %3935 = vmatprep.mubr.bf16.mxu0 0
        %3936 = vmatmul.mubr.bf16.gmra.mrb[0].mxu0 %v3731
        %v3937 = vpop.f32.mrb[0].mxu0
        %v3938 = vadd.f32 0.0, %v3937
        %v3939 = vpop.f32.mrb[0].mxu0
        %v3940 = vpop.f32.mrb[0].mxu0
        %v3941 = vadd.f32 0.0, %v3940
        %v3942 = vpop.f32.mrb[0].mxu0
        %3943 = vmatprep.mubr.bf16.mxu0 0
        %3944 = vmatmul.mubr.bf16.gmra.mrb[0].mxu0 %v3732
        %v3945 = vpop.f32.mrb[0].mxu0
        %v3946 = vadd.f32 0.0, %v3945
        %v3947 = vpop.f32.mrb[0].mxu0
        %v3948 = vpop.f32.mrb[0].mxu0
        %v3949 = vadd.f32 0.0, %v3948
        %v3950 = vpop.f32.mrb[0].mxu0
        %3951 = vmatprep.mubr.bf16.mxu0 0
        %3952 = vmatmul.mubr.bf16.gmra.mrb[0].mxu0 %v3733
        %v3953 = vpop.f32.mrb[0].mxu0
        %v3954 = vadd.f32 0.0, %v3953
        %v3955 = vpop.f32.mrb[0].mxu0
        %v3956 = vpop.f32.mrb[0].mxu0
        %v3957 = vadd.f32 0.0, %v3956
        %v3958 = vpop.f32.mrb[0].mxu0
        %3959 = vdwg.mxu0
        %v3960 = vld [vmem:[#allocation4] sm:$0xff]
        %v3961 = vld [vmem:[#allocation4 + $0x8] sm:$0xff]
        %v3962 = vld [vmem:[#allocation4 + $0x10] sm:$0xff]
        %v3963 = vld [vmem:[#allocation4 + $0x18] sm:$0xff]
        %v3964 = vld [vmem:[#allocation4 + $0x20] sm:$0xff]
        %v3965 = vld [vmem:[#allocation4 + $0x28] sm:$0xff]
        %v3966 = vld [vmem:[#allocation4 + $0x30] sm:$0xff]
        %v3967 = vld [vmem:[#allocation4 + $0x38] sm:$0xff]
        %v3968 = vld [vmem:[#allocation4 + $0x40] sm:$0xff]
        %v3969 = vld [vmem:[#allocation4 + $0x48] sm:$0xff]
        %v3970 = vld [vmem:[#allocation4 + $0x50] sm:$0xff]
        %v3971 = vld [vmem:[#allocation4 + $0x58] sm:$0xff]
        %v3972 = vld [vmem:[#allocation4 + $0x60] sm:$0xff]
        %v3973 = vld [vmem:[#allocation4 + $0x68] sm:$0xff]
        %v3974 = vld [vmem:[#allocation4 + $0x70] sm:$0xff]
        %v3975 = vld [vmem:[#allocation4 + $0x78] sm:$0xff]
        %v3976 = vld [vmem:[#allocation4 + $0x80] sm:$0xff]
        %v3977 = vld [vmem:[#allocation4 + $0x88] sm:$0xff]
        %v3978 = vld [vmem:[#allocation4 + $0x90] sm:$0xff]
        %v3979 = vld [vmem:[#allocation4 + $0x98] sm:$0xff]
        %v3980 = vld [vmem:[#allocation4 + $0xa0] sm:$0xff]
        %v3981 = vld [vmem:[#allocation4 + $0xa8] sm:$0xff]
        %v3982 = vld [vmem:[#allocation4 + $0xb0] sm:$0xff]
        %v3983 = vld [vmem:[#allocation4 + $0xb8] sm:$0xff]
        %v3984 = vld [vmem:[#allocation4 + $0xc0] sm:$0xff]
        %v3985 = vld [vmem:[#allocation4 + $0xc8] sm:$0xff]
        %v3986 = vld [vmem:[#allocation4 + $0xd0] sm:$0xff]
        %v3987 = vld [vmem:[#allocation4 + $0xd8] sm:$0xff]
        %v3988 = vld [vmem:[#allocation4 + $0xe0] sm:$0xff]
        %v3989 = vld [vmem:[#allocation4 + $0xe8] sm:$0xff]
        %v3990 = vld [vmem:[#allocation4 + $0xf0] sm:$0xff]
        %v3991 = vld [vmem:[#allocation4 + $0xf8] sm:$0xff]
        %v3992 = vadd.f32 %v3960, %v3834
        %v3993 = vadd.f32 %v3961, %v3837
        %v3994 = vadd.f32 %v3962, %v3842
        %v3995 = vadd.f32 %v3963, %v3845
        %v3996 = vadd.f32 %v3964, %v3850
        %v3997 = vadd.f32 %v3965, %v3853
        %v3998 = vadd.f32 %v3966, %v3858
        %v3999 = vadd.f32 %v3967, %v3861
        %v4000 = vadd.f32 %v3968, %v3866
        %v4001 = vadd.f32 %v3969, %v3869
        %v4002 = vadd.f32 %v3970, %v3874
        %v4003 = vadd.f32 %v3971, %v3877
        %v4004 = vadd.f32 %v3972, %v3882
        %v4005 = vadd.f32 %v3973, %v3885
        %v4006 = vadd.f32 %v3974, %v3890
        %v4007 = vadd.f32 %v3975, %v3893
        %v4008 = vadd.f32 %v3976, %v3898
        %v4009 = vadd.f32 %v3977, %v3901
        %v4010 = vadd.f32 %v3978, %v3906
        %v4011 = vadd.f32 %v3979, %v3909
        %v4012 = vadd.f32 %v3980, %v3914
        %v4013 = vadd.f32 %v3981, %v3917
        %v4014 = vadd.f32 %v3982, %v3922
        %v4015 = vadd.f32 %v3983, %v3925
        %v4016 = vadd.f32 %v3984, %v3930
        %v4017 = vadd.f32 %v3985, %v3933
        %v4018 = vadd.f32 %v3986, %v3938
        %v4019 = vadd.f32 %v3987, %v3941
        %v4020 = vadd.f32 %v3988, %v3946
        %v4021 = vadd.f32 %v3989, %v3949
        %v4022 = vadd.f32 %v3990, %v3954
        %v4023 = vadd.f32 %v3991, %v3957
        %4024 = vst [vmem:[#allocation4] sm:$0xff] %v3992
        %4025 = vst [vmem:[#allocation4 + $0x8] sm:$0xff] %v3993
        %4026 = vst [vmem:[#allocation4 + $0x10] sm:$0xff] %v3994
        %4027 = vst [vmem:[#allocation4 + $0x18] sm:$0xff] %v3995
        %4028 = vst [vmem:[#allocation4 + $0x20] sm:$0xff] %v3996
        %4029 = vst [vmem:[#allocation4 + $0x28] sm:$0xff] %v3997
        %4030 = vst [vmem:[#allocation4 + $0x30] sm:$0xff] %v3998
        %4031 = vst [vmem:[#allocation4 + $0x38] sm:$0xff] %v3999
        %4032 = vst [vmem:[#allocation4 + $0x40] sm:$0xff] %v4000
        %4033 = vst [vmem:[#allocation4 + $0x48] sm:$0xff] %v4001
        %4034 = vst [vmem:[#allocation4 + $0x50] sm:$0xff] %v4002
        %4035 = vst [vmem:[#allocation4 + $0x58] sm:$0xff] %v4003
        %4036 = vst [vmem:[#allocation4 + $0x60] sm:$0xff] %v4004
        %4037 = vst [vmem:[#allocation4 + $0x68] sm:$0xff] %v4005
        %4038 = vst [vmem:[#allocation4 + $0x70] sm:$0xff] %v4006
        %4039 = vst [vmem:[#allocation4 + $0x78] sm:$0xff] %v4007
        %4040 = vst [vmem:[#allocation4 + $0x80] sm:$0xff] %v4008
        %4041 = vst [vmem:[#allocation4 + $0x88] sm:$0xff] %v4009
        %4042 = vst [vmem:[#allocation4 + $0x90] sm:$0xff] %v4010
        %4043 = vst [vmem:[#allocation4 + $0x98] sm:$0xff] %v4011
        %4044 = vst [vmem:[#allocation4 + $0xa0] sm:$0xff] %v4012
        %4045 = vst [vmem:[#allocation4 + $0xa8] sm:$0xff] %v4013
        %4046 = vst [vmem:[#allocation4 + $0xb0] sm:$0xff] %v4014
        %4047 = vst [vmem:[#allocation4 + $0xb8] sm:$0xff] %v4015
        %4048 = vst [vmem:[#allocation4 + $0xc0] sm:$0xff] %v4016
        %4049 = vst [vmem:[#allocation4 + $0xc8] sm:$0xff] %v4017
        %4050 = vst [vmem:[#allocation4 + $0xd0] sm:$0xff] %v4018
        %4051 = vst [vmem:[#allocation4 + $0xd8] sm:$0xff] %v4019
        %4052 = vst [vmem:[#allocation4 + $0xe0] sm:$0xff] %v4020
        %4053 = vst [vmem:[#allocation4 + $0xe8] sm:$0xff] %v4021
        %4054 = vst [vmem:[#allocation4 + $0xf0] sm:$0xff] %v4022
        %4055 = vst [vmem:[#allocation4 + $0xf8] sm:$0xff] %v4023
        %s4056 = scalar_lea.vmem [#allocation3], 32
        %v4057 = vld [vmem:[%s4056] sm:$0xff]
        %v4058 = vld [vmem:[%s4056 + $0x8] sm:$0xff]
        %v4059 = vld [vmem:[%s4056 + $0x10] sm:$0xff]
        %v4060 = vld [vmem:[%s4056 + $0x18] sm:$0xff]
        %v4061 = vld [vmem:[%s4056 + $0x20] sm:$0xff]
        %v4062 = vld [vmem:[%s4056 + $0x28] sm:$0xff]
        %v4063 = vld [vmem:[%s4056 + $0x30] sm:$0xff]
        %v4064 = vld [vmem:[%s4056 + $0x38] sm:$0xff]
        %v4065 = vld [vmem:[%s4056 + $0x40] sm:$0xff]
        %v4066 = vld [vmem:[%s4056 + $0x48] sm:$0xff]
        %v4067 = vld [vmem:[%s4056 + $0x50] sm:$0xff]
        %v4068 = vld [vmem:[%s4056 + $0x58] sm:$0xff]
        %v4069 = vld [vmem:[%s4056 + $0x60] sm:$0xff]
        %v4070 = vld [vmem:[%s4056 + $0x68] sm:$0xff]
        %v4071 = vld [vmem:[%s4056 + $0x70] sm:$0xff]
        %v4072 = vld [vmem:[%s4056 + $0x78] sm:$0xff]
        %v4073 = vld [vmem:[%s4056 + $0x80] sm:$0xff]
        %v4074 = vld [vmem:[%s4056 + $0x88] sm:$0xff]
        %v4075 = vld [vmem:[%s4056 + $0x90] sm:$0xff]
        %v4076 = vld [vmem:[%s4056 + $0x98] sm:$0xff]
        %v4077 = vld [vmem:[%s4056 + $0xa0] sm:$0xff]
        %v4078 = vld [vmem:[%s4056 + $0xa8] sm:$0xff]
        %v4079 = vld [vmem:[%s4056 + $0xb0] sm:$0xff]
        %v4080 = vld [vmem:[%s4056 + $0xb8] sm:$0xff]
        %v4081 = vld [vmem:[%s4056 + $0xc0] sm:$0xff]
        %v4082 = vld [vmem:[%s4056 + $0xc8] sm:$0xff]
        %v4083 = vld [vmem:[%s4056 + $0xd0] sm:$0xff]
        %v4084 = vld [vmem:[%s4056 + $0xd8] sm:$0xff]
        %v4085 = vld [vmem:[%s4056 + $0xe0] sm:$0xff]
        %v4086 = vld [vmem:[%s4056 + $0xe8] sm:$0xff]
        %v4087 = vld [vmem:[%s4056 + $0xf0] sm:$0xff]
        %v4088 = vld [vmem:[%s4056 + $0xf8] sm:$0xff]
        %v4089 = vrot.slane %v4057, 7
        %v4090 = vrot.slane %v4058, 7
        %v4091 = vrot.slane %v4059, 7
        %v4092 = vrot.slane %v4060, 7
        %v4093 = vrot.slane %v4061, 7
        %v4094 = vrot.slane %v4062, 7
        %v4095 = vrot.slane %v4063, 7
        %v4096 = vrot.slane %v4064, 7
        %v4097 = vrot.slane %v4065, 7
        %v4098 = vrot.slane %v4066, 7
        %v4099 = vrot.slane %v4067, 7
        %v4100 = vrot.slane %v4068, 7
        %v4101 = vrot.slane %v4069, 7
        %v4102 = vrot.slane %v4070, 7
        %v4103 = vrot.slane %v4071, 7
        %v4104 = vrot.slane %v4072, 7
        %v4105 = vrot.slane %v4073, 7
        %v4106 = vrot.slane %v4074, 7
        %v4107 = vrot.slane %v4075, 7
        %v4108 = vrot.slane %v4076, 7
        %v4109 = vrot.slane %v4077, 7
        %v4110 = vrot.slane %v4078, 7
        %v4111 = vrot.slane %v4079, 7
        %v4112 = vrot.slane %v4080, 7
        %v4113 = vrot.slane %v4081, 7
        %v4114 = vrot.slane %v4082, 7
        %v4115 = vrot.slane %v4083, 7
        %v4116 = vrot.slane %v4084, 7
        %v4117 = vrot.slane %v4085, 7
        %v4118 = vrot.slane %v4086, 7
        %v4119 = vrot.slane %v4087, 7
        %v4120 = vrot.slane %v4088, 7
        %v4121 = vsel %vm1579, %v4119, %v4120
        %v4122 = vsel %vm1579, %v4118, %v4119
        %v4123 = vsel %vm1579, %v4117, %v4118
        %v4124 = vsel %vm1579, %v4116, %v4117
        %v4125 = vsel %vm1579, %v4115, %v4116
        %v4126 = vsel %vm1579, %v4114, %v4115
        %v4127 = vsel %vm1579, %v4113, %v4114
        %v4128 = vsel %vm1579, %v4112, %v4113
        %v4129 = vsel %vm1579, %v4111, %v4112
        %v4130 = vsel %vm1579, %v4110, %v4111
        %v4131 = vsel %vm1579, %v4109, %v4110
        %v4132 = vsel %vm1579, %v4108, %v4109
        %v4133 = vsel %vm1579, %v4107, %v4108
        %v4134 = vsel %vm1579, %v4106, %v4107
        %v4135 = vsel %vm1579, %v4105, %v4106
        %v4136 = vsel %vm1579, %v4104, %v4105
        %v4137 = vsel %vm1579, %v4103, %v4104
        %v4138 = vsel %vm1579, %v4102, %v4103
        %v4139 = vsel %vm1579, %v4101, %v4102
        %v4140 = vsel %vm1579, %v4100, %v4101
        %v4141 = vsel %vm1579, %v4099, %v4100
        %v4142 = vsel %vm1579, %v4098, %v4099
        %v4143 = vsel %vm1579, %v4097, %v4098
        %v4144 = vsel %vm1579, %v4096, %v4097
        %v4145 = vsel %vm1579, %v4095, %v4096
        %v4146 = vsel %vm1579, %v4094, %v4095
        %v4147 = vsel %vm1579, %v4093, %v4094
        %v4148 = vsel %vm1579, %v4092, %v4093
        %v4149 = vsel %vm1579, %v4091, %v4092
        %v4150 = vsel %vm1579, %v4090, %v4091
        %v4151 = vsel %vm1579, %v4089, %v4090
        %v4152 = vsel %vm1579, %v4120, %v4089
        %v4153 = vsel %vm1387, %v4152, 0.0
        %v4154 = vsel %vm1388, %v4151, 0.0
        %v4155 = vsel %vm1389, %v4150, 0.0
        %v4156 = vsel %vm1390, %v4149, 0.0
        %v4157 = vsel %vm1391, %v4148, 0.0
        %v4158 = vsel %vm1392, %v4147, 0.0
        %v4159 = vsel %vm1393, %v4146, 0.0
        %v4160 = vsel %vm1394, %v4145, 0.0
        %v4161 = vsel %vm1395, %v4144, 0.0
        %v4162 = vsel %vm1396, %v4143, 0.0
        %v4163 = vsel %vm1397, %v4142, 0.0
        %v4164 = vsel %vm1398, %v4141, 0.0
        %v4165 = vsel %vm1399, %v4140, 0.0
        %v4166 = vsel %vm1400, %v4139, 0.0
        %v4167 = vsel %vm1401, %v4138, 0.0
        %v4168 = vsel %vm1402, %v4137, 0.0
        %v4169 = vsel %vm1403, %v4136, 0.0
        %v4170 = vsel %vm1404, %v4135, 0.0
        %v4171 = vsel %vm1405, %v4134, 0.0
        %v4172 = vsel %vm1406, %v4133, 0.0
        %v4173 = vsel %vm1407, %v4132, 0.0
        %v4174 = vsel %vm1408, %v4131, 0.0
        %v4175 = vsel %vm1409, %v4130, 0.0
        %v4176 = vsel %vm1410, %v4129, 0.0
        %v4177 = vsel %vm1411, %v4128, 0.0
        %v4178 = vsel %vm1412, %v4127, 0.0
        %v4179 = vsel %vm1413, %v4126, 0.0
        %v4180 = vsel %vm1414, %v4125, 0.0
        %v4181 = vsel %vm1415, %v4124, 0.0
        %v4182 = vsel %vm1416, %v4123, 0.0
        %v4183 = vsel %vm1417, %v4122, 0.0
        %v4184 = vsel %vm1418, %v4121, 0.0
        %v4185 = vpack.c.bf16 %v4154, %v4153
        %v4186 = vpack.c.bf16 %v4156, %v4155
        %v4187 = vpack.c.bf16 %v4158, %v4157
        %v4188 = vpack.c.bf16 %v4160, %v4159
        %v4189 = vpack.c.bf16 %v4162, %v4161
        %v4190 = vpack.c.bf16 %v4164, %v4163
        %v4191 = vpack.c.bf16 %v4166, %v4165
        %v4192 = vpack.c.bf16 %v4168, %v4167
        %v4193 = vpack.c.bf16 %v4170, %v4169
        %v4194 = vpack.c.bf16 %v4172, %v4171
        %v4195 = vpack.c.bf16 %v4174, %v4173
        %v4196 = vpack.c.bf16 %v4176, %v4175
        %v4197 = vpack.c.bf16 %v4178, %v4177
        %v4198 = vpack.c.bf16 %v4180, %v4179
        %v4199 = vpack.c.bf16 %v4182, %v4181
        %v4200 = vpack.c.bf16 %v4184, %v4183
        %s4201 = scalar_lea.vmem [#allocation5], 384
        %v4202 = vld [vmem:[%s4201] sm:$0xf]
        %v4203 = vld [vmem:[%s4201 + $0x4] sm:$0xf]
        %v4204 = vld [vmem:[%s4201 + $0x8] sm:$0xf]
        %v4205 = vld [vmem:[%s4201 + $0xc] sm:$0xf]
        %v4206 = vld [vmem:[%s4201 + $0x10] sm:$0xf]
        %v4207 = vld [vmem:[%s4201 + $0x14] sm:$0xf]
        %v4208 = vld [vmem:[%s4201 + $0x18] sm:$0xf]
        %v4209 = vld [vmem:[%s4201 + $0x1c] sm:$0xf]
        %v4210 = vld [vmem:[%s4201 + $0x20] sm:$0xf]
        %v4211 = vld [vmem:[%s4201 + $0x24] sm:$0xf]
        %v4212 = vld [vmem:[%s4201 + $0x28] sm:$0xf]
        %v4213 = vld [vmem:[%s4201 + $0x2c] sm:$0xf]
        %v4214 = vld [vmem:[%s4201 + $0x30] sm:$0xf]
        %v4215 = vld [vmem:[%s4201 + $0x34] sm:$0xf]
        %v4216 = vld [vmem:[%s4201 + $0x38] sm:$0xf]
        %v4217 = vld [vmem:[%s4201 + $0x3c] sm:$0xf]
        %v4234 = vunpack.c.l.b16 %v4202
        %v4235 = vunpack.c.l.b16 %v4203
        %v4236 = vunpack.c.l.b16 %v4204
        %v4237 = vunpack.c.l.b16 %v4205
        %v4238 = vunpack.c.l.b16 %v4206
        %v4239 = vunpack.c.l.b16 %v4207
        %v4240 = vunpack.c.l.b16 %v4208
        %v4241 = vunpack.c.l.b16 %v4209
        %v4242 = vunpack.c.l.b16 %v4210
        %v4243 = vunpack.c.l.b16 %v4211
        %v4244 = vunpack.c.l.b16 %v4212
        %v4245 = vunpack.c.l.b16 %v4213
        %v4246 = vunpack.c.l.b16 %v4214
        %v4247 = vunpack.c.l.b16 %v4215
        %v4248 = vunpack.c.l.b16 %v4216
        %v4249 = vunpack.c.l.b16 %v4217
        %v4250 = vpack.c.b16 %v4235, %v4234
        %v4251 = vpack.c.b16 %v4237, %v4236
        %v4252 = vpack.c.b16 %v4239, %v4238
        %v4253 = vpack.c.b16 %v4241, %v4240
        %v4254 = vpack.c.b16 %v4243, %v4242
        %v4255 = vpack.c.b16 %v4245, %v4244
        %v4256 = vpack.c.b16 %v4247, %v4246
        %v4257 = vpack.c.b16 %v4249, %v4248
        %4266 = vmatprep.subr.bf16.mxu0 0
        %4267 = vmatpush1.bf16.msra.mxu0 %v4250
        %4268 = vmatprep.subr.bf16.mxu0 0
        %4269 = vmatpush1.bf16.msra.mxu0 %v4251
        %4270 = vmatprep.subr.bf16.mxu0 0
        %4271 = vmatpush1.bf16.msra.mxu0 %v4252
        %4272 = vmatprep.subr.bf16.mxu0 0
        %4273 = vmatpush1.bf16.msra.mxu0 %v4253
        %4274 = vmatprep.subr.bf16.mxu0 0
        %4275 = vmatpush1.bf16.msra.mxu0 %v4254
        %4276 = vmatprep.subr.bf16.mxu0 0
        %4277 = vmatpush1.bf16.msra.mxu0 %v4255
        %4278 = vmatprep.subr.bf16.mxu0 0
        %4279 = vmatpush1.bf16.msra.mxu0 %v4256
        %4280 = vmatprep.subr.bf16.mxu0 0
        %4281 = vmatpush1.bf16.msra.mxu0 %v4257
        %4282 = vmatprep.subr.bf16.mxu0 0
        %4283 = vmatpush1.bf16.msra.mxu0 0
        %4284 = vmatprep.subr.bf16.mxu0 0
        %4285 = vmatpush1.bf16.msra.mxu0 0
        %4286 = vmatprep.subr.bf16.mxu0 0
        %4287 = vmatpush1.bf16.msra.mxu0 0
        %4288 = vmatprep.subr.bf16.mxu0 0
        %4289 = vmatpush1.bf16.msra.mxu0 0
        %4290 = vmatprep.subr.bf16.mxu0 0
        %4291 = vmatpush1.bf16.msra.mxu0 0
        %4292 = vmatprep.subr.bf16.mxu0 0
        %4293 = vmatpush1.bf16.msra.mxu0 0
        %4294 = vmatprep.subr.bf16.mxu0 0
        %4295 = vmatpush1.bf16.msra.mxu0 0
        %4296 = vmatprep.subr.bf16.mxu0 0
        %4297 = vmatpush1.bf16.msra.mxu0 0
        %4298 = vmatprep.mubr.bf16.mxu0 0
        %4299 = vmatmul.mubr.bf16.gmra.mrb[0].mxu0 %v4185
        %v4300 = vpop.f32.mrb[0].mxu0
        %v4301 = vadd.f32 0.0, %v4300
        %v4302 = vpop.f32.mrb[0].mxu0
        %v4303 = vpop.f32.mrb[0].mxu0
        %v4304 = vadd.f32 0.0, %v4303
        %v4305 = vpop.f32.mrb[0].mxu0
        %4306 = vmatprep.mubr.bf16.mxu0 0
        %4307 = vmatmul.mubr.bf16.gmra.mrb[0].mxu0 %v4186
        %v4308 = vpop.f32.mrb[0].mxu0
        %v4309 = vadd.f32 0.0, %v4308
        %v4310 = vpop.f32.mrb[0].mxu0
        %v4311 = vpop.f32.mrb[0].mxu0
        %v4312 = vadd.f32 0.0, %v4311
        %v4313 = vpop.f32.mrb[0].mxu0
        %4314 = vmatprep.mubr.bf16.mxu0 0
        %4315 = vmatmul.mubr.bf16.gmra.mrb[0].mxu0 %v4187
        %v4316 = vpop.f32.mrb[0].mxu0
        %v4317 = vadd.f32 0.0, %v4316
        %v4318 = vpop.f32.mrb[0].mxu0
        %v4319 = vpop.f32.mrb[0].mxu0
        %v4320 = vadd.f32 0.0, %v4319
        %v4321 = vpop.f32.mrb[0].mxu0
        %4322 = vmatprep.mubr.bf16.mxu0 0
        %4323 = vmatmul.mubr.bf16.gmra.mrb[0].mxu0 %v4188
        %v4324 = vpop.f32.mrb[0].mxu0
        %v4325 = vadd.f32 0.0, %v4324
        %v4326 = vpop.f32.mrb[0].mxu0
        %v4327 = vpop.f32.mrb[0].mxu0
        %v4328 = vadd.f32 0.0, %v4327
        %v4329 = vpop.f32.mrb[0].mxu0
        %4330 = vmatprep.mubr.bf16.mxu0 0
        %4331 = vmatmul.mubr.bf16.gmra.mrb[0].mxu0 %v4189
        %v4332 = vpop.f32.mrb[0].mxu0
        %v4333 = vadd.f32 0.0, %v4332
        %v4334 = vpop.f32.mrb[0].mxu0
        %v4335 = vpop.f32.mrb[0].mxu0
        %v4336 = vadd.f32 0.0, %v4335
        %v4337 = vpop.f32.mrb[0].mxu0
        %4338 = vmatprep.mubr.bf16.mxu0 0
        %4339 = vmatmul.mubr.bf16.gmra.mrb[0].mxu0 %v4190
        %v4340 = vpop.f32.mrb[0].mxu0
        %v4341 = vadd.f32 0.0, %v4340
        %v4342 = vpop.f32.mrb[0].mxu0
        %v4343 = vpop.f32.mrb[0].mxu0
        %v4344 = vadd.f32 0.0, %v4343
        %v4345 = vpop.f32.mrb[0].mxu0
        %4346 = vmatprep.mubr.bf16.mxu0 0
        %4347 = vmatmul.mubr.bf16.gmra.mrb[0].mxu0 %v4191
        %v4348 = vpop.f32.mrb[0].mxu0
        %v4349 = vadd.f32 0.0, %v4348
        %v4350 = vpop.f32.mrb[0].mxu0
        %v4351 = vpop.f32.mrb[0].mxu0
        %v4352 = vadd.f32 0.0, %v4351
        %v4353 = vpop.f32.mrb[0].mxu0
        %4354 = vmatprep.mubr.bf16.mxu0 0
        %4355 = vmatmul.mubr.bf16.gmra.mrb[0].mxu0 %v4192
        %v4356 = vpop.f32.mrb[0].mxu0
        %v4357 = vadd.f32 0.0, %v4356
        %v4358 = vpop.f32.mrb[0].mxu0
        %v4359 = vpop.f32.mrb[0].mxu0
        %v4360 = vadd.f32 0.0, %v4359
        %v4361 = vpop.f32.mrb[0].mxu0
        %4362 = vmatprep.mubr.bf16.mxu0 0
        %4363 = vmatmul.mubr.bf16.gmra.mrb[0].mxu0 %v4193
        %v4364 = vpop.f32.mrb[0].mxu0
        %v4365 = vadd.f32 0.0, %v4364
        %v4366 = vpop.f32.mrb[0].mxu0
        %v4367 = vpop.f32.mrb[0].mxu0
        %v4368 = vadd.f32 0.0, %v4367
        %v4369 = vpop.f32.mrb[0].mxu0
        %4370 = vmatprep.mubr.bf16.mxu0 0
        %4371 = vmatmul.mubr.bf16.gmra.mrb[0].mxu0 %v4194
        %v4372 = vpop.f32.mrb[0].mxu0
        %v4373 = vadd.f32 0.0, %v4372
        %v4374 = vpop.f32.mrb[0].mxu0
        %v4375 = vpop.f32.mrb[0].mxu0
        %v4376 = vadd.f32 0.0, %v4375
        %v4377 = vpop.f32.mrb[0].mxu0
        %4378 = vmatprep.mubr.bf16.mxu0 0
        %4379 = vmatmul.mubr.bf16.gmra.mrb[0].mxu0 %v4195
        %v4380 = vpop.f32.mrb[0].mxu0
        %v4381 = vadd.f32 0.0, %v4380
        %v4382 = vpop.f32.mrb[0].mxu0
        %v4383 = vpop.f32.mrb[0].mxu0
        %v4384 = vadd.f32 0.0, %v4383
        %v4385 = vpop.f32.mrb[0].mxu0
        %4386 = vmatprep.mubr.bf16.mxu0 0
        %4387 = vmatmul.mubr.bf16.gmra.mrb[0].mxu0 %v4196
        %v4388 = vpop.f32.mrb[0].mxu0
        %v4389 = vadd.f32 0.0, %v4388
        %v4390 = vpop.f32.mrb[0].mxu0
        %v4391 = vpop.f32.mrb[0].mxu0
        %v4392 = vadd.f32 0.0, %v4391
        %v4393 = vpop.f32.mrb[0].mxu0
        %4394 = vmatprep.mubr.bf16.mxu0 0
        %4395 = vmatmul.mubr.bf16.gmra.mrb[0].mxu0 %v4197
        %v4396 = vpop.f32.mrb[0].mxu0
        %v4397 = vadd.f32 0.0, %v4396
        %v4398 = vpop.f32.mrb[0].mxu0
        %v4399 = vpop.f32.mrb[0].mxu0
        %v4400 = vadd.f32 0.0, %v4399
        %v4401 = vpop.f32.mrb[0].mxu0
        %4402 = vmatprep.mubr.bf16.mxu0 0
        %4403 = vmatmul.mubr.bf16.gmra.mrb[0].mxu0 %v4198
        %v4404 = vpop.f32.mrb[0].mxu0
        %v4405 = vadd.f32 0.0, %v4404
        %v4406 = vpop.f32.mrb[0].mxu0
        %v4407 = vpop.f32.mrb[0].mxu0
        %v4408 = vadd.f32 0.0, %v4407
        %v4409 = vpop.f32.mrb[0].mxu0
        %4410 = vmatprep.mubr.bf16.mxu0 0
        %4411 = vmatmul.mubr.bf16.gmra.mrb[0].mxu0 %v4199
        %v4412 = vpop.f32.mrb[0].mxu0
        %v4413 = vadd.f32 0.0, %v4412
        %v4414 = vpop.f32.mrb[0].mxu0
        %v4415 = vpop.f32.mrb[0].mxu0
        %v4416 = vadd.f32 0.0, %v4415
        %v4417 = vpop.f32.mrb[0].mxu0
        %4418 = vmatprep.mubr.bf16.mxu0 0
        %4419 = vmatmul.mubr.bf16.gmra.mrb[0].mxu0 %v4200
        %v4420 = vpop.f32.mrb[0].mxu0
        %v4421 = vadd.f32 0.0, %v4420
        %v4422 = vpop.f32.mrb[0].mxu0
        %v4423 = vpop.f32.mrb[0].mxu0
        %v4424 = vadd.f32 0.0, %v4423
        %v4425 = vpop.f32.mrb[0].mxu0
        %4426 = vdwg.mxu0
        %v4427 = vld [vmem:[#allocation4] sm:$0xff]
        %v4428 = vld [vmem:[#allocation4 + $0x8] sm:$0xff]
        %v4429 = vld [vmem:[#allocation4 + $0x10] sm:$0xff]
        %v4430 = vld [vmem:[#allocation4 + $0x18] sm:$0xff]
        %v4431 = vld [vmem:[#allocation4 + $0x20] sm:$0xff]
        %v4432 = vld [vmem:[#allocation4 + $0x28] sm:$0xff]
        %v4433 = vld [vmem:[#allocation4 + $0x30] sm:$0xff]
        %v4434 = vld [vmem:[#allocation4 + $0x38] sm:$0xff]
        %v4435 = vld [vmem:[#allocation4 + $0x40] sm:$0xff]
        %v4436 = vld [vmem:[#allocation4 + $0x48] sm:$0xff]
        %v4437 = vld [vmem:[#allocation4 + $0x50] sm:$0xff]
        %v4438 = vld [vmem:[#allocation4 + $0x58] sm:$0xff]
        %v4439 = vld [vmem:[#allocation4 + $0x60] sm:$0xff]
        %v4440 = vld [vmem:[#allocation4 + $0x68] sm:$0xff]
        %v4441 = vld [vmem:[#allocation4 + $0x70] sm:$0xff]
        %v4442 = vld [vmem:[#allocation4 + $0x78] sm:$0xff]
        %v4443 = vld [vmem:[#allocation4 + $0x80] sm:$0xff]
        %v4444 = vld [vmem:[#allocation4 + $0x88] sm:$0xff]
        %v4445 = vld [vmem:[#allocation4 + $0x90] sm:$0xff]
        %v4446 = vld [vmem:[#allocation4 + $0x98] sm:$0xff]
        %v4447 = vld [vmem:[#allocation4 + $0xa0] sm:$0xff]
        %v4448 = vld [vmem:[#allocation4 + $0xa8] sm:$0xff]
        %v4449 = vld [vmem:[#allocation4 + $0xb0] sm:$0xff]
        %v4450 = vld [vmem:[#allocation4 + $0xb8] sm:$0xff]
        %v4451 = vld [vmem:[#allocation4 + $0xc0] sm:$0xff]
        %v4452 = vld [vmem:[#allocation4 + $0xc8] sm:$0xff]
        %v4453 = vld [vmem:[#allocation4 + $0xd0] sm:$0xff]
        %v4454 = vld [vmem:[#allocation4 + $0xd8] sm:$0xff]
        %v4455 = vld [vmem:[#allocation4 + $0xe0] sm:$0xff]
        %v4456 = vld [vmem:[#allocation4 + $0xe8] sm:$0xff]
        %v4457 = vld [vmem:[#allocation4 + $0xf0] sm:$0xff]
        %v4458 = vld [vmem:[#allocation4 + $0xf8] sm:$0xff]
        %v4459 = vadd.f32 %v4427, %v4301
        %v4460 = vadd.f32 %v4428, %v4304
        %v4461 = vadd.f32 %v4429, %v4309
        %v4462 = vadd.f32 %v4430, %v4312
        %v4463 = vadd.f32 %v4431, %v4317
        %v4464 = vadd.f32 %v4432, %v4320
        %v4465 = vadd.f32 %v4433, %v4325
        %v4466 = vadd.f32 %v4434, %v4328
        %v4467 = vadd.f32 %v4435, %v4333
        %v4468 = vadd.f32 %v4436, %v4336
        %v4469 = vadd.f32 %v4437, %v4341
        %v4470 = vadd.f32 %v4438, %v4344
        %v4471 = vadd.f32 %v4439, %v4349
        %v4472 = vadd.f32 %v4440, %v4352
        %v4473 = vadd.f32 %v4441, %v4357
        %v4474 = vadd.f32 %v4442, %v4360
        %v4475 = vadd.f32 %v4443, %v4365
        %v4476 = vadd.f32 %v4444, %v4368
        %v4477 = vadd.f32 %v4445, %v4373
        %v4478 = vadd.f32 %v4446, %v4376
        %v4479 = vadd.f32 %v4447, %v4381
        %v4480 = vadd.f32 %v4448, %v4384
        %v4481 = vadd.f32 %v4449, %v4389
        %v4482 = vadd.f32 %v4450, %v4392
        %v4483 = vadd.f32 %v4451, %v4397
        %v4484 = vadd.f32 %v4452, %v4400
        %v4485 = vadd.f32 %v4453, %v4405
        %v4486 = vadd.f32 %v4454, %v4408
        %v4487 = vadd.f32 %v4455, %v4413
        %v4488 = vadd.f32 %v4456, %v4416
        %v4489 = vadd.f32 %v4457, %v4421
        %v4490 = vadd.f32 %v4458, %v4424
        %4491 = vst [vmem:[#allocation4] sm:$0xff] %v4459
        %4492 = vst [vmem:[#allocation4 + $0x8] sm:$0xff] %v4460
        %4493 = vst [vmem:[#allocation4 + $0x10] sm:$0xff] %v4461
        %4494 = vst [vmem:[#allocation4 + $0x18] sm:$0xff] %v4462
        %4495 = vst [vmem:[#allocation4 + $0x20] sm:$0xff] %v4463
        %4496 = vst [vmem:[#allocation4 + $0x28] sm:$0xff] %v4464
        %4497 = vst [vmem:[#allocation4 + $0x30] sm:$0xff] %v4465
        %4498 = vst [vmem:[#allocation4 + $0x38] sm:$0xff] %v4466
        %4499 = vst [vmem:[#allocation4 + $0x40] sm:$0xff] %v4467
        %4500 = vst [vmem:[#allocation4 + $0x48] sm:$0xff] %v4468
        %4501 = vst [vmem:[#allocation4 + $0x50] sm:$0xff] %v4469
        %4502 = vst [vmem:[#allocation4 + $0x58] sm:$0xff] %v4470
        %4503 = vst [vmem:[#allocation4 + $0x60] sm:$0xff] %v4471
        %4504 = vst [vmem:[#allocation4 + $0x68] sm:$0xff] %v4472
        %4505 = vst [vmem:[#allocation4 + $0x70] sm:$0xff] %v4473
        %4506 = vst [vmem:[#allocation4 + $0x78] sm:$0xff] %v4474
        %4507 = vst [vmem:[#allocation4 + $0x80] sm:$0xff] %v4475
        %4508 = vst [vmem:[#allocation4 + $0x88] sm:$0xff] %v4476
        %4509 = vst [vmem:[#allocation4 + $0x90] sm:$0xff] %v4477
        %4510 = vst [vmem:[#allocation4 + $0x98] sm:$0xff] %v4478
        %4511 = vst [vmem:[#allocation4 + $0xa0] sm:$0xff] %v4479
        %4512 = vst [vmem:[#allocation4 + $0xa8] sm:$0xff] %v4480
        %4513 = vst [vmem:[#allocation4 + $0xb0] sm:$0xff] %v4481
        %4514 = vst [vmem:[#allocation4 + $0xb8] sm:$0xff] %v4482
        %4515 = vst [vmem:[#allocation4 + $0xc0] sm:$0xff] %v4483
        %4516 = vst [vmem:[#allocation4 + $0xc8] sm:$0xff] %v4484
        %4517 = vst [vmem:[#allocation4 + $0xd0] sm:$0xff] %v4485
        %4518 = vst [vmem:[#allocation4 + $0xd8] sm:$0xff] %v4486
        %4519 = vst [vmem:[#allocation4 + $0xe0] sm:$0xff] %v4487
        %4520 = vst [vmem:[#allocation4 + $0xe8] sm:$0xff] %v4488
        %4521 = vst [vmem:[#allocation4 + $0xf0] sm:$0xff] %v4489
        %4522 = vst [vmem:[#allocation4 + $0xf8] sm:$0xff] %v4490
        %v4523 = vld [vmem:[%s4056] sm:$0xff]
        %v4524 = vld [vmem:[%s4056 + $0x8] sm:$0xff]
        %v4525 = vld [vmem:[%s4056 + $0x10] sm:$0xff]
        %v4526 = vld [vmem:[%s4056 + $0x18] sm:$0xff]
        %v4527 = vld [vmem:[%s4056 + $0x20] sm:$0xff]
        %v4528 = vld [vmem:[%s4056 + $0x28] sm:$0xff]
        %v4529 = vld [vmem:[%s4056 + $0x30] sm:$0xff]
        %v4530 = vld [vmem:[%s4056 + $0x38] sm:$0xff]
        %v4531 = vld [vmem:[%s4056 + $0x40] sm:$0xff]
        %v4532 = vld [vmem:[%s4056 + $0x48] sm:$0xff]
        %v4533 = vld [vmem:[%s4056 + $0x50] sm:$0xff]
        %v4534 = vld [vmem:[%s4056 + $0x58] sm:$0xff]
        %v4535 = vld [vmem:[%s4056 + $0x60] sm:$0xff]
        %v4536 = vld [vmem:[%s4056 + $0x68] sm:$0xff]
        %v4537 = vld [vmem:[%s4056 + $0x70] sm:$0xff]
        %v4538 = vld [vmem:[%s4056 + $0x78] sm:$0xff]
        %v4539 = vld [vmem:[%s4056 + $0x80] sm:$0xff]
        %v4540 = vld [vmem:[%s4056 + $0x88] sm:$0xff]
        %v4541 = vld [vmem:[%s4056 + $0x90] sm:$0xff]
        %v4542 = vld [vmem:[%s4056 + $0x98] sm:$0xff]
        %v4543 = vld [vmem:[%s4056 + $0xa0] sm:$0xff]
        %v4544 = vld [vmem:[%s4056 + $0xa8] sm:$0xff]
        %v4545 = vld [vmem:[%s4056 + $0xb0] sm:$0xff]
        %v4546 = vld [vmem:[%s4056 + $0xb8] sm:$0xff]
        %v4547 = vld [vmem:[%s4056 + $0xc0] sm:$0xff]
        %v4548 = vld [vmem:[%s4056 + $0xc8] sm:$0xff]
        %v4549 = vld [vmem:[%s4056 + $0xd0] sm:$0xff]
        %v4550 = vld [vmem:[%s4056 + $0xd8] sm:$0xff]
        %v4551 = vld [vmem:[%s4056 + $0xe0] sm:$0xff]
        %v4552 = vld [vmem:[%s4056 + $0xe8] sm:$0xff]
        %v4553 = vld [vmem:[%s4056 + $0xf0] sm:$0xff]
        %v4554 = vld [vmem:[%s4056 + $0xf8] sm:$0xff]
        %v4555 = vpack.c.bf16 %v4524, %v4523
        %v4556 = vpack.c.bf16 %v4526, %v4525
        %v4557 = vpack.c.bf16 %v4528, %v4527
        %v4558 = vpack.c.bf16 %v4530, %v4529
        %v4559 = vpack.c.bf16 %v4532, %v4531
        %v4560 = vpack.c.bf16 %v4534, %v4533
        %v4561 = vpack.c.bf16 %v4536, %v4535
        %v4562 = vpack.c.bf16 %v4538, %v4537
        %v4563 = vpack.c.bf16 %v4540, %v4539
        %v4564 = vpack.c.bf16 %v4542, %v4541
        %v4565 = vpack.c.bf16 %v4544, %v4543
        %v4566 = vpack.c.bf16 %v4546, %v4545
        %v4567 = vpack.c.bf16 %v4548, %v4547
        %v4568 = vpack.c.bf16 %v4550, %v4549
        %v4569 = vpack.c.bf16 %v4552, %v4551
        %v4570 = vpack.c.bf16 %v4554, %v4553
        %s4571 = scalar_lea.vmem [#allocation5], 448
        %v4572 = vld [vmem:[%s4571] sm:$0xf]
        %v4573 = vld [vmem:[%s4571 + $0x4] sm:$0xf]
        %v4574 = vld [vmem:[%s4571 + $0x8] sm:$0xf]
        %v4575 = vld [vmem:[%s4571 + $0xc] sm:$0xf]
        %v4576 = vld [vmem:[%s4571 + $0x10] sm:$0xf]
        %v4577 = vld [vmem:[%s4571 + $0x14] sm:$0xf]
        %v4578 = vld [vmem:[%s4571 + $0x18] sm:$0xf]
        %v4579 = vld [vmem:[%s4571 + $0x1c] sm:$0xf]
        %v4580 = vld [vmem:[%s4571 + $0x20] sm:$0xf]
        %v4581 = vld [vmem:[%s4571 + $0x24] sm:$0xf]
        %v4582 = vld [vmem:[%s4571 + $0x28] sm:$0xf]
        %v4583 = vld [vmem:[%s4571 + $0x2c] sm:$0xf]
        %v4584 = vld [vmem:[%s4571 + $0x30] sm:$0xf]
        %v4585 = vld [vmem:[%s4571 + $0x34] sm:$0xf]
        %v4586 = vld [vmem:[%s4571 + $0x38] sm:$0xf]
        %v4587 = vld [vmem:[%s4571 + $0x3c] sm:$0xf]
        %v4604 = vunpack.c.l.b16 %v4572
        %v4605 = vunpack.c.l.b16 %v4573
        %v4606 = vunpack.c.l.b16 %v4574
        %v4607 = vunpack.c.l.b16 %v4575
        %v4608 = vunpack.c.l.b16 %v4576
        %v4609 = vunpack.c.l.b16 %v4577
        %v4610 = vunpack.c.l.b16 %v4578
        %v4611 = vunpack.c.l.b16 %v4579
        %v4612 = vunpack.c.l.b16 %v4580
        %v4613 = vunpack.c.l.b16 %v4581
        %v4614 = vunpack.c.l.b16 %v4582
        %v4615 = vunpack.c.l.b16 %v4583
        %v4616 = vunpack.c.l.b16 %v4584
        %v4617 = vunpack.c.l.b16 %v4585
        %v4618 = vunpack.c.l.b16 %v4586
        %v4619 = vunpack.c.l.b16 %v4587
        %v4620 = vpack.c.b16 %v4605, %v4604
        %v4621 = vpack.c.b16 %v4607, %v4606
        %v4622 = vpack.c.b16 %v4609, %v4608
        %v4623 = vpack.c.b16 %v4611, %v4610
        %v4624 = vpack.c.b16 %v4613, %v4612
        %v4625 = vpack.c.b16 %v4615, %v4614
        %v4626 = vpack.c.b16 %v4617, %v4616
        %v4627 = vpack.c.b16 %v4619, %v4618
        %4636 = vmatprep.subr.bf16.mxu0 0
        %4637 = vmatpush1.bf16.msra.mxu0 %v4620
        %4638 = vmatprep.subr.bf16.mxu0 0
        %4639 = vmatpush1.bf16.msra.mxu0 %v4621
        %4640 = vmatprep.subr.bf16.mxu0 0
        %4641 = vmatpush1.bf16.msra.mxu0 %v4622
        %4642 = vmatprep.subr.bf16.mxu0 0
        %4643 = vmatpush1.bf16.msra.mxu0 %v4623
        %4644 = vmatprep.subr.bf16.mxu0 0
        %4645 = vmatpush1.bf16.msra.mxu0 %v4624
        %4646 = vmatprep.subr.bf16.mxu0 0
        %4647 = vmatpush1.bf16.msra.mxu0 %v4625
        %4648 = vmatprep.subr.bf16.mxu0 0
        %4649 = vmatpush1.bf16.msra.mxu0 %v4626
        %4650 = vmatprep.subr.bf16.mxu0 0
        %4651 = vmatpush1.bf16.msra.mxu0 %v4627
        %4652 = vmatprep.subr.bf16.mxu0 0
        %4653 = vmatpush1.bf16.msra.mxu0 0
        %4654 = vmatprep.subr.bf16.mxu0 0
        %4655 = vmatpush1.bf16.msra.mxu0 0
        %4656 = vmatprep.subr.bf16.mxu0 0
        %4657 = vmatpush1.bf16.msra.mxu0 0
        %4658 = vmatprep.subr.bf16.mxu0 0
        %4659 = vmatpush1.bf16.msra.mxu0 0
        %4660 = vmatprep.subr.bf16.mxu0 0
        %4661 = vmatpush1.bf16.msra.mxu0 0
        %4662 = vmatprep.subr.bf16.mxu0 0
        %4663 = vmatpush1.bf16.msra.mxu0 0
        %4664 = vmatprep.subr.bf16.mxu0 0
        %4665 = vmatpush1.bf16.msra.mxu0 0
        %4666 = vmatprep.subr.bf16.mxu0 0
        %4667 = vmatpush1.bf16.msra.mxu0 0
        %4668 = vmatprep.mubr.bf16.mxu0 0
        %4669 = vmatmul.mubr.bf16.gmra.mrb[0].mxu0 %v4555
        %v4670 = vpop.f32.mrb[0].mxu0
        %v4671 = vadd.f32 0.0, %v4670
        %v4672 = vpop.f32.mrb[0].mxu0
        %v4673 = vpop.f32.mrb[0].mxu0
        %v4674 = vadd.f32 0.0, %v4673
        %v4675 = vpop.f32.mrb[0].mxu0
        %4676 = vmatprep.mubr.bf16.mxu0 0
        %4677 = vmatmul.mubr.bf16.gmra.mrb[0].mxu0 %v4556
        %v4678 = vpop.f32.mrb[0].mxu0
        %v4679 = vadd.f32 0.0, %v4678
        %v4680 = vpop.f32.mrb[0].mxu0
        %v4681 = vpop.f32.mrb[0].mxu0
        %v4682 = vadd.f32 0.0, %v4681
        %v4683 = vpop.f32.mrb[0].mxu0
        %4684 = vmatprep.mubr.bf16.mxu0 0
        %4685 = vmatmul.mubr.bf16.gmra.mrb[0].mxu0 %v4557
        %v4686 = vpop.f32.mrb[0].mxu0
        %v4687 = vadd.f32 0.0, %v4686
        %v4688 = vpop.f32.mrb[0].mxu0
        %v4689 = vpop.f32.mrb[0].mxu0
        %v4690 = vadd.f32 0.0, %v4689
        %v4691 = vpop.f32.mrb[0].mxu0
        %4692 = vmatprep.mubr.bf16.mxu0 0
        %4693 = vmatmul.mubr.bf16.gmra.mrb[0].mxu0 %v4558
        %v4694 = vpop.f32.mrb[0].mxu0
        %v4695 = vadd.f32 0.0, %v4694
        %v4696 = vpop.f32.mrb[0].mxu0
        %v4697 = vpop.f32.mrb[0].mxu0
        %v4698 = vadd.f32 0.0, %v4697
        %v4699 = vpop.f32.mrb[0].mxu0
        %4700 = vmatprep.mubr.bf16.mxu0 0
        %4701 = vmatmul.mubr.bf16.gmra.mrb[0].mxu0 %v4559
        %v4702 = vpop.f32.mrb[0].mxu0
        %v4703 = vadd.f32 0.0, %v4702
        %v4704 = vpop.f32.mrb[0].mxu0
        %v4705 = vpop.f32.mrb[0].mxu0
        %v4706 = vadd.f32 0.0, %v4705
        %v4707 = vpop.f32.mrb[0].mxu0
        %4708 = vmatprep.mubr.bf16.mxu0 0
        %4709 = vmatmul.mubr.bf16.gmra.mrb[0].mxu0 %v4560
        %v4710 = vpop.f32.mrb[0].mxu0
        %v4711 = vadd.f32 0.0, %v4710
        %v4712 = vpop.f32.mrb[0].mxu0
        %v4713 = vpop.f32.mrb[0].mxu0
        %v4714 = vadd.f32 0.0, %v4713
        %v4715 = vpop.f32.mrb[0].mxu0
        %4716 = vmatprep.mubr.bf16.mxu0 0
        %4717 = vmatmul.mubr.bf16.gmra.mrb[0].mxu0 %v4561
        %v4718 = vpop.f32.mrb[0].mxu0
        %v4719 = vadd.f32 0.0, %v4718
        %v4720 = vpop.f32.mrb[0].mxu0
        %v4721 = vpop.f32.mrb[0].mxu0
        %v4722 = vadd.f32 0.0, %v4721
        %v4723 = vpop.f32.mrb[0].mxu0
        %4724 = vmatprep.mubr.bf16.mxu0 0
        %4725 = vmatmul.mubr.bf16.gmra.mrb[0].mxu0 %v4562
        %v4726 = vpop.f32.mrb[0].mxu0
        %v4727 = vadd.f32 0.0, %v4726
        %v4728 = vpop.f32.mrb[0].mxu0
        %v4729 = vpop.f32.mrb[0].mxu0
        %v4730 = vadd.f32 0.0, %v4729
        %v4731 = vpop.f32.mrb[0].mxu0
        %4732 = vmatprep.mubr.bf16.mxu0 0
        %4733 = vmatmul.mubr.bf16.gmra.mrb[0].mxu0 %v4563
        %v4734 = vpop.f32.mrb[0].mxu0
        %v4735 = vadd.f32 0.0, %v4734
        %v4736 = vpop.f32.mrb[0].mxu0
        %v4737 = vpop.f32.mrb[0].mxu0
        %v4738 = vadd.f32 0.0, %v4737
        %v4739 = vpop.f32.mrb[0].mxu0
        %4740 = vmatprep.mubr.bf16.mxu0 0
        %4741 = vmatmul.mubr.bf16.gmra.mrb[0].mxu0 %v4564
        %v4742 = vpop.f32.mrb[0].mxu0
        %v4743 = vadd.f32 0.0, %v4742
        %v4744 = vpop.f32.mrb[0].mxu0
        %v4745 = vpop.f32.mrb[0].mxu0
        %v4746 = vadd.f32 0.0, %v4745
        %v4747 = vpop.f32.mrb[0].mxu0
        %4748 = vmatprep.mubr.bf16.mxu0 0
        %4749 = vmatmul.mubr.bf16.gmra.mrb[0].mxu0 %v4565
        %v4750 = vpop.f32.mrb[0].mxu0
        %v4751 = vadd.f32 0.0, %v4750
        %v4752 = vpop.f32.mrb[0].mxu0
        %v4753 = vpop.f32.mrb[0].mxu0
        %v4754 = vadd.f32 0.0, %v4753
        %v4755 = vpop.f32.mrb[0].mxu0
        %4756 = vmatprep.mubr.bf16.mxu0 0
        %4757 = vmatmul.mubr.bf16.gmra.mrb[0].mxu0 %v4566
        %v4758 = vpop.f32.mrb[0].mxu0
        %v4759 = vadd.f32 0.0, %v4758
        %v4760 = vpop.f32.mrb[0].mxu0
        %v4761 = vpop.f32.mrb[0].mxu0
        %v4762 = vadd.f32 0.0, %v4761
        %v4763 = vpop.f32.mrb[0].mxu0
        %4764 = vmatprep.mubr.bf16.mxu0 0
        %4765 = vmatmul.mubr.bf16.gmra.mrb[0].mxu0 %v4567
        %v4766 = vpop.f32.mrb[0].mxu0
        %v4767 = vadd.f32 0.0, %v4766
        %v4768 = vpop.f32.mrb[0].mxu0
        %v4769 = vpop.f32.mrb[0].mxu0
        %v4770 = vadd.f32 0.0, %v4769
        %v4771 = vpop.f32.mrb[0].mxu0
        %4772 = vmatprep.mubr.bf16.mxu0 0
        %4773 = vmatmul.mubr.bf16.gmra.mrb[0].mxu0 %v4568
        %v4774 = vpop.f32.mrb[0].mxu0
        %v4775 = vadd.f32 0.0, %v4774
        %v4776 = vpop.f32.mrb[0].mxu0
        %v4777 = vpop.f32.mrb[0].mxu0
        %v4778 = vadd.f32 0.0, %v4777
        %v4779 = vpop.f32.mrb[0].mxu0
        %4780 = vmatprep.mubr.bf16.mxu0 0
        %4781 = vmatmul.mubr.bf16.gmra.mrb[0].mxu0 %v4569
        %v4782 = vpop.f32.mrb[0].mxu0
        %v4783 = vadd.f32 0.0, %v4782
        %v4784 = vpop.f32.mrb[0].mxu0
        %v4785 = vpop.f32.mrb[0].mxu0
        %v4786 = vadd.f32 0.0, %v4785
        %v4787 = vpop.f32.mrb[0].mxu0
        %4788 = vmatprep.mubr.bf16.mxu0 0
        %4789 = vmatmul.mubr.bf16.gmra.mrb[0].mxu0 %v4570
        %v4790 = vpop.f32.mrb[0].mxu0
        %v4791 = vadd.f32 0.0, %v4790
        %v4792 = vpop.f32.mrb[0].mxu0
        %v4793 = vpop.f32.mrb[0].mxu0
        %v4794 = vadd.f32 0.0, %v4793
        %v4795 = vpop.f32.mrb[0].mxu0
        %4796 = vdwg.mxu0
        %v4797 = vld [vmem:[#allocation4] sm:$0xff]
        %v4798 = vld [vmem:[#allocation4 + $0x8] sm:$0xff]
        %v4799 = vld [vmem:[#allocation4 + $0x10] sm:$0xff]
        %v4800 = vld [vmem:[#allocation4 + $0x18] sm:$0xff]
        %v4801 = vld [vmem:[#allocation4 + $0x20] sm:$0xff]
        %v4802 = vld [vmem:[#allocation4 + $0x28] sm:$0xff]
        %v4803 = vld [vmem:[#allocation4 + $0x30] sm:$0xff]
        %v4804 = vld [vmem:[#allocation4 + $0x38] sm:$0xff]
        %v4805 = vld [vmem:[#allocation4 + $0x40] sm:$0xff]
        %v4806 = vld [vmem:[#allocation4 + $0x48] sm:$0xff]
        %v4807 = vld [vmem:[#allocation4 + $0x50] sm:$0xff]
        %v4808 = vld [vmem:[#allocation4 + $0x58] sm:$0xff]
        %v4809 = vld [vmem:[#allocation4 + $0x60] sm:$0xff]
        %v4810 = vld [vmem:[#allocation4 + $0x68] sm:$0xff]
        %v4811 = vld [vmem:[#allocation4 + $0x70] sm:$0xff]
        %v4812 = vld [vmem:[#allocation4 + $0x78] sm:$0xff]
        %v4813 = vld [vmem:[#allocation4 + $0x80] sm:$0xff]
        %v4814 = vld [vmem:[#allocation4 + $0x88] sm:$0xff]
        %v4815 = vld [vmem:[#allocation4 + $0x90] sm:$0xff]
        %v4816 = vld [vmem:[#allocation4 + $0x98] sm:$0xff]
        %v4817 = vld [vmem:[#allocation4 + $0xa0] sm:$0xff]
        %v4818 = vld [vmem:[#allocation4 + $0xa8] sm:$0xff]
        %v4819 = vld [vmem:[#allocation4 + $0xb0] sm:$0xff]
        %v4820 = vld [vmem:[#allocation4 + $0xb8] sm:$0xff]
        %v4821 = vld [vmem:[#allocation4 + $0xc0] sm:$0xff]
        %v4822 = vld [vmem:[#allocation4 + $0xc8] sm:$0xff]
        %v4823 = vld [vmem:[#allocation4 + $0xd0] sm:$0xff]
        %v4824 = vld [vmem:[#allocation4 + $0xd8] sm:$0xff]
        %v4825 = vld [vmem:[#allocation4 + $0xe0] sm:$0xff]
        %v4826 = vld [vmem:[#allocation4 + $0xe8] sm:$0xff]
        %v4827 = vld [vmem:[#allocation4 + $0xf0] sm:$0xff]
        %v4828 = vld [vmem:[#allocation4 + $0xf8] sm:$0xff]
        %v4829 = vadd.f32 %v4797, %v4671
        %v4830 = vadd.f32 %v4798, %v4674
        %v4831 = vadd.f32 %v4799, %v4679
        %v4832 = vadd.f32 %v4800, %v4682
        %v4833 = vadd.f32 %v4801, %v4687
        %v4834 = vadd.f32 %v4802, %v4690
        %v4835 = vadd.f32 %v4803, %v4695
        %v4836 = vadd.f32 %v4804, %v4698
        %v4837 = vadd.f32 %v4805, %v4703
        %v4838 = vadd.f32 %v4806, %v4706
        %v4839 = vadd.f32 %v4807, %v4711
        %v4840 = vadd.f32 %v4808, %v4714
        %v4841 = vadd.f32 %v4809, %v4719
        %v4842 = vadd.f32 %v4810, %v4722
        %v4843 = vadd.f32 %v4811, %v4727
        %v4844 = vadd.f32 %v4812, %v4730
        %v4845 = vadd.f32 %v4813, %v4735
        %v4846 = vadd.f32 %v4814, %v4738
        %v4847 = vadd.f32 %v4815, %v4743
        %v4848 = vadd.f32 %v4816, %v4746
        %v4849 = vadd.f32 %v4817, %v4751
        %v4850 = vadd.f32 %v4818, %v4754
        %v4851 = vadd.f32 %v4819, %v4759
        %v4852 = vadd.f32 %v4820, %v4762
        %v4853 = vadd.f32 %v4821, %v4767
        %v4854 = vadd.f32 %v4822, %v4770
        %v4855 = vadd.f32 %v4823, %v4775
        %v4856 = vadd.f32 %v4824, %v4778
        %v4857 = vadd.f32 %v4825, %v4783
        %v4858 = vadd.f32 %v4826, %v4786
        %v4859 = vadd.f32 %v4827, %v4791
        %v4860 = vadd.f32 %v4828, %v4794
        %4861 = vst [vmem:[#allocation4] sm:$0xff] %v4829
        %4862 = vst [vmem:[#allocation4 + $0x8] sm:$0xff] %v4830
        %4863 = vst [vmem:[#allocation4 + $0x10] sm:$0xff] %v4831
        %4864 = vst [vmem:[#allocation4 + $0x18] sm:$0xff] %v4832
        %4865 = vst [vmem:[#allocation4 + $0x20] sm:$0xff] %v4833
        %4866 = vst [vmem:[#allocation4 + $0x28] sm:$0xff] %v4834
        %4867 = vst [vmem:[#allocation4 + $0x30] sm:$0xff] %v4835
        %4868 = vst [vmem:[#allocation4 + $0x38] sm:$0xff] %v4836
        %4869 = vst [vmem:[#allocation4 + $0x40] sm:$0xff] %v4837
        %4870 = vst [vmem:[#allocation4 + $0x48] sm:$0xff] %v4838
        %4871 = vst [vmem:[#allocation4 + $0x50] sm:$0xff] %v4839
        %4872 = vst [vmem:[#allocation4 + $0x58] sm:$0xff] %v4840
        %4873 = vst [vmem:[#allocation4 + $0x60] sm:$0xff] %v4841
        %4874 = vst [vmem:[#allocation4 + $0x68] sm:$0xff] %v4842
        %4875 = vst [vmem:[#allocation4 + $0x70] sm:$0xff] %v4843
        %4876 = vst [vmem:[#allocation4 + $0x78] sm:$0xff] %v4844
        %4877 = vst [vmem:[#allocation4 + $0x80] sm:$0xff] %v4845
        %4878 = vst [vmem:[#allocation4 + $0x88] sm:$0xff] %v4846
        %4879 = vst [vmem:[#allocation4 + $0x90] sm:$0xff] %v4847
        %4880 = vst [vmem:[#allocation4 + $0x98] sm:$0xff] %v4848
        %4881 = vst [vmem:[#allocation4 + $0xa0] sm:$0xff] %v4849
        %4882 = vst [vmem:[#allocation4 + $0xa8] sm:$0xff] %v4850
        %4883 = vst [vmem:[#allocation4 + $0xb0] sm:$0xff] %v4851
        %4884 = vst [vmem:[#allocation4 + $0xb8] sm:$0xff] %v4852
        %4885 = vst [vmem:[#allocation4 + $0xc0] sm:$0xff] %v4853
        %4886 = vst [vmem:[#allocation4 + $0xc8] sm:$0xff] %v4854
        %4887 = vst [vmem:[#allocation4 + $0xd0] sm:$0xff] %v4855
        %4888 = vst [vmem:[#allocation4 + $0xd8] sm:$0xff] %v4856
        %4889 = vst [vmem:[#allocation4 + $0xe0] sm:$0xff] %v4857
        %4890 = vst [vmem:[#allocation4 + $0xe8] sm:$0xff] %v4858
        %4891 = vst [vmem:[#allocation4 + $0xf0] sm:$0xff] %v4859
        %4892 = vst [vmem:[#allocation4 + $0xf8] sm:$0xff] %v4860
        %v4893 = vld [vmem:[%s4056] sm:$0xff]
        %v4894 = vld [vmem:[%s4056 + $0x8] sm:$0xff]
        %v4895 = vld [vmem:[%s4056 + $0x10] sm:$0xff]
        %v4896 = vld [vmem:[%s4056 + $0x18] sm:$0xff]
        %v4897 = vld [vmem:[%s4056 + $0x20] sm:$0xff]
        %v4898 = vld [vmem:[%s4056 + $0x28] sm:$0xff]
        %v4899 = vld [vmem:[%s4056 + $0x30] sm:$0xff]
        %v4900 = vld [vmem:[%s4056 + $0x38] sm:$0xff]
        %v4901 = vld [vmem:[%s4056 + $0x40] sm:$0xff]
        %v4902 = vld [vmem:[%s4056 + $0x48] sm:$0xff]
        %v4903 = vld [vmem:[%s4056 + $0x50] sm:$0xff]
        %v4904 = vld [vmem:[%s4056 + $0x58] sm:$0xff]
        %v4905 = vld [vmem:[%s4056 + $0x60] sm:$0xff]
        %v4906 = vld [vmem:[%s4056 + $0x68] sm:$0xff]
        %v4907 = vld [vmem:[%s4056 + $0x70] sm:$0xff]
        %v4908 = vld [vmem:[%s4056 + $0x78] sm:$0xff]
        %v4909 = vld [vmem:[%s4056 + $0x80] sm:$0xff]
        %v4910 = vld [vmem:[%s4056 + $0x88] sm:$0xff]
        %v4911 = vld [vmem:[%s4056 + $0x90] sm:$0xff]
        %v4912 = vld [vmem:[%s4056 + $0x98] sm:$0xff]
        %v4913 = vld [vmem:[%s4056 + $0xa0] sm:$0xff]
        %v4914 = vld [vmem:[%s4056 + $0xa8] sm:$0xff]
        %v4915 = vld [vmem:[%s4056 + $0xb0] sm:$0xff]
        %v4916 = vld [vmem:[%s4056 + $0xb8] sm:$0xff]
        %v4917 = vld [vmem:[%s4056 + $0xc0] sm:$0xff]
        %v4918 = vld [vmem:[%s4056 + $0xc8] sm:$0xff]
        %v4919 = vld [vmem:[%s4056 + $0xd0] sm:$0xff]
        %v4920 = vld [vmem:[%s4056 + $0xd8] sm:$0xff]
        %v4921 = vld [vmem:[%s4056 + $0xe0] sm:$0xff]
        %v4922 = vld [vmem:[%s4056 + $0xe8] sm:$0xff]
        %v4923 = vld [vmem:[%s4056 + $0xf0] sm:$0xff]
        %v4924 = vld [vmem:[%s4056 + $0xf8] sm:$0xff]
        %v4925 = vrot.slane %v4893, 1
        %v4926 = vrot.slane %v4894, 1
        %v4927 = vrot.slane %v4895, 1
        %v4928 = vrot.slane %v4896, 1
        %v4929 = vrot.slane %v4897, 1
        %v4930 = vrot.slane %v4898, 1
        %v4931 = vrot.slane %v4899, 1
        %v4932 = vrot.slane %v4900, 1
        %v4933 = vrot.slane %v4901, 1
        %v4934 = vrot.slane %v4902, 1
        %v4935 = vrot.slane %v4903, 1
        %v4936 = vrot.slane %v4904, 1
        %v4937 = vrot.slane %v4905, 1
        %v4938 = vrot.slane %v4906, 1
        %v4939 = vrot.slane %v4907, 1
        %v4940 = vrot.slane %v4908, 1
        %v4941 = vrot.slane %v4909, 1
        %v4942 = vrot.slane %v4910, 1
        %v4943 = vrot.slane %v4911, 1
        %v4944 = vrot.slane %v4912, 1
        %v4945 = vrot.slane %v4913, 1
        %v4946 = vrot.slane %v4914, 1
        %v4947 = vrot.slane %v4915, 1
        %v4948 = vrot.slane %v4916, 1
        %v4949 = vrot.slane %v4917, 1
        %v4950 = vrot.slane %v4918, 1
        %v4951 = vrot.slane %v4919, 1
        %v4952 = vrot.slane %v4920, 1
        %v4953 = vrot.slane %v4921, 1
        %v4954 = vrot.slane %v4922, 1
        %v4955 = vrot.slane %v4923, 1
        %v4956 = vrot.slane %v4924, 1
        %v4957 = vsel %vm2351, %v4955, %v4956
        %v4958 = vsel %vm2351, %v4954, %v4955
        %v4959 = vsel %vm2351, %v4953, %v4954
        %v4960 = vsel %vm2351, %v4952, %v4953
        %v4961 = vsel %vm2351, %v4951, %v4952
        %v4962 = vsel %vm2351, %v4950, %v4951
        %v4963 = vsel %vm2351, %v4949, %v4950
        %v4964 = vsel %vm2351, %v4948, %v4949
        %v4965 = vsel %vm2351, %v4947, %v4948
        %v4966 = vsel %vm2351, %v4946, %v4947
        %v4967 = vsel %vm2351, %v4945, %v4946
        %v4968 = vsel %vm2351, %v4944, %v4945
        %v4969 = vsel %vm2351, %v4943, %v4944
        %v4970 = vsel %vm2351, %v4942, %v4943
        %v4971 = vsel %vm2351, %v4941, %v4942
        %v4972 = vsel %vm2351, %v4940, %v4941
        %v4973 = vsel %vm2351, %v4939, %v4940
        %v4974 = vsel %vm2351, %v4938, %v4939
        %v4975 = vsel %vm2351, %v4937, %v4938
        %v4976 = vsel %vm2351, %v4936, %v4937
        %v4977 = vsel %vm2351, %v4935, %v4936
        %v4978 = vsel %vm2351, %v4934, %v4935
        %v4979 = vsel %vm2351, %v4933, %v4934
        %v4980 = vsel %vm2351, %v4932, %v4933
        %v4981 = vsel %vm2351, %v4931, %v4932
        %v4982 = vsel %vm2351, %v4930, %v4931
        %v4983 = vsel %vm2351, %v4929, %v4930
        %v4984 = vsel %vm2351, %v4928, %v4929
        %v4985 = vsel %vm2351, %v4927, %v4928
        %v4986 = vsel %vm2351, %v4926, %v4927
        %v4987 = vsel %vm2351, %v4925, %v4926
        %v4988 = vsel %vm2351, %v4956, %v4925
        %v4989 = vsel %vm1483, %v4987, 0.0
        %v4990 = vsel %vm1484, %v4986, 0.0
        %v4991 = vsel %vm1485, %v4985, 0.0
        %v4992 = vsel %vm1486, %v4984, 0.0
        %v4993 = vsel %vm1487, %v4983, 0.0
        %v4994 = vsel %vm1488, %v4982, 0.0
        %v4995 = vsel %vm1489, %v4981, 0.0
        %v4996 = vsel %vm1490, %v4980, 0.0
        %v4997 = vsel %vm1491, %v4979, 0.0
        %v4998 = vsel %vm1492, %v4978, 0.0
        %v4999 = vsel %vm1493, %v4977, 0.0
        %v5000 = vsel %vm1494, %v4976, 0.0
        %v5001 = vsel %vm1495, %v4975, 0.0
        %v5002 = vsel %vm1496, %v4974, 0.0
        %v5003 = vsel %vm1497, %v4973, 0.0
        %v5004 = vsel %vm1498, %v4972, 0.0
        %v5005 = vsel %vm1499, %v4971, 0.0
        %v5006 = vsel %vm1500, %v4970, 0.0
        %v5007 = vsel %vm1501, %v4969, 0.0
        %v5008 = vsel %vm1502, %v4968, 0.0
        %v5009 = vsel %vm1503, %v4967, 0.0
        %v5010 = vsel %vm1504, %v4966, 0.0
        %v5011 = vsel %vm1505, %v4965, 0.0
        %v5012 = vsel %vm1506, %v4964, 0.0
        %v5013 = vsel %vm1507, %v4963, 0.0
        %v5014 = vsel %vm1508, %v4962, 0.0
        %v5015 = vsel %vm1509, %v4961, 0.0
        %v5016 = vsel %vm1510, %v4960, 0.0
        %v5017 = vsel %vm1511, %v4959, 0.0
        %v5018 = vsel %vm1512, %v4958, 0.0
        %v5019 = vsel %vm1513, %v4957, 0.0
        %v5020 = vsel %vm1514, %v4988, 0.0
        %v5021 = vpack.c.bf16 %v4990, %v4989
        %v5022 = vpack.c.bf16 %v4992, %v4991
        %v5023 = vpack.c.bf16 %v4994, %v4993
        %v5024 = vpack.c.bf16 %v4996, %v4995
        %v5025 = vpack.c.bf16 %v4998, %v4997
        %v5026 = vpack.c.bf16 %v5000, %v4999
        %v5027 = vpack.c.bf16 %v5002, %v5001
        %v5028 = vpack.c.bf16 %v5004, %v5003
        %v5029 = vpack.c.bf16 %v5006, %v5005
        %v5030 = vpack.c.bf16 %v5008, %v5007
        %v5031 = vpack.c.bf16 %v5010, %v5009
        %v5032 = vpack.c.bf16 %v5012, %v5011
        %v5033 = vpack.c.bf16 %v5014, %v5013
        %v5034 = vpack.c.bf16 %v5016, %v5015
        %v5035 = vpack.c.bf16 %v5018, %v5017
        %v5036 = vpack.c.bf16 %v5020, %v5019
        %s5037 = scalar_lea.vmem [#allocation5], 512
        %v5038 = vld [vmem:[%s5037] sm:$0xf]
        %v5039 = vld [vmem:[%s5037 + $0x4] sm:$0xf]
        %v5040 = vld [vmem:[%s5037 + $0x8] sm:$0xf]
        %v5041 = vld [vmem:[%s5037 + $0xc] sm:$0xf]
        %v5042 = vld [vmem:[%s5037 + $0x10] sm:$0xf]
        %v5043 = vld [vmem:[%s5037 + $0x14] sm:$0xf]
        %v5044 = vld [vmem:[%s5037 + $0x18] sm:$0xf]
        %v5045 = vld [vmem:[%s5037 + $0x1c] sm:$0xf]
        %v5046 = vld [vmem:[%s5037 + $0x20] sm:$0xf]
        %v5047 = vld [vmem:[%s5037 + $0x24] sm:$0xf]
        %v5048 = vld [vmem:[%s5037 + $0x28] sm:$0xf]
        %v5049 = vld [vmem:[%s5037 + $0x2c] sm:$0xf]
        %v5050 = vld [vmem:[%s5037 + $0x30] sm:$0xf]
        %v5051 = vld [vmem:[%s5037 + $0x34] sm:$0xf]
        %v5052 = vld [vmem:[%s5037 + $0x38] sm:$0xf]
        %v5053 = vld [vmem:[%s5037 + $0x3c] sm:$0xf]
        %v5070 = vunpack.c.l.b16 %v5038
        %v5071 = vunpack.c.l.b16 %v5039
        %v5072 = vunpack.c.l.b16 %v5040
        %v5073 = vunpack.c.l.b16 %v5041
        %v5074 = vunpack.c.l.b16 %v5042
        %v5075 = vunpack.c.l.b16 %v5043
        %v5076 = vunpack.c.l.b16 %v5044
        %v5077 = vunpack.c.l.b16 %v5045
        %v5078 = vunpack.c.l.b16 %v5046
        %v5079 = vunpack.c.l.b16 %v5047
        %v5080 = vunpack.c.l.b16 %v5048
        %v5081 = vunpack.c.l.b16 %v5049
        %v5082 = vunpack.c.l.b16 %v5050
        %v5083 = vunpack.c.l.b16 %v5051
        %v5084 = vunpack.c.l.b16 %v5052
        %v5085 = vunpack.c.l.b16 %v5053
        %v5086 = vpack.c.b16 %v5071, %v5070
        %v5087 = vpack.c.b16 %v5073, %v5072
        %v5088 = vpack.c.b16 %v5075, %v5074
        %v5089 = vpack.c.b16 %v5077, %v5076
        %v5090 = vpack.c.b16 %v5079, %v5078
        %v5091 = vpack.c.b16 %v5081, %v5080
        %v5092 = vpack.c.b16 %v5083, %v5082
        %v5093 = vpack.c.b16 %v5085, %v5084
        %5102 = vmatprep.subr.bf16.mxu0 0
        %5103 = vmatpush1.bf16.msra.mxu0 %v5086
        %5104 = vmatprep.subr.bf16.mxu0 0
        %5105 = vmatpush1.bf16.msra.mxu0 %v5087
        %5106 = vmatprep.subr.bf16.mxu0 0
        %5107 = vmatpush1.bf16.msra.mxu0 %v5088
        %5108 = vmatprep.subr.bf16.mxu0 0
        %5109 = vmatpush1.bf16.msra.mxu0 %v5089
        %5110 = vmatprep.subr.bf16.mxu0 0
        %5111 = vmatpush1.bf16.msra.mxu0 %v5090
        %5112 = vmatprep.subr.bf16.mxu0 0
        %5113 = vmatpush1.bf16.msra.mxu0 %v5091
        %5114 = vmatprep.subr.bf16.mxu0 0
        %5115 = vmatpush1.bf16.msra.mxu0 %v5092
        %5116 = vmatprep.subr.bf16.mxu0 0
        %5117 = vmatpush1.bf16.msra.mxu0 %v5093
        %5118 = vmatprep.subr.bf16.mxu0 0
        %5119 = vmatpush1.bf16.msra.mxu0 0
        %5120 = vmatprep.subr.bf16.mxu0 0
        %5121 = vmatpush1.bf16.msra.mxu0 0
        %5122 = vmatprep.subr.bf16.mxu0 0
        %5123 = vmatpush1.bf16.msra.mxu0 0
        %5124 = vmatprep.subr.bf16.mxu0 0
        %5125 = vmatpush1.bf16.msra.mxu0 0
        %5126 = vmatprep.subr.bf16.mxu0 0
        %5127 = vmatpush1.bf16.msra.mxu0 0
        %5128 = vmatprep.subr.bf16.mxu0 0
        %5129 = vmatpush1.bf16.msra.mxu0 0
        %5130 = vmatprep.subr.bf16.mxu0 0
        %5131 = vmatpush1.bf16.msra.mxu0 0
        %5132 = vmatprep.subr.bf16.mxu0 0
        %5133 = vmatpush1.bf16.msra.mxu0 0
        %5134 = vmatprep.mubr.bf16.mxu0 0
        %5135 = vmatmul.mubr.bf16.gmra.mrb[0].mxu0 %v5021
        %v5136 = vpop.f32.mrb[0].mxu0
        %v5137 = vadd.f32 0.0, %v5136
        %v5138 = vpop.f32.mrb[0].mxu0
        %v5139 = vpop.f32.mrb[0].mxu0
        %v5140 = vadd.f32 0.0, %v5139
        %v5141 = vpop.f32.mrb[0].mxu0
        %5142 = vmatprep.mubr.bf16.mxu0 0
        %5143 = vmatmul.mubr.bf16.gmra.mrb[0].mxu0 %v5022
        %v5144 = vpop.f32.mrb[0].mxu0
        %v5145 = vadd.f32 0.0, %v5144
        %v5146 = vpop.f32.mrb[0].mxu0
        %v5147 = vpop.f32.mrb[0].mxu0
        %v5148 = vadd.f32 0.0, %v5147
        %v5149 = vpop.f32.mrb[0].mxu0
        %5150 = vmatprep.mubr.bf16.mxu0 0
        %5151 = vmatmul.mubr.bf16.gmra.mrb[0].mxu0 %v5023
        %v5152 = vpop.f32.mrb[0].mxu0
        %v5153 = vadd.f32 0.0, %v5152
        %v5154 = vpop.f32.mrb[0].mxu0
        %v5155 = vpop.f32.mrb[0].mxu0
        %v5156 = vadd.f32 0.0, %v5155
        %v5157 = vpop.f32.mrb[0].mxu0
        %5158 = vmatprep.mubr.bf16.mxu0 0
        %5159 = vmatmul.mubr.bf16.gmra.mrb[0].mxu0 %v5024
        %v5160 = vpop.f32.mrb[0].mxu0
        %v5161 = vadd.f32 0.0, %v5160
        %v5162 = vpop.f32.mrb[0].mxu0
        %v5163 = vpop.f32.mrb[0].mxu0
        %v5164 = vadd.f32 0.0, %v5163
        %v5165 = vpop.f32.mrb[0].mxu0
        %5166 = vmatprep.mubr.bf16.mxu0 0
        %5167 = vmatmul.mubr.bf16.gmra.mrb[0].mxu0 %v5025
        %v5168 = vpop.f32.mrb[0].mxu0
        %v5169 = vadd.f32 0.0, %v5168
        %v5170 = vpop.f32.mrb[0].mxu0
        %v5171 = vpop.f32.mrb[0].mxu0
        %v5172 = vadd.f32 0.0, %v5171
        %v5173 = vpop.f32.mrb[0].mxu0
        %5174 = vmatprep.mubr.bf16.mxu0 0
        %5175 = vmatmul.mubr.bf16.gmra.mrb[0].mxu0 %v5026
        %v5176 = vpop.f32.mrb[0].mxu0
        %v5177 = vadd.f32 0.0, %v5176
        %v5178 = vpop.f32.mrb[0].mxu0
        %v5179 = vpop.f32.mrb[0].mxu0
        %v5180 = vadd.f32 0.0, %v5179
        %v5181 = vpop.f32.mrb[0].mxu0
        %5182 = vmatprep.mubr.bf16.mxu0 0
        %5183 = vmatmul.mubr.bf16.gmra.mrb[0].mxu0 %v5027
        %v5184 = vpop.f32.mrb[0].mxu0
        %v5185 = vadd.f32 0.0, %v5184
        %v5186 = vpop.f32.mrb[0].mxu0
        %v5187 = vpop.f32.mrb[0].mxu0
        %v5188 = vadd.f32 0.0, %v5187
        %v5189 = vpop.f32.mrb[0].mxu0
        %5190 = vmatprep.mubr.bf16.mxu0 0
        %5191 = vmatmul.mubr.bf16.gmra.mrb[0].mxu0 %v5028
        %v5192 = vpop.f32.mrb[0].mxu0
        %v5193 = vadd.f32 0.0, %v5192
        %v5194 = vpop.f32.mrb[0].mxu0
        %v5195 = vpop.f32.mrb[0].mxu0
        %v5196 = vadd.f32 0.0, %v5195
        %v5197 = vpop.f32.mrb[0].mxu0
        %5198 = vmatprep.mubr.bf16.mxu0 0
        %5199 = vmatmul.mubr.bf16.gmra.mrb[0].mxu0 %v5029
        %v5200 = vpop.f32.mrb[0].mxu0
        %v5201 = vadd.f32 0.0, %v5200
        %v5202 = vpop.f32.mrb[0].mxu0
        %v5203 = vpop.f32.mrb[0].mxu0
        %v5204 = vadd.f32 0.0, %v5203
        %v5205 = vpop.f32.mrb[0].mxu0
        %5206 = vmatprep.mubr.bf16.mxu0 0
        %5207 = vmatmul.mubr.bf16.gmra.mrb[0].mxu0 %v5030
        %v5208 = vpop.f32.mrb[0].mxu0
        %v5209 = vadd.f32 0.0, %v5208
        %v5210 = vpop.f32.mrb[0].mxu0
        %v5211 = vpop.f32.mrb[0].mxu0
        %v5212 = vadd.f32 0.0, %v5211
        %v5213 = vpop.f32.mrb[0].mxu0
        %5214 = vmatprep.mubr.bf16.mxu0 0
        %5215 = vmatmul.mubr.bf16.gmra.mrb[0].mxu0 %v5031
        %v5216 = vpop.f32.mrb[0].mxu0
        %v5217 = vadd.f32 0.0, %v5216
        %v5218 = vpop.f32.mrb[0].mxu0
        %v5219 = vpop.f32.mrb[0].mxu0
        %v5220 = vadd.f32 0.0, %v5219
        %v5221 = vpop.f32.mrb[0].mxu0
        %5222 = vmatprep.mubr.bf16.mxu0 0
        %5223 = vmatmul.mubr.bf16.gmra.mrb[0].mxu0 %v5032
        %v5224 = vpop.f32.mrb[0].mxu0
        %v5225 = vadd.f32 0.0, %v5224
        %v5226 = vpop.f32.mrb[0].mxu0
        %v5227 = vpop.f32.mrb[0].mxu0
        %v5228 = vadd.f32 0.0, %v5227
        %v5229 = vpop.f32.mrb[0].mxu0
        %5230 = vmatprep.mubr.bf16.mxu0 0
        %5231 = vmatmul.mubr.bf16.gmra.mrb[0].mxu0 %v5033
        %v5232 = vpop.f32.mrb[0].mxu0
        %v5233 = vadd.f32 0.0, %v5232
        %v5234 = vpop.f32.mrb[0].mxu0
        %v5235 = vpop.f32.mrb[0].mxu0
        %v5236 = vadd.f32 0.0, %v5235
        %v5237 = vpop.f32.mrb[0].mxu0
        %5238 = vmatprep.mubr.bf16.mxu0 0
        %5239 = vmatmul.mubr.bf16.gmra.mrb[0].mxu0 %v5034
        %v5240 = vpop.f32.mrb[0].mxu0
        %v5241 = vadd.f32 0.0, %v5240
        %v5242 = vpop.f32.mrb[0].mxu0
        %v5243 = vpop.f32.mrb[0].mxu0
        %v5244 = vadd.f32 0.0, %v5243
        %v5245 = vpop.f32.mrb[0].mxu0
        %5246 = vmatprep.mubr.bf16.mxu0 0
        %5247 = vmatmul.mubr.bf16.gmra.mrb[0].mxu0 %v5035
        %v5248 = vpop.f32.mrb[0].mxu0
        %v5249 = vadd.f32 0.0, %v5248
        %v5250 = vpop.f32.mrb[0].mxu0
        %v5251 = vpop.f32.mrb[0].mxu0
        %v5252 = vadd.f32 0.0, %v5251
        %v5253 = vpop.f32.mrb[0].mxu0
        %5254 = vmatprep.mubr.bf16.mxu0 0
        %5255 = vmatmul.mubr.bf16.gmra.mrb[0].mxu0 %v5036
        %v5256 = vpop.f32.mrb[0].mxu0
        %v5257 = vadd.f32 0.0, %v5256
        %v5258 = vpop.f32.mrb[0].mxu0
        %v5259 = vpop.f32.mrb[0].mxu0
        %v5260 = vadd.f32 0.0, %v5259
        %v5261 = vpop.f32.mrb[0].mxu0
        %5262 = vdwg.mxu0
        %v5263 = vld [vmem:[#allocation4] sm:$0xff]
        %v5264 = vld [vmem:[#allocation4 + $0x8] sm:$0xff]
        %v5265 = vld [vmem:[#allocation4 + $0x10] sm:$0xff]
        %v5266 = vld [vmem:[#allocation4 + $0x18] sm:$0xff]
        %v5267 = vld [vmem:[#allocation4 + $0x20] sm:$0xff]
        %v5268 = vld [vmem:[#allocation4 + $0x28] sm:$0xff]
        %v5269 = vld [vmem:[#allocation4 + $0x30] sm:$0xff]
        %v5270 = vld [vmem:[#allocation4 + $0x38] sm:$0xff]
        %v5271 = vld [vmem:[#allocation4 + $0x40] sm:$0xff]
        %v5272 = vld [vmem:[#allocation4 + $0x48] sm:$0xff]
        %v5273 = vld [vmem:[#allocation4 + $0x50] sm:$0xff]
        %v5274 = vld [vmem:[#allocation4 + $0x58] sm:$0xff]
        %v5275 = vld [vmem:[#allocation4 + $0x60] sm:$0xff]
        %v5276 = vld [vmem:[#allocation4 + $0x68] sm:$0xff]
        %v5277 = vld [vmem:[#allocation4 + $0x70] sm:$0xff]
        %v5278 = vld [vmem:[#allocation4 + $0x78] sm:$0xff]
        %v5279 = vld [vmem:[#allocation4 + $0x80] sm:$0xff]
        %v5280 = vld [vmem:[#allocation4 + $0x88] sm:$0xff]
        %v5281 = vld [vmem:[#allocation4 + $0x90] sm:$0xff]
        %v5282 = vld [vmem:[#allocation4 + $0x98] sm:$0xff]
        %v5283 = vld [vmem:[#allocation4 + $0xa0] sm:$0xff]
        %v5284 = vld [vmem:[#allocation4 + $0xa8] sm:$0xff]
        %v5285 = vld [vmem:[#allocation4 + $0xb0] sm:$0xff]
        %v5286 = vld [vmem:[#allocation4 + $0xb8] sm:$0xff]
        %v5287 = vld [vmem:[#allocation4 + $0xc0] sm:$0xff]
        %v5288 = vld [vmem:[#allocation4 + $0xc8] sm:$0xff]
        %v5289 = vld [vmem:[#allocation4 + $0xd0] sm:$0xff]
        %v5290 = vld [vmem:[#allocation4 + $0xd8] sm:$0xff]
        %v5291 = vld [vmem:[#allocation4 + $0xe0] sm:$0xff]
        %v5292 = vld [vmem:[#allocation4 + $0xe8] sm:$0xff]
        %v5293 = vld [vmem:[#allocation4 + $0xf0] sm:$0xff]
        %v5294 = vld [vmem:[#allocation4 + $0xf8] sm:$0xff]
        %v5295 = vadd.f32 %v5263, %v5137
        %v5296 = vadd.f32 %v5264, %v5140
        %v5297 = vadd.f32 %v5265, %v5145
        %v5298 = vadd.f32 %v5266, %v5148
        %v5299 = vadd.f32 %v5267, %v5153
        %v5300 = vadd.f32 %v5268, %v5156
        %v5301 = vadd.f32 %v5269, %v5161
        %v5302 = vadd.f32 %v5270, %v5164
        %v5303 = vadd.f32 %v5271, %v5169
        %v5304 = vadd.f32 %v5272, %v5172
        %v5305 = vadd.f32 %v5273, %v5177
        %v5306 = vadd.f32 %v5274, %v5180
        %v5307 = vadd.f32 %v5275, %v5185
        %v5308 = vadd.f32 %v5276, %v5188
        %v5309 = vadd.f32 %v5277, %v5193
        %v5310 = vadd.f32 %v5278, %v5196
        %v5311 = vadd.f32 %v5279, %v5201
        %v5312 = vadd.f32 %v5280, %v5204
        %v5313 = vadd.f32 %v5281, %v5209
        %v5314 = vadd.f32 %v5282, %v5212
        %v5315 = vadd.f32 %v5283, %v5217
        %v5316 = vadd.f32 %v5284, %v5220
        %v5317 = vadd.f32 %v5285, %v5225
        %v5318 = vadd.f32 %v5286, %v5228
        %v5319 = vadd.f32 %v5287, %v5233
        %v5320 = vadd.f32 %v5288, %v5236
        %v5321 = vadd.f32 %v5289, %v5241
        %v5322 = vadd.f32 %v5290, %v5244
        %v5323 = vadd.f32 %v5291, %v5249
        %v5324 = vadd.f32 %v5292, %v5252
        %v5325 = vadd.f32 %v5293, %v5257
        %v5326 = vadd.f32 %v5294, %v5260
        %5327 = vst [vmem:[#allocation4] sm:$0xff] %v5295
        %5328 = vst [vmem:[#allocation4 + $0x8] sm:$0xff] %v5296
        %5329 = vst [vmem:[#allocation4 + $0x10] sm:$0xff] %v5297
        %5330 = vst [vmem:[#allocation4 + $0x18] sm:$0xff] %v5298
        %5331 = vst [vmem:[#allocation4 + $0x20] sm:$0xff] %v5299
        %5332 = vst [vmem:[#allocation4 + $0x28] sm:$0xff] %v5300
        %5333 = vst [vmem:[#allocation4 + $0x30] sm:$0xff] %v5301
        %5334 = vst [vmem:[#allocation4 + $0x38] sm:$0xff] %v5302
        %5335 = vst [vmem:[#allocation4 + $0x40] sm:$0xff] %v5303
        %5336 = vst [vmem:[#allocation4 + $0x48] sm:$0xff] %v5304
        %5337 = vst [vmem:[#allocation4 + $0x50] sm:$0xff] %v5305
        %5338 = vst [vmem:[#allocation4 + $0x58] sm:$0xff] %v5306
        %5339 = vst [vmem:[#allocation4 + $0x60] sm:$0xff] %v5307
        %5340 = vst [vmem:[#allocation4 + $0x68] sm:$0xff] %v5308
        %5341 = vst [vmem:[#allocation4 + $0x70] sm:$0xff] %v5309
        %5342 = vst [vmem:[#allocation4 + $0x78] sm:$0xff] %v5310
        %5343 = vst [vmem:[#allocation4 + $0x80] sm:$0xff] %v5311
        %5344 = vst [vmem:[#allocation4 + $0x88] sm:$0xff] %v5312
        %5345 = vst [vmem:[#allocation4 + $0x90] sm:$0xff] %v5313
        %5346 = vst [vmem:[#allocation4 + $0x98] sm:$0xff] %v5314
        %5347 = vst [vmem:[#allocation4 + $0xa0] sm:$0xff] %v5315
        %5348 = vst [vmem:[#allocation4 + $0xa8] sm:$0xff] %v5316
        %5349 = vst [vmem:[#allocation4 + $0xb0] sm:$0xff] %v5317
        %5350 = vst [vmem:[#allocation4 + $0xb8] sm:$0xff] %v5318
        %5351 = vst [vmem:[#allocation4 + $0xc0] sm:$0xff] %v5319
        %5352 = vst [vmem:[#allocation4 + $0xc8] sm:$0xff] %v5320
        %5353 = vst [vmem:[#allocation4 + $0xd0] sm:$0xff] %v5321
        %5354 = vst [vmem:[#allocation4 + $0xd8] sm:$0xff] %v5322
        %5355 = vst [vmem:[#allocation4 + $0xe0] sm:$0xff] %v5323
        %5356 = vst [vmem:[#allocation4 + $0xe8] sm:$0xff] %v5324
        %5357 = vst [vmem:[#allocation4 + $0xf0] sm:$0xff] %v5325
        %5358 = vst [vmem:[#allocation4 + $0xf8] sm:$0xff] %v5326
        %v5359 = vld [vmem:[#allocation4] sm:$0xff]
        %v5360 = vld [vmem:[#allocation4 + $0x8] sm:$0xff]
        %v5361 = vld [vmem:[#allocation4 + $0x10] sm:$0xff]
        %v5362 = vld [vmem:[#allocation4 + $0x18] sm:$0xff]
        %v5363 = vld [vmem:[#allocation4 + $0x20] sm:$0xff]
        %v5364 = vld [vmem:[#allocation4 + $0x28] sm:$0xff]
        %v5365 = vld [vmem:[#allocation4 + $0x30] sm:$0xff]
        %v5366 = vld [vmem:[#allocation4 + $0x38] sm:$0xff]
        %v5367 = vld [vmem:[#allocation4 + $0x40] sm:$0xff]
        %v5368 = vld [vmem:[#allocation4 + $0x48] sm:$0xff]
        %v5369 = vld [vmem:[#allocation4 + $0x50] sm:$0xff]
        %v5370 = vld [vmem:[#allocation4 + $0x58] sm:$0xff]
        %v5371 = vld [vmem:[#allocation4 + $0x60] sm:$0xff]
        %v5372 = vld [vmem:[#allocation4 + $0x68] sm:$0xff]
        %v5373 = vld [vmem:[#allocation4 + $0x70] sm:$0xff]
        %v5374 = vld [vmem:[#allocation4 + $0x78] sm:$0xff]
        %v5375 = vld [vmem:[#allocation4 + $0x80] sm:$0xff]
        %v5376 = vld [vmem:[#allocation4 + $0x88] sm:$0xff]
        %v5377 = vld [vmem:[#allocation4 + $0x90] sm:$0xff]
        %v5378 = vld [vmem:[#allocation4 + $0x98] sm:$0xff]
        %v5379 = vld [vmem:[#allocation4 + $0xa0] sm:$0xff]
        %v5380 = vld [vmem:[#allocation4 + $0xa8] sm:$0xff]
        %v5381 = vld [vmem:[#allocation4 + $0xb0] sm:$0xff]
        %v5382 = vld [vmem:[#allocation4 + $0xb8] sm:$0xff]
        %v5383 = vld [vmem:[#allocation4 + $0xc0] sm:$0xff]
        %v5384 = vld [vmem:[#allocation4 + $0xc8] sm:$0xff]
        %v5385 = vld [vmem:[#allocation4 + $0xd0] sm:$0xff]
        %v5386 = vld [vmem:[#allocation4 + $0xd8] sm:$0xff]
        %v5387 = vld [vmem:[#allocation4 + $0xe0] sm:$0xff]
        %v5388 = vld [vmem:[#allocation4 + $0xe8] sm:$0xff]
        %v5389 = vld [vmem:[#allocation4 + $0xf0] sm:$0xff]
        %v5390 = vld [vmem:[#allocation4 + $0xf8] sm:$0xff]
        %v5391 = vld [vmem:[%s6] sm:$0x1]
        %v5393 = vlaneseq
        %v5394 = vshrl.u32 %v5393, 7
        %v5395 = vsub.s32 0, %v5394
        %v5396 = vrot.slane %v5391, %v5395
        %v5398 = vadd.f32 %v5359, %v5396
        %v5399 = vadd.f32 %v5360, %v5396
        %v5400 = vadd.f32 %v5361, %v5396
        %v5401 = vadd.f32 %v5362, %v5396
        %v5402 = vadd.f32 %v5363, %v5396
        %v5403 = vadd.f32 %v5364, %v5396
        %v5404 = vadd.f32 %v5365, %v5396
        %v5405 = vadd.f32 %v5366, %v5396
        %v5406 = vadd.f32 %v5367, %v5396
        %v5407 = vadd.f32 %v5368, %v5396
        %v5408 = vadd.f32 %v5369, %v5396
        %v5409 = vadd.f32 %v5370, %v5396
        %v5410 = vadd.f32 %v5371, %v5396
        %v5411 = vadd.f32 %v5372, %v5396
        %v5412 = vadd.f32 %v5373, %v5396
        %v5413 = vadd.f32 %v5374, %v5396
        %v5414 = vadd.f32 %v5375, %v5396
        %v5415 = vadd.f32 %v5376, %v5396
        %v5416 = vadd.f32 %v5377, %v5396
        %v5417 = vadd.f32 %v5378, %v5396
        %v5418 = vadd.f32 %v5379, %v5396
        %v5419 = vadd.f32 %v5380, %v5396
        %v5420 = vadd.f32 %v5381, %v5396
        %v5421 = vadd.f32 %v5382, %v5396
        %v5422 = vadd.f32 %v5383, %v5396
        %v5423 = vadd.f32 %v5384, %v5396
        %v5424 = vadd.f32 %v5385, %v5396
        %v5425 = vadd.f32 %v5386, %v5396
        %v5426 = vadd.f32 %v5387, %v5396
        %v5427 = vadd.f32 %v5388, %v5396
        %v5428 = vadd.f32 %v5389, %v5396
        %v5429 = vadd.f32 %v5390, %v5396
        %v5430 = vmax.f32 %v5398, 0.0
        %v5431 = vmax.f32 %v5399, 0.0
        %v5432 = vmax.f32 %v5400, 0.0
        %v5433 = vmax.f32 %v5401, 0.0
        %v5434 = vmax.f32 %v5402, 0.0
        %v5435 = vmax.f32 %v5403, 0.0
        %v5436 = vmax.f32 %v5404, 0.0
        %v5437 = vmax.f32 %v5405, 0.0
        %v5438 = vmax.f32 %v5406, 0.0
        %v5439 = vmax.f32 %v5407, 0.0
        %v5440 = vmax.f32 %v5408, 0.0
        %v5441 = vmax.f32 %v5409, 0.0
        %v5442 = vmax.f32 %v5410, 0.0
        %v5443 = vmax.f32 %v5411, 0.0
        %v5444 = vmax.f32 %v5412, 0.0
        %v5445 = vmax.f32 %v5413, 0.0
        %v5446 = vmax.f32 %v5414, 0.0
        %v5447 = vmax.f32 %v5415, 0.0
        %v5448 = vmax.f32 %v5416, 0.0
        %v5449 = vmax.f32 %v5417, 0.0
        %v5450 = vmax.f32 %v5418, 0.0
        %v5451 = vmax.f32 %v5419, 0.0
        %v5452 = vmax.f32 %v5420, 0.0
        %v5453 = vmax.f32 %v5421, 0.0
        %v5454 = vmax.f32 %v5422, 0.0
        %v5455 = vmax.f32 %v5423, 0.0
        %v5456 = vmax.f32 %v5424, 0.0
        %v5457 = vmax.f32 %v5425, 0.0
        %v5458 = vmax.f32 %v5426, 0.0
        %v5459 = vmax.f32 %v5427, 0.0
        %v5460 = vmax.f32 %v5428, 0.0
        %v5461 = vmax.f32 %v5429, 0.0
        %v5462 = vpack.c.bf16 %v5431, %v5430
        %v5463 = vpack.c.bf16 %v5433, %v5432
        %v5464 = vpack.c.bf16 %v5435, %v5434
        %v5465 = vpack.c.bf16 %v5437, %v5436
        %v5466 = vpack.c.bf16 %v5439, %v5438
        %v5467 = vpack.c.bf16 %v5441, %v5440
        %v5468 = vpack.c.bf16 %v5443, %v5442
        %v5469 = vpack.c.bf16 %v5445, %v5444
        %v5470 = vpack.c.bf16 %v5447, %v5446
        %v5471 = vpack.c.bf16 %v5449, %v5448
        %v5472 = vpack.c.bf16 %v5451, %v5450
        %v5473 = vpack.c.bf16 %v5453, %v5452
        %v5474 = vpack.c.bf16 %v5455, %v5454
        %v5475 = vpack.c.bf16 %v5457, %v5456
        %v5476 = vpack.c.bf16 %v5459, %v5458
        %v5477 = vpack.c.bf16 %v5461, %v5460
        %v5478 = vpack.c.bf16 %v447, %v446
        %v5479 = vpack.c.bf16 %v449, %v448
        %v5480 = vpack.c.bf16 %v451, %v450
        %v5481 = vpack.c.bf16 %v453, %v452
        %v5482 = vpack.c.bf16 %v455, %v454
        %v5483 = vpack.c.bf16 %v457, %v456
        %v5484 = vpack.c.bf16 %v459, %v458
        %v5485 = vpack.c.bf16 %v461, %v460
        %v5486 = vpack.c.bf16 %v463, %v462
        %v5487 = vpack.c.bf16 %v465, %v464
        %v5488 = vpack.c.bf16 %v467, %v466
        %v5489 = vpack.c.bf16 %v469, %v468
        %v5490 = vpack.c.bf16 %v471, %v470
        %v5491 = vpack.c.bf16 %v473, %v472
        %v5492 = vpack.c.bf16 %v475, %v474
        %v5493 = vpack.c.bf16 %v477, %v476
        %v5494 = vld [vmem:[%s7] sm:$0xf]
        %v5495 = vld [vmem:[%s7 + $0x4] sm:$0xf]
        %v5496 = vld [vmem:[%s7 + $0x8] sm:$0xf]
        %v5497 = vld [vmem:[%s7 + $0xc] sm:$0xf]
        %v5498 = vld [vmem:[%s7 + $0x10] sm:$0xf]
        %v5499 = vld [vmem:[%s7 + $0x14] sm:$0xf]
        %v5500 = vld [vmem:[%s7 + $0x18] sm:$0xf]
        %v5501 = vld [vmem:[%s7 + $0x1c] sm:$0xf]
        %v5502 = vld [vmem:[%s7 + $0x20] sm:$0xf]
        %v5503 = vld [vmem:[%s7 + $0x24] sm:$0xf]
        %v5504 = vld [vmem:[%s7 + $0x28] sm:$0xf]
        %v5505 = vld [vmem:[%s7 + $0x2c] sm:$0xf]
        %v5506 = vld [vmem:[%s7 + $0x30] sm:$0xf]
        %v5507 = vld [vmem:[%s7 + $0x34] sm:$0xf]
        %v5508 = vld [vmem:[%s7 + $0x38] sm:$0xf]
        %v5509 = vld [vmem:[%s7 + $0x3c] sm:$0xf]
        %v5510 = vld [vmem:[%s7 + $0x40] sm:$0xf]
        %v5511 = vld [vmem:[%s7 + $0x44] sm:$0xf]
        %v5512 = vld [vmem:[%s7 + $0x48] sm:$0xf]
        %v5513 = vld [vmem:[%s7 + $0x4c] sm:$0xf]
        %v5514 = vld [vmem:[%s7 + $0x50] sm:$0xf]
        %v5515 = vld [vmem:[%s7 + $0x54] sm:$0xf]
        %v5516 = vld [vmem:[%s7 + $0x58] sm:$0xf]
        %v5517 = vld [vmem:[%s7 + $0x5c] sm:$0xf]
        %v5518 = vld [vmem:[%s7 + $0x60] sm:$0xf]
        %v5519 = vld [vmem:[%s7 + $0x64] sm:$0xf]
        %v5520 = vld [vmem:[%s7 + $0x68] sm:$0xf]
        %v5521 = vld [vmem:[%s7 + $0x6c] sm:$0xf]
        %v5522 = vld [vmem:[%s7 + $0x70] sm:$0xf]
        %v5523 = vld [vmem:[%s7 + $0x74] sm:$0xf]
        %v5524 = vld [vmem:[%s7 + $0x78] sm:$0xf]
        %v5525 = vld [vmem:[%s7 + $0x7c] sm:$0xf]
        %v5526 = vld [vmem:[%s8] sm:$0x1]
        %v5528 = vlaneseq
        %v5529 = vshrl.u32 %v5528, 7
        %v5530 = vsub.s32 0, %v5529
        %v5531 = vrot.slane %v5526, %v5530
        %v5565 = vunpack.c.l.b16 %v5494
        %v5566 = vunpack.c.l.b16 %v5495
        %v5567 = vunpack.c.l.b16 %v5496
        %v5568 = vunpack.c.l.b16 %v5497
        %v5569 = vunpack.c.l.b16 %v5498
        %v5570 = vunpack.c.l.b16 %v5499
        %v5571 = vunpack.c.l.b16 %v5500
        %v5572 = vunpack.c.l.b16 %v5501
        %v5573 = vunpack.c.l.b16 %v5502
        %v5574 = vunpack.c.l.b16 %v5503
        %v5575 = vunpack.c.l.b16 %v5504
        %v5576 = vunpack.c.l.b16 %v5505
        %v5577 = vunpack.c.l.b16 %v5506
        %v5578 = vunpack.c.l.b16 %v5507
        %v5579 = vunpack.c.l.b16 %v5508
        %v5580 = vunpack.c.l.b16 %v5509
        %v5581 = vunpack.c.l.b16 %v5510
        %v5582 = vunpack.c.l.b16 %v5511
        %v5583 = vunpack.c.l.b16 %v5512
        %v5584 = vunpack.c.l.b16 %v5513
        %v5585 = vunpack.c.l.b16 %v5514
        %v5586 = vunpack.c.l.b16 %v5515
        %v5587 = vunpack.c.l.b16 %v5516
        %v5588 = vunpack.c.l.b16 %v5517
        %v5589 = vunpack.c.l.b16 %v5518
        %v5590 = vunpack.c.l.b16 %v5519
        %v5591 = vunpack.c.l.b16 %v5520
        %v5592 = vunpack.c.l.b16 %v5521
        %v5593 = vunpack.c.l.b16 %v5522
        %v5594 = vunpack.c.l.b16 %v5523
        %v5595 = vunpack.c.l.b16 %v5524
        %v5596 = vunpack.c.l.b16 %v5525
        %v5597 = vpack.c.b16 %v5566, %v5565
        %v5598 = vpack.c.b16 %v5568, %v5567
        %v5599 = vpack.c.b16 %v5570, %v5569
        %v5600 = vpack.c.b16 %v5572, %v5571
        %v5601 = vpack.c.b16 %v5574, %v5573
        %v5602 = vpack.c.b16 %v5576, %v5575
        %v5603 = vpack.c.b16 %v5578, %v5577
        %v5604 = vpack.c.b16 %v5580, %v5579
        %v5605 = vpack.c.b16 %v5582, %v5581
        %v5606 = vpack.c.b16 %v5584, %v5583
        %v5607 = vpack.c.b16 %v5586, %v5585
        %v5608 = vpack.c.b16 %v5588, %v5587
        %v5609 = vpack.c.b16 %v5590, %v5589
        %v5610 = vpack.c.b16 %v5592, %v5591
        %v5611 = vpack.c.b16 %v5594, %v5593
        %v5612 = vpack.c.b16 %v5596, %v5595
        %5629 = vmatprep.subr.bf16.mxu0 0
        %5630 = vmatpush1.bf16.msra.mxu0 %v5597
        %5631 = vmatprep.subr.bf16.mxu0 0
        %5632 = vmatpush1.bf16.msra.mxu0 %v5598
        %5633 = vmatprep.subr.bf16.mxu0 0
        %5634 = vmatpush1.bf16.msra.mxu0 %v5599
        %5635 = vmatprep.subr.bf16.mxu0 0
        %5636 = vmatpush1.bf16.msra.mxu0 %v5600
        %5637 = vmatprep.subr.bf16.mxu0 0
        %5638 = vmatpush1.bf16.msra.mxu0 %v5601
        %5639 = vmatprep.subr.bf16.mxu0 0
        %5640 = vmatpush1.bf16.msra.mxu0 %v5602
        %5641 = vmatprep.subr.bf16.mxu0 0
        %5642 = vmatpush1.bf16.msra.mxu0 %v5603
        %5643 = vmatprep.subr.bf16.mxu0 0
        %5644 = vmatpush1.bf16.msra.mxu0 %v5604
        %5645 = vmatprep.subr.bf16.mxu0 0
        %5646 = vmatpush1.bf16.msra.mxu0 %v5605
        %5647 = vmatprep.subr.bf16.mxu0 0
        %5648 = vmatpush1.bf16.msra.mxu0 %v5606
        %5649 = vmatprep.subr.bf16.mxu0 0
        %5650 = vmatpush1.bf16.msra.mxu0 %v5607
        %5651 = vmatprep.subr.bf16.mxu0 0
        %5652 = vmatpush1.bf16.msra.mxu0 %v5608
        %5653 = vmatprep.subr.bf16.mxu0 0
        %5654 = vmatpush1.bf16.msra.mxu0 %v5609
        %5655 = vmatprep.subr.bf16.mxu0 0
        %5656 = vmatpush1.bf16.msra.mxu0 %v5610
        %5657 = vmatprep.subr.bf16.mxu0 0
        %5658 = vmatpush1.bf16.msra.mxu0 %v5611
        %5659 = vmatprep.subr.bf16.mxu0 0
        %5660 = vmatpush1.bf16.msra.mxu0 %v5612
        %5661 = vmatprep.mubr.bf16.mxu0 %v5478
        %5662 = vmatmul.mubr.bf16.gmra.mrb[0].mxu0 %v5462
        %v5663 = vpop.f32.mrb[0].mxu0
        %v5664 = vadd.f32 %v5531, %v5663
        %v5665 = vpop.f32.mrb[0].mxu0
        %v5666 = vpop.f32.mrb[0].mxu0
        %v5667 = vadd.f32 %v5531, %v5666
        %v5668 = vpop.f32.mrb[0].mxu0
        %5669 = vmatprep.mubr.bf16.mxu0 %v5479
        %5670 = vmatmul.mubr.bf16.gmra.mrb[0].mxu0 %v5463
        %v5671 = vpop.f32.mrb[0].mxu0
        %v5672 = vadd.f32 %v5531, %v5671
        %v5673 = vpop.f32.mrb[0].mxu0
        %v5674 = vpop.f32.mrb[0].mxu0
        %v5675 = vadd.f32 %v5531, %v5674
        %v5676 = vpop.f32.mrb[0].mxu0
        %5677 = vmatprep.mubr.bf16.mxu0 %v5480
        %5678 = vmatmul.mubr.bf16.gmra.mrb[0].mxu0 %v5464
        %v5679 = vpop.f32.mrb[0].mxu0
        %v5680 = vadd.f32 %v5531, %v5679
        %v5681 = vpop.f32.mrb[0].mxu0
        %v5682 = vpop.f32.mrb[0].mxu0
        %v5683 = vadd.f32 %v5531, %v5682
        %v5684 = vpop.f32.mrb[0].mxu0
        %5685 = vmatprep.mubr.bf16.mxu0 %v5481
        %5686 = vmatmul.mubr.bf16.gmra.mrb[0].mxu0 %v5465
        %v5687 = vpop.f32.mrb[0].mxu0
        %v5688 = vadd.f32 %v5531, %v5687
        %v5689 = vpop.f32.mrb[0].mxu0
        %v5690 = vpop.f32.mrb[0].mxu0
        %v5691 = vadd.f32 %v5531, %v5690
        %v5692 = vpop.f32.mrb[0].mxu0
        %5693 = vmatprep.mubr.bf16.mxu0 %v5482
        %5694 = vmatmul.mubr.bf16.gmra.mrb[0].mxu0 %v5466
        %v5695 = vpop.f32.mrb[0].mxu0
        %v5696 = vadd.f32 %v5531, %v5695
        %v5697 = vpop.f32.mrb[0].mxu0
        %v5698 = vpop.f32.mrb[0].mxu0
        %v5699 = vadd.f32 %v5531, %v5698
        %v5700 = vpop.f32.mrb[0].mxu0
        %5701 = vmatprep.mubr.bf16.mxu0 %v5483
        %5702 = vmatmul.mubr.bf16.gmra.mrb[0].mxu0 %v5467
        %v5703 = vpop.f32.mrb[0].mxu0
        %v5704 = vadd.f32 %v5531, %v5703
        %v5705 = vpop.f32.mrb[0].mxu0
        %v5706 = vpop.f32.mrb[0].mxu0
        %v5707 = vadd.f32 %v5531, %v5706
        %v5708 = vpop.f32.mrb[0].mxu0
        %5709 = vmatprep.mubr.bf16.mxu0 %v5484
        %5710 = vmatmul.mubr.bf16.gmra.mrb[0].mxu0 %v5468
        %v5711 = vpop.f32.mrb[0].mxu0
        %v5712 = vadd.f32 %v5531, %v5711
        %v5713 = vpop.f32.mrb[0].mxu0
        %v5714 = vpop.f32.mrb[0].mxu0
        %v5715 = vadd.f32 %v5531, %v5714
        %v5716 = vpop.f32.mrb[0].mxu0
        %5717 = vmatprep.mubr.bf16.mxu0 %v5485
        %5718 = vmatmul.mubr.bf16.gmra.mrb[0].mxu0 %v5469
        %v5719 = vpop.f32.mrb[0].mxu0
        %v5720 = vadd.f32 %v5531, %v5719
        %v5721 = vpop.f32.mrb[0].mxu0
        %v5722 = vpop.f32.mrb[0].mxu0
        %v5723 = vadd.f32 %v5531, %v5722
        %v5724 = vpop.f32.mrb[0].mxu0
        %5725 = vmatprep.mubr.bf16.mxu0 %v5486
        %5726 = vmatmul.mubr.bf16.gmra.mrb[0].mxu0 %v5470
        %v5727 = vpop.f32.mrb[0].mxu0
        %v5728 = vadd.f32 %v5531, %v5727
        %v5729 = vpop.f32.mrb[0].mxu0
        %v5730 = vpop.f32.mrb[0].mxu0
        %v5731 = vadd.f32 %v5531, %v5730
        %v5732 = vpop.f32.mrb[0].mxu0
        %5733 = vmatprep.mubr.bf16.mxu0 %v5487
        %5734 = vmatmul.mubr.bf16.gmra.mrb[0].mxu0 %v5471
        %v5735 = vpop.f32.mrb[0].mxu0
        %v5736 = vadd.f32 %v5531, %v5735
        %v5737 = vpop.f32.mrb[0].mxu0
        %v5738 = vpop.f32.mrb[0].mxu0
        %v5739 = vadd.f32 %v5531, %v5738
        %v5740 = vpop.f32.mrb[0].mxu0
        %5741 = vmatprep.mubr.bf16.mxu0 %v5488
        %5742 = vmatmul.mubr.bf16.gmra.mrb[0].mxu0 %v5472
        %v5743 = vpop.f32.mrb[0].mxu0
        %v5744 = vadd.f32 %v5531, %v5743
        %v5745 = vpop.f32.mrb[0].mxu0
        %v5746 = vpop.f32.mrb[0].mxu0
        %v5747 = vadd.f32 %v5531, %v5746
        %v5748 = vpop.f32.mrb[0].mxu0
        %5749 = vmatprep.mubr.bf16.mxu0 %v5489
        %5750 = vmatmul.mubr.bf16.gmra.mrb[0].mxu0 %v5473
        %v5751 = vpop.f32.mrb[0].mxu0
        %v5752 = vadd.f32 %v5531, %v5751
        %v5753 = vpop.f32.mrb[0].mxu0
        %v5754 = vpop.f32.mrb[0].mxu0
        %v5755 = vadd.f32 %v5531, %v5754
        %v5756 = vpop.f32.mrb[0].mxu0
        %5757 = vmatprep.mubr.bf16.mxu0 %v5490
        %5758 = vmatmul.mubr.bf16.gmra.mrb[0].mxu0 %v5474
        %v5759 = vpop.f32.mrb[0].mxu0
        %v5760 = vadd.f32 %v5531, %v5759
        %v5761 = vpop.f32.mrb[0].mxu0
        %v5762 = vpop.f32.mrb[0].mxu0
        %v5763 = vadd.f32 %v5531, %v5762
        %v5764 = vpop.f32.mrb[0].mxu0
        %5765 = vmatprep.mubr.bf16.mxu0 %v5491
        %5766 = vmatmul.mubr.bf16.gmra.mrb[0].mxu0 %v5475
        %v5767 = vpop.f32.mrb[0].mxu0
        %v5768 = vadd.f32 %v5531, %v5767
        %v5769 = vpop.f32.mrb[0].mxu0
        %v5770 = vpop.f32.mrb[0].mxu0
        %v5771 = vadd.f32 %v5531, %v5770
        %v5772 = vpop.f32.mrb[0].mxu0
        %5773 = vmatprep.mubr.bf16.mxu0 %v5492
        %5774 = vmatmul.mubr.bf16.gmra.mrb[0].mxu0 %v5476
        %v5775 = vpop.f32.mrb[0].mxu0
        %v5776 = vadd.f32 %v5531, %v5775
        %v5777 = vpop.f32.mrb[0].mxu0
        %v5778 = vpop.f32.mrb[0].mxu0
        %v5779 = vadd.f32 %v5531, %v5778
        %v5780 = vpop.f32.mrb[0].mxu0
        %5781 = vmatprep.mubr.bf16.mxu0 %v5493
        %5782 = vmatmul.mubr.bf16.gmra.mrb[0].mxu0 %v5477
        %v5783 = vpop.f32.mrb[0].mxu0
        %v5784 = vadd.f32 %v5531, %v5783
        %v5785 = vpop.f32.mrb[0].mxu0
        %v5786 = vpop.f32.mrb[0].mxu0
        %v5787 = vadd.f32 %v5531, %v5786
        %v5788 = vpop.f32.mrb[0].mxu0
        %5789 = vdwg.mxu0
        %vm5790 = vcmask 64512
        %5791 = vst.msk [vmem:[%s347] sm:$0xff] %vm5790, %v5664
        %5792 = vst.msk [vmem:[%s347 + $0x8] sm:$0xff] %vm5790, %v5667
        %5793 = vst.msk [vmem:[%s347 + $0x10] sm:$0xff] %vm5790, %v5672
        %5794 = vst.msk [vmem:[%s347 + $0x18] sm:$0xff] %vm5790, %v5675
        %5795 = vst.msk [vmem:[%s347 + $0x20] sm:$0xff] %vm5790, %v5680
        %5796 = vst.msk [vmem:[%s347 + $0x28] sm:$0xff] %vm5790, %v5683
        %5797 = vst.msk [vmem:[%s347 + $0x30] sm:$0xff] %vm5790, %v5688
        %5798 = vst.msk [vmem:[%s347 + $0x38] sm:$0xff] %vm5790, %v5691
        %5799 = vst.msk [vmem:[%s347 + $0x40] sm:$0xff] %vm5790, %v5696
        %5800 = vst.msk [vmem:[%s347 + $0x48] sm:$0xff] %vm5790, %v5699
        %5801 = vst.msk [vmem:[%s347 + $0x50] sm:$0xff] %vm5790, %v5704
        %5802 = vst.msk [vmem:[%s347 + $0x58] sm:$0xff] %vm5790, %v5707
        %5803 = vst.msk [vmem:[%s347 + $0x60] sm:$0xff] %vm5790, %v5712
        %5804 = vst.msk [vmem:[%s347 + $0x68] sm:$0xff] %vm5790, %v5715
        %5805 = vst.msk [vmem:[%s347 + $0x70] sm:$0xff] %vm5790, %v5720
        %5806 = vst.msk [vmem:[%s347 + $0x78] sm:$0xff] %vm5790, %v5723
        %5807 = vst.msk [vmem:[%s347 + $0x80] sm:$0xff] %vm5790, %v5728
        %5808 = vst.msk [vmem:[%s347 + $0x88] sm:$0xff] %vm5790, %v5731
        %5809 = vst.msk [vmem:[%s347 + $0x90] sm:$0xff] %vm5790, %v5736
        %5810 = vst.msk [vmem:[%s347 + $0x98] sm:$0xff] %vm5790, %v5739
        %5811 = vst.msk [vmem:[%s347 + $0xa0] sm:$0xff] %vm5790, %v5744
        %5812 = vst.msk [vmem:[%s347 + $0xa8] sm:$0xff] %vm5790, %v5747
        %5813 = vst.msk [vmem:[%s347 + $0xb0] sm:$0xff] %vm5790, %v5752
        %5814 = vst.msk [vmem:[%s347 + $0xb8] sm:$0xff] %vm5790, %v5755
        %5815 = vst.msk [vmem:[%s347 + $0xc0] sm:$0xff] %vm5790, %v5760
        %5816 = vst.msk [vmem:[%s347 + $0xc8] sm:$0xff] %vm5790, %v5763
        %5817 = vst.msk [vmem:[%s347 + $0xd0] sm:$0xff] %vm5790, %v5768
        %5818 = vst.msk [vmem:[%s347 + $0xd8] sm:$0xff] %vm5790, %v5771
        %5819 = vst.msk [vmem:[%s347 + $0xe0] sm:$0xff] %vm5790, %v5776
        %5820 = vst.msk [vmem:[%s347 + $0xe8] sm:$0xff] %vm5790, %v5779
        %5821 = vst.msk [vmem:[%s347 + $0xf0] sm:$0xff] %vm5790, %v5784
        %5822 = vst.msk [vmem:[%s347 + $0xf8] sm:$0xff] %vm5790, %v5787
        %p5823 = scmp.lt.s32.totalorder %s21, 1
        %s5824 = scalar_select %p5823, %s21, 1
        %s5825 = smul.addr %s5824, 32
        %s5826 = smul.addr %s5825, 8
        %s5827 = scalar_lea.vmem %s9, %s5826
        // Predicated region
        $region61: #{tpu_custom_call.1} parent=55 // pred_check
          %p5828 = pneg %p233
        $region62: #{tpu_custom_call.1} parent=55 // pred_check_branch
          %5830 = sbr.rel (%p5828) target = $region64
        $region63: #{tpu_custom_call.1} parent=55 // pred_region
          _
        $region64: #{tpu_custom_call.1} parent=55 // pred_fallthru
          _
      $region56: #{tpu_custom_call.1} parent=5 // pred_fallthru
        _
      %p5831 = scmp.le.s32.totalorder 2, %s16
      // Predicated region
      $region65: #{tpu_custom_call.1} parent=5 // pred_check
        %p5832 = pneg %p5831
      $region66: #{tpu_custom_call.1} parent=5 // pred_check_branch
        %5834 = sbr.rel (%p5832) target = $region68
      $region67: #{tpu_custom_call.1} parent=5 // pred_region
        %s5835 = ssub.s32 %s16, 2
        // Predicated region
        $region69: #{tpu_custom_call.1} parent=67 // pred_check
          %p5836 = pneg %p239
        $region70: #{tpu_custom_call.1} parent=67 // pred_check_branch
          %5838 = sbr.rel (%p5836) target = $region72
        $region71: #{tpu_custom_call.1} parent=67 // pred_region
          %p5839 = scmp.lt.s32.totalorder %s22, 1
          %s5840 = scalar_select %p5839, %s22, 1
          %s5841 = smul.addr %s5840, 32
          %s5842 = smul.addr %s5841, 8
          %s5843 = scalar_lea.vmem %s9, %s5842
        $region72: #{tpu_custom_call.1} parent=67 // pred_fallthru
          _
      $region68: #{tpu_custom_call.1} parent=5 // pred_fallthru
        _
    $region6: #{tpu_custom_call.1} parent=1 // loop_footer
      %s20 = sadd.s32 1, %s16
    $region7: #{tpu_custom_call.1} parent=1 // loop_footer_branch
      %15 = sbr.rel target = $region3
    $region8: #{tpu_custom_call.1} parent=1 // loop_exit
      _
    %5844 = vsyncpa [#allocation6], 1
    %s5845 = scalar_lea.sflag [#allocation6], 1
    %5846 = vsyncpa %s5845, 1

</llo_original>
